<compile_context>
chip_gen: v7x
topology: tpu7x:2x2x1
jax: 0.10.0
libtpu: 0.0.40
codegen_flags: <defaults>
</compile_context>

<pallas_src>
import math

import jax
import jax.numpy as jnp
from jax.experimental import pallas as pl
from jax.experimental.pallas import tpu as pltpu


def _make_bigru_kernel(time_chunk, hidden, t_valid, t_padded):
    TC = time_chunk
    H = hidden
    needs_mask = (t_padded != t_valid)

    def kernel(xf_ref, xb_ref, wx_ref, wh_ref, pb_ref,
               memf_ref, memb_ref, fin_ref, hf_scr, hb_scr):
        c = pl.program_id(0)  # time-chunk index (sequential)

        @pl.when(c == 0)
        def _():
            hf_scr[...] = jnp.zeros_like(hf_scr)
            hb_scr[...] = jnp.zeros_like(hb_scr)

        cdt = jnp.bfloat16
        wx_f = wx_ref[0]          # (E, 3H) bf16
        wx_b = wx_ref[1]
        wh_f = wh_ref[0]          # (H, 3H) bf16
        wh_b = wh_ref[1]
        pb_f = pb_ref[0]          # (B, 3H) f32 : asp@Wa + bias
        pb_b = pb_ref[1]

        # Fully unrolled serial recurrence over the chunk: all indices static.
        for i in range(TC):
            hf = hf_scr[...]      # (B, H) f32
            hb = hb_scr[...]

            # Input-side matmuls are independent of the hidden state, so the
            # MXU pipelines them under the h@Wh latency chain.
            gx_f = jnp.dot(xf_ref[i], wx_f, preferred_element_type=jnp.float32)
            gx_b = jnp.dot(xb_ref[TC - 1 - i], wx_b,
                           preferred_element_type=jnp.float32)
            # Two directions issued back-to-back so their latency chains overlap.
            gh_f = jnp.dot(hf.astype(cdt), wh_f,
                           preferred_element_type=jnp.float32)
            gh_b = jnp.dot(hb.astype(cdt), wh_b,
                           preferred_element_type=jnp.float32)

            pre_f = gx_f + pb_f
            pre_b = gx_b + pb_b

            r_f = jax.nn.sigmoid(pre_f[:, :H] + gh_f[:, :H])
            z_f = jax.nn.sigmoid(pre_f[:, H:2 * H] + gh_f[:, H:2 * H])
            n_f = jnp.tanh(pre_f[:, 2 * H:] + r_f * gh_f[:, 2 * H:])
            hf_new = n_f + z_f * (hf - n_f)

            r_b = jax.nn.sigmoid(pre_b[:, :H] + gh_b[:, :H])
            z_b = jax.nn.sigmoid(pre_b[:, H:2 * H] + gh_b[:, H:2 * H])
            n_b = jnp.tanh(pre_b[:, 2 * H:] + r_b * gh_b[:, 2 * H:])
            hb_new = n_b + z_b * (hb - n_b)

            if needs_mask:
                # Padded timesteps must not advance the state: fwd pads sit at
                # the end of the stream, bwd pads at the beginning.
                s = c * TC + i
                hf_new = jnp.where(s < t_valid, hf_new, hf)
                hb_new = jnp.where(s >= t_padded - t_valid, hb_new, hb)

            hf_scr[...] = hf_new
            hb_scr[...] = hb_new

            # Forward writes local row i of time block c; backward writes
            # local row TC-1-i of time block NC-1-c (see out BlockSpecs), so
            # both land directly in global time order, already [B, T, H].
            memf_ref[:, i, :] = hf_new.astype(memf_ref.dtype)
            memb_ref[:, TC - 1 - i, :] = hb_new.astype(memb_ref.dtype)

        # fin's block index is constant, so it is written back to HBM only at
        # the end of the grid -> holds the final hidden states.
        fin_ref[0] = hf_scr[...].astype(fin_ref.dtype)
        fin_ref[1] = hb_scr[...].astype(fin_ref.dtype)

    return kernel


def bi_aspect_gru(x_tbe, asp, wx, wh, wa, b, *, time_chunk=32):
    """Bidirectional aspect-conditioned GRU.

    x_tbe: [T, B, E] f32, asp: [B, A] f32
    wx: [2, E, 3H], wh: [2, H, 3H], wa: [2, A, 3H], b: [2, 1, 3H]
    Returns memory_bank [B, T, 2H] f32 and final_state [2, B, H] f32
    (index 0 = forward, 1 = backward).
    """
    T, B, E = x_tbe.shape
    H = wh.shape[1]
    cdt = jnp.bfloat16

    # Time-chunk: large (amortize ~0.35us/grid-step overhead).  For T larger
    # than the target, pad T up to a TC multiple (multiple of 8 for the output
    # block sublane constraint) instead of degrading TC.
    if T <= time_chunk:
        TC, Tp = T, T
    else:
        TC = max(8, (time_chunk // 8) * 8)
        Tp = ((T + TC - 1) // TC) * TC
    NC = Tp // TC

    x = x_tbe.astype(cdt)
    if Tp != T:
        x = jnp.pad(x, ((0, Tp - T), (0, 0), (0, 0)))

    # Tiny aspect + bias pre-activation, computed once outside the kernel.
    pb = jnp.einsum('ba,dah->dbh', asp.astype(cdt), wa.astype(cdt),
                    preferred_element_type=jnp.float32) \
        + b.astype(jnp.float32)                                   # [2, B, 3H]

    wx_c = wx.astype(cdt)
    wh_c = wh.astype(cdt)

    kernel = _make_bigru_kernel(TC, H, T, Tp)

    # Rough VMEM budget (double-buffered blocks + weights + scratch).
    est = (2 * 2 * TC * B * E * 2        # x fwd/bwd chunks (bf16)
           + 2 * 2 * E * 3 * H * 2       # wx
           + 2 * 2 * H * 3 * H * 2       # wh
           + 2 * 2 * B * 3 * H * 4       # pb
           + 2 * 2 * B * TC * H * 4      # mem_f / mem_b blocks
           + 2 * 2 * B * H * 4           # fin
           + 2 * B * H * 4)              # hidden-state scratch
    vmem_limit = int(min(64 * 1024 * 1024, max(32 * 1024 * 1024, 2 * est)))

    mem_f, mem_b, fin = pl.pallas_call(
        kernel,
        out_shape=(
            jax.ShapeDtypeStruct((B, Tp, H), jnp.float32),   # forward bank
            jax.ShapeDtypeStruct((B, Tp, H), jnp.float32),   # backward bank
            jax.ShapeDtypeStruct((2, B, H), jnp.float32),    # final states
        ),
        grid_spec=pltpu.PrefetchScalarGridSpec(
            num_scalar_prefetch=0,
            grid=(NC,),
            in_specs=[
                pl.BlockSpec((TC, B, E), lambda c: (c, 0, 0)),            # x fwd
                pl.BlockSpec((TC, B, E), lambda c: (NC - 1 - c, 0, 0)),   # x bwd
                pl.BlockSpec((2, E, 3 * H), lambda c: (0, 0, 0)),         # wx
                pl.BlockSpec((2, H, 3 * H), lambda c: (0, 0, 0)),         # wh
                pl.BlockSpec((2, B, 3 * H), lambda c: (0, 0, 0)),         # asp+bias
            ],
            out_specs=[
                pl.BlockSpec((B, TC, H), lambda c: (0, c, 0)),
                pl.BlockSpec((B, TC, H), lambda c: (0, NC - 1 - c, 0)),
                pl.BlockSpec((2, B, H), lambda c: (0, 0, 0)),
            ],
            scratch_shapes=[
                pltpu.VMEM((B, H), jnp.float32),   # h forward
                pltpu.VMEM((B, H), jnp.float32),   # h backward
            ],
        ),
        compiler_params=pltpu.CompilerParams(
            dimension_semantics=("arbitrary",),
            vmem_limit_bytes=vmem_limit,
        ),
    )(x, x, wx_c, wh_c, pb)

    memory_bank = jnp.concatenate([mem_f[:, :T, :], mem_b[:, :T, :]], axis=-1)
    return memory_bank, fin


class RNNEncoderBasicPallas:
    def __init__(self, vocab_size, embed_size, asp_size, hidden_size,
                 num_layers, bidirectional, pad_token, key, dropout=0.0):
        self.vocab_size = vocab_size
        self.embed_size = embed_size
        self.hidden_size = hidden_size
        self.num_layers = num_layers
        self.bidirectional = bidirectional
        self.pad_token = pad_token

        ks = jax.random.split(key, 6)
        # nn.Embedding init ~ N(0,1); padding_idx row zeroed
        emb = jax.random.normal(ks[0], (vocab_size, embed_size), jnp.float32)
        self.embedding = emb.at[pad_token].set(0.0)
        # GRU-style uniform(-1/sqrt(H), 1/sqrt(H)) init, stacked per direction.
        # Matmul weights stored in bf16 (MXU/DMA dtype); bias kept f32.
        lim = 1.0 / math.sqrt(hidden_size)
        u = lambda k, s: jax.random.uniform(k, s, jnp.float32, -lim, lim)
        self.wx = u(ks[1], (2, embed_size, 3 * hidden_size)).astype(jnp.bfloat16)
        self.wh = u(ks[2], (2, hidden_size, 3 * hidden_size)).astype(jnp.bfloat16)
        self.wa = u(ks[3], (2, asp_size, 3 * hidden_size)).astype(jnp.bfloat16)
        self.b = u(ks[4], (2, 1, 3 * hidden_size))

    def __call__(self, src, src_lens, asp_hidden):
        # src: [B, T] int32, asp_hidden: [B, asp_size]
        # TODO(synk): src_lens is unused (matches BiAspectGRULayer(src_embed, state, asp_hidden) signature)
        src_embed = jnp.take(self.embedding, src, axis=0)        # [B, T, E]
        x_tbe = jnp.transpose(src_embed, (1, 0, 2))              # [T, B, E]
        memory_bank, fin = bi_aspect_gru(x_tbe, asp_hidden,
                                         self.wx, self.wh, self.wa, self.b)
        if self.bidirectional:
            last = jnp.concatenate([fin[-1], fin[-2]], axis=1)   # [B, 2H]
        else:
            last = fin[-1]
        return memory_bank, last


if __name__ == "__main__":
    key = jax.random.PRNGKey(0)
    # Aligned small shapes: B multiple of 8 (sublane), H multiple of 128 (lane).
    B, T = 8, 16
    vocab_size, embed_size, asp_size, hidden_size = 64, 64, 32, 128

    enc = RNNEncoderBasicPallas(vocab_size, embed_size, asp_size, hidden_size,
                                num_layers=1, bidirectional=True,
                                pad_token=0, key=key)

    k1, k2 = jax.random.split(jax.random.PRNGKey(0))
    src = jax.random.randint(k1, (B, T), 0, vocab_size, dtype=jnp.int32)
    src_lens = [T] * B
    asp_hidden = jax.random.normal(k2, (B, asp_size), jnp.float32)

    memory_bank, last_state = enc(src, src_lens, asp_hidden)
    jax.block_until_ready((memory_bank, last_state))

    assert memory_bank.shape == (B, T, 2 * hidden_size)
    assert last_state.shape == (B, 2 * hidden_size)
    assert bool(jnp.all(jnp.isfinite(memory_bank)))
    assert bool(jnp.all(jnp.isfinite(last_state)))
    print("KERNEL_OK")
</pallas_src>

<mosaic_0001>
module attributes {stable_mosaic.version = 11 : i64} {
  func.func @kernel(%arg0: i32, %arg1: memref<16x8x64xbf16, #tpu.memory_space<vmem>>, %arg2: memref<16x8x64xbf16, #tpu.memory_space<vmem>>, %arg3: memref<2x64x384xbf16, #tpu.memory_space<vmem>>, %arg4: memref<2x128x384xbf16, #tpu.memory_space<vmem>>, %arg5: memref<2x8x384xf32, #tpu.memory_space<vmem>>, %arg6: memref<8x16x128xf32, #tpu.memory_space<vmem>>, %arg7: memref<8x16x128xf32, #tpu.memory_space<vmem>>, %arg8: memref<2x8x128xf32, #tpu.memory_space<vmem>>, %arg9: memref<8x128xf32, #tpu.memory_space<vmem>>, %arg10: memref<8x128xf32, #tpu.memory_space<vmem>>) attributes {dimension_semantics = [#tpu.dimension_semantics<arbitrary>], iteration_bounds = array<i64: 1>, scalar_prefetch = 0 : i64, scratch_operands = 2 : i64, tpu.core_type = #tpu.core_type<tc>, window_params = [{transform_indices = @transform_0, window_bounds = array<i64: 16, 8, 64>}, {transform_indices = @transform_1, window_bounds = array<i64: 16, 8, 64>}, {pipeline_mode = #tpu.pipeline_mode<synchronous>, transform_indices = @transform_2, window_bounds = array<i64: 2, 64, 384>}, {pipeline_mode = #tpu.pipeline_mode<synchronous>, transform_indices = @transform_3, window_bounds = array<i64: 2, 128, 384>}, {pipeline_mode = #tpu.pipeline_mode<synchronous>, transform_indices = @transform_4, window_bounds = array<i64: 2, 8, 384>}, {transform_indices = @transform_5, window_bounds = array<i64: 8, 16, 128>}, {transform_indices = @transform_6, window_bounds = array<i64: 8, 16, 128>}, {pipeline_mode = #tpu.pipeline_mode<synchronous>, transform_indices = @transform_7, window_bounds = array<i64: 2, 8, 128>}]} {
    %c0_i32 = arith.constant 0 : i32
    %0 = arith.cmpi eq, %arg0, %c0_i32 : i32
    %1 = arith.extui %0 : i1 to i32
    %c0_i32_0 = arith.constant 0 : i32
    %2 = arith.cmpi ne, %1, %c0_i32_0 : i32
    scf.if %2 {
      %cst_460 = arith.constant 0.000000e+00 : f32
      %1143 = vector.broadcast %cst_460 : f32 to vector<8x128xf32>
      %c0_461 = arith.constant 0 : index
      %c0_462 = arith.constant 0 : index
      %1144 = vector.load %arg9[%c0_461, %c0_462] : memref<8x128xf32, #tpu.memory_space<vmem>>, vector<8x128xf32>
      tpu.vector_store %arg9[%c0_461, %c0_462], %1143 {strides = array<i32>} : memref<8x128xf32, #tpu.memory_space<vmem>>, vector<8x128xf32>,
      %cst_463 = arith.constant 0.000000e+00 : f32
      %1145 = vector.broadcast %cst_463 : f32 to vector<8x128xf32>
      %c0_464 = arith.constant 0 : index
      %c0_465 = arith.constant 0 : index
      %1146 = vector.load %arg10[%c0_464, %c0_465] : memref<8x128xf32, #tpu.memory_space<vmem>>, vector<8x128xf32>
      tpu.vector_store %arg10[%c0_464, %c0_465], %1145 {strides = array<i32>} : memref<8x128xf32, #tpu.memory_space<vmem>>, vector<8x128xf32>,
    } else {
    }
    %c0 = arith.constant 0 : index
    %c0_1 = arith.constant 0 : index
    %c0_2 = arith.constant 0 : index
    %3 = vector.load %arg3[%c0, %c0_1, %c0_2] : memref<2x64x384xbf16, #tpu.memory_space<vmem>>, vector<1x64x384xbf16>
    %4 = vector.shape_cast %3 : vector<1x64x384xbf16> to vector<64x384xbf16>
    %c1 = arith.constant 1 : index
    %c0_3 = arith.constant 0 : index
    %c0_4 = arith.constant 0 : index
    %5 = vector.load %arg3[%c1, %c0_3, %c0_4] : memref<2x64x384xbf16, #tpu.memory_space<vmem>>, vector<1x64x384xbf16>
    %6 = vector.shape_cast %5 : vector<1x64x384xbf16> to vector<64x384xbf16>
    %c0_5 = arith.constant 0 : index
    %c0_6 = arith.constant 0 : index
    %c0_7 = arith.constant 0 : index
    %7 = vector.load %arg4[%c0_5, %c0_6, %c0_7] : memref<2x128x384xbf16, #tpu.memory_space<vmem>>, vector<1x128x384xbf16>
    %8 = vector.shape_cast %7 : vector<1x128x384xbf16> to vector<128x384xbf16>
    %c1_8 = arith.constant 1 : index
    %c0_9 = arith.constant 0 : index
    %c0_10 = arith.constant 0 : index
    %9 = vector.load %arg4[%c1_8, %c0_9, %c0_10] : memref<2x128x384xbf16, #tpu.memory_space<vmem>>, vector<1x128x384xbf16>
    %10 = vector.shape_cast %9 : vector<1x128x384xbf16> to vector<128x384xbf16>
    %c0_11 = arith.constant 0 : index
    %c0_12 = arith.constant 0 : index
    %c0_13 = arith.constant 0 : index
    %11 = vector.load %arg5[%c0_11, %c0_12, %c0_13] : memref<2x8x384xf32, #tpu.memory_space<vmem>>, vector<1x8x384xf32>
    %12 = vector.shape_cast %11 : vector<1x8x384xf32> to vector<8x384xf32>
    %c1_14 = arith.constant 1 : index
    %c0_15 = arith.constant 0 : index
    %c0_16 = arith.constant 0 : index
    %13 = vector.load %arg5[%c1_14, %c0_15, %c0_16] : memref<2x8x384xf32, #tpu.memory_space<vmem>>, vector<1x8x384xf32>
    %14 = vector.shape_cast %13 : vector<1x8x384xf32> to vector<8x384xf32>
    %c0_17 = arith.constant 0 : index
    %c0_18 = arith.constant 0 : index
    %15 = vector.load %arg9[%c0_17, %c0_18] : memref<8x128xf32, #tpu.memory_space<vmem>>, vector<8x128xf32>
    %c0_19 = arith.constant 0 : index
    %c0_20 = arith.constant 0 : index
    %16 = vector.load %arg10[%c0_19, %c0_20] : memref<8x128xf32, #tpu.memory_space<vmem>>, vector<8x128xf32>
    %c0_21 = arith.constant 0 : index
    %c0_22 = arith.constant 0 : index
    %c0_23 = arith.constant 0 : index
    %17 = vector.load %arg1[%c0_21, %c0_22, %c0_23] : memref<16x8x64xbf16, #tpu.memory_space<vmem>>, vector<1x8x64xbf16>
    %18 = vector.shape_cast %17 : vector<1x8x64xbf16> to vector<8x64xbf16>
    %cst = arith.constant dense<0.000000e+00> : vector<8x384xf32>
    %19 = tpu.matmul %18, %4, %cst {dimension_numbers = #tpu.dot_dimension_numbers<[1], [0], [0], [1], [0, 0, 1, 1], [], []>} : vector<8x64xbf16>, vector<64x384xbf16>, vector<8x384xf32> -> vector<8x384xf32>
    %c15 = arith.constant 15 : index
    %c0_24 = arith.constant 0 : index
    %c0_25 = arith.constant 0 : index
    %20 = vector.load %arg2[%c15, %c0_24, %c0_25] : memref<16x8x64xbf16, #tpu.memory_space<vmem>>, vector<1x8x64xbf16>
    %21 = vector.shape_cast %20 : vector<1x8x64xbf16> to vector<8x64xbf16>
    %cst_26 = arith.constant dense<0.000000e+00> : vector<8x384xf32>
    %22 = tpu.matmul %21, %6, %cst_26 {dimension_numbers = #tpu.dot_dimension_numbers<[1], [0], [0], [1], [0, 0, 1, 1], [], []>} : vector<8x64xbf16>, vector<64x384xbf16>, vector<8x384xf32> -> vector<8x384xf32>
    %23 = arith.truncf %15 : vector<8x128xf32> to vector<8x128xbf16>
    %cst_27 = arith.constant dense<0.000000e+00> : vector<8x384xf32>
    %24 = tpu.matmul %23, %8, %cst_27 {dimension_numbers = #tpu.dot_dimension_numbers<[1], [0], [0], [1], [0, 0, 1, 1], [], []>} : vector<8x128xbf16>, vector<128x384xbf16>, vector<8x384xf32> -> vector<8x384xf32>
    %25 = arith.truncf %16 : vector<8x128xf32> to vector<8x128xbf16>
    %cst_28 = arith.constant dense<0.000000e+00> : vector<8x384xf32>
    %26 = tpu.matmul %25, %10, %cst_28 {dimension_numbers = #tpu.dot_dimension_numbers<[1], [0], [0], [1], [0, 0, 1, 1], [], []>} : vector<8x128xbf16>, vector<128x384xbf16>, vector<8x384xf32> -> vector<8x384xf32>
    %27 = arith.addf %19, %12 : vector<8x384xf32>
    %28 = arith.addf %22, %14 : vector<8x384xf32>
    %29 = vector.extract_strided_slice %27 {offsets = [0, 0], sizes = [8, 128], strides = [1, 1]} : vector<8x384xf32> to vector<8x128xf32>
    %30 = vector.extract_strided_slice %24 {offsets = [0, 0], sizes = [8, 128], strides = [1, 1]} : vector<8x384xf32> to vector<8x128xf32>
    %31 = arith.addf %29, %30 : vector<8x128xf32>
    %32 = arith.negf %31 : vector<8x128xf32>
    %33 = math.exp %32 : vector<8x128xf32>
    %cst_29 = arith.constant 1.000000e+00 : f32
    %34 = vector.broadcast %cst_29 : f32 to vector<8x128xf32>
    %35 = arith.addf %34, %33 : vector<8x128xf32>
    %36 = arith.divf %34, %35 : vector<8x128xf32>
    %37 = vector.extract_strided_slice %27 {offsets = [0, 128], sizes = [8, 128], strides = [1, 1]} : vector<8x384xf32> to vector<8x128xf32>
    %38 = vector.extract_strided_slice %24 {offsets = [0, 128], sizes = [8, 128], strides = [1, 1]} : vector<8x384xf32> to vector<8x128xf32>
    %39 = arith.addf %37, %38 : vector<8x128xf32>
    %40 = arith.negf %39 : vector<8x128xf32>
    %41 = math.exp %40 : vector<8x128xf32>
    %cst_30 = arith.constant 1.000000e+00 : f32
    %42 = vector.broadcast %cst_30 : f32 to vector<8x128xf32>
    %43 = arith.addf %42, %41 : vector<8x128xf32>
    %44 = arith.divf %42, %43 : vector<8x128xf32>
    %45 = vector.extract_strided_slice %27 {offsets = [0, 256], sizes = [8, 128], strides = [1, 1]} : vector<8x384xf32> to vector<8x128xf32>
    %46 = vector.extract_strided_slice %24 {offsets = [0, 256], sizes = [8, 128], strides = [1, 1]} : vector<8x384xf32> to vector<8x128xf32>
    %47 = arith.mulf %36, %46 : vector<8x128xf32>
    %48 = arith.addf %45, %47 : vector<8x128xf32>
    %49 = math.tanh %48 : vector<8x128xf32>
    %50 = arith.subf %15, %49 : vector<8x128xf32>
    %51 = arith.mulf %44, %50 : vector<8x128xf32>
    %52 = arith.addf %49, %51 : vector<8x128xf32>
    %53 = vector.extract_strided_slice %28 {offsets = [0, 0], sizes = [8, 128], strides = [1, 1]} : vector<8x384xf32> to vector<8x128xf32>
    %54 = vector.extract_strided_slice %26 {offsets = [0, 0], sizes = [8, 128], strides = [1, 1]} : vector<8x384xf32> to vector<8x128xf32>
    %55 = arith.addf %53, %54 : vector<8x128xf32>
    %56 = arith.negf %55 : vector<8x128xf32>
    %57 = math.exp %56 : vector<8x128xf32>
    %cst_31 = arith.constant 1.000000e+00 : f32
    %58 = vector.broadcast %cst_31 : f32 to vector<8x128xf32>
    %59 = arith.addf %58, %57 : vector<8x128xf32>
    %60 = arith.divf %58, %59 : vector<8x128xf32>
    %61 = vector.extract_strided_slice %28 {offsets = [0, 128], sizes = [8, 128], strides = [1, 1]} : vector<8x384xf32> to vector<8x128xf32>
    %62 = vector.extract_strided_slice %26 {offsets = [0, 128], sizes = [8, 128], strides = [1, 1]} : vector<8x384xf32> to vector<8x128xf32>
    %63 = arith.addf %61, %62 : vector<8x128xf32>
    %64 = arith.negf %63 : vector<8x128xf32>
    %65 = math.exp %64 : vector<8x128xf32>
    %cst_32 = arith.constant 1.000000e+00 : f32
    %66 = vector.broadcast %cst_32 : f32 to vector<8x128xf32>
    %67 = arith.addf %66, %65 : vector<8x128xf32>
    %68 = arith.divf %66, %67 : vector<8x128xf32>
    %69 = vector.extract_strided_slice %28 {offsets = [0, 256], sizes = [8, 128], strides = [1, 1]} : vector<8x384xf32> to vector<8x128xf32>
    %70 = vector.extract_strided_slice %26 {offsets = [0, 256], sizes = [8, 128], strides = [1, 1]} : vector<8x384xf32> to vector<8x128xf32>
    %71 = arith.mulf %60, %70 : vector<8x128xf32>
    %72 = arith.addf %69, %71 : vector<8x128xf32>
    %73 = math.tanh %72 : vector<8x128xf32>
    %74 = arith.subf %16, %73 : vector<8x128xf32>
    %75 = arith.mulf %68, %74 : vector<8x128xf32>
    %76 = arith.addf %73, %75 : vector<8x128xf32>
    %c0_33 = arith.constant 0 : index
    %c0_34 = arith.constant 0 : index
    %77 = vector.load %arg9[%c0_33, %c0_34] : memref<8x128xf32, #tpu.memory_space<vmem>>, vector<8x128xf32>
    tpu.vector_store %arg9[%c0_33, %c0_34], %52 {strides = array<i32>} : memref<8x128xf32, #tpu.memory_space<vmem>>, vector<8x128xf32>,
    %c0_35 = arith.constant 0 : index
    %c0_36 = arith.constant 0 : index
    %78 = vector.load %arg10[%c0_35, %c0_36] : memref<8x128xf32, #tpu.memory_space<vmem>>, vector<8x128xf32>
    tpu.vector_store %arg10[%c0_35, %c0_36], %76 {strides = array<i32>} : memref<8x128xf32, #tpu.memory_space<vmem>>, vector<8x128xf32>,
    %c0_37 = arith.constant 0 : index
    %c0_38 = arith.constant 0 : index
    %c0_39 = arith.constant 0 : index
    %79 = vector.load %arg6[%c0_37, %c0_38, %c0_39] : memref<8x16x128xf32, #tpu.memory_space<vmem>>, vector<8x1x128xf32>
    %80 = vector.shape_cast %79 : vector<8x1x128xf32> to vector<8x128xf32>
    %81 = vector.shape_cast %52 : vector<8x128xf32> to vector<8x1x128xf32>
    tpu.vector_store %arg6[%c0_37, %c0_38, %c0_39], %81 {strides = array<i32>} : memref<8x16x128xf32, #tpu.memory_space<vmem>>, vector<8x1x128xf32>,
    %c0_40 = arith.constant 0 : index
    %c15_41 = arith.constant 15 : index
    %c0_42 = arith.constant 0 : index
    %82 = vector.load %arg7[%c0_40, %c15_41, %c0_42] : memref<8x16x128xf32, #tpu.memory_space<vmem>>, vector<8x1x128xf32>
    %83 = vector.shape_cast %82 : vector<8x1x128xf32> to vector<8x128xf32>
    %84 = vector.shape_cast %76 : vector<8x128xf32> to vector<8x1x128xf32>
    tpu.vector_store %arg7[%c0_40, %c15_41, %c0_42], %84 {strides = array<i32>} : memref<8x16x128xf32, #tpu.memory_space<vmem>>, vector<8x1x128xf32>,
    %c0_43 = arith.constant 0 : index
    %c0_44 = arith.constant 0 : index
    %85 = vector.load %arg9[%c0_43, %c0_44] : memref<8x128xf32, #tpu.memory_space<vmem>>, vector<8x128xf32>
    %c0_45 = arith.constant 0 : index
    %c0_46 = arith.constant 0 : index
    %86 = vector.load %arg10[%c0_45, %c0_46] : memref<8x128xf32, #tpu.memory_space<vmem>>, vector<8x128xf32>
    %c1_47 = arith.constant 1 : index
    %c0_48 = arith.constant 0 : index
    %c0_49 = arith.constant 0 : index
    %87 = vector.load %arg1[%c1_47, %c0_48, %c0_49] : memref<16x8x64xbf16, #tpu.memory_space<vmem>>, vector<1x8x64xbf16>
    %88 = vector.shape_cast %87 : vector<1x8x64xbf16> to vector<8x64xbf16>
    %cst_50 = arith.constant dense<0.000000e+00> : vector<8x384xf32>
    %89 = tpu.matmul %88, %4, %cst_50 {dimension_numbers = #tpu.dot_dimension_numbers<[1], [0], [0], [1], [0, 0, 1, 1], [], []>} : vector<8x64xbf16>, vector<64x384xbf16>, vector<8x384xf32> -> vector<8x384xf32>
    %c14 = arith.constant 14 : index
    %c0_51 = arith.constant 0 : index
    %c0_52 = arith.constant 0 : index
    %90 = vector.load %arg2[%c14, %c0_51, %c0_52] : memref<16x8x64xbf16, #tpu.memory_space<vmem>>, vector<1x8x64xbf16>
    %91 = vector.shape_cast %90 : vector<1x8x64xbf16> to vector<8x64xbf16>
    %cst_53 = arith.constant dense<0.000000e+00> : vector<8x384xf32>
    %92 = tpu.matmul %91, %6, %cst_53 {dimension_numbers = #tpu.dot_dimension_numbers<[1], [0], [0], [1], [0, 0, 1, 1], [], []>} : vector<8x64xbf16>, vector<64x384xbf16>, vector<8x384xf32> -> vector<8x384xf32>
    %93 = arith.truncf %85 : vector<8x128xf32> to vector<8x128xbf16>
    %cst_54 = arith.constant dense<0.000000e+00> : vector<8x384xf32>
    %94 = tpu.matmul %93, %8, %cst_54 {dimension_numbers = #tpu.dot_dimension_numbers<[1], [0], [0], [1], [0, 0, 1, 1], [], []>} : vector<8x128xbf16>, vector<128x384xbf16>, vector<8x384xf32> -> vector<8x384xf32>
    %95 = arith.truncf %86 : vector<8x128xf32> to vector<8x128xbf16>
    %cst_55 = arith.constant dense<0.000000e+00> : vector<8x384xf32>
    %96 = tpu.matmul %95, %10, %cst_55 {dimension_numbers = #tpu.dot_dimension_numbers<[1], [0], [0], [1], [0, 0, 1, 1], [], []>} : vector<8x128xbf16>, vector<128x384xbf16>, vector<8x384xf32> -> vector<8x384xf32>
    %97 = arith.addf %89, %12 : vector<8x384xf32>
    %98 = arith.addf %92, %14 : vector<8x384xf32>
    %99 = vector.extract_strided_slice %97 {offsets = [0, 0], sizes = [8, 128], strides = [1, 1]} : vector<8x384xf32> to vector<8x128xf32>
    %100 = vector.extract_strided_slice %94 {offsets = [0, 0], sizes = [8, 128], strides = [1, 1]} : vector<8x384xf32> to vector<8x128xf32>
    %101 = arith.addf %99, %100 : vector<8x128xf32>
    %102 = arith.negf %101 : vector<8x128xf32>
    %103 = math.exp %102 : vector<8x128xf32>
    %cst_56 = arith.constant 1.000000e+00 : f32
    %104 = vector.broadcast %cst_56 : f32 to vector<8x128xf32>
    %105 = arith.addf %104, %103 : vector<8x128xf32>
    %106 = arith.divf %104, %105 : vector<8x128xf32>
    %107 = vector.extract_strided_slice %97 {offsets = [0, 128], sizes = [8, 128], strides = [1, 1]} : vector<8x384xf32> to vector<8x128xf32>
    %108 = vector.extract_strided_slice %94 {offsets = [0, 128], sizes = [8, 128], strides = [1, 1]} : vector<8x384xf32> to vector<8x128xf32>
    %109 = arith.addf %107, %108 : vector<8x128xf32>
    %110 = arith.negf %109 : vector<8x128xf32>
    %111 = math.exp %110 : vector<8x128xf32>
    %cst_57 = arith.constant 1.000000e+00 : f32
    %112 = vector.broadcast %cst_57 : f32 to vector<8x128xf32>
    %113 = arith.addf %112, %111 : vector<8x128xf32>
    %114 = arith.divf %112, %113 : vector<8x128xf32>
    %115 = vector.extract_strided_slice %97 {offsets = [0, 256], sizes = [8, 128], strides = [1, 1]} : vector<8x384xf32> to vector<8x128xf32>
    %116 = vector.extract_strided_slice %94 {offsets = [0, 256], sizes = [8, 128], strides = [1, 1]} : vector<8x384xf32> to vector<8x128xf32>
    %117 = arith.mulf %106, %116 : vector<8x128xf32>
    %118 = arith.addf %115, %117 : vector<8x128xf32>
    %119 = math.tanh %118 : vector<8x128xf32>
    %120 = arith.subf %85, %119 : vector<8x128xf32>
    %121 = arith.mulf %114, %120 : vector<8x128xf32>
    %122 = arith.addf %119, %121 : vector<8x128xf32>
    %123 = vector.extract_strided_slice %98 {offsets = [0, 0], sizes = [8, 128], strides = [1, 1]} : vector<8x384xf32> to vector<8x128xf32>
    %124 = vector.extract_strided_slice %96 {offsets = [0, 0], sizes = [8, 128], strides = [1, 1]} : vector<8x384xf32> to vector<8x128xf32>
    %125 = arith.addf %123, %124 : vector<8x128xf32>
    %126 = arith.negf %125 : vector<8x128xf32>
    %127 = math.exp %126 : vector<8x128xf32>
    %cst_58 = arith.constant 1.000000e+00 : f32
    %128 = vector.broadcast %cst_58 : f32 to vector<8x128xf32>
    %129 = arith.addf %128, %127 : vector<8x128xf32>
    %130 = arith.divf %128, %129 : vector<8x128xf32>
    %131 = vector.extract_strided_slice %98 {offsets = [0, 128], sizes = [8, 128], strides = [1, 1]} : vector<8x384xf32> to vector<8x128xf32>
    %132 = vector.extract_strided_slice %96 {offsets = [0, 128], sizes = [8, 128], strides = [1, 1]} : vector<8x384xf32> to vector<8x128xf32>
    %133 = arith.addf %131, %132 : vector<8x128xf32>
    %134 = arith.negf %133 : vector<8x128xf32>
    %135 = math.exp %134 : vector<8x128xf32>
    %cst_59 = arith.constant 1.000000e+00 : f32
    %136 = vector.broadcast %cst_59 : f32 to vector<8x128xf32>
    %137 = arith.addf %136, %135 : vector<8x128xf32>
    %138 = arith.divf %136, %137 : vector<8x128xf32>
    %139 = vector.extract_strided_slice %98 {offsets = [0, 256], sizes = [8, 128], strides = [1, 1]} : vector<8x384xf32> to vector<8x128xf32>
    %140 = vector.extract_strided_slice %96 {offsets = [0, 256], sizes = [8, 128], strides = [1, 1]} : vector<8x384xf32> to vector<8x128xf32>
    %141 = arith.mulf %130, %140 : vector<8x128xf32>
    %142 = arith.addf %139, %141 : vector<8x128xf32>
    %143 = math.tanh %142 : vector<8x128xf32>
    %144 = arith.subf %86, %143 : vector<8x128xf32>
    %145 = arith.mulf %138, %144 : vector<8x128xf32>
    %146 = arith.addf %143, %145 : vector<8x128xf32>
    %c0_60 = arith.constant 0 : index
    %c0_61 = arith.constant 0 : index
    %147 = vector.load %arg9[%c0_60, %c0_61] : memref<8x128xf32, #tpu.memory_space<vmem>>, vector<8x128xf32>
    tpu.vector_store %arg9[%c0_60, %c0_61], %122 {strides = array<i32>} : memref<8x128xf32, #tpu.memory_space<vmem>>, vector<8x128xf32>,
    %c0_62 = arith.constant 0 : index
    %c0_63 = arith.constant 0 : index
    %148 = vector.load %arg10[%c0_62, %c0_63] : memref<8x128xf32, #tpu.memory_space<vmem>>, vector<8x128xf32>
    tpu.vector_store %arg10[%c0_62, %c0_63], %146 {strides = array<i32>} : memref<8x128xf32, #tpu.memory_space<vmem>>, vector<8x128xf32>,
    %c0_64 = arith.constant 0 : index
    %c1_65 = arith.constant 1 : index
    %c0_66 = arith.constant 0 : index
    %149 = vector.load %arg6[%c0_64, %c1_65, %c0_66] : memref<8x16x128xf32, #tpu.memory_space<vmem>>, vector<8x1x128xf32>
    %150 = vector.shape_cast %149 : vector<8x1x128xf32> to vector<8x128xf32>
    %151 = vector.shape_cast %122 : vector<8x128xf32> to vector<8x1x128xf32>
    tpu.vector_store %arg6[%c0_64, %c1_65, %c0_66], %151 {strides = array<i32>} : memref<8x16x128xf32, #tpu.memory_space<vmem>>, vector<8x1x128xf32>,
    %c0_67 = arith.constant 0 : index
    %c14_68 = arith.constant 14 : index
    %c0_69 = arith.constant 0 : index
    %152 = vector.load %arg7[%c0_67, %c14_68, %c0_69] : memref<8x16x128xf32, #tpu.memory_space<vmem>>, vector<8x1x128xf32>
    %153 = vector.shape_cast %152 : vector<8x1x128xf32> to vector<8x128xf32>
    %154 = vector.shape_cast %146 : vector<8x128xf32> to vector<8x1x128xf32>
    tpu.vector_store %arg7[%c0_67, %c14_68, %c0_69], %154 {strides = array<i32>} : memref<8x16x128xf32, #tpu.memory_space<vmem>>, vector<8x1x128xf32>,
    %c0_70 = arith.constant 0 : index
    %c0_71 = arith.constant 0 : index
    %155 = vector.load %arg9[%c0_70, %c0_71] : memref<8x128xf32, #tpu.memory_space<vmem>>, vector<8x128xf32>
    %c0_72 = arith.constant 0 : index
    %c0_73 = arith.constant 0 : index
    %156 = vector.load %arg10[%c0_72, %c0_73] : memref<8x128xf32, #tpu.memory_space<vmem>>, vector<8x128xf32>
    %c2 = arith.constant 2 : index
    %c0_74 = arith.constant 0 : index
    %c0_75 = arith.constant 0 : index
    %157 = vector.load %arg1[%c2, %c0_74, %c0_75] : memref<16x8x64xbf16, #tpu.memory_space<vmem>>, vector<1x8x64xbf16>
    %158 = vector.shape_cast %157 : vector<1x8x64xbf16> to vector<8x64xbf16>
    %cst_76 = arith.constant dense<0.000000e+00> : vector<8x384xf32>
    %159 = tpu.matmul %158, %4, %cst_76 {dimension_numbers = #tpu.dot_dimension_numbers<[1], [0], [0], [1], [0, 0, 1, 1], [], []>} : vector<8x64xbf16>, vector<64x384xbf16>, vector<8x384xf32> -> vector<8x384xf32>
    %c13 = arith.constant 13 : index
    %c0_77 = arith.constant 0 : index
    %c0_78 = arith.constant 0 : index
    %160 = vector.load %arg2[%c13, %c0_77, %c0_78] : memref<16x8x64xbf16, #tpu.memory_space<vmem>>, vector<1x8x64xbf16>
    %161 = vector.shape_cast %160 : vector<1x8x64xbf16> to vector<8x64xbf16>
    %cst_79 = arith.constant dense<0.000000e+00> : vector<8x384xf32>
    %162 = tpu.matmul %161, %6, %cst_79 {dimension_numbers = #tpu.dot_dimension_numbers<[1], [0], [0], [1], [0, 0, 1, 1], [], []>} : vector<8x64xbf16>, vector<64x384xbf16>, vector<8x384xf32> -> vector<8x384xf32>
    %163 = arith.truncf %155 : vector<8x128xf32> to vector<8x128xbf16>
    %cst_80 = arith.constant dense<0.000000e+00> : vector<8x384xf32>
    %164 = tpu.matmul %163, %8, %cst_80 {dimension_numbers = #tpu.dot_dimension_numbers<[1], [0], [0], [1], [0, 0, 1, 1], [], []>} : vector<8x128xbf16>, vector<128x384xbf16>, vector<8x384xf32> -> vector<8x384xf32>
    %165 = arith.truncf %156 : vector<8x128xf32> to vector<8x128xbf16>
    %cst_81 = arith.constant dense<0.000000e+00> : vector<8x384xf32>
    %166 = tpu.matmul %165, %10, %cst_81 {dimension_numbers = #tpu.dot_dimension_numbers<[1], [0], [0], [1], [0, 0, 1, 1], [], []>} : vector<8x128xbf16>, vector<128x384xbf16>, vector<8x384xf32> -> vector<8x384xf32>
    %167 = arith.addf %159, %12 : vector<8x384xf32>
    %168 = arith.addf %162, %14 : vector<8x384xf32>
    %169 = vector.extract_strided_slice %167 {offsets = [0, 0], sizes = [8, 128], strides = [1, 1]} : vector<8x384xf32> to vector<8x128xf32>
    %170 = vector.extract_strided_slice %164 {offsets = [0, 0], sizes = [8, 128], strides = [1, 1]} : vector<8x384xf32> to vector<8x128xf32>
    %171 = arith.addf %169, %170 : vector<8x128xf32>
    %172 = arith.negf %171 : vector<8x128xf32>
    %173 = math.exp %172 : vector<8x128xf32>
    %cst_82 = arith.constant 1.000000e+00 : f32
    %174 = vector.broadcast %cst_82 : f32 to vector<8x128xf32>
    %175 = arith.addf %174, %173 : vector<8x128xf32>
    %176 = arith.divf %174, %175 : vector<8x128xf32>
    %177 = vector.extract_strided_slice %167 {offsets = [0, 128], sizes = [8, 128], strides = [1, 1]} : vector<8x384xf32> to vector<8x128xf32>
    %178 = vector.extract_strided_slice %164 {offsets = [0, 128], sizes = [8, 128], strides = [1, 1]} : vector<8x384xf32> to vector<8x128xf32>
    %179 = arith.addf %177, %178 : vector<8x128xf32>
    %180 = arith.negf %179 : vector<8x128xf32>
    %181 = math.exp %180 : vector<8x128xf32>
    %cst_83 = arith.constant 1.000000e+00 : f32
    %182 = vector.broadcast %cst_83 : f32 to vector<8x128xf32>
    %183 = arith.addf %182, %181 : vector<8x128xf32>
    %184 = arith.divf %182, %183 : vector<8x128xf32>
    %185 = vector.extract_strided_slice %167 {offsets = [0, 256], sizes = [8, 128], strides = [1, 1]} : vector<8x384xf32> to vector<8x128xf32>
    %186 = vector.extract_strided_slice %164 {offsets = [0, 256], sizes = [8, 128], strides = [1, 1]} : vector<8x384xf32> to vector<8x128xf32>
    %187 = arith.mulf %176, %186 : vector<8x128xf32>
    %188 = arith.addf %185, %187 : vector<8x128xf32>
    %189 = math.tanh %188 : vector<8x128xf32>
    %190 = arith.subf %155, %189 : vector<8x128xf32>
    %191 = arith.mulf %184, %190 : vector<8x128xf32>
    %192 = arith.addf %189, %191 : vector<8x128xf32>
    %193 = vector.extract_strided_slice %168 {offsets = [0, 0], sizes = [8, 128], strides = [1, 1]} : vector<8x384xf32> to vector<8x128xf32>
    %194 = vector.extract_strided_slice %166 {offsets = [0, 0], sizes = [8, 128], strides = [1, 1]} : vector<8x384xf32> to vector<8x128xf32>
    %195 = arith.addf %193, %194 : vector<8x128xf32>
    %196 = arith.negf %195 : vector<8x128xf32>
    %197 = math.exp %196 : vector<8x128xf32>
    %cst_84 = arith.constant 1.000000e+00 : f32
    %198 = vector.broadcast %cst_84 : f32 to vector<8x128xf32>
    %199 = arith.addf %198, %197 : vector<8x128xf32>
    %200 = arith.divf %198, %199 : vector<8x128xf32>
    %201 = vector.extract_strided_slice %168 {offsets = [0, 128], sizes = [8, 128], strides = [1, 1]} : vector<8x384xf32> to vector<8x128xf32>
    %202 = vector.extract_strided_slice %166 {offsets = [0, 128], sizes = [8, 128], strides = [1, 1]} : vector<8x384xf32> to vector<8x128xf32>
    %203 = arith.addf %201, %202 : vector<8x128xf32>
    %204 = arith.negf %203 : vector<8x128xf32>
    %205 = math.exp %204 : vector<8x128xf32>
    %cst_85 = arith.constant 1.000000e+00 : f32
    %206 = vector.broadcast %cst_85 : f32 to vector<8x128xf32>
    %207 = arith.addf %206, %205 : vector<8x128xf32>
    %208 = arith.divf %206, %207 : vector<8x128xf32>
    %209 = vector.extract_strided_slice %168 {offsets = [0, 256], sizes = [8, 128], strides = [1, 1]} : vector<8x384xf32> to vector<8x128xf32>
    %210 = vector.extract_strided_slice %166 {offsets = [0, 256], sizes = [8, 128], strides = [1, 1]} : vector<8x384xf32> to vector<8x128xf32>
    %211 = arith.mulf %200, %210 : vector<8x128xf32>
    %212 = arith.addf %209, %211 : vector<8x128xf32>
    %213 = math.tanh %212 : vector<8x128xf32>
    %214 = arith.subf %156, %213 : vector<8x128xf32>
    %215 = arith.mulf %208, %214 : vector<8x128xf32>
    %216 = arith.addf %213, %215 : vector<8x128xf32>
    %c0_86 = arith.constant 0 : index
    %c0_87 = arith.constant 0 : index
    %217 = vector.load %arg9[%c0_86, %c0_87] : memref<8x128xf32, #tpu.memory_space<vmem>>, vector<8x128xf32>
    tpu.vector_store %arg9[%c0_86, %c0_87], %192 {strides = array<i32>} : memref<8x128xf32, #tpu.memory_space<vmem>>, vector<8x128xf32>,
    %c0_88 = arith.constant 0 : index
    %c0_89 = arith.constant 0 : index
    %218 = vector.load %arg10[%c0_88, %c0_89] : memref<8x128xf32, #tpu.memory_space<vmem>>, vector<8x128xf32>
    tpu.vector_store %arg10[%c0_88, %c0_89], %216 {strides = array<i32>} : memref<8x128xf32, #tpu.memory_space<vmem>>, vector<8x128xf32>,
    %c0_90 = arith.constant 0 : index
    %c2_91 = arith.constant 2 : index
    %c0_92 = arith.constant 0 : index
    %219 = vector.load %arg6[%c0_90, %c2_91, %c0_92] : memref<8x16x128xf32, #tpu.memory_space<vmem>>, vector<8x1x128xf32>
    %220 = vector.shape_cast %219 : vector<8x1x128xf32> to vector<8x128xf32>
    %221 = vector.shape_cast %192 : vector<8x128xf32> to vector<8x1x128xf32>
    tpu.vector_store %arg6[%c0_90, %c2_91, %c0_92], %221 {strides = array<i32>} : memref<8x16x128xf32, #tpu.memory_space<vmem>>, vector<8x1x128xf32>,
    %c0_93 = arith.constant 0 : index
    %c13_94 = arith.constant 13 : index
    %c0_95 = arith.constant 0 : index
    %222 = vector.load %arg7[%c0_93, %c13_94, %c0_95] : memref<8x16x128xf32, #tpu.memory_space<vmem>>, vector<8x1x128xf32>
    %223 = vector.shape_cast %222 : vector<8x1x128xf32> to vector<8x128xf32>
    %224 = vector.shape_cast %216 : vector<8x128xf32> to vector<8x1x128xf32>
    tpu.vector_store %arg7[%c0_93, %c13_94, %c0_95], %224 {strides = array<i32>} : memref<8x16x128xf32, #tpu.memory_space<vmem>>, vector<8x1x128xf32>,
    %c0_96 = arith.constant 0 : index
    %c0_97 = arith.constant 0 : index
    %225 = vector.load %arg9[%c0_96, %c0_97] : memref<8x128xf32, #tpu.memory_space<vmem>>, vector<8x128xf32>
    %c0_98 = arith.constant 0 : index
    %c0_99 = arith.constant 0 : index
    %226 = vector.load %arg10[%c0_98, %c0_99] : memref<8x128xf32, #tpu.memory_space<vmem>>, vector<8x128xf32>
    %c3 = arith.constant 3 : index
    %c0_100 = arith.constant 0 : index
    %c0_101 = arith.constant 0 : index
    %227 = vector.load %arg1[%c3, %c0_100, %c0_101] : memref<16x8x64xbf16, #tpu.memory_space<vmem>>, vector<1x8x64xbf16>
    %228 = vector.shape_cast %227 : vector<1x8x64xbf16> to vector<8x64xbf16>
    %cst_102 = arith.constant dense<0.000000e+00> : vector<8x384xf32>
    %229 = tpu.matmul %228, %4, %cst_102 {dimension_numbers = #tpu.dot_dimension_numbers<[1], [0], [0], [1], [0, 0, 1, 1], [], []>} : vector<8x64xbf16>, vector<64x384xbf16>, vector<8x384xf32> -> vector<8x384xf32>
    %c12 = arith.constant 12 : index
    %c0_103 = arith.constant 0 : index
    %c0_104 = arith.constant 0 : index
    %230 = vector.load %arg2[%c12, %c0_103, %c0_104] : memref<16x8x64xbf16, #tpu.memory_space<vmem>>, vector<1x8x64xbf16>
    %231 = vector.shape_cast %230 : vector<1x8x64xbf16> to vector<8x64xbf16>
    %cst_105 = arith.constant dense<0.000000e+00> : vector<8x384xf32>
    %232 = tpu.matmul %231, %6, %cst_105 {dimension_numbers = #tpu.dot_dimension_numbers<[1], [0], [0], [1], [0, 0, 1, 1], [], []>} : vector<8x64xbf16>, vector<64x384xbf16>, vector<8x384xf32> -> vector<8x384xf32>
    %233 = arith.truncf %225 : vector<8x128xf32> to vector<8x128xbf16>
    %cst_106 = arith.constant dense<0.000000e+00> : vector<8x384xf32>
    %234 = tpu.matmul %233, %8, %cst_106 {dimension_numbers = #tpu.dot_dimension_numbers<[1], [0], [0], [1], [0, 0, 1, 1], [], []>} : vector<8x128xbf16>, vector<128x384xbf16>, vector<8x384xf32> -> vector<8x384xf32>
    %235 = arith.truncf %226 : vector<8x128xf32> to vector<8x128xbf16>
    %cst_107 = arith.constant dense<0.000000e+00> : vector<8x384xf32>
    %236 = tpu.matmul %235, %10, %cst_107 {dimension_numbers = #tpu.dot_dimension_numbers<[1], [0], [0], [1], [0, 0, 1, 1], [], []>} : vector<8x128xbf16>, vector<128x384xbf16>, vector<8x384xf32> -> vector<8x384xf32>
    %237 = arith.addf %229, %12 : vector<8x384xf32>
    %238 = arith.addf %232, %14 : vector<8x384xf32>
    %239 = vector.extract_strided_slice %237 {offsets = [0, 0], sizes = [8, 128], strides = [1, 1]} : vector<8x384xf32> to vector<8x128xf32>
    %240 = vector.extract_strided_slice %234 {offsets = [0, 0], sizes = [8, 128], strides = [1, 1]} : vector<8x384xf32> to vector<8x128xf32>
    %241 = arith.addf %239, %240 : vector<8x128xf32>
    %242 = arith.negf %241 : vector<8x128xf32>
    %243 = math.exp %242 : vector<8x128xf32>
    %cst_108 = arith.constant 1.000000e+00 : f32
    %244 = vector.broadcast %cst_108 : f32 to vector<8x128xf32>
    %245 = arith.addf %244, %243 : vector<8x128xf32>
    %246 = arith.divf %244, %245 : vector<8x128xf32>
    %247 = vector.extract_strided_slice %237 {offsets = [0, 128], sizes = [8, 128], strides = [1, 1]} : vector<8x384xf32> to vector<8x128xf32>
    %248 = vector.extract_strided_slice %234 {offsets = [0, 128], sizes = [8, 128], strides = [1, 1]} : vector<8x384xf32> to vector<8x128xf32>
    %249 = arith.addf %247, %248 : vector<8x128xf32>
    %250 = arith.negf %249 : vector<8x128xf32>
    %251 = math.exp %250 : vector<8x128xf32>
    %cst_109 = arith.constant 1.000000e+00 : f32
    %252 = vector.broadcast %cst_109 : f32 to vector<8x128xf32>
    %253 = arith.addf %252, %251 : vector<8x128xf32>
    %254 = arith.divf %252, %253 : vector<8x128xf32>
    %255 = vector.extract_strided_slice %237 {offsets = [0, 256], sizes = [8, 128], strides = [1, 1]} : vector<8x384xf32> to vector<8x128xf32>
    %256 = vector.extract_strided_slice %234 {offsets = [0, 256], sizes = [8, 128], strides = [1, 1]} : vector<8x384xf32> to vector<8x128xf32>
    %257 = arith.mulf %246, %256 : vector<8x128xf32>
    %258 = arith.addf %255, %257 : vector<8x128xf32>
    %259 = math.tanh %258 : vector<8x128xf32>
    %260 = arith.subf %225, %259 : vector<8x128xf32>
    %261 = arith.mulf %254, %260 : vector<8x128xf32>
    %262 = arith.addf %259, %261 : vector<8x128xf32>
    %263 = vector.extract_strided_slice %238 {offsets = [0, 0], sizes = [8, 128], strides = [1, 1]} : vector<8x384xf32> to vector<8x128xf32>
    %264 = vector.extract_strided_slice %236 {offsets = [0, 0], sizes = [8, 128], strides = [1, 1]} : vector<8x384xf32> to vector<8x128xf32>
    %265 = arith.addf %263, %264 : vector<8x128xf32>
    %266 = arith.negf %265 : vector<8x128xf32>
    %267 = math.exp %266 : vector<8x128xf32>
    %cst_110 = arith.constant 1.000000e+00 : f32
    %268 = vector.broadcast %cst_110 : f32 to vector<8x128xf32>
    %269 = arith.addf %268, %267 : vector<8x128xf32>
    %270 = arith.divf %268, %269 : vector<8x128xf32>
    %271 = vector.extract_strided_slice %238 {offsets = [0, 128], sizes = [8, 128], strides = [1, 1]} : vector<8x384xf32> to vector<8x128xf32>
    %272 = vector.extract_strided_slice %236 {offsets = [0, 128], sizes = [8, 128], strides = [1, 1]} : vector<8x384xf32> to vector<8x128xf32>
    %273 = arith.addf %271, %272 : vector<8x128xf32>
    %274 = arith.negf %273 : vector<8x128xf32>
    %275 = math.exp %274 : vector<8x128xf32>
    %cst_111 = arith.constant 1.000000e+00 : f32
    %276 = vector.broadcast %cst_111 : f32 to vector<8x128xf32>
    %277 = arith.addf %276, %275 : vector<8x128xf32>
    %278 = arith.divf %276, %277 : vector<8x128xf32>
    %279 = vector.extract_strided_slice %238 {offsets = [0, 256], sizes = [8, 128], strides = [1, 1]} : vector<8x384xf32> to vector<8x128xf32>
    %280 = vector.extract_strided_slice %236 {offsets = [0, 256], sizes = [8, 128], strides = [1, 1]} : vector<8x384xf32> to vector<8x128xf32>
    %281 = arith.mulf %270, %280 : vector<8x128xf32>
    %282 = arith.addf %279, %281 : vector<8x128xf32>
    %283 = math.tanh %282 : vector<8x128xf32>
    %284 = arith.subf %226, %283 : vector<8x128xf32>
    %285 = arith.mulf %278, %284 : vector<8x128xf32>
    %286 = arith.addf %283, %285 : vector<8x128xf32>
    %c0_112 = arith.constant 0 : index
    %c0_113 = arith.constant 0 : index
    %287 = vector.load %arg9[%c0_112, %c0_113] : memref<8x128xf32, #tpu.memory_space<vmem>>, vector<8x128xf32>
    tpu.vector_store %arg9[%c0_112, %c0_113], %262 {strides = array<i32>} : memref<8x128xf32, #tpu.memory_space<vmem>>, vector<8x128xf32>,
    %c0_114 = arith.constant 0 : index
    %c0_115 = arith.constant 0 : index
    %288 = vector.load %arg10[%c0_114, %c0_115] : memref<8x128xf32, #tpu.memory_space<vmem>>, vector<8x128xf32>
    tpu.vector_store %arg10[%c0_114, %c0_115], %286 {strides = array<i32>} : memref<8x128xf32, #tpu.memory_space<vmem>>, vector<8x128xf32>,
    %c0_116 = arith.constant 0 : index
    %c3_117 = arith.constant 3 : index
    %c0_118 = arith.constant 0 : index
    %289 = vector.load %arg6[%c0_116, %c3_117, %c0_118] : memref<8x16x128xf32, #tpu.memory_space<vmem>>, vector<8x1x128xf32>
    %290 = vector.shape_cast %289 : vector<8x1x128xf32> to vector<8x128xf32>
    %291 = vector.shape_cast %262 : vector<8x128xf32> to vector<8x1x128xf32>
    tpu.vector_store %arg6[%c0_116, %c3_117, %c0_118], %291 {strides = array<i32>} : memref<8x16x128xf32, #tpu.memory_space<vmem>>, vector<8x1x128xf32>,
    %c0_119 = arith.constant 0 : index
    %c12_120 = arith.constant 12 : index
    %c0_121 = arith.constant 0 : index
    %292 = vector.load %arg7[%c0_119, %c12_120, %c0_121] : memref<8x16x128xf32, #tpu.memory_space<vmem>>, vector<8x1x128xf32>
    %293 = vector.shape_cast %292 : vector<8x1x128xf32> to vector<8x128xf32>
    %294 = vector.shape_cast %286 : vector<8x128xf32> to vector<8x1x128xf32>
    tpu.vector_store %arg7[%c0_119, %c12_120, %c0_121], %294 {strides = array<i32>} : memref<8x16x128xf32, #tpu.memory_space<vmem>>, vector<8x1x128xf32>,
    %c0_122 = arith.constant 0 : index
    %c0_123 = arith.constant 0 : index
    %295 = vector.load %arg9[%c0_122, %c0_123] : memref<8x128xf32, #tpu.memory_space<vmem>>, vector<8x128xf32>
    %c0_124 = arith.constant 0 : index
    %c0_125 = arith.constant 0 : index
    %296 = vector.load %arg10[%c0_124, %c0_125] : memref<8x128xf32, #tpu.memory_space<vmem>>, vector<8x128xf32>
    %c4 = arith.constant 4 : index
    %c0_126 = arith.constant 0 : index
    %c0_127 = arith.constant 0 : index
    %297 = vector.load %arg1[%c4, %c0_126, %c0_127] : memref<16x8x64xbf16, #tpu.memory_space<vmem>>, vector<1x8x64xbf16>
    %298 = vector.shape_cast %297 : vector<1x8x64xbf16> to vector<8x64xbf16>
    %cst_128 = arith.constant dense<0.000000e+00> : vector<8x384xf32>
    %299 = tpu.matmul %298, %4, %cst_128 {dimension_numbers = #tpu.dot_dimension_numbers<[1], [0], [0], [1], [0, 0, 1, 1], [], []>} : vector<8x64xbf16>, vector<64x384xbf16>, vector<8x384xf32> -> vector<8x384xf32>
    %c11 = arith.constant 11 : index
    %c0_129 = arith.constant 0 : index
    %c0_130 = arith.constant 0 : index
    %300 = vector.load %arg2[%c11, %c0_129, %c0_130] : memref<16x8x64xbf16, #tpu.memory_space<vmem>>, vector<1x8x64xbf16>
    %301 = vector.shape_cast %300 : vector<1x8x64xbf16> to vector<8x64xbf16>
    %cst_131 = arith.constant dense<0.000000e+00> : vector<8x384xf32>
    %302 = tpu.matmul %301, %6, %cst_131 {dimension_numbers = #tpu.dot_dimension_numbers<[1], [0], [0], [1], [0, 0, 1, 1], [], []>} : vector<8x64xbf16>, vector<64x384xbf16>, vector<8x384xf32> -> vector<8x384xf32>
    %303 = arith.truncf %295 : vector<8x128xf32> to vector<8x128xbf16>
    %cst_132 = arith.constant dense<0.000000e+00> : vector<8x384xf32>
    %304 = tpu.matmul %303, %8, %cst_132 {dimension_numbers = #tpu.dot_dimension_numbers<[1], [0], [0], [1], [0, 0, 1, 1], [], []>} : vector<8x128xbf16>, vector<128x384xbf16>, vector<8x384xf32> -> vector<8x384xf32>
    %305 = arith.truncf %296 : vector<8x128xf32> to vector<8x128xbf16>
    %cst_133 = arith.constant dense<0.000000e+00> : vector<8x384xf32>
    %306 = tpu.matmul %305, %10, %cst_133 {dimension_numbers = #tpu.dot_dimension_numbers<[1], [0], [0], [1], [0, 0, 1, 1], [], []>} : vector<8x128xbf16>, vector<128x384xbf16>, vector<8x384xf32> -> vector<8x384xf32>
    %307 = arith.addf %299, %12 : vector<8x384xf32>
    %308 = arith.addf %302, %14 : vector<8x384xf32>
    %309 = vector.extract_strided_slice %307 {offsets = [0, 0], sizes = [8, 128], strides = [1, 1]} : vector<8x384xf32> to vector<8x128xf32>
    %310 = vector.extract_strided_slice %304 {offsets = [0, 0], sizes = [8, 128], strides = [1, 1]} : vector<8x384xf32> to vector<8x128xf32>
    %311 = arith.addf %309, %310 : vector<8x128xf32>
    %312 = arith.negf %311 : vector<8x128xf32>
    %313 = math.exp %312 : vector<8x128xf32>
    %cst_134 = arith.constant 1.000000e+00 : f32
    %314 = vector.broadcast %cst_134 : f32 to vector<8x128xf32>
    %315 = arith.addf %314, %313 : vector<8x128xf32>
    %316 = arith.divf %314, %315 : vector<8x128xf32>
    %317 = vector.extract_strided_slice %307 {offsets = [0, 128], sizes = [8, 128], strides = [1, 1]} : vector<8x384xf32> to vector<8x128xf32>
    %318 = vector.extract_strided_slice %304 {offsets = [0, 128], sizes = [8, 128], strides = [1, 1]} : vector<8x384xf32> to vector<8x128xf32>
    %319 = arith.addf %317, %318 : vector<8x128xf32>
    %320 = arith.negf %319 : vector<8x128xf32>
    %321 = math.exp %320 : vector<8x128xf32>
    %cst_135 = arith.constant 1.000000e+00 : f32
    %322 = vector.broadcast %cst_135 : f32 to vector<8x128xf32>
    %323 = arith.addf %322, %321 : vector<8x128xf32>
    %324 = arith.divf %322, %323 : vector<8x128xf32>
    %325 = vector.extract_strided_slice %307 {offsets = [0, 256], sizes = [8, 128], strides = [1, 1]} : vector<8x384xf32> to vector<8x128xf32>
    %326 = vector.extract_strided_slice %304 {offsets = [0, 256], sizes = [8, 128], strides = [1, 1]} : vector<8x384xf32> to vector<8x128xf32>
    %327 = arith.mulf %316, %326 : vector<8x128xf32>
    %328 = arith.addf %325, %327 : vector<8x128xf32>
    %329 = math.tanh %328 : vector<8x128xf32>
    %330 = arith.subf %295, %329 : vector<8x128xf32>
    %331 = arith.mulf %324, %330 : vector<8x128xf32>
    %332 = arith.addf %329, %331 : vector<8x128xf32>
    %333 = vector.extract_strided_slice %308 {offsets = [0, 0], sizes = [8, 128], strides = [1, 1]} : vector<8x384xf32> to vector<8x128xf32>
    %334 = vector.extract_strided_slice %306 {offsets = [0, 0], sizes = [8, 128], strides = [1, 1]} : vector<8x384xf32> to vector<8x128xf32>
    %335 = arith.addf %333, %334 : vector<8x128xf32>
    %336 = arith.negf %335 : vector<8x128xf32>
    %337 = math.exp %336 : vector<8x128xf32>
    %cst_136 = arith.constant 1.000000e+00 : f32
    %338 = vector.broadcast %cst_136 : f32 to vector<8x128xf32>
    %339 = arith.addf %338, %337 : vector<8x128xf32>
    %340 = arith.divf %338, %339 : vector<8x128xf32>
    %341 = vector.extract_strided_slice %308 {offsets = [0, 128], sizes = [8, 128], strides = [1, 1]} : vector<8x384xf32> to vector<8x128xf32>
    %342 = vector.extract_strided_slice %306 {offsets = [0, 128], sizes = [8, 128], strides = [1, 1]} : vector<8x384xf32> to vector<8x128xf32>
    %343 = arith.addf %341, %342 : vector<8x128xf32>
    %344 = arith.negf %343 : vector<8x128xf32>
    %345 = math.exp %344 : vector<8x128xf32>
    %cst_137 = arith.constant 1.000000e+00 : f32
    %346 = vector.broadcast %cst_137 : f32 to vector<8x128xf32>
    %347 = arith.addf %346, %345 : vector<8x128xf32>
    %348 = arith.divf %346, %347 : vector<8x128xf32>
    %349 = vector.extract_strided_slice %308 {offsets = [0, 256], sizes = [8, 128], strides = [1, 1]} : vector<8x384xf32> to vector<8x128xf32>
    %350 = vector.extract_strided_slice %306 {offsets = [0, 256], sizes = [8, 128], strides = [1, 1]} : vector<8x384xf32> to vector<8x128xf32>
    %351 = arith.mulf %340, %350 : vector<8x128xf32>
    %352 = arith.addf %349, %351 : vector<8x128xf32>
    %353 = math.tanh %352 : vector<8x128xf32>
    %354 = arith.subf %296, %353 : vector<8x128xf32>
    %355 = arith.mulf %348, %354 : vector<8x128xf32>
    %356 = arith.addf %353, %355 : vector<8x128xf32>
    %c0_138 = arith.constant 0 : index
    %c0_139 = arith.constant 0 : index
    %357 = vector.load %arg9[%c0_138, %c0_139] : memref<8x128xf32, #tpu.memory_space<vmem>>, vector<8x128xf32>
    tpu.vector_store %arg9[%c0_138, %c0_139], %332 {strides = array<i32>} : memref<8x128xf32, #tpu.memory_space<vmem>>, vector<8x128xf32>,
    %c0_140 = arith.constant 0 : index
    %c0_141 = arith.constant 0 : index
    %358 = vector.load %arg10[%c0_140, %c0_141] : memref<8x128xf32, #tpu.memory_space<vmem>>, vector<8x128xf32>
    tpu.vector_store %arg10[%c0_140, %c0_141], %356 {strides = array<i32>} : memref<8x128xf32, #tpu.memory_space<vmem>>, vector<8x128xf32>,
    %c0_142 = arith.constant 0 : index
    %c4_143 = arith.constant 4 : index
    %c0_144 = arith.constant 0 : index
    %359 = vector.load %arg6[%c0_142, %c4_143, %c0_144] : memref<8x16x128xf32, #tpu.memory_space<vmem>>, vector<8x1x128xf32>
    %360 = vector.shape_cast %359 : vector<8x1x128xf32> to vector<8x128xf32>
    %361 = vector.shape_cast %332 : vector<8x128xf32> to vector<8x1x128xf32>
    tpu.vector_store %arg6[%c0_142, %c4_143, %c0_144], %361 {strides = array<i32>} : memref<8x16x128xf32, #tpu.memory_space<vmem>>, vector<8x1x128xf32>,
    %c0_145 = arith.constant 0 : index
    %c11_146 = arith.constant 11 : index
    %c0_147 = arith.constant 0 : index
    %362 = vector.load %arg7[%c0_145, %c11_146, %c0_147] : memref<8x16x128xf32, #tpu.memory_space<vmem>>, vector<8x1x128xf32>
    %363 = vector.shape_cast %362 : vector<8x1x128xf32> to vector<8x128xf32>
    %364 = vector.shape_cast %356 : vector<8x128xf32> to vector<8x1x128xf32>
    tpu.vector_store %arg7[%c0_145, %c11_146, %c0_147], %364 {strides = array<i32>} : memref<8x16x128xf32, #tpu.memory_space<vmem>>, vector<8x1x128xf32>,
    %c0_148 = arith.constant 0 : index
    %c0_149 = arith.constant 0 : index
    %365 = vector.load %arg9[%c0_148, %c0_149] : memref<8x128xf32, #tpu.memory_space<vmem>>, vector<8x128xf32>
    %c0_150 = arith.constant 0 : index
    %c0_151 = arith.constant 0 : index
    %366 = vector.load %arg10[%c0_150, %c0_151] : memref<8x128xf32, #tpu.memory_space<vmem>>, vector<8x128xf32>
    %c5 = arith.constant 5 : index
    %c0_152 = arith.constant 0 : index
    %c0_153 = arith.constant 0 : index
    %367 = vector.load %arg1[%c5, %c0_152, %c0_153] : memref<16x8x64xbf16, #tpu.memory_space<vmem>>, vector<1x8x64xbf16>
    %368 = vector.shape_cast %367 : vector<1x8x64xbf16> to vector<8x64xbf16>
    %cst_154 = arith.constant dense<0.000000e+00> : vector<8x384xf32>
    %369 = tpu.matmul %368, %4, %cst_154 {dimension_numbers = #tpu.dot_dimension_numbers<[1], [0], [0], [1], [0, 0, 1, 1], [], []>} : vector<8x64xbf16>, vector<64x384xbf16>, vector<8x384xf32> -> vector<8x384xf32>
    %c10 = arith.constant 10 : index
    %c0_155 = arith.constant 0 : index
    %c0_156 = arith.constant 0 : index
    %370 = vector.load %arg2[%c10, %c0_155, %c0_156] : memref<16x8x64xbf16, #tpu.memory_space<vmem>>, vector<1x8x64xbf16>
    %371 = vector.shape_cast %370 : vector<1x8x64xbf16> to vector<8x64xbf16>
    %cst_157 = arith.constant dense<0.000000e+00> : vector<8x384xf32>
    %372 = tpu.matmul %371, %6, %cst_157 {dimension_numbers = #tpu.dot_dimension_numbers<[1], [0], [0], [1], [0, 0, 1, 1], [], []>} : vector<8x64xbf16>, vector<64x384xbf16>, vector<8x384xf32> -> vector<8x384xf32>
    %373 = arith.truncf %365 : vector<8x128xf32> to vector<8x128xbf16>
    %cst_158 = arith.constant dense<0.000000e+00> : vector<8x384xf32>
    %374 = tpu.matmul %373, %8, %cst_158 {dimension_numbers = #tpu.dot_dimension_numbers<[1], [0], [0], [1], [0, 0, 1, 1], [], []>} : vector<8x128xbf16>, vector<128x384xbf16>, vector<8x384xf32> -> vector<8x384xf32>
    %375 = arith.truncf %366 : vector<8x128xf32> to vector<8x128xbf16>
    %cst_159 = arith.constant dense<0.000000e+00> : vector<8x384xf32>
    %376 = tpu.matmul %375, %10, %cst_159 {dimension_numbers = #tpu.dot_dimension_numbers<[1], [0], [0], [1], [0, 0, 1, 1], [], []>} : vector<8x128xbf16>, vector<128x384xbf16>, vector<8x384xf32> -> vector<8x384xf32>
    %377 = arith.addf %369, %12 : vector<8x384xf32>
    %378 = arith.addf %372, %14 : vector<8x384xf32>
    %379 = vector.extract_strided_slice %377 {offsets = [0, 0], sizes = [8, 128], strides = [1, 1]} : vector<8x384xf32> to vector<8x128xf32>
    %380 = vector.extract_strided_slice %374 {offsets = [0, 0], sizes = [8, 128], strides = [1, 1]} : vector<8x384xf32> to vector<8x128xf32>
    %381 = arith.addf %379, %380 : vector<8x128xf32>
    %382 = arith.negf %381 : vector<8x128xf32>
    %383 = math.exp %382 : vector<8x128xf32>
    %cst_160 = arith.constant 1.000000e+00 : f32
    %384 = vector.broadcast %cst_160 : f32 to vector<8x128xf32>
    %385 = arith.addf %384, %383 : vector<8x128xf32>
    %386 = arith.divf %384, %385 : vector<8x128xf32>
    %387 = vector.extract_strided_slice %377 {offsets = [0, 128], sizes = [8, 128], strides = [1, 1]} : vector<8x384xf32> to vector<8x128xf32>
    %388 = vector.extract_strided_slice %374 {offsets = [0, 128], sizes = [8, 128], strides = [1, 1]} : vector<8x384xf32> to vector<8x128xf32>
    %389 = arith.addf %387, %388 : vector<8x128xf32>
    %390 = arith.negf %389 : vector<8x128xf32>
    %391 = math.exp %390 : vector<8x128xf32>
    %cst_161 = arith.constant 1.000000e+00 : f32
    %392 = vector.broadcast %cst_161 : f32 to vector<8x128xf32>
    %393 = arith.addf %392, %391 : vector<8x128xf32>
    %394 = arith.divf %392, %393 : vector<8x128xf32>
    %395 = vector.extract_strided_slice %377 {offsets = [0, 256], sizes = [8, 128], strides = [1, 1]} : vector<8x384xf32> to vector<8x128xf32>
    %396 = vector.extract_strided_slice %374 {offsets = [0, 256], sizes = [8, 128], strides = [1, 1]} : vector<8x384xf32> to vector<8x128xf32>
    %397 = arith.mulf %386, %396 : vector<8x128xf32>
    %398 = arith.addf %395, %397 : vector<8x128xf32>
    %399 = math.tanh %398 : vector<8x128xf32>
    %400 = arith.subf %365, %399 : vector<8x128xf32>
    %401 = arith.mulf %394, %400 : vector<8x128xf32>
    %402 = arith.addf %399, %401 : vector<8x128xf32>
    %403 = vector.extract_strided_slice %378 {offsets = [0, 0], sizes = [8, 128], strides = [1, 1]} : vector<8x384xf32> to vector<8x128xf32>
    %404 = vector.extract_strided_slice %376 {offsets = [0, 0], sizes = [8, 128], strides = [1, 1]} : vector<8x384xf32> to vector<8x128xf32>
    %405 = arith.addf %403, %404 : vector<8x128xf32>
    %406 = arith.negf %405 : vector<8x128xf32>
    %407 = math.exp %406 : vector<8x128xf32>
    %cst_162 = arith.constant 1.000000e+00 : f32
    %408 = vector.broadcast %cst_162 : f32 to vector<8x128xf32>
    %409 = arith.addf %408, %407 : vector<8x128xf32>
    %410 = arith.divf %408, %409 : vector<8x128xf32>
    %411 = vector.extract_strided_slice %378 {offsets = [0, 128], sizes = [8, 128], strides = [1, 1]} : vector<8x384xf32> to vector<8x128xf32>
    %412 = vector.extract_strided_slice %376 {offsets = [0, 128], sizes = [8, 128], strides = [1, 1]} : vector<8x384xf32> to vector<8x128xf32>
    %413 = arith.addf %411, %412 : vector<8x128xf32>
    %414 = arith.negf %413 : vector<8x128xf32>
    %415 = math.exp %414 : vector<8x128xf32>
    %cst_163 = arith.constant 1.000000e+00 : f32
    %416 = vector.broadcast %cst_163 : f32 to vector<8x128xf32>
    %417 = arith.addf %416, %415 : vector<8x128xf32>
    %418 = arith.divf %416, %417 : vector<8x128xf32>
    %419 = vector.extract_strided_slice %378 {offsets = [0, 256], sizes = [8, 128], strides = [1, 1]} : vector<8x384xf32> to vector<8x128xf32>
    %420 = vector.extract_strided_slice %376 {offsets = [0, 256], sizes = [8, 128], strides = [1, 1]} : vector<8x384xf32> to vector<8x128xf32>
    %421 = arith.mulf %410, %420 : vector<8x128xf32>
    %422 = arith.addf %419, %421 : vector<8x128xf32>
    %423 = math.tanh %422 : vector<8x128xf32>
    %424 = arith.subf %366, %423 : vector<8x128xf32>
    %425 = arith.mulf %418, %424 : vector<8x128xf32>
    %426 = arith.addf %423, %425 : vector<8x128xf32>
    %c0_164 = arith.constant 0 : index
    %c0_165 = arith.constant 0 : index
    %427 = vector.load %arg9[%c0_164, %c0_165] : memref<8x128xf32, #tpu.memory_space<vmem>>, vector<8x128xf32>
    tpu.vector_store %arg9[%c0_164, %c0_165], %402 {strides = array<i32>} : memref<8x128xf32, #tpu.memory_space<vmem>>, vector<8x128xf32>,
    %c0_166 = arith.constant 0 : index
    %c0_167 = arith.constant 0 : index
    %428 = vector.load %arg10[%c0_166, %c0_167] : memref<8x128xf32, #tpu.memory_space<vmem>>, vector<8x128xf32>
    tpu.vector_store %arg10[%c0_166, %c0_167], %426 {strides = array<i32>} : memref<8x128xf32, #tpu.memory_space<vmem>>, vector<8x128xf32>,
    %c0_168 = arith.constant 0 : index
    %c5_169 = arith.constant 5 : index
    %c0_170 = arith.constant 0 : index
    %429 = vector.load %arg6[%c0_168, %c5_169, %c0_170] : memref<8x16x128xf32, #tpu.memory_space<vmem>>, vector<8x1x128xf32>
    %430 = vector.shape_cast %429 : vector<8x1x128xf32> to vector<8x128xf32>
    %431 = vector.shape_cast %402 : vector<8x128xf32> to vector<8x1x128xf32>
    tpu.vector_store %arg6[%c0_168, %c5_169, %c0_170], %431 {strides = array<i32>} : memref<8x16x128xf32, #tpu.memory_space<vmem>>, vector<8x1x128xf32>,
    %c0_171 = arith.constant 0 : index
    %c10_172 = arith.constant 10 : index
    %c0_173 = arith.constant 0 : index
    %432 = vector.load %arg7[%c0_171, %c10_172, %c0_173] : memref<8x16x128xf32, #tpu.memory_space<vmem>>, vector<8x1x128xf32>
    %433 = vector.shape_cast %432 : vector<8x1x128xf32> to vector<8x128xf32>
    %434 = vector.shape_cast %426 : vector<8x128xf32> to vector<8x1x128xf32>
    tpu.vector_store %arg7[%c0_171, %c10_172, %c0_173], %434 {strides = array<i32>} : memref<8x16x128xf32, #tpu.memory_space<vmem>>, vector<8x1x128xf32>,
    %c0_174 = arith.constant 0 : index
    %c0_175 = arith.constant 0 : index
    %435 = vector.load %arg9[%c0_174, %c0_175] : memref<8x128xf32, #tpu.memory_space<vmem>>, vector<8x128xf32>
    %c0_176 = arith.constant 0 : index
    %c0_177 = arith.constant 0 : index
    %436 = vector.load %arg10[%c0_176, %c0_177] : memref<8x128xf32, #tpu.memory_space<vmem>>, vector<8x128xf32>
    %c6 = arith.constant 6 : index
    %c0_178 = arith.constant 0 : index
    %c0_179 = arith.constant 0 : index
    %437 = vector.load %arg1[%c6, %c0_178, %c0_179] : memref<16x8x64xbf16, #tpu.memory_space<vmem>>, vector<1x8x64xbf16>
    %438 = vector.shape_cast %437 : vector<1x8x64xbf16> to vector<8x64xbf16>
    %cst_180 = arith.constant dense<0.000000e+00> : vector<8x384xf32>
    %439 = tpu.matmul %438, %4, %cst_180 {dimension_numbers = #tpu.dot_dimension_numbers<[1], [0], [0], [1], [0, 0, 1, 1], [], []>} : vector<8x64xbf16>, vector<64x384xbf16>, vector<8x384xf32> -> vector<8x384xf32>
    %c9 = arith.constant 9 : index
    %c0_181 = arith.constant 0 : index
    %c0_182 = arith.constant 0 : index
    %440 = vector.load %arg2[%c9, %c0_181, %c0_182] : memref<16x8x64xbf16, #tpu.memory_space<vmem>>, vector<1x8x64xbf16>
    %441 = vector.shape_cast %440 : vector<1x8x64xbf16> to vector<8x64xbf16>
    %cst_183 = arith.constant dense<0.000000e+00> : vector<8x384xf32>
    %442 = tpu.matmul %441, %6, %cst_183 {dimension_numbers = #tpu.dot_dimension_numbers<[1], [0], [0], [1], [0, 0, 1, 1], [], []>} : vector<8x64xbf16>, vector<64x384xbf16>, vector<8x384xf32> -> vector<8x384xf32>
    %443 = arith.truncf %435 : vector<8x128xf32> to vector<8x128xbf16>
    %cst_184 = arith.constant dense<0.000000e+00> : vector<8x384xf32>
    %444 = tpu.matmul %443, %8, %cst_184 {dimension_numbers = #tpu.dot_dimension_numbers<[1], [0], [0], [1], [0, 0, 1, 1], [], []>} : vector<8x128xbf16>, vector<128x384xbf16>, vector<8x384xf32> -> vector<8x384xf32>
    %445 = arith.truncf %436 : vector<8x128xf32> to vector<8x128xbf16>
    %cst_185 = arith.constant dense<0.000000e+00> : vector<8x384xf32>
    %446 = tpu.matmul %445, %10, %cst_185 {dimension_numbers = #tpu.dot_dimension_numbers<[1], [0], [0], [1], [0, 0, 1, 1], [], []>} : vector<8x128xbf16>, vector<128x384xbf16>, vector<8x384xf32> -> vector<8x384xf32>
    %447 = arith.addf %439, %12 : vector<8x384xf32>
    %448 = arith.addf %442, %14 : vector<8x384xf32>
    %449 = vector.extract_strided_slice %447 {offsets = [0, 0], sizes = [8, 128], strides = [1, 1]} : vector<8x384xf32> to vector<8x128xf32>
    %450 = vector.extract_strided_slice %444 {offsets = [0, 0], sizes = [8, 128], strides = [1, 1]} : vector<8x384xf32> to vector<8x128xf32>
    %451 = arith.addf %449, %450 : vector<8x128xf32>
    %452 = arith.negf %451 : vector<8x128xf32>
    %453 = math.exp %452 : vector<8x128xf32>
    %cst_186 = arith.constant 1.000000e+00 : f32
    %454 = vector.broadcast %cst_186 : f32 to vector<8x128xf32>
    %455 = arith.addf %454, %453 : vector<8x128xf32>
    %456 = arith.divf %454, %455 : vector<8x128xf32>
    %457 = vector.extract_strided_slice %447 {offsets = [0, 128], sizes = [8, 128], strides = [1, 1]} : vector<8x384xf32> to vector<8x128xf32>
    %458 = vector.extract_strided_slice %444 {offsets = [0, 128], sizes = [8, 128], strides = [1, 1]} : vector<8x384xf32> to vector<8x128xf32>
    %459 = arith.addf %457, %458 : vector<8x128xf32>
    %460 = arith.negf %459 : vector<8x128xf32>
    %461 = math.exp %460 : vector<8x128xf32>
    %cst_187 = arith.constant 1.000000e+00 : f32
    %462 = vector.broadcast %cst_187 : f32 to vector<8x128xf32>
    %463 = arith.addf %462, %461 : vector<8x128xf32>
    %464 = arith.divf %462, %463 : vector<8x128xf32>
    %465 = vector.extract_strided_slice %447 {offsets = [0, 256], sizes = [8, 128], strides = [1, 1]} : vector<8x384xf32> to vector<8x128xf32>
    %466 = vector.extract_strided_slice %444 {offsets = [0, 256], sizes = [8, 128], strides = [1, 1]} : vector<8x384xf32> to vector<8x128xf32>
    %467 = arith.mulf %456, %466 : vector<8x128xf32>
    %468 = arith.addf %465, %467 : vector<8x128xf32>
    %469 = math.tanh %468 : vector<8x128xf32>
    %470 = arith.subf %435, %469 : vector<8x128xf32>
    %471 = arith.mulf %464, %470 : vector<8x128xf32>
    %472 = arith.addf %469, %471 : vector<8x128xf32>
    %473 = vector.extract_strided_slice %448 {offsets = [0, 0], sizes = [8, 128], strides = [1, 1]} : vector<8x384xf32> to vector<8x128xf32>
    %474 = vector.extract_strided_slice %446 {offsets = [0, 0], sizes = [8, 128], strides = [1, 1]} : vector<8x384xf32> to vector<8x128xf32>
    %475 = arith.addf %473, %474 : vector<8x128xf32>
    %476 = arith.negf %475 : vector<8x128xf32>
    %477 = math.exp %476 : vector<8x128xf32>
    %cst_188 = arith.constant 1.000000e+00 : f32
    %478 = vector.broadcast %cst_188 : f32 to vector<8x128xf32>
    %479 = arith.addf %478, %477 : vector<8x128xf32>
    %480 = arith.divf %478, %479 : vector<8x128xf32>
    %481 = vector.extract_strided_slice %448 {offsets = [0, 128], sizes = [8, 128], strides = [1, 1]} : vector<8x384xf32> to vector<8x128xf32>
    %482 = vector.extract_strided_slice %446 {offsets = [0, 128], sizes = [8, 128], strides = [1, 1]} : vector<8x384xf32> to vector<8x128xf32>
    %483 = arith.addf %481, %482 : vector<8x128xf32>
    %484 = arith.negf %483 : vector<8x128xf32>
    %485 = math.exp %484 : vector<8x128xf32>
    %cst_189 = arith.constant 1.000000e+00 : f32
    %486 = vector.broadcast %cst_189 : f32 to vector<8x128xf32>
    %487 = arith.addf %486, %485 : vector<8x128xf32>
    %488 = arith.divf %486, %487 : vector<8x128xf32>
    %489 = vector.extract_strided_slice %448 {offsets = [0, 256], sizes = [8, 128], strides = [1, 1]} : vector<8x384xf32> to vector<8x128xf32>
    %490 = vector.extract_strided_slice %446 {offsets = [0, 256], sizes = [8, 128], strides = [1, 1]} : vector<8x384xf32> to vector<8x128xf32>
    %491 = arith.mulf %480, %490 : vector<8x128xf32>
    %492 = arith.addf %489, %491 : vector<8x128xf32>
    %493 = math.tanh %492 : vector<8x128xf32>
    %494 = arith.subf %436, %493 : vector<8x128xf32>
    %495 = arith.mulf %488, %494 : vector<8x128xf32>
    %496 = arith.addf %493, %495 : vector<8x128xf32>
    %c0_190 = arith.constant 0 : index
    %c0_191 = arith.constant 0 : index
    %497 = vector.load %arg9[%c0_190, %c0_191] : memref<8x128xf32, #tpu.memory_space<vmem>>, vector<8x128xf32>
    tpu.vector_store %arg9[%c0_190, %c0_191], %472 {strides = array<i32>} : memref<8x128xf32, #tpu.memory_space<vmem>>, vector<8x128xf32>,
    %c0_192 = arith.constant 0 : index
    %c0_193 = arith.constant 0 : index
    %498 = vector.load %arg10[%c0_192, %c0_193] : memref<8x128xf32, #tpu.memory_space<vmem>>, vector<8x128xf32>
    tpu.vector_store %arg10[%c0_192, %c0_193], %496 {strides = array<i32>} : memref<8x128xf32, #tpu.memory_space<vmem>>, vector<8x128xf32>,
    %c0_194 = arith.constant 0 : index
    %c6_195 = arith.constant 6 : index
    %c0_196 = arith.constant 0 : index
    %499 = vector.load %arg6[%c0_194, %c6_195, %c0_196] : memref<8x16x128xf32, #tpu.memory_space<vmem>>, vector<8x1x128xf32>
    %500 = vector.shape_cast %499 : vector<8x1x128xf32> to vector<8x128xf32>
    %501 = vector.shape_cast %472 : vector<8x128xf32> to vector<8x1x128xf32>
    tpu.vector_store %arg6[%c0_194, %c6_195, %c0_196], %501 {strides = array<i32>} : memref<8x16x128xf32, #tpu.memory_space<vmem>>, vector<8x1x128xf32>,
    %c0_197 = arith.constant 0 : index
    %c9_198 = arith.constant 9 : index
    %c0_199 = arith.constant 0 : index
    %502 = vector.load %arg7[%c0_197, %c9_198, %c0_199] : memref<8x16x128xf32, #tpu.memory_space<vmem>>, vector<8x1x128xf32>
    %503 = vector.shape_cast %502 : vector<8x1x128xf32> to vector<8x128xf32>
    %504 = vector.shape_cast %496 : vector<8x128xf32> to vector<8x1x128xf32>
    tpu.vector_store %arg7[%c0_197, %c9_198, %c0_199], %504 {strides = array<i32>} : memref<8x16x128xf32, #tpu.memory_space<vmem>>, vector<8x1x128xf32>,
    %c0_200 = arith.constant 0 : index
    %c0_201 = arith.constant 0 : index
    %505 = vector.load %arg9[%c0_200, %c0_201] : memref<8x128xf32, #tpu.memory_space<vmem>>, vector<8x128xf32>
    %c0_202 = arith.constant 0 : index
    %c0_203 = arith.constant 0 : index
    %506 = vector.load %arg10[%c0_202, %c0_203] : memref<8x128xf32, #tpu.memory_space<vmem>>, vector<8x128xf32>
    %c7 = arith.constant 7 : index
    %c0_204 = arith.constant 0 : index
    %c0_205 = arith.constant 0 : index
    %507 = vector.load %arg1[%c7, %c0_204, %c0_205] : memref<16x8x64xbf16, #tpu.memory_space<vmem>>, vector<1x8x64xbf16>
    %508 = vector.shape_cast %507 : vector<1x8x64xbf16> to vector<8x64xbf16>
    %cst_206 = arith.constant dense<0.000000e+00> : vector<8x384xf32>
    %509 = tpu.matmul %508, %4, %cst_206 {dimension_numbers = #tpu.dot_dimension_numbers<[1], [0], [0], [1], [0, 0, 1, 1], [], []>} : vector<8x64xbf16>, vector<64x384xbf16>, vector<8x384xf32> -> vector<8x384xf32>
    %c8 = arith.constant 8 : index
    %c0_207 = arith.constant 0 : index
    %c0_208 = arith.constant 0 : index
    %510 = vector.load %arg2[%c8, %c0_207, %c0_208] : memref<16x8x64xbf16, #tpu.memory_space<vmem>>, vector<1x8x64xbf16>
    %511 = vector.shape_cast %510 : vector<1x8x64xbf16> to vector<8x64xbf16>
    %cst_209 = arith.constant dense<0.000000e+00> : vector<8x384xf32>
    %512 = tpu.matmul %511, %6, %cst_209 {dimension_numbers = #tpu.dot_dimension_numbers<[1], [0], [0], [1], [0, 0, 1, 1], [], []>} : vector<8x64xbf16>, vector<64x384xbf16>, vector<8x384xf32> -> vector<8x384xf32>
    %513 = arith.truncf %505 : vector<8x128xf32> to vector<8x128xbf16>
    %cst_210 = arith.constant dense<0.000000e+00> : vector<8x384xf32>
    %514 = tpu.matmul %513, %8, %cst_210 {dimension_numbers = #tpu.dot_dimension_numbers<[1], [0], [0], [1], [0, 0, 1, 1], [], []>} : vector<8x128xbf16>, vector<128x384xbf16>, vector<8x384xf32> -> vector<8x384xf32>
    %515 = arith.truncf %506 : vector<8x128xf32> to vector<8x128xbf16>
    %cst_211 = arith.constant dense<0.000000e+00> : vector<8x384xf32>
    %516 = tpu.matmul %515, %10, %cst_211 {dimension_numbers = #tpu.dot_dimension_numbers<[1], [0], [0], [1], [0, 0, 1, 1], [], []>} : vector<8x128xbf16>, vector<128x384xbf16>, vector<8x384xf32> -> vector<8x384xf32>
    %517 = arith.addf %509, %12 : vector<8x384xf32>
    %518 = arith.addf %512, %14 : vector<8x384xf32>
    %519 = vector.extract_strided_slice %517 {offsets = [0, 0], sizes = [8, 128], strides = [1, 1]} : vector<8x384xf32> to vector<8x128xf32>
    %520 = vector.extract_strided_slice %514 {offsets = [0, 0], sizes = [8, 128], strides = [1, 1]} : vector<8x384xf32> to vector<8x128xf32>
    %521 = arith.addf %519, %520 : vector<8x128xf32>
    %522 = arith.negf %521 : vector<8x128xf32>
    %523 = math.exp %522 : vector<8x128xf32>
    %cst_212 = arith.constant 1.000000e+00 : f32
    %524 = vector.broadcast %cst_212 : f32 to vector<8x128xf32>
    %525 = arith.addf %524, %523 : vector<8x128xf32>
    %526 = arith.divf %524, %525 : vector<8x128xf32>
    %527 = vector.extract_strided_slice %517 {offsets = [0, 128], sizes = [8, 128], strides = [1, 1]} : vector<8x384xf32> to vector<8x128xf32>
    %528 = vector.extract_strided_slice %514 {offsets = [0, 128], sizes = [8, 128], strides = [1, 1]} : vector<8x384xf32> to vector<8x128xf32>
    %529 = arith.addf %527, %528 : vector<8x128xf32>
    %530 = arith.negf %529 : vector<8x128xf32>
    %531 = math.exp %530 : vector<8x128xf32>
    %cst_213 = arith.constant 1.000000e+00 : f32
    %532 = vector.broadcast %cst_213 : f32 to vector<8x128xf32>
    %533 = arith.addf %532, %531 : vector<8x128xf32>
    %534 = arith.divf %532, %533 : vector<8x128xf32>
    %535 = vector.extract_strided_slice %517 {offsets = [0, 256], sizes = [8, 128], strides = [1, 1]} : vector<8x384xf32> to vector<8x128xf32>
    %536 = vector.extract_strided_slice %514 {offsets = [0, 256], sizes = [8, 128], strides = [1, 1]} : vector<8x384xf32> to vector<8x128xf32>
    %537 = arith.mulf %526, %536 : vector<8x128xf32>
    %538 = arith.addf %535, %537 : vector<8x128xf32>
    %539 = math.tanh %538 : vector<8x128xf32>
    %540 = arith.subf %505, %539 : vector<8x128xf32>
    %541 = arith.mulf %534, %540 : vector<8x128xf32>
    %542 = arith.addf %539, %541 : vector<8x128xf32>
    %543 = vector.extract_strided_slice %518 {offsets = [0, 0], sizes = [8, 128], strides = [1, 1]} : vector<8x384xf32> to vector<8x128xf32>
    %544 = vector.extract_strided_slice %516 {offsets = [0, 0], sizes = [8, 128], strides = [1, 1]} : vector<8x384xf32> to vector<8x128xf32>
    %545 = arith.addf %543, %544 : vector<8x128xf32>
    %546 = arith.negf %545 : vector<8x128xf32>
    %547 = math.exp %546 : vector<8x128xf32>
    %cst_214 = arith.constant 1.000000e+00 : f32
    %548 = vector.broadcast %cst_214 : f32 to vector<8x128xf32>
    %549 = arith.addf %548, %547 : vector<8x128xf32>
    %550 = arith.divf %548, %549 : vector<8x128xf32>
    %551 = vector.extract_strided_slice %518 {offsets = [0, 128], sizes = [8, 128], strides = [1, 1]} : vector<8x384xf32> to vector<8x128xf32>
    %552 = vector.extract_strided_slice %516 {offsets = [0, 128], sizes = [8, 128], strides = [1, 1]} : vector<8x384xf32> to vector<8x128xf32>
    %553 = arith.addf %551, %552 : vector<8x128xf32>
    %554 = arith.negf %553 : vector<8x128xf32>
    %555 = math.exp %554 : vector<8x128xf32>
    %cst_215 = arith.constant 1.000000e+00 : f32
    %556 = vector.broadcast %cst_215 : f32 to vector<8x128xf32>
    %557 = arith.addf %556, %555 : vector<8x128xf32>
    %558 = arith.divf %556, %557 : vector<8x128xf32>
    %559 = vector.extract_strided_slice %518 {offsets = [0, 256], sizes = [8, 128], strides = [1, 1]} : vector<8x384xf32> to vector<8x128xf32>
    %560 = vector.extract_strided_slice %516 {offsets = [0, 256], sizes = [8, 128], strides = [1, 1]} : vector<8x384xf32> to vector<8x128xf32>
    %561 = arith.mulf %550, %560 : vector<8x128xf32>
    %562 = arith.addf %559, %561 : vector<8x128xf32>
    %563 = math.tanh %562 : vector<8x128xf32>
    %564 = arith.subf %506, %563 : vector<8x128xf32>
    %565 = arith.mulf %558, %564 : vector<8x128xf32>
    %566 = arith.addf %563, %565 : vector<8x128xf32>
    %c0_216 = arith.constant 0 : index
    %c0_217 = arith.constant 0 : index
    %567 = vector.load %arg9[%c0_216, %c0_217] : memref<8x128xf32, #tpu.memory_space<vmem>>, vector<8x128xf32>
    tpu.vector_store %arg9[%c0_216, %c0_217], %542 {strides = array<i32>} : memref<8x128xf32, #tpu.memory_space<vmem>>, vector<8x128xf32>,
    %c0_218 = arith.constant 0 : index
    %c0_219 = arith.constant 0 : index
    %568 = vector.load %arg10[%c0_218, %c0_219] : memref<8x128xf32, #tpu.memory_space<vmem>>, vector<8x128xf32>
    tpu.vector_store %arg10[%c0_218, %c0_219], %566 {strides = array<i32>} : memref<8x128xf32, #tpu.memory_space<vmem>>, vector<8x128xf32>,
    %c0_220 = arith.constant 0 : index
    %c7_221 = arith.constant 7 : index
    %c0_222 = arith.constant 0 : index
    %569 = vector.load %arg6[%c0_220, %c7_221, %c0_222] : memref<8x16x128xf32, #tpu.memory_space<vmem>>, vector<8x1x128xf32>
    %570 = vector.shape_cast %569 : vector<8x1x128xf32> to vector<8x128xf32>
    %571 = vector.shape_cast %542 : vector<8x128xf32> to vector<8x1x128xf32>
    tpu.vector_store %arg6[%c0_220, %c7_221, %c0_222], %571 {strides = array<i32>} : memref<8x16x128xf32, #tpu.memory_space<vmem>>, vector<8x1x128xf32>,
    %c0_223 = arith.constant 0 : index
    %c8_224 = arith.constant 8 : index
    %c0_225 = arith.constant 0 : index
    %572 = vector.load %arg7[%c0_223, %c8_224, %c0_225] : memref<8x16x128xf32, #tpu.memory_space<vmem>>, vector<8x1x128xf32>
    %573 = vector.shape_cast %572 : vector<8x1x128xf32> to vector<8x128xf32>
    %574 = vector.shape_cast %566 : vector<8x128xf32> to vector<8x1x128xf32>
    tpu.vector_store %arg7[%c0_223, %c8_224, %c0_225], %574 {strides = array<i32>} : memref<8x16x128xf32, #tpu.memory_space<vmem>>, vector<8x1x128xf32>,
    %c0_226 = arith.constant 0 : index
    %c0_227 = arith.constant 0 : index
    %575 = vector.load %arg9[%c0_226, %c0_227] : memref<8x128xf32, #tpu.memory_space<vmem>>, vector<8x128xf32>
    %c0_228 = arith.constant 0 : index
    %c0_229 = arith.constant 0 : index
    %576 = vector.load %arg10[%c0_228, %c0_229] : memref<8x128xf32, #tpu.memory_space<vmem>>, vector<8x128xf32>
    %c8_230 = arith.constant 8 : index
    %c0_231 = arith.constant 0 : index
    %c0_232 = arith.constant 0 : index
    %577 = vector.load %arg1[%c8_230, %c0_231, %c0_232] : memref<16x8x64xbf16, #tpu.memory_space<vmem>>, vector<1x8x64xbf16>
    %578 = vector.shape_cast %577 : vector<1x8x64xbf16> to vector<8x64xbf16>
    %cst_233 = arith.constant dense<0.000000e+00> : vector<8x384xf32>
    %579 = tpu.matmul %578, %4, %cst_233 {dimension_numbers = #tpu.dot_dimension_numbers<[1], [0], [0], [1], [0, 0, 1, 1], [], []>} : vector<8x64xbf16>, vector<64x384xbf16>, vector<8x384xf32> -> vector<8x384xf32>
    %c7_234 = arith.constant 7 : index
    %c0_235 = arith.constant 0 : index
    %c0_236 = arith.constant 0 : index
    %580 = vector.load %arg2[%c7_234, %c0_235, %c0_236] : memref<16x8x64xbf16, #tpu.memory_space<vmem>>, vector<1x8x64xbf16>
    %581 = vector.shape_cast %580 : vector<1x8x64xbf16> to vector<8x64xbf16>
    %cst_237 = arith.constant dense<0.000000e+00> : vector<8x384xf32>
    %582 = tpu.matmul %581, %6, %cst_237 {dimension_numbers = #tpu.dot_dimension_numbers<[1], [0], [0], [1], [0, 0, 1, 1], [], []>} : vector<8x64xbf16>, vector<64x384xbf16>, vector<8x384xf32> -> vector<8x384xf32>
    %583 = arith.truncf %575 : vector<8x128xf32> to vector<8x128xbf16>
    %cst_238 = arith.constant dense<0.000000e+00> : vector<8x384xf32>
    %584 = tpu.matmul %583, %8, %cst_238 {dimension_numbers = #tpu.dot_dimension_numbers<[1], [0], [0], [1], [0, 0, 1, 1], [], []>} : vector<8x128xbf16>, vector<128x384xbf16>, vector<8x384xf32> -> vector<8x384xf32>
    %585 = arith.truncf %576 : vector<8x128xf32> to vector<8x128xbf16>
    %cst_239 = arith.constant dense<0.000000e+00> : vector<8x384xf32>
    %586 = tpu.matmul %585, %10, %cst_239 {dimension_numbers = #tpu.dot_dimension_numbers<[1], [0], [0], [1], [0, 0, 1, 1], [], []>} : vector<8x128xbf16>, vector<128x384xbf16>, vector<8x384xf32> -> vector<8x384xf32>
    %587 = arith.addf %579, %12 : vector<8x384xf32>
    %588 = arith.addf %582, %14 : vector<8x384xf32>
    %589 = vector.extract_strided_slice %587 {offsets = [0, 0], sizes = [8, 128], strides = [1, 1]} : vector<8x384xf32> to vector<8x128xf32>
    %590 = vector.extract_strided_slice %584 {offsets = [0, 0], sizes = [8, 128], strides = [1, 1]} : vector<8x384xf32> to vector<8x128xf32>
    %591 = arith.addf %589, %590 : vector<8x128xf32>
    %592 = arith.negf %591 : vector<8x128xf32>
    %593 = math.exp %592 : vector<8x128xf32>
    %cst_240 = arith.constant 1.000000e+00 : f32
    %594 = vector.broadcast %cst_240 : f32 to vector<8x128xf32>
    %595 = arith.addf %594, %593 : vector<8x128xf32>
    %596 = arith.divf %594, %595 : vector<8x128xf32>
    %597 = vector.extract_strided_slice %587 {offsets = [0, 128], sizes = [8, 128], strides = [1, 1]} : vector<8x384xf32> to vector<8x128xf32>
    %598 = vector.extract_strided_slice %584 {offsets = [0, 128], sizes = [8, 128], strides = [1, 1]} : vector<8x384xf32> to vector<8x128xf32>
    %599 = arith.addf %597, %598 : vector<8x128xf32>
    %600 = arith.negf %599 : vector<8x128xf32>
    %601 = math.exp %600 : vector<8x128xf32>
    %cst_241 = arith.constant 1.000000e+00 : f32
    %602 = vector.broadcast %cst_241 : f32 to vector<8x128xf32>
    %603 = arith.addf %602, %601 : vector<8x128xf32>
    %604 = arith.divf %602, %603 : vector<8x128xf32>
    %605 = vector.extract_strided_slice %587 {offsets = [0, 256], sizes = [8, 128], strides = [1, 1]} : vector<8x384xf32> to vector<8x128xf32>
    %606 = vector.extract_strided_slice %584 {offsets = [0, 256], sizes = [8, 128], strides = [1, 1]} : vector<8x384xf32> to vector<8x128xf32>
    %607 = arith.mulf %596, %606 : vector<8x128xf32>
    %608 = arith.addf %605, %607 : vector<8x128xf32>
    %609 = math.tanh %608 : vector<8x128xf32>
    %610 = arith.subf %575, %609 : vector<8x128xf32>
    %611 = arith.mulf %604, %610 : vector<8x128xf32>
    %612 = arith.addf %609, %611 : vector<8x128xf32>
    %613 = vector.extract_strided_slice %588 {offsets = [0, 0], sizes = [8, 128], strides = [1, 1]} : vector<8x384xf32> to vector<8x128xf32>
    %614 = vector.extract_strided_slice %586 {offsets = [0, 0], sizes = [8, 128], strides = [1, 1]} : vector<8x384xf32> to vector<8x128xf32>
    %615 = arith.addf %613, %614 : vector<8x128xf32>
    %616 = arith.negf %615 : vector<8x128xf32>
    %617 = math.exp %616 : vector<8x128xf32>
    %cst_242 = arith.constant 1.000000e+00 : f32
    %618 = vector.broadcast %cst_242 : f32 to vector<8x128xf32>
    %619 = arith.addf %618, %617 : vector<8x128xf32>
    %620 = arith.divf %618, %619 : vector<8x128xf32>
    %621 = vector.extract_strided_slice %588 {offsets = [0, 128], sizes = [8, 128], strides = [1, 1]} : vector<8x384xf32> to vector<8x128xf32>
    %622 = vector.extract_strided_slice %586 {offsets = [0, 128], sizes = [8, 128], strides = [1, 1]} : vector<8x384xf32> to vector<8x128xf32>
    %623 = arith.addf %621, %622 : vector<8x128xf32>
    %624 = arith.negf %623 : vector<8x128xf32>
    %625 = math.exp %624 : vector<8x128xf32>
    %cst_243 = arith.constant 1.000000e+00 : f32
    %626 = vector.broadcast %cst_243 : f32 to vector<8x128xf32>
    %627 = arith.addf %626, %625 : vector<8x128xf32>
    %628 = arith.divf %626, %627 : vector<8x128xf32>
    %629 = vector.extract_strided_slice %588 {offsets = [0, 256], sizes = [8, 128], strides = [1, 1]} : vector<8x384xf32> to vector<8x128xf32>
    %630 = vector.extract_strided_slice %586 {offsets = [0, 256], sizes = [8, 128], strides = [1, 1]} : vector<8x384xf32> to vector<8x128xf32>
    %631 = arith.mulf %620, %630 : vector<8x128xf32>
    %632 = arith.addf %629, %631 : vector<8x128xf32>
    %633 = math.tanh %632 : vector<8x128xf32>
    %634 = arith.subf %576, %633 : vector<8x128xf32>
    %635 = arith.mulf %628, %634 : vector<8x128xf32>
    %636 = arith.addf %633, %635 : vector<8x128xf32>
    %c0_244 = arith.constant 0 : index
    %c0_245 = arith.constant 0 : index
    %637 = vector.load %arg9[%c0_244, %c0_245] : memref<8x128xf32, #tpu.memory_space<vmem>>, vector<8x128xf32>
    tpu.vector_store %arg9[%c0_244, %c0_245], %612 {strides = array<i32>} : memref<8x128xf32, #tpu.memory_space<vmem>>, vector<8x128xf32>,
    %c0_246 = arith.constant 0 : index
    %c0_247 = arith.constant 0 : index
    %638 = vector.load %arg10[%c0_246, %c0_247] : memref<8x128xf32, #tpu.memory_space<vmem>>, vector<8x128xf32>
    tpu.vector_store %arg10[%c0_246, %c0_247], %636 {strides = array<i32>} : memref<8x128xf32, #tpu.memory_space<vmem>>, vector<8x128xf32>,
    %c0_248 = arith.constant 0 : index
    %c8_249 = arith.constant 8 : index
    %c0_250 = arith.constant 0 : index
    %639 = vector.load %arg6[%c0_248, %c8_249, %c0_250] : memref<8x16x128xf32, #tpu.memory_space<vmem>>, vector<8x1x128xf32>
    %640 = vector.shape_cast %639 : vector<8x1x128xf32> to vector<8x128xf32>
    %641 = vector.shape_cast %612 : vector<8x128xf32> to vector<8x1x128xf32>
    tpu.vector_store %arg6[%c0_248, %c8_249, %c0_250], %641 {strides = array<i32>} : memref<8x16x128xf32, #tpu.memory_space<vmem>>, vector<8x1x128xf32>,
    %c0_251 = arith.constant 0 : index
    %c7_252 = arith.constant 7 : index
    %c0_253 = arith.constant 0 : index
    %642 = vector.load %arg7[%c0_251, %c7_252, %c0_253] : memref<8x16x128xf32, #tpu.memory_space<vmem>>, vector<8x1x128xf32>
    %643 = vector.shape_cast %642 : vector<8x1x128xf32> to vector<8x128xf32>
    %644 = vector.shape_cast %636 : vector<8x128xf32> to vector<8x1x128xf32>
    tpu.vector_store %arg7[%c0_251, %c7_252, %c0_253], %644 {strides = array<i32>} : memref<8x16x128xf32, #tpu.memory_space<vmem>>, vector<8x1x128xf32>,
    %c0_254 = arith.constant 0 : index
    %c0_255 = arith.constant 0 : index
    %645 = vector.load %arg9[%c0_254, %c0_255] : memref<8x128xf32, #tpu.memory_space<vmem>>, vector<8x128xf32>
    %c0_256 = arith.constant 0 : index
    %c0_257 = arith.constant 0 : index
    %646 = vector.load %arg10[%c0_256, %c0_257] : memref<8x128xf32, #tpu.memory_space<vmem>>, vector<8x128xf32>
    %c9_258 = arith.constant 9 : index
    %c0_259 = arith.constant 0 : index
    %c0_260 = arith.constant 0 : index
    %647 = vector.load %arg1[%c9_258, %c0_259, %c0_260] : memref<16x8x64xbf16, #tpu.memory_space<vmem>>, vector<1x8x64xbf16>
    %648 = vector.shape_cast %647 : vector<1x8x64xbf16> to vector<8x64xbf16>
    %cst_261 = arith.constant dense<0.000000e+00> : vector<8x384xf32>
    %649 = tpu.matmul %648, %4, %cst_261 {dimension_numbers = #tpu.dot_dimension_numbers<[1], [0], [0], [1], [0, 0, 1, 1], [], []>} : vector<8x64xbf16>, vector<64x384xbf16>, vector<8x384xf32> -> vector<8x384xf32>
    %c6_262 = arith.constant 6 : index
    %c0_263 = arith.constant 0 : index
    %c0_264 = arith.constant 0 : index
    %650 = vector.load %arg2[%c6_262, %c0_263, %c0_264] : memref<16x8x64xbf16, #tpu.memory_space<vmem>>, vector<1x8x64xbf16>
    %651 = vector.shape_cast %650 : vector<1x8x64xbf16> to vector<8x64xbf16>
    %cst_265 = arith.constant dense<0.000000e+00> : vector<8x384xf32>
    %652 = tpu.matmul %651, %6, %cst_265 {dimension_numbers = #tpu.dot_dimension_numbers<[1], [0], [0], [1], [0, 0, 1, 1], [], []>} : vector<8x64xbf16>, vector<64x384xbf16>, vector<8x384xf32> -> vector<8x384xf32>
    %653 = arith.truncf %645 : vector<8x128xf32> to vector<8x128xbf16>
    %cst_266 = arith.constant dense<0.000000e+00> : vector<8x384xf32>
    %654 = tpu.matmul %653, %8, %cst_266 {dimension_numbers = #tpu.dot_dimension_numbers<[1], [0], [0], [1], [0, 0, 1, 1], [], []>} : vector<8x128xbf16>, vector<128x384xbf16>, vector<8x384xf32> -> vector<8x384xf32>
    %655 = arith.truncf %646 : vector<8x128xf32> to vector<8x128xbf16>
    %cst_267 = arith.constant dense<0.000000e+00> : vector<8x384xf32>
    %656 = tpu.matmul %655, %10, %cst_267 {dimension_numbers = #tpu.dot_dimension_numbers<[1], [0], [0], [1], [0, 0, 1, 1], [], []>} : vector<8x128xbf16>, vector<128x384xbf16>, vector<8x384xf32> -> vector<8x384xf32>
    %657 = arith.addf %649, %12 : vector<8x384xf32>
    %658 = arith.addf %652, %14 : vector<8x384xf32>
    %659 = vector.extract_strided_slice %657 {offsets = [0, 0], sizes = [8, 128], strides = [1, 1]} : vector<8x384xf32> to vector<8x128xf32>
    %660 = vector.extract_strided_slice %654 {offsets = [0, 0], sizes = [8, 128], strides = [1, 1]} : vector<8x384xf32> to vector<8x128xf32>
    %661 = arith.addf %659, %660 : vector<8x128xf32>
    %662 = arith.negf %661 : vector<8x128xf32>
    %663 = math.exp %662 : vector<8x128xf32>
    %cst_268 = arith.constant 1.000000e+00 : f32
    %664 = vector.broadcast %cst_268 : f32 to vector<8x128xf32>
    %665 = arith.addf %664, %663 : vector<8x128xf32>
    %666 = arith.divf %664, %665 : vector<8x128xf32>
    %667 = vector.extract_strided_slice %657 {offsets = [0, 128], sizes = [8, 128], strides = [1, 1]} : vector<8x384xf32> to vector<8x128xf32>
    %668 = vector.extract_strided_slice %654 {offsets = [0, 128], sizes = [8, 128], strides = [1, 1]} : vector<8x384xf32> to vector<8x128xf32>
    %669 = arith.addf %667, %668 : vector<8x128xf32>
    %670 = arith.negf %669 : vector<8x128xf32>
    %671 = math.exp %670 : vector<8x128xf32>
    %cst_269 = arith.constant 1.000000e+00 : f32
    %672 = vector.broadcast %cst_269 : f32 to vector<8x128xf32>
    %673 = arith.addf %672, %671 : vector<8x128xf32>
    %674 = arith.divf %672, %673 : vector<8x128xf32>
    %675 = vector.extract_strided_slice %657 {offsets = [0, 256], sizes = [8, 128], strides = [1, 1]} : vector<8x384xf32> to vector<8x128xf32>
    %676 = vector.extract_strided_slice %654 {offsets = [0, 256], sizes = [8, 128], strides = [1, 1]} : vector<8x384xf32> to vector<8x128xf32>
    %677 = arith.mulf %666, %676 : vector<8x128xf32>
    %678 = arith.addf %675, %677 : vector<8x128xf32>
    %679 = math.tanh %678 : vector<8x128xf32>
    %680 = arith.subf %645, %679 : vector<8x128xf32>
    %681 = arith.mulf %674, %680 : vector<8x128xf32>
    %682 = arith.addf %679, %681 : vector<8x128xf32>
    %683 = vector.extract_strided_slice %658 {offsets = [0, 0], sizes = [8, 128], strides = [1, 1]} : vector<8x384xf32> to vector<8x128xf32>
    %684 = vector.extract_strided_slice %656 {offsets = [0, 0], sizes = [8, 128], strides = [1, 1]} : vector<8x384xf32> to vector<8x128xf32>
    %685 = arith.addf %683, %684 : vector<8x128xf32>
    %686 = arith.negf %685 : vector<8x128xf32>
    %687 = math.exp %686 : vector<8x128xf32>
    %cst_270 = arith.constant 1.000000e+00 : f32
    %688 = vector.broadcast %cst_270 : f32 to vector<8x128xf32>
    %689 = arith.addf %688, %687 : vector<8x128xf32>
    %690 = arith.divf %688, %689 : vector<8x128xf32>
    %691 = vector.extract_strided_slice %658 {offsets = [0, 128], sizes = [8, 128], strides = [1, 1]} : vector<8x384xf32> to vector<8x128xf32>
    %692 = vector.extract_strided_slice %656 {offsets = [0, 128], sizes = [8, 128], strides = [1, 1]} : vector<8x384xf32> to vector<8x128xf32>
    %693 = arith.addf %691, %692 : vector<8x128xf32>
    %694 = arith.negf %693 : vector<8x128xf32>
    %695 = math.exp %694 : vector<8x128xf32>
    %cst_271 = arith.constant 1.000000e+00 : f32
    %696 = vector.broadcast %cst_271 : f32 to vector<8x128xf32>
    %697 = arith.addf %696, %695 : vector<8x128xf32>
    %698 = arith.divf %696, %697 : vector<8x128xf32>
    %699 = vector.extract_strided_slice %658 {offsets = [0, 256], sizes = [8, 128], strides = [1, 1]} : vector<8x384xf32> to vector<8x128xf32>
    %700 = vector.extract_strided_slice %656 {offsets = [0, 256], sizes = [8, 128], strides = [1, 1]} : vector<8x384xf32> to vector<8x128xf32>
    %701 = arith.mulf %690, %700 : vector<8x128xf32>
    %702 = arith.addf %699, %701 : vector<8x128xf32>
    %703 = math.tanh %702 : vector<8x128xf32>
    %704 = arith.subf %646, %703 : vector<8x128xf32>
    %705 = arith.mulf %698, %704 : vector<8x128xf32>
    %706 = arith.addf %703, %705 : vector<8x128xf32>
    %c0_272 = arith.constant 0 : index
    %c0_273 = arith.constant 0 : index
    %707 = vector.load %arg9[%c0_272, %c0_273] : memref<8x128xf32, #tpu.memory_space<vmem>>, vector<8x128xf32>
    tpu.vector_store %arg9[%c0_272, %c0_273], %682 {strides = array<i32>} : memref<8x128xf32, #tpu.memory_space<vmem>>, vector<8x128xf32>,
    %c0_274 = arith.constant 0 : index
    %c0_275 = arith.constant 0 : index
    %708 = vector.load %arg10[%c0_274, %c0_275] : memref<8x128xf32, #tpu.memory_space<vmem>>, vector<8x128xf32>
    tpu.vector_store %arg10[%c0_274, %c0_275], %706 {strides = array<i32>} : memref<8x128xf32, #tpu.memory_space<vmem>>, vector<8x128xf32>,
    %c0_276 = arith.constant 0 : index
    %c9_277 = arith.constant 9 : index
    %c0_278 = arith.constant 0 : index
    %709 = vector.load %arg6[%c0_276, %c9_277, %c0_278] : memref<8x16x128xf32, #tpu.memory_space<vmem>>, vector<8x1x128xf32>
    %710 = vector.shape_cast %709 : vector<8x1x128xf32> to vector<8x128xf32>
    %711 = vector.shape_cast %682 : vector<8x128xf32> to vector<8x1x128xf32>
    tpu.vector_store %arg6[%c0_276, %c9_277, %c0_278], %711 {strides = array<i32>} : memref<8x16x128xf32, #tpu.memory_space<vmem>>, vector<8x1x128xf32>,
    %c0_279 = arith.constant 0 : index
    %c6_280 = arith.constant 6 : index
    %c0_281 = arith.constant 0 : index
    %712 = vector.load %arg7[%c0_279, %c6_280, %c0_281] : memref<8x16x128xf32, #tpu.memory_space<vmem>>, vector<8x1x128xf32>
    %713 = vector.shape_cast %712 : vector<8x1x128xf32> to vector<8x128xf32>
    %714 = vector.shape_cast %706 : vector<8x128xf32> to vector<8x1x128xf32>
    tpu.vector_store %arg7[%c0_279, %c6_280, %c0_281], %714 {strides = array<i32>} : memref<8x16x128xf32, #tpu.memory_space<vmem>>, vector<8x1x128xf32>,
    %c0_282 = arith.constant 0 : index
    %c0_283 = arith.constant 0 : index
    %715 = vector.load %arg9[%c0_282, %c0_283] : memref<8x128xf32, #tpu.memory_space<vmem>>, vector<8x128xf32>
    %c0_284 = arith.constant 0 : index
    %c0_285 = arith.constant 0 : index
    %716 = vector.load %arg10[%c0_284, %c0_285] : memref<8x128xf32, #tpu.memory_space<vmem>>, vector<8x128xf32>
    %c10_286 = arith.constant 10 : index
    %c0_287 = arith.constant 0 : index
    %c0_288 = arith.constant 0 : index
    %717 = vector.load %arg1[%c10_286, %c0_287, %c0_288] : memref<16x8x64xbf16, #tpu.memory_space<vmem>>, vector<1x8x64xbf16>
    %718 = vector.shape_cast %717 : vector<1x8x64xbf16> to vector<8x64xbf16>
    %cst_289 = arith.constant dense<0.000000e+00> : vector<8x384xf32>
    %719 = tpu.matmul %718, %4, %cst_289 {dimension_numbers = #tpu.dot_dimension_numbers<[1], [0], [0], [1], [0, 0, 1, 1], [], []>} : vector<8x64xbf16>, vector<64x384xbf16>, vector<8x384xf32> -> vector<8x384xf32>
    %c5_290 = arith.constant 5 : index
    %c0_291 = arith.constant 0 : index
    %c0_292 = arith.constant 0 : index
    %720 = vector.load %arg2[%c5_290, %c0_291, %c0_292] : memref<16x8x64xbf16, #tpu.memory_space<vmem>>, vector<1x8x64xbf16>
    %721 = vector.shape_cast %720 : vector<1x8x64xbf16> to vector<8x64xbf16>
    %cst_293 = arith.constant dense<0.000000e+00> : vector<8x384xf32>
    %722 = tpu.matmul %721, %6, %cst_293 {dimension_numbers = #tpu.dot_dimension_numbers<[1], [0], [0], [1], [0, 0, 1, 1], [], []>} : vector<8x64xbf16>, vector<64x384xbf16>, vector<8x384xf32> -> vector<8x384xf32>
    %723 = arith.truncf %715 : vector<8x128xf32> to vector<8x128xbf16>
    %cst_294 = arith.constant dense<0.000000e+00> : vector<8x384xf32>
    %724 = tpu.matmul %723, %8, %cst_294 {dimension_numbers = #tpu.dot_dimension_numbers<[1], [0], [0], [1], [0, 0, 1, 1], [], []>} : vector<8x128xbf16>, vector<128x384xbf16>, vector<8x384xf32> -> vector<8x384xf32>
    %725 = arith.truncf %716 : vector<8x128xf32> to vector<8x128xbf16>
    %cst_295 = arith.constant dense<0.000000e+00> : vector<8x384xf32>
    %726 = tpu.matmul %725, %10, %cst_295 {dimension_numbers = #tpu.dot_dimension_numbers<[1], [0], [0], [1], [0, 0, 1, 1], [], []>} : vector<8x128xbf16>, vector<128x384xbf16>, vector<8x384xf32> -> vector<8x384xf32>
    %727 = arith.addf %719, %12 : vector<8x384xf32>
    %728 = arith.addf %722, %14 : vector<8x384xf32>
    %729 = vector.extract_strided_slice %727 {offsets = [0, 0], sizes = [8, 128], strides = [1, 1]} : vector<8x384xf32> to vector<8x128xf32>
    %730 = vector.extract_strided_slice %724 {offsets = [0, 0], sizes = [8, 128], strides = [1, 1]} : vector<8x384xf32> to vector<8x128xf32>
    %731 = arith.addf %729, %730 : vector<8x128xf32>
    %732 = arith.negf %731 : vector<8x128xf32>
    %733 = math.exp %732 : vector<8x128xf32>
    %cst_296 = arith.constant 1.000000e+00 : f32
    %734 = vector.broadcast %cst_296 : f32 to vector<8x128xf32>
    %735 = arith.addf %734, %733 : vector<8x128xf32>
    %736 = arith.divf %734, %735 : vector<8x128xf32>
    %737 = vector.extract_strided_slice %727 {offsets = [0, 128], sizes = [8, 128], strides = [1, 1]} : vector<8x384xf32> to vector<8x128xf32>
    %738 = vector.extract_strided_slice %724 {offsets = [0, 128], sizes = [8, 128], strides = [1, 1]} : vector<8x384xf32> to vector<8x128xf32>
    %739 = arith.addf %737, %738 : vector<8x128xf32>
    %740 = arith.negf %739 : vector<8x128xf32>
    %741 = math.exp %740 : vector<8x128xf32>
    %cst_297 = arith.constant 1.000000e+00 : f32
    %742 = vector.broadcast %cst_297 : f32 to vector<8x128xf32>
    %743 = arith.addf %742, %741 : vector<8x128xf32>
    %744 = arith.divf %742, %743 : vector<8x128xf32>
    %745 = vector.extract_strided_slice %727 {offsets = [0, 256], sizes = [8, 128], strides = [1, 1]} : vector<8x384xf32> to vector<8x128xf32>
    %746 = vector.extract_strided_slice %724 {offsets = [0, 256], sizes = [8, 128], strides = [1, 1]} : vector<8x384xf32> to vector<8x128xf32>
    %747 = arith.mulf %736, %746 : vector<8x128xf32>
    %748 = arith.addf %745, %747 : vector<8x128xf32>
    %749 = math.tanh %748 : vector<8x128xf32>
    %750 = arith.subf %715, %749 : vector<8x128xf32>
    %751 = arith.mulf %744, %750 : vector<8x128xf32>
    %752 = arith.addf %749, %751 : vector<8x128xf32>
    %753 = vector.extract_strided_slice %728 {offsets = [0, 0], sizes = [8, 128], strides = [1, 1]} : vector<8x384xf32> to vector<8x128xf32>
    %754 = vector.extract_strided_slice %726 {offsets = [0, 0], sizes = [8, 128], strides = [1, 1]} : vector<8x384xf32> to vector<8x128xf32>
    %755 = arith.addf %753, %754 : vector<8x128xf32>
    %756 = arith.negf %755 : vector<8x128xf32>
    %757 = math.exp %756 : vector<8x128xf32>
    %cst_298 = arith.constant 1.000000e+00 : f32
    %758 = vector.broadcast %cst_298 : f32 to vector<8x128xf32>
    %759 = arith.addf %758, %757 : vector<8x128xf32>
    %760 = arith.divf %758, %759 : vector<8x128xf32>
    %761 = vector.extract_strided_slice %728 {offsets = [0, 128], sizes = [8, 128], strides = [1, 1]} : vector<8x384xf32> to vector<8x128xf32>
    %762 = vector.extract_strided_slice %726 {offsets = [0, 128], sizes = [8, 128], strides = [1, 1]} : vector<8x384xf32> to vector<8x128xf32>
    %763 = arith.addf %761, %762 : vector<8x128xf32>
    %764 = arith.negf %763 : vector<8x128xf32>
    %765 = math.exp %764 : vector<8x128xf32>
    %cst_299 = arith.constant 1.000000e+00 : f32
    %766 = vector.broadcast %cst_299 : f32 to vector<8x128xf32>
    %767 = arith.addf %766, %765 : vector<8x128xf32>
    %768 = arith.divf %766, %767 : vector<8x128xf32>
    %769 = vector.extract_strided_slice %728 {offsets = [0, 256], sizes = [8, 128], strides = [1, 1]} : vector<8x384xf32> to vector<8x128xf32>
    %770 = vector.extract_strided_slice %726 {offsets = [0, 256], sizes = [8, 128], strides = [1, 1]} : vector<8x384xf32> to vector<8x128xf32>
    %771 = arith.mulf %760, %770 : vector<8x128xf32>
    %772 = arith.addf %769, %771 : vector<8x128xf32>
    %773 = math.tanh %772 : vector<8x128xf32>
    %774 = arith.subf %716, %773 : vector<8x128xf32>
    %775 = arith.mulf %768, %774 : vector<8x128xf32>
    %776 = arith.addf %773, %775 : vector<8x128xf32>
    %c0_300 = arith.constant 0 : index
    %c0_301 = arith.constant 0 : index
    %777 = vector.load %arg9[%c0_300, %c0_301] : memref<8x128xf32, #tpu.memory_space<vmem>>, vector<8x128xf32>
    tpu.vector_store %arg9[%c0_300, %c0_301], %752 {strides = array<i32>} : memref<8x128xf32, #tpu.memory_space<vmem>>, vector<8x128xf32>,
    %c0_302 = arith.constant 0 : index
    %c0_303 = arith.constant 0 : index
    %778 = vector.load %arg10[%c0_302, %c0_303] : memref<8x128xf32, #tpu.memory_space<vmem>>, vector<8x128xf32>
    tpu.vector_store %arg10[%c0_302, %c0_303], %776 {strides = array<i32>} : memref<8x128xf32, #tpu.memory_space<vmem>>, vector<8x128xf32>,
    %c0_304 = arith.constant 0 : index
    %c10_305 = arith.constant 10 : index
    %c0_306 = arith.constant 0 : index
    %779 = vector.load %arg6[%c0_304, %c10_305, %c0_306] : memref<8x16x128xf32, #tpu.memory_space<vmem>>, vector<8x1x128xf32>
    %780 = vector.shape_cast %779 : vector<8x1x128xf32> to vector<8x128xf32>
    %781 = vector.shape_cast %752 : vector<8x128xf32> to vector<8x1x128xf32>
    tpu.vector_store %arg6[%c0_304, %c10_305, %c0_306], %781 {strides = array<i32>} : memref<8x16x128xf32, #tpu.memory_space<vmem>>, vector<8x1x128xf32>,
    %c0_307 = arith.constant 0 : index
    %c5_308 = arith.constant 5 : index
    %c0_309 = arith.constant 0 : index
    %782 = vector.load %arg7[%c0_307, %c5_308, %c0_309] : memref<8x16x128xf32, #tpu.memory_space<vmem>>, vector<8x1x128xf32>
    %783 = vector.shape_cast %782 : vector<8x1x128xf32> to vector<8x128xf32>
    %784 = vector.shape_cast %776 : vector<8x128xf32> to vector<8x1x128xf32>
    tpu.vector_store %arg7[%c0_307, %c5_308, %c0_309], %784 {strides = array<i32>} : memref<8x16x128xf32, #tpu.memory_space<vmem>>, vector<8x1x128xf32>,
    %c0_310 = arith.constant 0 : index
    %c0_311 = arith.constant 0 : index
    %785 = vector.load %arg9[%c0_310, %c0_311] : memref<8x128xf32, #tpu.memory_space<vmem>>, vector<8x128xf32>
    %c0_312 = arith.constant 0 : index
    %c0_313 = arith.constant 0 : index
    %786 = vector.load %arg10[%c0_312, %c0_313] : memref<8x128xf32, #tpu.memory_space<vmem>>, vector<8x128xf32>
    %c11_314 = arith.constant 11 : index
    %c0_315 = arith.constant 0 : index
    %c0_316 = arith.constant 0 : index
    %787 = vector.load %arg1[%c11_314, %c0_315, %c0_316] : memref<16x8x64xbf16, #tpu.memory_space<vmem>>, vector<1x8x64xbf16>
    %788 = vector.shape_cast %787 : vector<1x8x64xbf16> to vector<8x64xbf16>
    %cst_317 = arith.constant dense<0.000000e+00> : vector<8x384xf32>
    %789 = tpu.matmul %788, %4, %cst_317 {dimension_numbers = #tpu.dot_dimension_numbers<[1], [0], [0], [1], [0, 0, 1, 1], [], []>} : vector<8x64xbf16>, vector<64x384xbf16>, vector<8x384xf32> -> vector<8x384xf32>
    %c4_318 = arith.constant 4 : index
    %c0_319 = arith.constant 0 : index
    %c0_320 = arith.constant 0 : index
    %790 = vector.load %arg2[%c4_318, %c0_319, %c0_320] : memref<16x8x64xbf16, #tpu.memory_space<vmem>>, vector<1x8x64xbf16>
    %791 = vector.shape_cast %790 : vector<1x8x64xbf16> to vector<8x64xbf16>
    %cst_321 = arith.constant dense<0.000000e+00> : vector<8x384xf32>
    %792 = tpu.matmul %791, %6, %cst_321 {dimension_numbers = #tpu.dot_dimension_numbers<[1], [0], [0], [1], [0, 0, 1, 1], [], []>} : vector<8x64xbf16>, vector<64x384xbf16>, vector<8x384xf32> -> vector<8x384xf32>
    %793 = arith.truncf %785 : vector<8x128xf32> to vector<8x128xbf16>
    %cst_322 = arith.constant dense<0.000000e+00> : vector<8x384xf32>
    %794 = tpu.matmul %793, %8, %cst_322 {dimension_numbers = #tpu.dot_dimension_numbers<[1], [0], [0], [1], [0, 0, 1, 1], [], []>} : vector<8x128xbf16>, vector<128x384xbf16>, vector<8x384xf32> -> vector<8x384xf32>
    %795 = arith.truncf %786 : vector<8x128xf32> to vector<8x128xbf16>
    %cst_323 = arith.constant dense<0.000000e+00> : vector<8x384xf32>
    %796 = tpu.matmul %795, %10, %cst_323 {dimension_numbers = #tpu.dot_dimension_numbers<[1], [0], [0], [1], [0, 0, 1, 1], [], []>} : vector<8x128xbf16>, vector<128x384xbf16>, vector<8x384xf32> -> vector<8x384xf32>
    %797 = arith.addf %789, %12 : vector<8x384xf32>
    %798 = arith.addf %792, %14 : vector<8x384xf32>
    %799 = vector.extract_strided_slice %797 {offsets = [0, 0], sizes = [8, 128], strides = [1, 1]} : vector<8x384xf32> to vector<8x128xf32>
    %800 = vector.extract_strided_slice %794 {offsets = [0, 0], sizes = [8, 128], strides = [1, 1]} : vector<8x384xf32> to vector<8x128xf32>
    %801 = arith.addf %799, %800 : vector<8x128xf32>
    %802 = arith.negf %801 : vector<8x128xf32>
    %803 = math.exp %802 : vector<8x128xf32>
    %cst_324 = arith.constant 1.000000e+00 : f32
    %804 = vector.broadcast %cst_324 : f32 to vector<8x128xf32>
    %805 = arith.addf %804, %803 : vector<8x128xf32>
    %806 = arith.divf %804, %805 : vector<8x128xf32>
    %807 = vector.extract_strided_slice %797 {offsets = [0, 128], sizes = [8, 128], strides = [1, 1]} : vector<8x384xf32> to vector<8x128xf32>
    %808 = vector.extract_strided_slice %794 {offsets = [0, 128], sizes = [8, 128], strides = [1, 1]} : vector<8x384xf32> to vector<8x128xf32>
    %809 = arith.addf %807, %808 : vector<8x128xf32>
    %810 = arith.negf %809 : vector<8x128xf32>
    %811 = math.exp %810 : vector<8x128xf32>
    %cst_325 = arith.constant 1.000000e+00 : f32
    %812 = vector.broadcast %cst_325 : f32 to vector<8x128xf32>
    %813 = arith.addf %812, %811 : vector<8x128xf32>
    %814 = arith.divf %812, %813 : vector<8x128xf32>
    %815 = vector.extract_strided_slice %797 {offsets = [0, 256], sizes = [8, 128], strides = [1, 1]} : vector<8x384xf32> to vector<8x128xf32>
    %816 = vector.extract_strided_slice %794 {offsets = [0, 256], sizes = [8, 128], strides = [1, 1]} : vector<8x384xf32> to vector<8x128xf32>
    %817 = arith.mulf %806, %816 : vector<8x128xf32>
    %818 = arith.addf %815, %817 : vector<8x128xf32>
    %819 = math.tanh %818 : vector<8x128xf32>
    %820 = arith.subf %785, %819 : vector<8x128xf32>
    %821 = arith.mulf %814, %820 : vector<8x128xf32>
    %822 = arith.addf %819, %821 : vector<8x128xf32>
    %823 = vector.extract_strided_slice %798 {offsets = [0, 0], sizes = [8, 128], strides = [1, 1]} : vector<8x384xf32> to vector<8x128xf32>
    %824 = vector.extract_strided_slice %796 {offsets = [0, 0], sizes = [8, 128], strides = [1, 1]} : vector<8x384xf32> to vector<8x128xf32>
    %825 = arith.addf %823, %824 : vector<8x128xf32>
    %826 = arith.negf %825 : vector<8x128xf32>
    %827 = math.exp %826 : vector<8x128xf32>
    %cst_326 = arith.constant 1.000000e+00 : f32
    %828 = vector.broadcast %cst_326 : f32 to vector<8x128xf32>
    %829 = arith.addf %828, %827 : vector<8x128xf32>
    %830 = arith.divf %828, %829 : vector<8x128xf32>
    %831 = vector.extract_strided_slice %798 {offsets = [0, 128], sizes = [8, 128], strides = [1, 1]} : vector<8x384xf32> to vector<8x128xf32>
    %832 = vector.extract_strided_slice %796 {offsets = [0, 128], sizes = [8, 128], strides = [1, 1]} : vector<8x384xf32> to vector<8x128xf32>
    %833 = arith.addf %831, %832 : vector<8x128xf32>
    %834 = arith.negf %833 : vector<8x128xf32>
    %835 = math.exp %834 : vector<8x128xf32>
    %cst_327 = arith.constant 1.000000e+00 : f32
    %836 = vector.broadcast %cst_327 : f32 to vector<8x128xf32>
    %837 = arith.addf %836, %835 : vector<8x128xf32>
    %838 = arith.divf %836, %837 : vector<8x128xf32>
    %839 = vector.extract_strided_slice %798 {offsets = [0, 256], sizes = [8, 128], strides = [1, 1]} : vector<8x384xf32> to vector<8x128xf32>
    %840 = vector.extract_strided_slice %796 {offsets = [0, 256], sizes = [8, 128], strides = [1, 1]} : vector<8x384xf32> to vector<8x128xf32>
    %841 = arith.mulf %830, %840 : vector<8x128xf32>
    %842 = arith.addf %839, %841 : vector<8x128xf32>
    %843 = math.tanh %842 : vector<8x128xf32>
    %844 = arith.subf %786, %843 : vector<8x128xf32>
    %845 = arith.mulf %838, %844 : vector<8x128xf32>
    %846 = arith.addf %843, %845 : vector<8x128xf32>
    %c0_328 = arith.constant 0 : index
    %c0_329 = arith.constant 0 : index
    %847 = vector.load %arg9[%c0_328, %c0_329] : memref<8x128xf32, #tpu.memory_space<vmem>>, vector<8x128xf32>
    tpu.vector_store %arg9[%c0_328, %c0_329], %822 {strides = array<i32>} : memref<8x128xf32, #tpu.memory_space<vmem>>, vector<8x128xf32>,
    %c0_330 = arith.constant 0 : index
    %c0_331 = arith.constant 0 : index
    %848 = vector.load %arg10[%c0_330, %c0_331] : memref<8x128xf32, #tpu.memory_space<vmem>>, vector<8x128xf32>
    tpu.vector_store %arg10[%c0_330, %c0_331], %846 {strides = array<i32>} : memref<8x128xf32, #tpu.memory_space<vmem>>, vector<8x128xf32>,
    %c0_332 = arith.constant 0 : index
    %c11_333 = arith.constant 11 : index
    %c0_334 = arith.constant 0 : index
    %849 = vector.load %arg6[%c0_332, %c11_333, %c0_334] : memref<8x16x128xf32, #tpu.memory_space<vmem>>, vector<8x1x128xf32>
    %850 = vector.shape_cast %849 : vector<8x1x128xf32> to vector<8x128xf32>
    %851 = vector.shape_cast %822 : vector<8x128xf32> to vector<8x1x128xf32>
    tpu.vector_store %arg6[%c0_332, %c11_333, %c0_334], %851 {strides = array<i32>} : memref<8x16x128xf32, #tpu.memory_space<vmem>>, vector<8x1x128xf32>,
    %c0_335 = arith.constant 0 : index
    %c4_336 = arith.constant 4 : index
    %c0_337 = arith.constant 0 : index
    %852 = vector.load %arg7[%c0_335, %c4_336, %c0_337] : memref<8x16x128xf32, #tpu.memory_space<vmem>>, vector<8x1x128xf32>
    %853 = vector.shape_cast %852 : vector<8x1x128xf32> to vector<8x128xf32>
    %854 = vector.shape_cast %846 : vector<8x128xf32> to vector<8x1x128xf32>
    tpu.vector_store %arg7[%c0_335, %c4_336, %c0_337], %854 {strides = array<i32>} : memref<8x16x128xf32, #tpu.memory_space<vmem>>, vector<8x1x128xf32>,
    %c0_338 = arith.constant 0 : index
    %c0_339 = arith.constant 0 : index
    %855 = vector.load %arg9[%c0_338, %c0_339] : memref<8x128xf32, #tpu.memory_space<vmem>>, vector<8x128xf32>
    %c0_340 = arith.constant 0 : index
    %c0_341 = arith.constant 0 : index
    %856 = vector.load %arg10[%c0_340, %c0_341] : memref<8x128xf32, #tpu.memory_space<vmem>>, vector<8x128xf32>
    %c12_342 = arith.constant 12 : index
    %c0_343 = arith.constant 0 : index
    %c0_344 = arith.constant 0 : index
    %857 = vector.load %arg1[%c12_342, %c0_343, %c0_344] : memref<16x8x64xbf16, #tpu.memory_space<vmem>>, vector<1x8x64xbf16>
    %858 = vector.shape_cast %857 : vector<1x8x64xbf16> to vector<8x64xbf16>
    %cst_345 = arith.constant dense<0.000000e+00> : vector<8x384xf32>
    %859 = tpu.matmul %858, %4, %cst_345 {dimension_numbers = #tpu.dot_dimension_numbers<[1], [0], [0], [1], [0, 0, 1, 1], [], []>} : vector<8x64xbf16>, vector<64x384xbf16>, vector<8x384xf32> -> vector<8x384xf32>
    %c3_346 = arith.constant 3 : index
    %c0_347 = arith.constant 0 : index
    %c0_348 = arith.constant 0 : index
    %860 = vector.load %arg2[%c3_346, %c0_347, %c0_348] : memref<16x8x64xbf16, #tpu.memory_space<vmem>>, vector<1x8x64xbf16>
    %861 = vector.shape_cast %860 : vector<1x8x64xbf16> to vector<8x64xbf16>
    %cst_349 = arith.constant dense<0.000000e+00> : vector<8x384xf32>
    %862 = tpu.matmul %861, %6, %cst_349 {dimension_numbers = #tpu.dot_dimension_numbers<[1], [0], [0], [1], [0, 0, 1, 1], [], []>} : vector<8x64xbf16>, vector<64x384xbf16>, vector<8x384xf32> -> vector<8x384xf32>
    %863 = arith.truncf %855 : vector<8x128xf32> to vector<8x128xbf16>
    %cst_350 = arith.constant dense<0.000000e+00> : vector<8x384xf32>
    %864 = tpu.matmul %863, %8, %cst_350 {dimension_numbers = #tpu.dot_dimension_numbers<[1], [0], [0], [1], [0, 0, 1, 1], [], []>} : vector<8x128xbf16>, vector<128x384xbf16>, vector<8x384xf32> -> vector<8x384xf32>
    %865 = arith.truncf %856 : vector<8x128xf32> to vector<8x128xbf16>
    %cst_351 = arith.constant dense<0.000000e+00> : vector<8x384xf32>
    %866 = tpu.matmul %865, %10, %cst_351 {dimension_numbers = #tpu.dot_dimension_numbers<[1], [0], [0], [1], [0, 0, 1, 1], [], []>} : vector<8x128xbf16>, vector<128x384xbf16>, vector<8x384xf32> -> vector<8x384xf32>
    %867 = arith.addf %859, %12 : vector<8x384xf32>
    %868 = arith.addf %862, %14 : vector<8x384xf32>
    %869 = vector.extract_strided_slice %867 {offsets = [0, 0], sizes = [8, 128], strides = [1, 1]} : vector<8x384xf32> to vector<8x128xf32>
    %870 = vector.extract_strided_slice %864 {offsets = [0, 0], sizes = [8, 128], strides = [1, 1]} : vector<8x384xf32> to vector<8x128xf32>
    %871 = arith.addf %869, %870 : vector<8x128xf32>
    %872 = arith.negf %871 : vector<8x128xf32>
    %873 = math.exp %872 : vector<8x128xf32>
    %cst_352 = arith.constant 1.000000e+00 : f32
    %874 = vector.broadcast %cst_352 : f32 to vector<8x128xf32>
    %875 = arith.addf %874, %873 : vector<8x128xf32>
    %876 = arith.divf %874, %875 : vector<8x128xf32>
    %877 = vector.extract_strided_slice %867 {offsets = [0, 128], sizes = [8, 128], strides = [1, 1]} : vector<8x384xf32> to vector<8x128xf32>
    %878 = vector.extract_strided_slice %864 {offsets = [0, 128], sizes = [8, 128], strides = [1, 1]} : vector<8x384xf32> to vector<8x128xf32>
    %879 = arith.addf %877, %878 : vector<8x128xf32>
    %880 = arith.negf %879 : vector<8x128xf32>
    %881 = math.exp %880 : vector<8x128xf32>
    %cst_353 = arith.constant 1.000000e+00 : f32
    %882 = vector.broadcast %cst_353 : f32 to vector<8x128xf32>
    %883 = arith.addf %882, %881 : vector<8x128xf32>
    %884 = arith.divf %882, %883 : vector<8x128xf32>
    %885 = vector.extract_strided_slice %867 {offsets = [0, 256], sizes = [8, 128], strides = [1, 1]} : vector<8x384xf32> to vector<8x128xf32>
    %886 = vector.extract_strided_slice %864 {offsets = [0, 256], sizes = [8, 128], strides = [1, 1]} : vector<8x384xf32> to vector<8x128xf32>
    %887 = arith.mulf %876, %886 : vector<8x128xf32>
    %888 = arith.addf %885, %887 : vector<8x128xf32>
    %889 = math.tanh %888 : vector<8x128xf32>
    %890 = arith.subf %855, %889 : vector<8x128xf32>
    %891 = arith.mulf %884, %890 : vector<8x128xf32>
    %892 = arith.addf %889, %891 : vector<8x128xf32>
    %893 = vector.extract_strided_slice %868 {offsets = [0, 0], sizes = [8, 128], strides = [1, 1]} : vector<8x384xf32> to vector<8x128xf32>
    %894 = vector.extract_strided_slice %866 {offsets = [0, 0], sizes = [8, 128], strides = [1, 1]} : vector<8x384xf32> to vector<8x128xf32>
    %895 = arith.addf %893, %894 : vector<8x128xf32>
    %896 = arith.negf %895 : vector<8x128xf32>
    %897 = math.exp %896 : vector<8x128xf32>
    %cst_354 = arith.constant 1.000000e+00 : f32
    %898 = vector.broadcast %cst_354 : f32 to vector<8x128xf32>
    %899 = arith.addf %898, %897 : vector<8x128xf32>
    %900 = arith.divf %898, %899 : vector<8x128xf32>
    %901 = vector.extract_strided_slice %868 {offsets = [0, 128], sizes = [8, 128], strides = [1, 1]} : vector<8x384xf32> to vector<8x128xf32>
    %902 = vector.extract_strided_slice %866 {offsets = [0, 128], sizes = [8, 128], strides = [1, 1]} : vector<8x384xf32> to vector<8x128xf32>
    %903 = arith.addf %901, %902 : vector<8x128xf32>
    %904 = arith.negf %903 : vector<8x128xf32>
    %905 = math.exp %904 : vector<8x128xf32>
    %cst_355 = arith.constant 1.000000e+00 : f32
    %906 = vector.broadcast %cst_355 : f32 to vector<8x128xf32>
    %907 = arith.addf %906, %905 : vector<8x128xf32>
    %908 = arith.divf %906, %907 : vector<8x128xf32>
    %909 = vector.extract_strided_slice %868 {offsets = [0, 256], sizes = [8, 128], strides = [1, 1]} : vector<8x384xf32> to vector<8x128xf32>
    %910 = vector.extract_strided_slice %866 {offsets = [0, 256], sizes = [8, 128], strides = [1, 1]} : vector<8x384xf32> to vector<8x128xf32>
    %911 = arith.mulf %900, %910 : vector<8x128xf32>
    %912 = arith.addf %909, %911 : vector<8x128xf32>
    %913 = math.tanh %912 : vector<8x128xf32>
    %914 = arith.subf %856, %913 : vector<8x128xf32>
    %915 = arith.mulf %908, %914 : vector<8x128xf32>
    %916 = arith.addf %913, %915 : vector<8x128xf32>
    %c0_356 = arith.constant 0 : index
    %c0_357 = arith.constant 0 : index
    %917 = vector.load %arg9[%c0_356, %c0_357] : memref<8x128xf32, #tpu.memory_space<vmem>>, vector<8x128xf32>
    tpu.vector_store %arg9[%c0_356, %c0_357], %892 {strides = array<i32>} : memref<8x128xf32, #tpu.memory_space<vmem>>, vector<8x128xf32>,
    %c0_358 = arith.constant 0 : index
    %c0_359 = arith.constant 0 : index
    %918 = vector.load %arg10[%c0_358, %c0_359] : memref<8x128xf32, #tpu.memory_space<vmem>>, vector<8x128xf32>
    tpu.vector_store %arg10[%c0_358, %c0_359], %916 {strides = array<i32>} : memref<8x128xf32, #tpu.memory_space<vmem>>, vector<8x128xf32>,
    %c0_360 = arith.constant 0 : index
    %c12_361 = arith.constant 12 : index
    %c0_362 = arith.constant 0 : index
    %919 = vector.load %arg6[%c0_360, %c12_361, %c0_362] : memref<8x16x128xf32, #tpu.memory_space<vmem>>, vector<8x1x128xf32>
    %920 = vector.shape_cast %919 : vector<8x1x128xf32> to vector<8x128xf32>
    %921 = vector.shape_cast %892 : vector<8x128xf32> to vector<8x1x128xf32>
    tpu.vector_store %arg6[%c0_360, %c12_361, %c0_362], %921 {strides = array<i32>} : memref<8x16x128xf32, #tpu.memory_space<vmem>>, vector<8x1x128xf32>,
    %c0_363 = arith.constant 0 : index
    %c3_364 = arith.constant 3 : index
    %c0_365 = arith.constant 0 : index
    %922 = vector.load %arg7[%c0_363, %c3_364, %c0_365] : memref<8x16x128xf32, #tpu.memory_space<vmem>>, vector<8x1x128xf32>
    %923 = vector.shape_cast %922 : vector<8x1x128xf32> to vector<8x128xf32>
    %924 = vector.shape_cast %916 : vector<8x128xf32> to vector<8x1x128xf32>
    tpu.vector_store %arg7[%c0_363, %c3_364, %c0_365], %924 {strides = array<i32>} : memref<8x16x128xf32, #tpu.memory_space<vmem>>, vector<8x1x128xf32>,
    %c0_366 = arith.constant 0 : index
    %c0_367 = arith.constant 0 : index
    %925 = vector.load %arg9[%c0_366, %c0_367] : memref<8x128xf32, #tpu.memory_space<vmem>>, vector<8x128xf32>
    %c0_368 = arith.constant 0 : index
    %c0_369 = arith.constant 0 : index
    %926 = vector.load %arg10[%c0_368, %c0_369] : memref<8x128xf32, #tpu.memory_space<vmem>>, vector<8x128xf32>
    %c13_370 = arith.constant 13 : index
    %c0_371 = arith.constant 0 : index
    %c0_372 = arith.constant 0 : index
    %927 = vector.load %arg1[%c13_370, %c0_371, %c0_372] : memref<16x8x64xbf16, #tpu.memory_space<vmem>>, vector<1x8x64xbf16>
    %928 = vector.shape_cast %927 : vector<1x8x64xbf16> to vector<8x64xbf16>
    %cst_373 = arith.constant dense<0.000000e+00> : vector<8x384xf32>
    %929 = tpu.matmul %928, %4, %cst_373 {dimension_numbers = #tpu.dot_dimension_numbers<[1], [0], [0], [1], [0, 0, 1, 1], [], []>} : vector<8x64xbf16>, vector<64x384xbf16>, vector<8x384xf32> -> vector<8x384xf32>
    %c2_374 = arith.constant 2 : index
    %c0_375 = arith.constant 0 : index
    %c0_376 = arith.constant 0 : index
    %930 = vector.load %arg2[%c2_374, %c0_375, %c0_376] : memref<16x8x64xbf16, #tpu.memory_space<vmem>>, vector<1x8x64xbf16>
    %931 = vector.shape_cast %930 : vector<1x8x64xbf16> to vector<8x64xbf16>
    %cst_377 = arith.constant dense<0.000000e+00> : vector<8x384xf32>
    %932 = tpu.matmul %931, %6, %cst_377 {dimension_numbers = #tpu.dot_dimension_numbers<[1], [0], [0], [1], [0, 0, 1, 1], [], []>} : vector<8x64xbf16>, vector<64x384xbf16>, vector<8x384xf32> -> vector<8x384xf32>
    %933 = arith.truncf %925 : vector<8x128xf32> to vector<8x128xbf16>
    %cst_378 = arith.constant dense<0.000000e+00> : vector<8x384xf32>
    %934 = tpu.matmul %933, %8, %cst_378 {dimension_numbers = #tpu.dot_dimension_numbers<[1], [0], [0], [1], [0, 0, 1, 1], [], []>} : vector<8x128xbf16>, vector<128x384xbf16>, vector<8x384xf32> -> vector<8x384xf32>
    %935 = arith.truncf %926 : vector<8x128xf32> to vector<8x128xbf16>
    %cst_379 = arith.constant dense<0.000000e+00> : vector<8x384xf32>
    %936 = tpu.matmul %935, %10, %cst_379 {dimension_numbers = #tpu.dot_dimension_numbers<[1], [0], [0], [1], [0, 0, 1, 1], [], []>} : vector<8x128xbf16>, vector<128x384xbf16>, vector<8x384xf32> -> vector<8x384xf32>
    %937 = arith.addf %929, %12 : vector<8x384xf32>
    %938 = arith.addf %932, %14 : vector<8x384xf32>
    %939 = vector.extract_strided_slice %937 {offsets = [0, 0], sizes = [8, 128], strides = [1, 1]} : vector<8x384xf32> to vector<8x128xf32>
    %940 = vector.extract_strided_slice %934 {offsets = [0, 0], sizes = [8, 128], strides = [1, 1]} : vector<8x384xf32> to vector<8x128xf32>
    %941 = arith.addf %939, %940 : vector<8x128xf32>
    %942 = arith.negf %941 : vector<8x128xf32>
    %943 = math.exp %942 : vector<8x128xf32>
    %cst_380 = arith.constant 1.000000e+00 : f32
    %944 = vector.broadcast %cst_380 : f32 to vector<8x128xf32>
    %945 = arith.addf %944, %943 : vector<8x128xf32>
    %946 = arith.divf %944, %945 : vector<8x128xf32>
    %947 = vector.extract_strided_slice %937 {offsets = [0, 128], sizes = [8, 128], strides = [1, 1]} : vector<8x384xf32> to vector<8x128xf32>
    %948 = vector.extract_strided_slice %934 {offsets = [0, 128], sizes = [8, 128], strides = [1, 1]} : vector<8x384xf32> to vector<8x128xf32>
    %949 = arith.addf %947, %948 : vector<8x128xf32>
    %950 = arith.negf %949 : vector<8x128xf32>
    %951 = math.exp %950 : vector<8x128xf32>
    %cst_381 = arith.constant 1.000000e+00 : f32
    %952 = vector.broadcast %cst_381 : f32 to vector<8x128xf32>
    %953 = arith.addf %952, %951 : vector<8x128xf32>
    %954 = arith.divf %952, %953 : vector<8x128xf32>
    %955 = vector.extract_strided_slice %937 {offsets = [0, 256], sizes = [8, 128], strides = [1, 1]} : vector<8x384xf32> to vector<8x128xf32>
    %956 = vector.extract_strided_slice %934 {offsets = [0, 256], sizes = [8, 128], strides = [1, 1]} : vector<8x384xf32> to vector<8x128xf32>
    %957 = arith.mulf %946, %956 : vector<8x128xf32>
    %958 = arith.addf %955, %957 : vector<8x128xf32>
    %959 = math.tanh %958 : vector<8x128xf32>
    %960 = arith.subf %925, %959 : vector<8x128xf32>
    %961 = arith.mulf %954, %960 : vector<8x128xf32>
    %962 = arith.addf %959, %961 : vector<8x128xf32>
    %963 = vector.extract_strided_slice %938 {offsets = [0, 0], sizes = [8, 128], strides = [1, 1]} : vector<8x384xf32> to vector<8x128xf32>
    %964 = vector.extract_strided_slice %936 {offsets = [0, 0], sizes = [8, 128], strides = [1, 1]} : vector<8x384xf32> to vector<8x128xf32>
    %965 = arith.addf %963, %964 : vector<8x128xf32>
    %966 = arith.negf %965 : vector<8x128xf32>
    %967 = math.exp %966 : vector<8x128xf32>
    %cst_382 = arith.constant 1.000000e+00 : f32
    %968 = vector.broadcast %cst_382 : f32 to vector<8x128xf32>
    %969 = arith.addf %968, %967 : vector<8x128xf32>
    %970 = arith.divf %968, %969 : vector<8x128xf32>
    %971 = vector.extract_strided_slice %938 {offsets = [0, 128], sizes = [8, 128], strides = [1, 1]} : vector<8x384xf32> to vector<8x128xf32>
    %972 = vector.extract_strided_slice %936 {offsets = [0, 128], sizes = [8, 128], strides = [1, 1]} : vector<8x384xf32> to vector<8x128xf32>
    %973 = arith.addf %971, %972 : vector<8x128xf32>
    %974 = arith.negf %973 : vector<8x128xf32>
    %975 = math.exp %974 : vector<8x128xf32>
    %cst_383 = arith.constant 1.000000e+00 : f32
    %976 = vector.broadcast %cst_383 : f32 to vector<8x128xf32>
    %977 = arith.addf %976, %975 : vector<8x128xf32>
    %978 = arith.divf %976, %977 : vector<8x128xf32>
    %979 = vector.extract_strided_slice %938 {offsets = [0, 256], sizes = [8, 128], strides = [1, 1]} : vector<8x384xf32> to vector<8x128xf32>
    %980 = vector.extract_strided_slice %936 {offsets = [0, 256], sizes = [8, 128], strides = [1, 1]} : vector<8x384xf32> to vector<8x128xf32>
    %981 = arith.mulf %970, %980 : vector<8x128xf32>
    %982 = arith.addf %979, %981 : vector<8x128xf32>
    %983 = math.tanh %982 : vector<8x128xf32>
    %984 = arith.subf %926, %983 : vector<8x128xf32>
    %985 = arith.mulf %978, %984 : vector<8x128xf32>
    %986 = arith.addf %983, %985 : vector<8x128xf32>
    %c0_384 = arith.constant 0 : index
    %c0_385 = arith.constant 0 : index
    %987 = vector.load %arg9[%c0_384, %c0_385] : memref<8x128xf32, #tpu.memory_space<vmem>>, vector<8x128xf32>
    tpu.vector_store %arg9[%c0_384, %c0_385], %962 {strides = array<i32>} : memref<8x128xf32, #tpu.memory_space<vmem>>, vector<8x128xf32>,
    %c0_386 = arith.constant 0 : index
    %c0_387 = arith.constant 0 : index
    %988 = vector.load %arg10[%c0_386, %c0_387] : memref<8x128xf32, #tpu.memory_space<vmem>>, vector<8x128xf32>
    tpu.vector_store %arg10[%c0_386, %c0_387], %986 {strides = array<i32>} : memref<8x128xf32, #tpu.memory_space<vmem>>, vector<8x128xf32>,
    %c0_388 = arith.constant 0 : index
    %c13_389 = arith.constant 13 : index
    %c0_390 = arith.constant 0 : index
    %989 = vector.load %arg6[%c0_388, %c13_389, %c0_390] : memref<8x16x128xf32, #tpu.memory_space<vmem>>, vector<8x1x128xf32>
    %990 = vector.shape_cast %989 : vector<8x1x128xf32> to vector<8x128xf32>
    %991 = vector.shape_cast %962 : vector<8x128xf32> to vector<8x1x128xf32>
    tpu.vector_store %arg6[%c0_388, %c13_389, %c0_390], %991 {strides = array<i32>} : memref<8x16x128xf32, #tpu.memory_space<vmem>>, vector<8x1x128xf32>,
    %c0_391 = arith.constant 0 : index
    %c2_392 = arith.constant 2 : index
    %c0_393 = arith.constant 0 : index
    %992 = vector.load %arg7[%c0_391, %c2_392, %c0_393] : memref<8x16x128xf32, #tpu.memory_space<vmem>>, vector<8x1x128xf32>
    %993 = vector.shape_cast %992 : vector<8x1x128xf32> to vector<8x128xf32>
    %994 = vector.shape_cast %986 : vector<8x128xf32> to vector<8x1x128xf32>
    tpu.vector_store %arg7[%c0_391, %c2_392, %c0_393], %994 {strides = array<i32>} : memref<8x16x128xf32, #tpu.memory_space<vmem>>, vector<8x1x128xf32>,
    %c0_394 = arith.constant 0 : index
    %c0_395 = arith.constant 0 : index
    %995 = vector.load %arg9[%c0_394, %c0_395] : memref<8x128xf32, #tpu.memory_space<vmem>>, vector<8x128xf32>
    %c0_396 = arith.constant 0 : index
    %c0_397 = arith.constant 0 : index
    %996 = vector.load %arg10[%c0_396, %c0_397] : memref<8x128xf32, #tpu.memory_space<vmem>>, vector<8x128xf32>
    %c14_398 = arith.constant 14 : index
    %c0_399 = arith.constant 0 : index
    %c0_400 = arith.constant 0 : index
    %997 = vector.load %arg1[%c14_398, %c0_399, %c0_400] : memref<16x8x64xbf16, #tpu.memory_space<vmem>>, vector<1x8x64xbf16>
    %998 = vector.shape_cast %997 : vector<1x8x64xbf16> to vector<8x64xbf16>
    %cst_401 = arith.constant dense<0.000000e+00> : vector<8x384xf32>
    %999 = tpu.matmul %998, %4, %cst_401 {dimension_numbers = #tpu.dot_dimension_numbers<[1], [0], [0], [1], [0, 0, 1, 1], [], []>} : vector<8x64xbf16>, vector<64x384xbf16>, vector<8x384xf32> -> vector<8x384xf32>
    %c1_402 = arith.constant 1 : index
    %c0_403 = arith.constant 0 : index
    %c0_404 = arith.constant 0 : index
    %1000 = vector.load %arg2[%c1_402, %c0_403, %c0_404] : memref<16x8x64xbf16, #tpu.memory_space<vmem>>, vector<1x8x64xbf16>
    %1001 = vector.shape_cast %1000 : vector<1x8x64xbf16> to vector<8x64xbf16>
    %cst_405 = arith.constant dense<0.000000e+00> : vector<8x384xf32>
    %1002 = tpu.matmul %1001, %6, %cst_405 {dimension_numbers = #tpu.dot_dimension_numbers<[1], [0], [0], [1], [0, 0, 1, 1], [], []>} : vector<8x64xbf16>, vector<64x384xbf16>, vector<8x384xf32> -> vector<8x384xf32>
    %1003 = arith.truncf %995 : vector<8x128xf32> to vector<8x128xbf16>
    %cst_406 = arith.constant dense<0.000000e+00> : vector<8x384xf32>
    %1004 = tpu.matmul %1003, %8, %cst_406 {dimension_numbers = #tpu.dot_dimension_numbers<[1], [0], [0], [1], [0, 0, 1, 1], [], []>} : vector<8x128xbf16>, vector<128x384xbf16>, vector<8x384xf32> -> vector<8x384xf32>
    %1005 = arith.truncf %996 : vector<8x128xf32> to vector<8x128xbf16>
    %cst_407 = arith.constant dense<0.000000e+00> : vector<8x384xf32>
    %1006 = tpu.matmul %1005, %10, %cst_407 {dimension_numbers = #tpu.dot_dimension_numbers<[1], [0], [0], [1], [0, 0, 1, 1], [], []>} : vector<8x128xbf16>, vector<128x384xbf16>, vector<8x384xf32> -> vector<8x384xf32>
    %1007 = arith.addf %999, %12 : vector<8x384xf32>
    %1008 = arith.addf %1002, %14 : vector<8x384xf32>
    %1009 = vector.extract_strided_slice %1007 {offsets = [0, 0], sizes = [8, 128], strides = [1, 1]} : vector<8x384xf32> to vector<8x128xf32>
    %1010 = vector.extract_strided_slice %1004 {offsets = [0, 0], sizes = [8, 128], strides = [1, 1]} : vector<8x384xf32> to vector<8x128xf32>
    %1011 = arith.addf %1009, %1010 : vector<8x128xf32>
    %1012 = arith.negf %1011 : vector<8x128xf32>
    %1013 = math.exp %1012 : vector<8x128xf32>
    %cst_408 = arith.constant 1.000000e+00 : f32
    %1014 = vector.broadcast %cst_408 : f32 to vector<8x128xf32>
    %1015 = arith.addf %1014, %1013 : vector<8x128xf32>
    %1016 = arith.divf %1014, %1015 : vector<8x128xf32>
    %1017 = vector.extract_strided_slice %1007 {offsets = [0, 128], sizes = [8, 128], strides = [1, 1]} : vector<8x384xf32> to vector<8x128xf32>
    %1018 = vector.extract_strided_slice %1004 {offsets = [0, 128], sizes = [8, 128], strides = [1, 1]} : vector<8x384xf32> to vector<8x128xf32>
    %1019 = arith.addf %1017, %1018 : vector<8x128xf32>
    %1020 = arith.negf %1019 : vector<8x128xf32>
    %1021 = math.exp %1020 : vector<8x128xf32>
    %cst_409 = arith.constant 1.000000e+00 : f32
    %1022 = vector.broadcast %cst_409 : f32 to vector<8x128xf32>
    %1023 = arith.addf %1022, %1021 : vector<8x128xf32>
    %1024 = arith.divf %1022, %1023 : vector<8x128xf32>
    %1025 = vector.extract_strided_slice %1007 {offsets = [0, 256], sizes = [8, 128], strides = [1, 1]} : vector<8x384xf32> to vector<8x128xf32>
    %1026 = vector.extract_strided_slice %1004 {offsets = [0, 256], sizes = [8, 128], strides = [1, 1]} : vector<8x384xf32> to vector<8x128xf32>
    %1027 = arith.mulf %1016, %1026 : vector<8x128xf32>
    %1028 = arith.addf %1025, %1027 : vector<8x128xf32>
    %1029 = math.tanh %1028 : vector<8x128xf32>
    %1030 = arith.subf %995, %1029 : vector<8x128xf32>
    %1031 = arith.mulf %1024, %1030 : vector<8x128xf32>
    %1032 = arith.addf %1029, %1031 : vector<8x128xf32>
    %1033 = vector.extract_strided_slice %1008 {offsets = [0, 0], sizes = [8, 128], strides = [1, 1]} : vector<8x384xf32> to vector<8x128xf32>
    %1034 = vector.extract_strided_slice %1006 {offsets = [0, 0], sizes = [8, 128], strides = [1, 1]} : vector<8x384xf32> to vector<8x128xf32>
    %1035 = arith.addf %1033, %1034 : vector<8x128xf32>
    %1036 = arith.negf %1035 : vector<8x128xf32>
    %1037 = math.exp %1036 : vector<8x128xf32>
    %cst_410 = arith.constant 1.000000e+00 : f32
    %1038 = vector.broadcast %cst_410 : f32 to vector<8x128xf32>
    %1039 = arith.addf %1038, %1037 : vector<8x128xf32>
    %1040 = arith.divf %1038, %1039 : vector<8x128xf32>
    %1041 = vector.extract_strided_slice %1008 {offsets = [0, 128], sizes = [8, 128], strides = [1, 1]} : vector<8x384xf32> to vector<8x128xf32>
    %1042 = vector.extract_strided_slice %1006 {offsets = [0, 128], sizes = [8, 128], strides = [1, 1]} : vector<8x384xf32> to vector<8x128xf32>
    %1043 = arith.addf %1041, %1042 : vector<8x128xf32>
    %1044 = arith.negf %1043 : vector<8x128xf32>
    %1045 = math.exp %1044 : vector<8x128xf32>
    %cst_411 = arith.constant 1.000000e+00 : f32
    %1046 = vector.broadcast %cst_411 : f32 to vector<8x128xf32>
    %1047 = arith.addf %1046, %1045 : vector<8x128xf32>
    %1048 = arith.divf %1046, %1047 : vector<8x128xf32>
    %1049 = vector.extract_strided_slice %1008 {offsets = [0, 256], sizes = [8, 128], strides = [1, 1]} : vector<8x384xf32> to vector<8x128xf32>
    %1050 = vector.extract_strided_slice %1006 {offsets = [0, 256], sizes = [8, 128], strides = [1, 1]} : vector<8x384xf32> to vector<8x128xf32>
    %1051 = arith.mulf %1040, %1050 : vector<8x128xf32>
    %1052 = arith.addf %1049, %1051 : vector<8x128xf32>
    %1053 = math.tanh %1052 : vector<8x128xf32>
    %1054 = arith.subf %996, %1053 : vector<8x128xf32>
    %1055 = arith.mulf %1048, %1054 : vector<8x128xf32>
    %1056 = arith.addf %1053, %1055 : vector<8x128xf32>
    %c0_412 = arith.constant 0 : index
    %c0_413 = arith.constant 0 : index
    %1057 = vector.load %arg9[%c0_412, %c0_413] : memref<8x128xf32, #tpu.memory_space<vmem>>, vector<8x128xf32>
    tpu.vector_store %arg9[%c0_412, %c0_413], %1032 {strides = array<i32>} : memref<8x128xf32, #tpu.memory_space<vmem>>, vector<8x128xf32>,
    %c0_414 = arith.constant 0 : index
    %c0_415 = arith.constant 0 : index
    %1058 = vector.load %arg10[%c0_414, %c0_415] : memref<8x128xf32, #tpu.memory_space<vmem>>, vector<8x128xf32>
    tpu.vector_store %arg10[%c0_414, %c0_415], %1056 {strides = array<i32>} : memref<8x128xf32, #tpu.memory_space<vmem>>, vector<8x128xf32>,
    %c0_416 = arith.constant 0 : index
    %c14_417 = arith.constant 14 : index
    %c0_418 = arith.constant 0 : index
    %1059 = vector.load %arg6[%c0_416, %c14_417, %c0_418] : memref<8x16x128xf32, #tpu.memory_space<vmem>>, vector<8x1x128xf32>
    %1060 = vector.shape_cast %1059 : vector<8x1x128xf32> to vector<8x128xf32>
    %1061 = vector.shape_cast %1032 : vector<8x128xf32> to vector<8x1x128xf32>
    tpu.vector_store %arg6[%c0_416, %c14_417, %c0_418], %1061 {strides = array<i32>} : memref<8x16x128xf32, #tpu.memory_space<vmem>>, vector<8x1x128xf32>,
    %c0_419 = arith.constant 0 : index
    %c1_420 = arith.constant 1 : index
    %c0_421 = arith.constant 0 : index
    %1062 = vector.load %arg7[%c0_419, %c1_420, %c0_421] : memref<8x16x128xf32, #tpu.memory_space<vmem>>, vector<8x1x128xf32>
    %1063 = vector.shape_cast %1062 : vector<8x1x128xf32> to vector<8x128xf32>
    %1064 = vector.shape_cast %1056 : vector<8x128xf32> to vector<8x1x128xf32>
    tpu.vector_store %arg7[%c0_419, %c1_420, %c0_421], %1064 {strides = array<i32>} : memref<8x16x128xf32, #tpu.memory_space<vmem>>, vector<8x1x128xf32>,
    %c0_422 = arith.constant 0 : index
    %c0_423 = arith.constant 0 : index
    %1065 = vector.load %arg9[%c0_422, %c0_423] : memref<8x128xf32, #tpu.memory_space<vmem>>, vector<8x128xf32>
    %c0_424 = arith.constant 0 : index
    %c0_425 = arith.constant 0 : index
    %1066 = vector.load %arg10[%c0_424, %c0_425] : memref<8x128xf32, #tpu.memory_space<vmem>>, vector<8x128xf32>
    %c15_426 = arith.constant 15 : index
    %c0_427 = arith.constant 0 : index
    %c0_428 = arith.constant 0 : index
    %1067 = vector.load %arg1[%c15_426, %c0_427, %c0_428] : memref<16x8x64xbf16, #tpu.memory_space<vmem>>, vector<1x8x64xbf16>
    %1068 = vector.shape_cast %1067 : vector<1x8x64xbf16> to vector<8x64xbf16>
    %cst_429 = arith.constant dense<0.000000e+00> : vector<8x384xf32>
    %1069 = tpu.matmul %1068, %4, %cst_429 {dimension_numbers = #tpu.dot_dimension_numbers<[1], [0], [0], [1], [0, 0, 1, 1], [], []>} : vector<8x64xbf16>, vector<64x384xbf16>, vector<8x384xf32> -> vector<8x384xf32>
    %c0_430 = arith.constant 0 : index
    %c0_431 = arith.constant 0 : index
    %c0_432 = arith.constant 0 : index
    %1070 = vector.load %arg2[%c0_430, %c0_431, %c0_432] : memref<16x8x64xbf16, #tpu.memory_space<vmem>>, vector<1x8x64xbf16>
    %1071 = vector.shape_cast %1070 : vector<1x8x64xbf16> to vector<8x64xbf16>
    %cst_433 = arith.constant dense<0.000000e+00> : vector<8x384xf32>
    %1072 = tpu.matmul %1071, %6, %cst_433 {dimension_numbers = #tpu.dot_dimension_numbers<[1], [0], [0], [1], [0, 0, 1, 1], [], []>} : vector<8x64xbf16>, vector<64x384xbf16>, vector<8x384xf32> -> vector<8x384xf32>
    %1073 = arith.truncf %1065 : vector<8x128xf32> to vector<8x128xbf16>
    %cst_434 = arith.constant dense<0.000000e+00> : vector<8x384xf32>
    %1074 = tpu.matmul %1073, %8, %cst_434 {dimension_numbers = #tpu.dot_dimension_numbers<[1], [0], [0], [1], [0, 0, 1, 1], [], []>} : vector<8x128xbf16>, vector<128x384xbf16>, vector<8x384xf32> -> vector<8x384xf32>
    %1075 = arith.truncf %1066 : vector<8x128xf32> to vector<8x128xbf16>
    %cst_435 = arith.constant dense<0.000000e+00> : vector<8x384xf32>
    %1076 = tpu.matmul %1075, %10, %cst_435 {dimension_numbers = #tpu.dot_dimension_numbers<[1], [0], [0], [1], [0, 0, 1, 1], [], []>} : vector<8x128xbf16>, vector<128x384xbf16>, vector<8x384xf32> -> vector<8x384xf32>
    %1077 = arith.addf %1069, %12 : vector<8x384xf32>
    %1078 = arith.addf %1072, %14 : vector<8x384xf32>
    %1079 = vector.extract_strided_slice %1077 {offsets = [0, 0], sizes = [8, 128], strides = [1, 1]} : vector<8x384xf32> to vector<8x128xf32>
    %1080 = vector.extract_strided_slice %1074 {offsets = [0, 0], sizes = [8, 128], strides = [1, 1]} : vector<8x384xf32> to vector<8x128xf32>
    %1081 = arith.addf %1079, %1080 : vector<8x128xf32>
    %1082 = arith.negf %1081 : vector<8x128xf32>
    %1083 = math.exp %1082 : vector<8x128xf32>
    %cst_436 = arith.constant 1.000000e+00 : f32
    %1084 = vector.broadcast %cst_436 : f32 to vector<8x128xf32>
    %1085 = arith.addf %1084, %1083 : vector<8x128xf32>
    %1086 = arith.divf %1084, %1085 : vector<8x128xf32>
    %1087 = vector.extract_strided_slice %1077 {offsets = [0, 128], sizes = [8, 128], strides = [1, 1]} : vector<8x384xf32> to vector<8x128xf32>
    %1088 = vector.extract_strided_slice %1074 {offsets = [0, 128], sizes = [8, 128], strides = [1, 1]} : vector<8x384xf32> to vector<8x128xf32>
    %1089 = arith.addf %1087, %1088 : vector<8x128xf32>
    %1090 = arith.negf %1089 : vector<8x128xf32>
    %1091 = math.exp %1090 : vector<8x128xf32>
    %cst_437 = arith.constant 1.000000e+00 : f32
    %1092 = vector.broadcast %cst_437 : f32 to vector<8x128xf32>
    %1093 = arith.addf %1092, %1091 : vector<8x128xf32>
    %1094 = arith.divf %1092, %1093 : vector<8x128xf32>
    %1095 = vector.extract_strided_slice %1077 {offsets = [0, 256], sizes = [8, 128], strides = [1, 1]} : vector<8x384xf32> to vector<8x128xf32>
    %1096 = vector.extract_strided_slice %1074 {offsets = [0, 256], sizes = [8, 128], strides = [1, 1]} : vector<8x384xf32> to vector<8x128xf32>
    %1097 = arith.mulf %1086, %1096 : vector<8x128xf32>
    %1098 = arith.addf %1095, %1097 : vector<8x128xf32>
    %1099 = math.tanh %1098 : vector<8x128xf32>
    %1100 = arith.subf %1065, %1099 : vector<8x128xf32>
    %1101 = arith.mulf %1094, %1100 : vector<8x128xf32>
    %1102 = arith.addf %1099, %1101 : vector<8x128xf32>
    %1103 = vector.extract_strided_slice %1078 {offsets = [0, 0], sizes = [8, 128], strides = [1, 1]} : vector<8x384xf32> to vector<8x128xf32>
    %1104 = vector.extract_strided_slice %1076 {offsets = [0, 0], sizes = [8, 128], strides = [1, 1]} : vector<8x384xf32> to vector<8x128xf32>
    %1105 = arith.addf %1103, %1104 : vector<8x128xf32>
    %1106 = arith.negf %1105 : vector<8x128xf32>
    %1107 = math.exp %1106 : vector<8x128xf32>
    %cst_438 = arith.constant 1.000000e+00 : f32
    %1108 = vector.broadcast %cst_438 : f32 to vector<8x128xf32>
    %1109 = arith.addf %1108, %1107 : vector<8x128xf32>
    %1110 = arith.divf %1108, %1109 : vector<8x128xf32>
    %1111 = vector.extract_strided_slice %1078 {offsets = [0, 128], sizes = [8, 128], strides = [1, 1]} : vector<8x384xf32> to vector<8x128xf32>
    %1112 = vector.extract_strided_slice %1076 {offsets = [0, 128], sizes = [8, 128], strides = [1, 1]} : vector<8x384xf32> to vector<8x128xf32>
    %1113 = arith.addf %1111, %1112 : vector<8x128xf32>
    %1114 = arith.negf %1113 : vector<8x128xf32>
    %1115 = math.exp %1114 : vector<8x128xf32>
    %cst_439 = arith.constant 1.000000e+00 : f32
    %1116 = vector.broadcast %cst_439 : f32 to vector<8x128xf32>
    %1117 = arith.addf %1116, %1115 : vector<8x128xf32>
    %1118 = arith.divf %1116, %1117 : vector<8x128xf32>
    %1119 = vector.extract_strided_slice %1078 {offsets = [0, 256], sizes = [8, 128], strides = [1, 1]} : vector<8x384xf32> to vector<8x128xf32>
    %1120 = vector.extract_strided_slice %1076 {offsets = [0, 256], sizes = [8, 128], strides = [1, 1]} : vector<8x384xf32> to vector<8x128xf32>
    %1121 = arith.mulf %1110, %1120 : vector<8x128xf32>
    %1122 = arith.addf %1119, %1121 : vector<8x128xf32>
    %1123 = math.tanh %1122 : vector<8x128xf32>
    %1124 = arith.subf %1066, %1123 : vector<8x128xf32>
    %1125 = arith.mulf %1118, %1124 : vector<8x128xf32>
    %1126 = arith.addf %1123, %1125 : vector<8x128xf32>
    %c0_440 = arith.constant 0 : index
    %c0_441 = arith.constant 0 : index
    %1127 = vector.load %arg9[%c0_440, %c0_441] : memref<8x128xf32, #tpu.memory_space<vmem>>, vector<8x128xf32>
    tpu.vector_store %arg9[%c0_440, %c0_441], %1102 {strides = array<i32>} : memref<8x128xf32, #tpu.memory_space<vmem>>, vector<8x128xf32>,
    %c0_442 = arith.constant 0 : index
    %c0_443 = arith.constant 0 : index
    %1128 = vector.load %arg10[%c0_442, %c0_443] : memref<8x128xf32, #tpu.memory_space<vmem>>, vector<8x128xf32>
    tpu.vector_store %arg10[%c0_442, %c0_443], %1126 {strides = array<i32>} : memref<8x128xf32, #tpu.memory_space<vmem>>, vector<8x128xf32>,
    %c0_444 = arith.constant 0 : index
    %c15_445 = arith.constant 15 : index
    %c0_446 = arith.constant 0 : index
    %1129 = vector.load %arg6[%c0_444, %c15_445, %c0_446] : memref<8x16x128xf32, #tpu.memory_space<vmem>>, vector<8x1x128xf32>
    %1130 = vector.shape_cast %1129 : vector<8x1x128xf32> to vector<8x128xf32>
    %1131 = vector.shape_cast %1102 : vector<8x128xf32> to vector<8x1x128xf32>
    tpu.vector_store %arg6[%c0_444, %c15_445, %c0_446], %1131 {strides = array<i32>} : memref<8x16x128xf32, #tpu.memory_space<vmem>>, vector<8x1x128xf32>,
    %c0_447 = arith.constant 0 : index
    %c0_448 = arith.constant 0 : index
    %c0_449 = arith.constant 0 : index
    %1132 = vector.load %arg7[%c0_447, %c0_448, %c0_449] : memref<8x16x128xf32, #tpu.memory_space<vmem>>, vector<8x1x128xf32>
    %1133 = vector.shape_cast %1132 : vector<8x1x128xf32> to vector<8x128xf32>
    %1134 = vector.shape_cast %1126 : vector<8x128xf32> to vector<8x1x128xf32>
    tpu.vector_store %arg7[%c0_447, %c0_448, %c0_449], %1134 {strides = array<i32>} : memref<8x16x128xf32, #tpu.memory_space<vmem>>, vector<8x1x128xf32>,
    %c0_450 = arith.constant 0 : index
    %c0_451 = arith.constant 0 : index
    %1135 = vector.load %arg9[%c0_450, %c0_451] : memref<8x128xf32, #tpu.memory_space<vmem>>, vector<8x128xf32>
    %c0_452 = arith.constant 0 : index
    %c0_453 = arith.constant 0 : index
    %c0_454 = arith.constant 0 : index
    %1136 = vector.load %arg8[%c0_452, %c0_453, %c0_454] : memref<2x8x128xf32, #tpu.memory_space<vmem>>, vector<1x8x128xf32>
    %1137 = vector.shape_cast %1136 : vector<1x8x128xf32> to vector<8x128xf32>
    %1138 = vector.shape_cast %1135 : vector<8x128xf32> to vector<1x8x128xf32>
    tpu.vector_store %arg8[%c0_452, %c0_453, %c0_454], %1138 {strides = array<i32>} : memref<2x8x128xf32, #tpu.memory_space<vmem>>, vector<1x8x128xf32>,
    %c0_455 = arith.constant 0 : index
    %c0_456 = arith.constant 0 : index
    %1139 = vector.load %arg10[%c0_455, %c0_456] : memref<8x128xf32, #tpu.memory_space<vmem>>, vector<8x128xf32>
    %c1_457 = arith.constant 1 : index
    %c0_458 = arith.constant 0 : index
    %c0_459 = arith.constant 0 : index
    %1140 = vector.load %arg8[%c1_457, %c0_458, %c0_459] : memref<2x8x128xf32, #tpu.memory_space<vmem>>, vector<1x8x128xf32>
    %1141 = vector.shape_cast %1140 : vector<1x8x128xf32> to vector<8x128xf32>
    %1142 = vector.shape_cast %1139 : vector<8x128xf32> to vector<1x8x128xf32>
    tpu.vector_store %arg8[%c1_457, %c0_458, %c0_459], %1142 {strides = array<i32>} : memref<2x8x128xf32, #tpu.memory_space<vmem>>, vector<1x8x128xf32>,
    return
  }
  func.func @transform_0(%arg0: i32) -> (i32, i32, i32) {
    %c0_i32 = arith.constant 0 : i32
    %c0_i32_0 = arith.constant 0 : i32
    %c0_i32_1 = arith.constant 0 : i32
    return %arg0, %c0_i32, %c0_i32_0 : i32, i32, i32
  }
  func.func @transform_1(%arg0: i32) -> (i32, i32, i32) {
    %c0_i32 = arith.constant 0 : i32
    %0 = arith.subi %c0_i32, %arg0 : i32
    %c0_i32_0 = arith.constant 0 : i32
    %c0_i32_1 = arith.constant 0 : i32
    %c0_i32_2 = arith.constant 0 : i32
    return %0, %c0_i32_0, %c0_i32_1 : i32, i32, i32
  }
  func.func @transform_2(%arg0: i32) -> (i32, i32, i32) {
    %c0_i32 = arith.constant 0 : i32
    %c0_i32_0 = arith.constant 0 : i32
    %c0_i32_1 = arith.constant 0 : i32
    %c0_i32_2 = arith.constant 0 : i32
    return %c0_i32, %c0_i32_0, %c0_i32_1 : i32, i32, i32
  }
  func.func @transform_3(%arg0: i32) -> (i32, i32, i32) {
    %c0_i32 = arith.constant 0 : i32
    %c0_i32_0 = arith.constant 0 : i32
    %c0_i32_1 = arith.constant 0 : i32
    %c0_i32_2 = arith.constant 0 : i32
    return %c0_i32, %c0_i32_0, %c0_i32_1 : i32, i32, i32
  }
  func.func @transform_4(%arg0: i32) -> (i32, i32, i32) {
    %c0_i32 = arith.constant 0 : i32
    %c0_i32_0 = arith.constant 0 : i32
    %c0_i32_1 = arith.constant 0 : i32
    %c0_i32_2 = arith.constant 0 : i32
    return %c0_i32, %c0_i32_0, %c0_i32_1 : i32, i32, i32
  }
  func.func @transform_5(%arg0: i32) -> (i32, i32, i32) {
    %c0_i32 = arith.constant 0 : i32
    %c0_i32_0 = arith.constant 0 : i32
    %c0_i32_1 = arith.constant 0 : i32
    return %c0_i32, %arg0, %c0_i32_0 : i32, i32, i32
  }
  func.func @transform_6(%arg0: i32) -> (i32, i32, i32) {
    %c0_i32 = arith.constant 0 : i32
    %0 = arith.subi %c0_i32, %arg0 : i32
    %c0_i32_0 = arith.constant 0 : i32
    %c0_i32_1 = arith.constant 0 : i32
    %c0_i32_2 = arith.constant 0 : i32
    return %c0_i32_0, %0, %c0_i32_1 : i32, i32, i32
  }
  func.func @transform_7(%arg0: i32) -> (i32, i32, i32) {
    %c0_i32 = arith.constant 0 : i32
    %c0_i32_0 = arith.constant 0 : i32
    %c0_i32_1 = arith.constant 0 : i32
    %c0_i32_2 = arith.constant 0 : i32
    return %c0_i32, %c0_i32_0, %c0_i32_1 : i32, i32, i32
  }
}

</mosaic_0001>

<llo_original>
// kernel: tpu_custom_call.1
$region0: #{tpu_custom_call.1}
  #allocation0 [shape = 'u32[]', space=smem, size = 0x4, offset = 0x4, fixed_abs, tag = 'smem constant byte address 0x4 - core index']
  #allocation1 [shape = 'u32[144,128]{1,0:T(1,128)}', space=vmem, size = 0x12000, scoped, tag = 'internal scratch']
  #allocation2 [shape = 'f32[8,128]{1,0:T(8,128)}', space=vmem, size = 0x1000, scoped, tag = 'scratch operand']
  #allocation3 [shape = 'f32[8,128]{1,0:T(8,128)}', space=vmem, size = 0x1000, scoped, tag = 'scratch operand']
  %s0 = inlined_call_operand.hbm [shape: bf16[16,8,64], index: 0, kind: input, shape index: {}]
  %s1 = inlined_call_operand.hbm [shape: bf16[16,8,64], index: 1, kind: input, shape index: {}]
  %s2 = inlined_call_operand.hbm [shape: bf16[2,64,384], index: 2, kind: input, shape index: {}]
  %s3 = inlined_call_operand.hbm [shape: bf16[2,128,384], index: 3, kind: input, shape index: {}]
  %s4 = inlined_call_operand.hbm [shape: f32[2,8,384], index: 4, kind: input, shape index: {}]
  %s5 = inlined_call_operand.hbm [shape: f32[8,16,128], index: 5, kind: output, shape index: {0}]
  %s6 = inlined_call_operand.hbm [shape: f32[8,16,128], index: 6, kind: output, shape index: {1}]
  %s7 = inlined_call_operand.hbm [shape: f32[2,8,128], index: 7, kind: output, shape index: {2}]
  %8 = xla_tuple %s5, %s6, %s7
  %s9 = sld [smem:[#allocation0]]
  $region70: #{tpu_custom_call.1} parent=0
    _
  %s11 = ssub.s32 1, %s9
  %s12 = scalar_select 0, %s11, %s9
  $region1: #{tpu_custom_call.1} parent=0
    #allocation4 [shape = 'u8[32768]{0}', space=vmem, size = 0x8000, scoped, tag = 'input window, operand 0, single buffered']
    #allocation5 [shape = 's32[1]{0}', space=sflag, size = 0x4, scoped, tag = 'scoped memory for tpu_custom_call.1']
    #allocation6 [shape = 's32[1]{0}', space=sflag, size = 0x4, scoped, tag = 'scoped memory for tpu_custom_call.1']
    #allocation7 [shape = 'u8[32768]{0}', space=vmem, size = 0x8000, scoped, tag = 'input window, operand 1, single buffered']
    #allocation8 [shape = 's32[1]{0}', space=sflag, size = 0x4, scoped, tag = 'scoped memory for tpu_custom_call.1']
    #allocation9 [shape = 'u8[98304]{0}', space=vmem, size = 0x18000, scoped, tag = 'input window, operand 2, single buffered']
    #allocation10 [shape = 'u8[196608]{0}', space=vmem, size = 0x30000, scoped, tag = 'input window, operand 3, single buffered']
    #allocation11 [shape = 's32[1]{0}', space=sflag, size = 0x4, scoped, tag = 'scoped memory for tpu_custom_call.1']
    #allocation12 [shape = 'u8[24576]{0}', space=vmem, size = 0x6000, scoped, tag = 'input window, operand 4, single buffered']
    #allocation13 [shape = 'u8[65536]{0}', space=vmem, size = 0x10000, scoped, tag = 'output window, operand 0, single buffered']
    #allocation14 [shape = 'u8[65536]{0}', space=vmem, size = 0x10000, scoped, tag = 'output window, operand 1, single buffered']
    #allocation15 [shape = 's32[1]{0}', space=sflag, size = 0x4, scoped, tag = 'scoped memory for tpu_custom_call.1']
    #allocation16 [shape = 'u8[8192]{0}', space=vmem, size = 0x2000, scoped, tag = 'output window, operand 2, single buffered']
    %13 = vsyncpa [#allocation5], 0
    %14 = vsyncpa [#allocation8], 0
    %15 = vsyncpa [#allocation11], 0
    %16 = vsyncpa [#allocation6], 0
    %17 = vsyncpa [#allocation15], 0
    // Predicated region
    $region2: #{tpu_custom_call.1} parent=1 // pred_check
      _
    $region3: #{tpu_custom_call.1} parent=1 // pred_check_branch
      %19 = sbr.rel (0) target = $region5
    $region4: #{tpu_custom_call.1} parent=1 // pred_region
      %s21 = ssub.s32 1024, 1024
      %22 = vsyncadd [#allocation5], %s21
      %s23 = sshll.u32 [#allocation4], 4
      %s24 = int_to_ptr.vmem [resolvable:$true] %s23
      %29 = dma.hbm_to_vmem [thread:$0]  %s0, 1024, %s24, [#allocation5], 64, 64, 4
    $region5: #{tpu_custom_call.1} parent=1 // pred_fallthru
      _
    // Predicated region
    $region6: #{tpu_custom_call.1} parent=1 // pred_check
      _
    $region7: #{tpu_custom_call.1} parent=1 // pred_check_branch
      %31 = sbr.rel (0) target = $region9
    $region8: #{tpu_custom_call.1} parent=1 // pred_region
      %s32 = ssub.s32 0, 0
      %s33 = smul.u32 16, %s32
      %s35 = ssub.s32 1024, 1024
      %36 = vsyncadd [#allocation8], %s35
      %s37 = smul.addr %s33, 64
      %s38 = scalar_lea.hbm %s1, %s37
      %s39 = sshll.u32 [#allocation7], 4
      %s40 = int_to_ptr.vmem [resolvable:$true] %s39
      %45 = dma.hbm_to_vmem [thread:$0]  %s38, 1024, %s40, [#allocation8], 64, 64, 4
    $region9: #{tpu_custom_call.1} parent=1 // pred_fallthru
      _
    // Predicated region
    $region10: #{tpu_custom_call.1} parent=1 // pred_check
      _
    $region11: #{tpu_custom_call.1} parent=1 // pred_check_branch
      %47 = sbr.rel (0) target = $region13
    $region12: #{tpu_custom_call.1} parent=1 // pred_region
      %s49 = ssub.s32 3072, 3072
      %50 = vsyncadd [#allocation8], %s49
      %s51 = sshll.u32 [#allocation9], 4
      %s52 = int_to_ptr.vmem [resolvable:$true] %s51
      %57 = dma.hbm_to_vmem [thread:$0]  %s2, 3072, %s52, [#allocation8], 192, 192, 12
    $region13: #{tpu_custom_call.1} parent=1 // pred_fallthru
      _
    // Predicated region
    $region14: #{tpu_custom_call.1} parent=1 // pred_check
      _
    $region15: #{tpu_custom_call.1} parent=1 // pred_check_branch
      %59 = sbr.rel (0) target = $region17
    $region16: #{tpu_custom_call.1} parent=1 // pred_region
      %s61 = ssub.s32 6144, 6144
      %62 = vsyncadd [#allocation11], %s61
      %s63 = sshll.u32 [#allocation10], 4
      %s64 = int_to_ptr.vmem [resolvable:$true] %s63
      %69 = dma.hbm_to_vmem [thread:$0]  %s3, 6144, %s64, [#allocation11], 192, 192, 12
    $region17: #{tpu_custom_call.1} parent=1 // pred_fallthru
      _
    // Predicated region
    $region18: #{tpu_custom_call.1} parent=1 // pred_check
      _
    $region19: #{tpu_custom_call.1} parent=1 // pred_check_branch
      %71 = sbr.rel (0) target = $region21
    $region20: #{tpu_custom_call.1} parent=1 // pred_region
      %s73 = ssub.s32 768, 768
      %74 = vsyncadd [#allocation11], %s73
      %s75 = sshll.u32 [#allocation12], 4
      %s76 = int_to_ptr.vmem [resolvable:$true] %s75
      %81 = dma.hbm_to_vmem [thread:$0]  %s4, 768, %s76, [#allocation11], 384, 384, 24
    $region21: #{tpu_custom_call.1} parent=1 // pred_fallthru
      _
    // Predicated region
    $region22: #{tpu_custom_call.1} parent=1 // pred_check
      _
    $region23: #{tpu_custom_call.1} parent=1 // pred_check_branch
      %83 = sbr.rel (0) target = $region25
    $region24: #{tpu_custom_call.1} parent=1 // pred_region
      %84 = dma.done [#allocation5], 1024
    $region25: #{tpu_custom_call.1} parent=1 // pred_fallthru
      _
    // Predicated region
    $region26: #{tpu_custom_call.1} parent=1 // pred_check
      _
    $region27: #{tpu_custom_call.1} parent=1 // pred_check_branch
      %86 = sbr.rel (0) target = $region29
    $region28: #{tpu_custom_call.1} parent=1 // pred_region
      %87 = dma.done [#allocation8], 1024
    $region29: #{tpu_custom_call.1} parent=1 // pred_fallthru
      _
    // Predicated region
    $region30: #{tpu_custom_call.1} parent=1 // pred_check
      _
    $region31: #{tpu_custom_call.1} parent=1 // pred_check_branch
      %89 = sbr.rel (0) target = $region33
    $region32: #{tpu_custom_call.1} parent=1 // pred_region
      %90 = dma.done [#allocation8], 3072
    $region33: #{tpu_custom_call.1} parent=1 // pred_fallthru
      _
    // Predicated region
    $region34: #{tpu_custom_call.1} parent=1 // pred_check
      _
    $region35: #{tpu_custom_call.1} parent=1 // pred_check_branch
      %92 = sbr.rel (0) target = $region37
    $region36: #{tpu_custom_call.1} parent=1 // pred_region
      %93 = dma.done [#allocation11], 6144
    $region37: #{tpu_custom_call.1} parent=1 // pred_fallthru
      _
    // Predicated region
    $region38: #{tpu_custom_call.1} parent=1 // pred_check
      _
    $region39: #{tpu_custom_call.1} parent=1 // pred_check_branch
      %95 = sbr.rel (0) target = $region41
    $region40: #{tpu_custom_call.1} parent=1 // pred_region
      %96 = dma.done [#allocation11], 768
    $region41: #{tpu_custom_call.1} parent=1 // pred_fallthru
      _
    %s97 = ssub.s32 0, 0
    %s98 = smul.u32 16, %s97
    %s99 = ssub.s32 0, 0
    %s100 = smul.u32 2, %s99
    %p102 = scmp.eq.s32.totalorder 0, 0
    // Predicated region
    $region42: #{tpu_custom_call.1} parent=1 // pred_check
      %p103 = pneg %p102
    $region43: #{tpu_custom_call.1} parent=1 // pred_check_branch
      %105 = sbr.rel (%p103) target = $region45
    $region44: #{tpu_custom_call.1} parent=1 // pred_region
      %106 = vst [vmem:[#allocation2] sm:$0xff] 0.0
      %107 = vst [vmem:[#allocation3] sm:$0xff] 0.0
    $region45: #{tpu_custom_call.1} parent=1 // pred_fallthru
      _
    %v108 = vld [vmem:[#allocation9] sm:$0xff]
    %v109 = vld [vmem:[#allocation9 + $0x8] sm:$0xf]
    %v110 = vld [vmem:[#allocation9 + $0xc] sm:$0xff]
    %v111 = vld [vmem:[#allocation9 + $0x14] sm:$0xf]
    %v112 = vld [vmem:[#allocation9 + $0x18] sm:$0xff]
    %v113 = vld [vmem:[#allocation9 + $0x20] sm:$0xf]
    %v114 = vld [vmem:[#allocation9 + $0x24] sm:$0xff]
    %v115 = vld [vmem:[#allocation9 + $0x2c] sm:$0xf]
    %v116 = vld [vmem:[#allocation9 + $0x30] sm:$0xff]
    %v117 = vld [vmem:[#allocation9 + $0x38] sm:$0xf]
    %v118 = vld [vmem:[#allocation9 + $0x3c] sm:$0xff]
    %v119 = vld [vmem:[#allocation9 + $0x44] sm:$0xf]
    %v120 = vld [vmem:[#allocation9 + $0x48] sm:$0xff]
    %v121 = vld [vmem:[#allocation9 + $0x50] sm:$0xf]
    %v122 = vld [vmem:[#allocation9 + $0x54] sm:$0xff]
    %v123 = vld [vmem:[#allocation9 + $0x5c] sm:$0xf]
    %s124 = scalar_lea.vmem [#allocation9], 96
    %v125 = vld [vmem:[%s124] sm:$0xff]
    %v126 = vld [vmem:[%s124 + $0x8] sm:$0xf]
    %v127 = vld [vmem:[%s124 + $0xc] sm:$0xff]
    %v128 = vld [vmem:[%s124 + $0x14] sm:$0xf]
    %v129 = vld [vmem:[%s124 + $0x18] sm:$0xff]
    %v130 = vld [vmem:[%s124 + $0x20] sm:$0xf]
    %v131 = vld [vmem:[%s124 + $0x24] sm:$0xff]
    %v132 = vld [vmem:[%s124 + $0x2c] sm:$0xf]
    %v133 = vld [vmem:[%s124 + $0x30] sm:$0xff]
    %v134 = vld [vmem:[%s124 + $0x38] sm:$0xf]
    %v135 = vld [vmem:[%s124 + $0x3c] sm:$0xff]
    %v136 = vld [vmem:[%s124 + $0x44] sm:$0xf]
    %v137 = vld [vmem:[%s124 + $0x48] sm:$0xff]
    %v138 = vld [vmem:[%s124 + $0x50] sm:$0xf]
    %v139 = vld [vmem:[%s124 + $0x54] sm:$0xff]
    %v140 = vld [vmem:[%s124 + $0x5c] sm:$0xf]
    %v141 = vld [vmem:[#allocation10] sm:$0xff]
    %v142 = vld [vmem:[#allocation10 + $0x8] sm:$0xf]
    %v143 = vld [vmem:[#allocation10 + $0xc] sm:$0xff]
    %v144 = vld [vmem:[#allocation10 + $0x14] sm:$0xf]
    %v145 = vld [vmem:[#allocation10 + $0x18] sm:$0xff]
    %v146 = vld [vmem:[#allocation10 + $0x20] sm:$0xf]
    %v147 = vld [vmem:[#allocation10 + $0x24] sm:$0xff]
    %v148 = vld [vmem:[#allocation10 + $0x2c] sm:$0xf]
    %v149 = vld [vmem:[#allocation10 + $0x30] sm:$0xff]
    %v150 = vld [vmem:[#allocation10 + $0x38] sm:$0xf]
    %v151 = vld [vmem:[#allocation10 + $0x3c] sm:$0xff]
    %v152 = vld [vmem:[#allocation10 + $0x44] sm:$0xf]
    %v153 = vld [vmem:[#allocation10 + $0x48] sm:$0xff]
    %v154 = vld [vmem:[#allocation10 + $0x50] sm:$0xf]
    %v155 = vld [vmem:[#allocation10 + $0x54] sm:$0xff]
    %v156 = vld [vmem:[#allocation10 + $0x5c] sm:$0xf]
    %v157 = vld [vmem:[#allocation10 + $0x60] sm:$0xff]
    %v158 = vld [vmem:[#allocation10 + $0x68] sm:$0xf]
    %v159 = vld [vmem:[#allocation10 + $0x6c] sm:$0xff]
    %v160 = vld [vmem:[#allocation10 + $0x74] sm:$0xf]
    %v161 = vld [vmem:[#allocation10 + $0x78] sm:$0xff]
    %v162 = vld [vmem:[#allocation10 + $0x80] sm:$0xf]
    %v163 = vld [vmem:[#allocation10 + $0x84] sm:$0xff]
    %v164 = vld [vmem:[#allocation10 + $0x8c] sm:$0xf]
    %v165 = vld [vmem:[#allocation10 + $0x90] sm:$0xff]
    %v166 = vld [vmem:[#allocation10 + $0x98] sm:$0xf]
    %v167 = vld [vmem:[#allocation10 + $0x9c] sm:$0xff]
    %v168 = vld [vmem:[#allocation10 + $0xa4] sm:$0xf]
    %v169 = vld [vmem:[#allocation10 + $0xa8] sm:$0xff]
    %v170 = vld [vmem:[#allocation10 + $0xb0] sm:$0xf]
    %v171 = vld [vmem:[#allocation10 + $0xb4] sm:$0xff]
    %v172 = vld [vmem:[#allocation10 + $0xbc] sm:$0xf]
    %s173 = scalar_lea.vmem [#allocation10], 192
    %v174 = vld [vmem:[%s173] sm:$0xff]
    %v175 = vld [vmem:[%s173 + $0x8] sm:$0xf]
    %v176 = vld [vmem:[%s173 + $0xc] sm:$0xff]
    %v177 = vld [vmem:[%s173 + $0x14] sm:$0xf]
    %v178 = vld [vmem:[%s173 + $0x18] sm:$0xff]
    %v179 = vld [vmem:[%s173 + $0x20] sm:$0xf]
    %v180 = vld [vmem:[%s173 + $0x24] sm:$0xff]
    %v181 = vld [vmem:[%s173 + $0x2c] sm:$0xf]
    %v182 = vld [vmem:[%s173 + $0x30] sm:$0xff]
    %v183 = vld [vmem:[%s173 + $0x38] sm:$0xf]
    %v184 = vld [vmem:[%s173 + $0x3c] sm:$0xff]
    %v185 = vld [vmem:[%s173 + $0x44] sm:$0xf]
    %v186 = vld [vmem:[%s173 + $0x48] sm:$0xff]
    %v187 = vld [vmem:[%s173 + $0x50] sm:$0xf]
    %v188 = vld [vmem:[%s173 + $0x54] sm:$0xff]
    %v189 = vld [vmem:[%s173 + $0x5c] sm:$0xf]
    %v190 = vld [vmem:[%s173 + $0x60] sm:$0xff]
    %v191 = vld [vmem:[%s173 + $0x68] sm:$0xf]
    %v192 = vld [vmem:[%s173 + $0x6c] sm:$0xff]
    %v193 = vld [vmem:[%s173 + $0x74] sm:$0xf]
    %v194 = vld [vmem:[%s173 + $0x78] sm:$0xff]
    %v195 = vld [vmem:[%s173 + $0x80] sm:$0xf]
    %v196 = vld [vmem:[%s173 + $0x84] sm:$0xff]
    %v197 = vld [vmem:[%s173 + $0x8c] sm:$0xf]
    %v198 = vld [vmem:[%s173 + $0x90] sm:$0xff]
    %v199 = vld [vmem:[%s173 + $0x98] sm:$0xf]
    %v200 = vld [vmem:[%s173 + $0x9c] sm:$0xff]
    %v201 = vld [vmem:[%s173 + $0xa4] sm:$0xf]
    %v202 = vld [vmem:[%s173 + $0xa8] sm:$0xff]
    %v203 = vld [vmem:[%s173 + $0xb0] sm:$0xf]
    %v204 = vld [vmem:[%s173 + $0xb4] sm:$0xff]
    %v205 = vld [vmem:[%s173 + $0xbc] sm:$0xf]
    %v206 = vld [vmem:[#allocation12] sm:$0xff]
    %v207 = vld [vmem:[#allocation12 + $0x8] sm:$0xff]
    %v208 = vld [vmem:[#allocation12 + $0x10] sm:$0xff]
    %s209 = scalar_lea.vmem [#allocation12], 24
    %v210 = vld [vmem:[%s209] sm:$0xff]
    %v211 = vld [vmem:[%s209 + $0x8] sm:$0xff]
    %v212 = vld [vmem:[%s209 + $0x10] sm:$0xff]
    %v213 = vld [vmem:[#allocation2] sm:$0xff]
    %v214 = vld [vmem:[#allocation3] sm:$0xff]
    %v215 = vld [vmem:[#allocation4] sm:$0xf]
    %s216 = scalar_lea.vmem [#allocation7], 60
    %v217 = vld [vmem:[%s216] sm:$0xf]
    %v218 = vpack.c.bf16 %v213, %v213
    %v251 = vunpack.c.l.b16 %v141
    %v252 = vunpack.c.h.b16 %v141
    %v253 = vunpack.c.l.b16 %v142
    %v254 = vunpack.c.l.b16 %v143
    %v255 = vunpack.c.h.b16 %v143
    %v256 = vunpack.c.l.b16 %v144
    %v257 = vunpack.c.l.b16 %v145
    %v258 = vunpack.c.h.b16 %v145
    %v259 = vunpack.c.l.b16 %v146
    %v260 = vunpack.c.l.b16 %v147
    %v261 = vunpack.c.h.b16 %v147
    %v262 = vunpack.c.l.b16 %v148
    %v263 = vunpack.c.l.b16 %v149
    %v264 = vunpack.c.h.b16 %v149
    %v265 = vunpack.c.l.b16 %v150
    %v266 = vunpack.c.l.b16 %v151
    %v267 = vunpack.c.h.b16 %v151
    %v268 = vunpack.c.l.b16 %v152
    %v269 = vunpack.c.l.b16 %v153
    %v270 = vunpack.c.h.b16 %v153
    %v271 = vunpack.c.l.b16 %v154
    %v272 = vunpack.c.l.b16 %v155
    %v273 = vunpack.c.h.b16 %v155
    %v274 = vunpack.c.l.b16 %v156
    %v275 = vunpack.c.l.b16 %v157
    %v276 = vunpack.c.h.b16 %v157
    %v277 = vunpack.c.l.b16 %v158
    %v278 = vunpack.c.l.b16 %v159
    %v279 = vunpack.c.h.b16 %v159
    %v280 = vunpack.c.l.b16 %v160
    %v281 = vunpack.c.l.b16 %v161
    %v282 = vunpack.c.h.b16 %v161
    %v283 = vunpack.c.l.b16 %v162
    %v284 = vunpack.c.l.b16 %v163
    %v285 = vunpack.c.h.b16 %v163
    %v286 = vunpack.c.l.b16 %v164
    %v287 = vunpack.c.l.b16 %v165
    %v288 = vunpack.c.h.b16 %v165
    %v289 = vunpack.c.l.b16 %v166
    %v290 = vunpack.c.l.b16 %v167
    %v291 = vunpack.c.h.b16 %v167
    %v292 = vunpack.c.l.b16 %v168
    %v293 = vunpack.c.l.b16 %v169
    %v294 = vunpack.c.h.b16 %v169
    %v295 = vunpack.c.l.b16 %v170
    %v296 = vunpack.c.l.b16 %v171
    %v297 = vunpack.c.h.b16 %v171
    %v298 = vunpack.c.l.b16 %v172
    %v299 = vpack.c.b16 %v254, %v251
    %v300 = vpack.c.b16 %v255, %v252
    %v301 = vpack.c.b16 %v256, %v253
    %v302 = vpack.c.b16 %v260, %v257
    %v303 = vpack.c.b16 %v261, %v258
    %v304 = vpack.c.b16 %v262, %v259
    %v305 = vpack.c.b16 %v266, %v263
    %v306 = vpack.c.b16 %v267, %v264
    %v307 = vpack.c.b16 %v268, %v265
    %v308 = vpack.c.b16 %v272, %v269
    %v309 = vpack.c.b16 %v273, %v270
    %v310 = vpack.c.b16 %v274, %v271
    %v311 = vpack.c.b16 %v278, %v275
    %v312 = vpack.c.b16 %v279, %v276
    %v313 = vpack.c.b16 %v280, %v277
    %v314 = vpack.c.b16 %v284, %v281
    %v315 = vpack.c.b16 %v285, %v282
    %v316 = vpack.c.b16 %v286, %v283
    %v317 = vpack.c.b16 %v290, %v287
    %v318 = vpack.c.b16 %v291, %v288
    %v319 = vpack.c.b16 %v292, %v289
    %v320 = vpack.c.b16 %v296, %v293
    %v321 = vpack.c.b16 %v297, %v294
    %v322 = vpack.c.b16 %v298, %v295
    %347 = vmatprep.subr.bf16.mxu0 %v300
    %348 = vmatpush1.bf16.msra.mxu0 %v299
    %349 = vmatprep.subr.bf16.mxu0 %v303
    %350 = vmatpush1.bf16.msra.mxu0 %v302
    %351 = vmatprep.subr.bf16.mxu0 %v306
    %352 = vmatpush1.bf16.msra.mxu0 %v305
    %353 = vmatprep.subr.bf16.mxu0 %v309
    %354 = vmatpush1.bf16.msra.mxu0 %v308
    %355 = vmatprep.subr.bf16.mxu0 %v312
    %356 = vmatpush1.bf16.msra.mxu0 %v311
    %357 = vmatprep.subr.bf16.mxu0 %v315
    %358 = vmatpush1.bf16.msra.mxu0 %v314
    %359 = vmatprep.subr.bf16.mxu0 %v318
    %360 = vmatpush1.bf16.msra.mxu0 %v317
    %361 = vmatprep.subr.bf16.mxu0 %v321
    %362 = vmatpush1.bf16.msra.mxu0 %v320
    %363 = vmatprep.subr.bf16.mxu0 0
    %364 = vmatpush1.bf16.msra.mxu0 0
    %365 = vmatprep.subr.bf16.mxu0 0
    %366 = vmatpush1.bf16.msra.mxu0 0
    %367 = vmatprep.subr.bf16.mxu0 0
    %368 = vmatpush1.bf16.msra.mxu0 0
    %369 = vmatprep.subr.bf16.mxu0 0
    %370 = vmatpush1.bf16.msra.mxu0 0
    %371 = vmatprep.subr.bf16.mxu0 0
    %372 = vmatpush1.bf16.msra.mxu0 0
    %373 = vmatprep.subr.bf16.mxu0 0
    %374 = vmatpush1.bf16.msra.mxu0 0
    %375 = vmatprep.subr.bf16.mxu0 0
    %376 = vmatpush1.bf16.msra.mxu0 0
    %377 = vmatprep.subr.bf16.mxu0 0
    %378 = vmatpush1.bf16.msra.mxu0 0
    %379 = vmatprep.mubr.bf16.mxu0 0
    %380 = vmatmul.mubr.bf16.gmra.mrb[0].mxu0 %v218
    %v381 = vpop.f32.mrb[0].mxu0
    %v382 = vadd.f32 0.0, %v381
    %v383 = vpop.f32.mrb[0].mxu0
    %v384 = vadd.f32 0.0, %v383
    %v385 = vpop.f32.mrb[0].mxu0
    %v386 = vpop.f32.mrb[0].mxu0
    %387 = vdwg.mxu0
    %388 = vmatprep.subr.bf16.mxu0 0
    %389 = vmatpush1.bf16.msra.mxu0 %v301
    %390 = vmatprep.subr.bf16.mxu0 0
    %391 = vmatpush1.bf16.msra.mxu0 %v304
    %392 = vmatprep.subr.bf16.mxu0 0
    %393 = vmatpush1.bf16.msra.mxu0 %v307
    %394 = vmatprep.subr.bf16.mxu0 0
    %395 = vmatpush1.bf16.msra.mxu0 %v310
    %396 = vmatprep.subr.bf16.mxu0 0
    %397 = vmatpush1.bf16.msra.mxu0 %v313
    %398 = vmatprep.subr.bf16.mxu0 0
    %399 = vmatpush1.bf16.msra.mxu0 %v316
    %400 = vmatprep.subr.bf16.mxu0 0
    %401 = vmatpush1.bf16.msra.mxu0 %v319
    %402 = vmatprep.subr.bf16.mxu0 0
    %403 = vmatpush1.bf16.msra.mxu0 %v322
    %404 = vmatprep.subr.bf16.mxu0 0
    %405 = vmatpush1.bf16.msra.mxu0 0
    %406 = vmatprep.subr.bf16.mxu0 0
    %407 = vmatpush1.bf16.msra.mxu0 0
    %408 = vmatprep.subr.bf16.mxu0 0
    %409 = vmatpush1.bf16.msra.mxu0 0
    %410 = vmatprep.subr.bf16.mxu0 0
    %411 = vmatpush1.bf16.msra.mxu0 0
    %412 = vmatprep.subr.bf16.mxu0 0
    %413 = vmatpush1.bf16.msra.mxu0 0
    %414 = vmatprep.subr.bf16.mxu0 0
    %415 = vmatpush1.bf16.msra.mxu0 0
    %416 = vmatprep.subr.bf16.mxu0 0
    %417 = vmatpush1.bf16.msra.mxu0 0
    %418 = vmatprep.subr.bf16.mxu0 0
    %419 = vmatpush1.bf16.msra.mxu0 0
    %420 = vmatprep.mubr.bf16.mxu0 0
    %421 = vmatmul.mubr.bf16.gmra.mrb[0].mxu0 %v218
    %v422 = vpop.f32.mrb[0].mxu0
    %v423 = vadd.f32 0.0, %v422
    %v424 = vpop.f32.mrb[0].mxu0
    %v425 = vpop.f32.mrb[0].mxu0
    %v426 = vpop.f32.mrb[0].mxu0
    %427 = vdwg.mxu0
    %v428 = vpack.c.bf16 %v214, %v214
    %v461 = vunpack.c.l.b16 %v174
    %v462 = vunpack.c.h.b16 %v174
    %v463 = vunpack.c.l.b16 %v175
    %v464 = vunpack.c.l.b16 %v176
    %v465 = vunpack.c.h.b16 %v176
    %v466 = vunpack.c.l.b16 %v177
    %v467 = vunpack.c.l.b16 %v178
    %v468 = vunpack.c.h.b16 %v178
    %v469 = vunpack.c.l.b16 %v179
    %v470 = vunpack.c.l.b16 %v180
    %v471 = vunpack.c.h.b16 %v180
    %v472 = vunpack.c.l.b16 %v181
    %v473 = vunpack.c.l.b16 %v182
    %v474 = vunpack.c.h.b16 %v182
    %v475 = vunpack.c.l.b16 %v183
    %v476 = vunpack.c.l.b16 %v184
    %v477 = vunpack.c.h.b16 %v184
    %v478 = vunpack.c.l.b16 %v185
    %v479 = vunpack.c.l.b16 %v186
    %v480 = vunpack.c.h.b16 %v186
    %v481 = vunpack.c.l.b16 %v187
    %v482 = vunpack.c.l.b16 %v188
    %v483 = vunpack.c.h.b16 %v188
    %v484 = vunpack.c.l.b16 %v189
    %v485 = vunpack.c.l.b16 %v190
    %v486 = vunpack.c.h.b16 %v190
    %v487 = vunpack.c.l.b16 %v191
    %v488 = vunpack.c.l.b16 %v192
    %v489 = vunpack.c.h.b16 %v192
    %v490 = vunpack.c.l.b16 %v193
    %v491 = vunpack.c.l.b16 %v194
    %v492 = vunpack.c.h.b16 %v194
    %v493 = vunpack.c.l.b16 %v195
    %v494 = vunpack.c.l.b16 %v196
    %v495 = vunpack.c.h.b16 %v196
    %v496 = vunpack.c.l.b16 %v197
    %v497 = vunpack.c.l.b16 %v198
    %v498 = vunpack.c.h.b16 %v198
    %v499 = vunpack.c.l.b16 %v199
    %v500 = vunpack.c.l.b16 %v200
    %v501 = vunpack.c.h.b16 %v200
    %v502 = vunpack.c.l.b16 %v201
    %v503 = vunpack.c.l.b16 %v202
    %v504 = vunpack.c.h.b16 %v202
    %v505 = vunpack.c.l.b16 %v203
    %v506 = vunpack.c.l.b16 %v204
    %v507 = vunpack.c.h.b16 %v204
    %v508 = vunpack.c.l.b16 %v205
    %v509 = vpack.c.b16 %v464, %v461
    %v510 = vpack.c.b16 %v465, %v462
    %v511 = vpack.c.b16 %v466, %v463
    %v512 = vpack.c.b16 %v470, %v467
    %v513 = vpack.c.b16 %v471, %v468
    %v514 = vpack.c.b16 %v472, %v469
    %v515 = vpack.c.b16 %v476, %v473
    %v516 = vpack.c.b16 %v477, %v474
    %v517 = vpack.c.b16 %v478, %v475
    %v518 = vpack.c.b16 %v482, %v479
    %v519 = vpack.c.b16 %v483, %v480
    %v520 = vpack.c.b16 %v484, %v481
    %v521 = vpack.c.b16 %v488, %v485
    %v522 = vpack.c.b16 %v489, %v486
    %v523 = vpack.c.b16 %v490, %v487
    %v524 = vpack.c.b16 %v494, %v491
    %v525 = vpack.c.b16 %v495, %v492
    %v526 = vpack.c.b16 %v496, %v493
    %v527 = vpack.c.b16 %v500, %v497
    %v528 = vpack.c.b16 %v501, %v498
    %v529 = vpack.c.b16 %v502, %v499
    %v530 = vpack.c.b16 %v506, %v503
    %v531 = vpack.c.b16 %v507, %v504
    %v532 = vpack.c.b16 %v508, %v505
    %557 = vmatprep.subr.bf16.mxu0 %v510
    %558 = vmatpush1.bf16.msra.mxu0 %v509
    %559 = vmatprep.subr.bf16.mxu0 %v513
    %560 = vmatpush1.bf16.msra.mxu0 %v512
    %561 = vmatprep.subr.bf16.mxu0 %v516
    %562 = vmatpush1.bf16.msra.mxu0 %v515
    %563 = vmatprep.subr.bf16.mxu0 %v519
    %564 = vmatpush1.bf16.msra.mxu0 %v518
    %565 = vmatprep.subr.bf16.mxu0 %v522
    %566 = vmatpush1.bf16.msra.mxu0 %v521
    %567 = vmatprep.subr.bf16.mxu0 %v525
    %568 = vmatpush1.bf16.msra.mxu0 %v524
    %569 = vmatprep.subr.bf16.mxu0 %v528
    %570 = vmatpush1.bf16.msra.mxu0 %v527
    %571 = vmatprep.subr.bf16.mxu0 %v531
    %572 = vmatpush1.bf16.msra.mxu0 %v530
    %573 = vmatprep.subr.bf16.mxu0 0
    %574 = vmatpush1.bf16.msra.mxu0 0
    %575 = vmatprep.subr.bf16.mxu0 0
    %576 = vmatpush1.bf16.msra.mxu0 0
    %577 = vmatprep.subr.bf16.mxu0 0
    %578 = vmatpush1.bf16.msra.mxu0 0
    %579 = vmatprep.subr.bf16.mxu0 0
    %580 = vmatpush1.bf16.msra.mxu0 0
    %581 = vmatprep.subr.bf16.mxu0 0
    %582 = vmatpush1.bf16.msra.mxu0 0
    %583 = vmatprep.subr.bf16.mxu0 0
    %584 = vmatpush1.bf16.msra.mxu0 0
    %585 = vmatprep.subr.bf16.mxu0 0
    %586 = vmatpush1.bf16.msra.mxu0 0
    %587 = vmatprep.subr.bf16.mxu0 0
    %588 = vmatpush1.bf16.msra.mxu0 0
    %589 = vmatprep.mubr.bf16.mxu0 0
    %590 = vmatmul.mubr.bf16.gmra.mrb[0].mxu0 %v428
    %v591 = vpop.f32.mrb[0].mxu0
    %v592 = vadd.f32 0.0, %v591
    %v593 = vpop.f32.mrb[0].mxu0
    %v594 = vadd.f32 0.0, %v593
    %v595 = vpop.f32.mrb[0].mxu0
    %v596 = vpop.f32.mrb[0].mxu0
    %597 = vdwg.mxu0
    %598 = vmatprep.subr.bf16.mxu0 0
    %599 = vmatpush1.bf16.msra.mxu0 %v511
    %600 = vmatprep.subr.bf16.mxu0 0
    %601 = vmatpush1.bf16.msra.mxu0 %v514
    %602 = vmatprep.subr.bf16.mxu0 0
    %603 = vmatpush1.bf16.msra.mxu0 %v517
    %604 = vmatprep.subr.bf16.mxu0 0
    %605 = vmatpush1.bf16.msra.mxu0 %v520
    %606 = vmatprep.subr.bf16.mxu0 0
    %607 = vmatpush1.bf16.msra.mxu0 %v523
    %608 = vmatprep.subr.bf16.mxu0 0
    %609 = vmatpush1.bf16.msra.mxu0 %v526
    %610 = vmatprep.subr.bf16.mxu0 0
    %611 = vmatpush1.bf16.msra.mxu0 %v529
    %612 = vmatprep.subr.bf16.mxu0 0
    %613 = vmatpush1.bf16.msra.mxu0 %v532
    %614 = vmatprep.subr.bf16.mxu0 0
    %615 = vmatpush1.bf16.msra.mxu0 0
    %616 = vmatprep.subr.bf16.mxu0 0
    %617 = vmatpush1.bf16.msra.mxu0 0
    %618 = vmatprep.subr.bf16.mxu0 0
    %619 = vmatpush1.bf16.msra.mxu0 0
    %620 = vmatprep.subr.bf16.mxu0 0
    %621 = vmatpush1.bf16.msra.mxu0 0
    %622 = vmatprep.subr.bf16.mxu0 0
    %623 = vmatpush1.bf16.msra.mxu0 0
    %624 = vmatprep.subr.bf16.mxu0 0
    %625 = vmatpush1.bf16.msra.mxu0 0
    %626 = vmatprep.subr.bf16.mxu0 0
    %627 = vmatpush1.bf16.msra.mxu0 0
    %628 = vmatprep.subr.bf16.mxu0 0
    %629 = vmatpush1.bf16.msra.mxu0 0
    %630 = vmatprep.mubr.bf16.mxu0 0
    %631 = vmatmul.mubr.bf16.gmra.mrb[0].mxu0 %v428
    %v632 = vpop.f32.mrb[0].mxu0
    %v633 = vadd.f32 0.0, %v632
    %v634 = vpop.f32.mrb[0].mxu0
    %v635 = vpop.f32.mrb[0].mxu0
    %v636 = vpop.f32.mrb[0].mxu0
    %637 = vdwg.mxu0
    %v654 = vunpack.c.l.b16 %v108
    %v655 = vunpack.c.h.b16 %v108
    %v656 = vunpack.c.l.b16 %v109
    %v657 = vunpack.c.l.b16 %v110
    %v658 = vunpack.c.h.b16 %v110
    %v659 = vunpack.c.l.b16 %v111
    %v660 = vunpack.c.l.b16 %v112
    %v661 = vunpack.c.h.b16 %v112
    %v662 = vunpack.c.l.b16 %v113
    %v663 = vunpack.c.l.b16 %v114
    %v664 = vunpack.c.h.b16 %v114
    %v665 = vunpack.c.l.b16 %v115
    %v666 = vunpack.c.l.b16 %v116
    %v667 = vunpack.c.h.b16 %v116
    %v668 = vunpack.c.l.b16 %v117
    %v669 = vunpack.c.l.b16 %v118
    %v670 = vunpack.c.h.b16 %v118
    %v671 = vunpack.c.l.b16 %v119
    %v672 = vunpack.c.l.b16 %v120
    %v673 = vunpack.c.h.b16 %v120
    %v674 = vunpack.c.l.b16 %v121
    %v675 = vunpack.c.l.b16 %v122
    %v676 = vunpack.c.h.b16 %v122
    %v677 = vunpack.c.l.b16 %v123
    %v678 = vpack.c.b16 %v657, %v654
    %v679 = vpack.c.b16 %v658, %v655
    %v680 = vpack.c.b16 %v659, %v656
    %v681 = vpack.c.b16 %v663, %v660
    %v682 = vpack.c.b16 %v664, %v661
    %v683 = vpack.c.b16 %v665, %v662
    %v684 = vpack.c.b16 %v669, %v666
    %v685 = vpack.c.b16 %v670, %v667
    %v686 = vpack.c.b16 %v671, %v668
    %v687 = vpack.c.b16 %v675, %v672
    %v688 = vpack.c.b16 %v676, %v673
    %v689 = vpack.c.b16 %v677, %v674
    %vm702 = vcmask 523264
    %v704 = vsel %vm702, %v215, 0
    %706 = vmatprep.subr.bf16.mxu0 %v679
    %707 = vmatpush1.bf16.msra.mxu0 %v678
    %708 = vmatprep.subr.bf16.mxu0 %v682
    %709 = vmatpush1.bf16.msra.mxu0 %v681
    %710 = vmatprep.subr.bf16.mxu0 %v685
    %711 = vmatpush1.bf16.msra.mxu0 %v684
    %712 = vmatprep.subr.bf16.mxu0 %v688
    %713 = vmatpush1.bf16.msra.mxu0 %v687
    %714 = vmatprep.subr.bf16.mxu0 0
    %715 = vmatpush1.bf16.msra.mxu0 0
    %716 = vmatprep.subr.bf16.mxu0 0
    %717 = vmatpush1.bf16.msra.mxu0 0
    %718 = vmatprep.subr.bf16.mxu0 0
    %719 = vmatpush1.bf16.msra.mxu0 0
    %720 = vmatprep.subr.bf16.mxu0 0
    %721 = vmatpush1.bf16.msra.mxu0 0
    %722 = vmatprep.subr.bf16.mxu0 0
    %723 = vmatpush1.bf16.msra.mxu0 0
    %724 = vmatprep.subr.bf16.mxu0 0
    %725 = vmatpush1.bf16.msra.mxu0 0
    %726 = vmatprep.subr.bf16.mxu0 0
    %727 = vmatpush1.bf16.msra.mxu0 0
    %728 = vmatprep.subr.bf16.mxu0 0
    %729 = vmatpush1.bf16.msra.mxu0 0
    %730 = vmatprep.subr.bf16.mxu0 0
    %731 = vmatpush1.bf16.msra.mxu0 0
    %732 = vmatprep.subr.bf16.mxu0 0
    %733 = vmatpush1.bf16.msra.mxu0 0
    %734 = vmatprep.subr.bf16.mxu0 0
    %735 = vmatpush1.bf16.msra.mxu0 0
    %736 = vmatprep.subr.bf16.mxu0 0
    %737 = vmatpush1.bf16.msra.mxu0 0
    %738 = vmatprep.mubr.bf16.mxu0 0
    %739 = vmatmul.mubr.bf16.gmra.mrb[0].mxu0 %v704
    %v740 = vpop.f32.mrb[0].mxu0
    %v741 = vadd.f32 %v206, %v740
    %v742 = vpop.f32.mrb[0].mxu0
    %v743 = vadd.f32 %v207, %v742
    %v744 = vpop.f32.mrb[0].mxu0
    %v745 = vpop.f32.mrb[0].mxu0
    %746 = vdwg.mxu0
    %747 = vmatprep.subr.bf16.mxu0 0
    %748 = vmatpush1.bf16.msra.mxu0 %v680
    %749 = vmatprep.subr.bf16.mxu0 0
    %750 = vmatpush1.bf16.msra.mxu0 %v683
    %751 = vmatprep.subr.bf16.mxu0 0
    %752 = vmatpush1.bf16.msra.mxu0 %v686
    %753 = vmatprep.subr.bf16.mxu0 0
    %754 = vmatpush1.bf16.msra.mxu0 %v689
    %755 = vmatprep.subr.bf16.mxu0 0
    %756 = vmatpush1.bf16.msra.mxu0 0
    %757 = vmatprep.subr.bf16.mxu0 0
    %758 = vmatpush1.bf16.msra.mxu0 0
    %759 = vmatprep.subr.bf16.mxu0 0
    %760 = vmatpush1.bf16.msra.mxu0 0
    %761 = vmatprep.subr.bf16.mxu0 0
    %762 = vmatpush1.bf16.msra.mxu0 0
    %763 = vmatprep.subr.bf16.mxu0 0
    %764 = vmatpush1.bf16.msra.mxu0 0
    %765 = vmatprep.subr.bf16.mxu0 0
    %766 = vmatpush1.bf16.msra.mxu0 0
    %767 = vmatprep.subr.bf16.mxu0 0
    %768 = vmatpush1.bf16.msra.mxu0 0
    %769 = vmatprep.subr.bf16.mxu0 0
    %770 = vmatpush1.bf16.msra.mxu0 0
    %771 = vmatprep.subr.bf16.mxu0 0
    %772 = vmatpush1.bf16.msra.mxu0 0
    %773 = vmatprep.subr.bf16.mxu0 0
    %774 = vmatpush1.bf16.msra.mxu0 0
    %775 = vmatprep.subr.bf16.mxu0 0
    %776 = vmatpush1.bf16.msra.mxu0 0
    %777 = vmatprep.subr.bf16.mxu0 0
    %778 = vmatpush1.bf16.msra.mxu0 0
    %779 = vmatprep.mubr.bf16.mxu0 0
    %780 = vmatmul.mubr.bf16.gmra.mrb[0].mxu0 %v704
    %v781 = vpop.f32.mrb[0].mxu0
    %v782 = vadd.f32 %v208, %v781
    %v783 = vpop.f32.mrb[0].mxu0
    %v784 = vpop.f32.mrb[0].mxu0
    %v785 = vpop.f32.mrb[0].mxu0
    %786 = vdwg.mxu0
    %v803 = vunpack.c.l.b16 %v125
    %v804 = vunpack.c.h.b16 %v125
    %v805 = vunpack.c.l.b16 %v126
    %v806 = vunpack.c.l.b16 %v127
    %v807 = vunpack.c.h.b16 %v127
    %v808 = vunpack.c.l.b16 %v128
    %v809 = vunpack.c.l.b16 %v129
    %v810 = vunpack.c.h.b16 %v129
    %v811 = vunpack.c.l.b16 %v130
    %v812 = vunpack.c.l.b16 %v131
    %v813 = vunpack.c.h.b16 %v131
    %v814 = vunpack.c.l.b16 %v132
    %v815 = vunpack.c.l.b16 %v133
    %v816 = vunpack.c.h.b16 %v133
    %v817 = vunpack.c.l.b16 %v134
    %v818 = vunpack.c.l.b16 %v135
    %v819 = vunpack.c.h.b16 %v135
    %v820 = vunpack.c.l.b16 %v136
    %v821 = vunpack.c.l.b16 %v137
    %v822 = vunpack.c.h.b16 %v137
    %v823 = vunpack.c.l.b16 %v138
    %v824 = vunpack.c.l.b16 %v139
    %v825 = vunpack.c.h.b16 %v139
    %v826 = vunpack.c.l.b16 %v140
    %v827 = vpack.c.b16 %v806, %v803
    %v828 = vpack.c.b16 %v807, %v804
    %v829 = vpack.c.b16 %v808, %v805
    %v830 = vpack.c.b16 %v812, %v809
    %v831 = vpack.c.b16 %v813, %v810
    %v832 = vpack.c.b16 %v814, %v811
    %v833 = vpack.c.b16 %v818, %v815
    %v834 = vpack.c.b16 %v819, %v816
    %v835 = vpack.c.b16 %v820, %v817
    %v836 = vpack.c.b16 %v824, %v821
    %v837 = vpack.c.b16 %v825, %v822
    %v838 = vpack.c.b16 %v826, %v823
    %v852 = vsel %vm702, %v217, 0
    %854 = vmatprep.subr.bf16.mxu0 %v828
    %855 = vmatpush1.bf16.msra.mxu0 %v827
    %856 = vmatprep.subr.bf16.mxu0 %v831
    %857 = vmatpush1.bf16.msra.mxu0 %v830
    %858 = vmatprep.subr.bf16.mxu0 %v834
    %859 = vmatpush1.bf16.msra.mxu0 %v833
    %860 = vmatprep.subr.bf16.mxu0 %v837
    %861 = vmatpush1.bf16.msra.mxu0 %v836
    %862 = vmatprep.subr.bf16.mxu0 0
    %863 = vmatpush1.bf16.msra.mxu0 0
    %864 = vmatprep.subr.bf16.mxu0 0
    %865 = vmatpush1.bf16.msra.mxu0 0
    %866 = vmatprep.subr.bf16.mxu0 0
    %867 = vmatpush1.bf16.msra.mxu0 0
    %868 = vmatprep.subr.bf16.mxu0 0
    %869 = vmatpush1.bf16.msra.mxu0 0
    %870 = vmatprep.subr.bf16.mxu0 0
    %871 = vmatpush1.bf16.msra.mxu0 0
    %872 = vmatprep.subr.bf16.mxu0 0
    %873 = vmatpush1.bf16.msra.mxu0 0
    %874 = vmatprep.subr.bf16.mxu0 0
    %875 = vmatpush1.bf16.msra.mxu0 0
    %876 = vmatprep.subr.bf16.mxu0 0
    %877 = vmatpush1.bf16.msra.mxu0 0
    %878 = vmatprep.subr.bf16.mxu0 0
    %879 = vmatpush1.bf16.msra.mxu0 0
    %880 = vmatprep.subr.bf16.mxu0 0
    %881 = vmatpush1.bf16.msra.mxu0 0
    %882 = vmatprep.subr.bf16.mxu0 0
    %883 = vmatpush1.bf16.msra.mxu0 0
    %884 = vmatprep.subr.bf16.mxu0 0
    %885 = vmatpush1.bf16.msra.mxu0 0
    %886 = vmatprep.mubr.bf16.mxu0 0
    %887 = vmatmul.mubr.bf16.gmra.mrb[0].mxu0 %v852
    %v888 = vpop.f32.mrb[0].mxu0
    %v889 = vadd.f32 %v210, %v888
    %v890 = vpop.f32.mrb[0].mxu0
    %v891 = vadd.f32 %v211, %v890
    %v892 = vpop.f32.mrb[0].mxu0
    %v893 = vpop.f32.mrb[0].mxu0
    %894 = vdwg.mxu0
    %895 = vmatprep.subr.bf16.mxu0 0
    %896 = vmatpush1.bf16.msra.mxu0 %v829
    %897 = vmatprep.subr.bf16.mxu0 0
    %898 = vmatpush1.bf16.msra.mxu0 %v832
    %899 = vmatprep.subr.bf16.mxu0 0
    %900 = vmatpush1.bf16.msra.mxu0 %v835
    %901 = vmatprep.subr.bf16.mxu0 0
    %902 = vmatpush1.bf16.msra.mxu0 %v838
    %903 = vmatprep.subr.bf16.mxu0 0
    %904 = vmatpush1.bf16.msra.mxu0 0
    %905 = vmatprep.subr.bf16.mxu0 0
    %906 = vmatpush1.bf16.msra.mxu0 0
    %907 = vmatprep.subr.bf16.mxu0 0
    %908 = vmatpush1.bf16.msra.mxu0 0
    %909 = vmatprep.subr.bf16.mxu0 0
    %910 = vmatpush1.bf16.msra.mxu0 0
    %911 = vmatprep.subr.bf16.mxu0 0
    %912 = vmatpush1.bf16.msra.mxu0 0
    %913 = vmatprep.subr.bf16.mxu0 0
    %914 = vmatpush1.bf16.msra.mxu0 0
    %915 = vmatprep.subr.bf16.mxu0 0
    %916 = vmatpush1.bf16.msra.mxu0 0
    %917 = vmatprep.subr.bf16.mxu0 0
    %918 = vmatpush1.bf16.msra.mxu0 0
    %919 = vmatprep.subr.bf16.mxu0 0
    %920 = vmatpush1.bf16.msra.mxu0 0
    %921 = vmatprep.subr.bf16.mxu0 0
    %922 = vmatpush1.bf16.msra.mxu0 0
    %923 = vmatprep.subr.bf16.mxu0 0
    %924 = vmatpush1.bf16.msra.mxu0 0
    %925 = vmatprep.subr.bf16.mxu0 0
    %926 = vmatpush1.bf16.msra.mxu0 0
    %927 = vmatprep.mubr.bf16.mxu0 0
    %928 = vmatmul.mubr.bf16.gmra.mrb[0].mxu0 %v852
    %v929 = vpop.f32.mrb[0].mxu0
    %v930 = vadd.f32 %v212, %v929
    %v931 = vpop.f32.mrb[0].mxu0
    %v932 = vpop.f32.mrb[0].mxu0
    %v933 = vpop.f32.mrb[0].mxu0
    %934 = vdwg.mxu0
    %v935 = vadd.f32 %v741, %v382
    %v936 = vxor.u32 %v935, 2147483648
    %v937 = vmul.f32 %v936, 1.442695
    %v938 = vpow.pop %v937
    %v939 = vadd.f32 %v938, 1.0
    %v940 = vrcp.pop %v939
    %v941 = vmul.f32 1.0, %v940
    %v942 = vadd.f32 %v743, %v384
    %v943 = vxor.u32 %v942, 2147483648
    %v944 = vmul.f32 %v943, 1.442695
    %v945 = vpow.pop %v944
    %v946 = vadd.f32 %v945, 1.0
    %v947 = vrcp.pop %v946
    %v948 = vmul.f32 1.0, %v947
    %v949 = vmul.f32 %v941, %v423
    %v950 = vadd.f32 %v782, %v949
    %v951 = vtanh.pop %v950
    %v952 = vsub.f32 %v213, %v951
    %v953 = vmul.f32 %v948, %v952
    %v954 = vadd.f32 %v951, %v953
    %v955 = vadd.f32 %v889, %v592
    %v956 = vxor.u32 %v955, 2147483648
    %v957 = vmul.f32 %v956, 1.442695
    %v958 = vpow.pop %v957
    %v959 = vadd.f32 %v958, 1.0
    %v960 = vrcp.pop %v959
    %v961 = vmul.f32 1.0, %v960
    %v962 = vadd.f32 %v891, %v594
    %v963 = vxor.u32 %v962, 2147483648
    %v964 = vmul.f32 %v963, 1.442695
    %v965 = vpow.pop %v964
    %v966 = vadd.f32 %v965, 1.0
    %v967 = vrcp.pop %v966
    %v968 = vmul.f32 1.0, %v967
    %v969 = vmul.f32 %v961, %v633
    %v970 = vadd.f32 %v930, %v969
    %v971 = vtanh.pop %v970
    %v972 = vsub.f32 %v214, %v971
    %v973 = vmul.f32 %v968, %v972
    %v974 = vadd.f32 %v971, %v973
    %975 = vst [vmem:[#allocation2] sm:$0xff] %v954
    %976 = vst [vmem:[#allocation3] sm:$0xff] %v974
    %v978 = vcombine.high %v954, %v954
    %v980 = vunpack.c.l.s4 1966171168
    %v981 = vunpack.c.0.s8 %v980
    %v982 = vlaneseq
    %v983 = vshrl.u32 %v982, 7
    %v984 = vsub.s32 %v981, %v983
    %v985 = vrot.slane %v954, %v984
    %v987 = vunpack.c.l.s4 1966171168
    %v988 = vunpack.c.0.s8 %v987
    %v989 = vlaneseq
    %v990 = vshrl.u32 %v989, 7
    %v991 = vsub.s32 %v988, %v990
    %v992 = vrot.slane %v978, %v991
    %v993 = vcombine.high %v985, %v985
    %v994 = vcombine.high %v992, %v992
    %v996 = vunpack.c.l.s4 1966171168
    %v997 = vunpack.c.0.s8 %v996
    %v998 = vlaneseq
    %v999 = vshrl.u32 %v998, 7
    %v1000 = vsub.s32 %v997, %v999
    %v1001 = vrot.slane %v985, %v1000
    %v1003 = vunpack.c.l.s4 1966171168
    %v1004 = vunpack.c.0.s8 %v1003
    %v1005 = vlaneseq
    %v1006 = vshrl.u32 %v1005, 7
    %v1007 = vsub.s32 %v1004, %v1006
    %v1008 = vrot.slane %v992, %v1007
    %v1010 = vunpack.c.l.s4 1966171168
    %v1011 = vunpack.c.0.s8 %v1010
    %v1012 = vlaneseq
    %v1013 = vshrl.u32 %v1012, 7
    %v1014 = vsub.s32 %v1011, %v1013
    %v1015 = vrot.slane %v993, %v1014
    %v1017 = vunpack.c.l.s4 1966171168
    %v1018 = vunpack.c.0.s8 %v1017
    %v1019 = vlaneseq
    %v1020 = vshrl.u32 %v1019, 7
    %v1021 = vsub.s32 %v1018, %v1020
    %v1022 = vrot.slane %v994, %v1021
    %v1023 = vcombine.high %v1001, %v1001
    %v1024 = vcombine.high %v1008, %v1008
    %v1025 = vcombine.high %v1015, %v1015
    %v1026 = vcombine.high %v1022, %v1022
    %1035 = vst [vmem:[#allocation13] sm:$0x1] %v1001
    %1036 = vst [vmem:[#allocation13 + $0x10] sm:$0x1] %v1015
    %1037 = vst [vmem:[#allocation13 + $0x20] sm:$0x1] %v1023
    %1038 = vst [vmem:[#allocation13 + $0x30] sm:$0x1] %v1025
    %1039 = vst [vmem:[#allocation13 + $0x40] sm:$0x1] %v1008
    %1040 = vst [vmem:[#allocation13 + $0x50] sm:$0x1] %v1022
    %1041 = vst [vmem:[#allocation13 + $0x60] sm:$0x1] %v1024
    %1042 = vst [vmem:[#allocation13 + $0x70] sm:$0x1] %v1026
    %v1044 = vcombine.high %v974, %v974
    %v1046 = vunpack.c.l.s4 1966171168
    %v1047 = vunpack.c.0.s8 %v1046
    %v1048 = vlaneseq
    %v1049 = vshrl.u32 %v1048, 7
    %v1050 = vsub.s32 %v1047, %v1049
    %v1051 = vrot.slane %v974, %v1050
    %v1053 = vunpack.c.l.s4 1966171168
    %v1054 = vunpack.c.0.s8 %v1053
    %v1055 = vlaneseq
    %v1056 = vshrl.u32 %v1055, 7
    %v1057 = vsub.s32 %v1054, %v1056
    %v1058 = vrot.slane %v1044, %v1057
    %v1059 = vcombine.high %v1051, %v1051
    %v1060 = vcombine.high %v1058, %v1058
    %v1062 = vunpack.c.l.s4 1966171168
    %v1063 = vunpack.c.0.s8 %v1062
    %v1064 = vlaneseq
    %v1065 = vshrl.u32 %v1064, 7
    %v1066 = vsub.s32 %v1063, %v1065
    %v1067 = vrot.slane %v1051, %v1066
    %v1069 = vunpack.c.l.s4 1966171168
    %v1070 = vunpack.c.0.s8 %v1069
    %v1071 = vlaneseq
    %v1072 = vshrl.u32 %v1071, 7
    %v1073 = vsub.s32 %v1070, %v1072
    %v1074 = vrot.slane %v1058, %v1073
    %v1076 = vunpack.c.l.s4 1966171168
    %v1077 = vunpack.c.0.s8 %v1076
    %v1078 = vlaneseq
    %v1079 = vshrl.u32 %v1078, 7
    %v1080 = vsub.s32 %v1077, %v1079
    %v1081 = vrot.slane %v1059, %v1080
    %v1083 = vunpack.c.l.s4 1966171168
    %v1084 = vunpack.c.0.s8 %v1083
    %v1085 = vlaneseq
    %v1086 = vshrl.u32 %v1085, 7
    %v1087 = vsub.s32 %v1084, %v1086
    %v1088 = vrot.slane %v1060, %v1087
    %v1089 = vcombine.high %v1067, %v1067
    %v1090 = vcombine.high %v1074, %v1074
    %v1091 = vcombine.high %v1081, %v1081
    %v1092 = vcombine.high %v1088, %v1088
    %1101 = vst [vmem:[#allocation14 + $0xf] sm:$0x1] %v1067
    %1102 = vst [vmem:[#allocation14 + $0x1f] sm:$0x1] %v1081
    %1103 = vst [vmem:[#allocation14 + $0x2f] sm:$0x1] %v1089
    %1104 = vst [vmem:[#allocation14 + $0x3f] sm:$0x1] %v1091
    %1105 = vst [vmem:[#allocation14 + $0x4f] sm:$0x1] %v1074
    %1106 = vst [vmem:[#allocation14 + $0x5f] sm:$0x1] %v1088
    %1107 = vst [vmem:[#allocation14 + $0x6f] sm:$0x1] %v1090
    %1108 = vst [vmem:[#allocation14 + $0x7f] sm:$0x1] %v1092
    %v1109 = vld [vmem:[#allocation2] sm:$0xff]
    %v1110 = vld [vmem:[#allocation3] sm:$0xff]
    %s1111 = scalar_lea.vmem [#allocation4], 4
    %v1112 = vld [vmem:[%s1111] sm:$0xf]
    %s1113 = scalar_lea.vmem [#allocation7], 56
    %v1114 = vld [vmem:[%s1113] sm:$0xf]
    %v1115 = vpack.c.bf16 %v1109, %v1109
    %1116 = vmatprep.subr.bf16.mxu0 %v300
    %1117 = vmatpush1.bf16.msra.mxu0 %v299
    %1118 = vmatprep.subr.bf16.mxu0 %v303
    %1119 = vmatpush1.bf16.msra.mxu0 %v302
    %1120 = vmatprep.subr.bf16.mxu0 %v306
    %1121 = vmatpush1.bf16.msra.mxu0 %v305
    %1122 = vmatprep.subr.bf16.mxu0 %v309
    %1123 = vmatpush1.bf16.msra.mxu0 %v308
    %1124 = vmatprep.subr.bf16.mxu0 %v312
    %1125 = vmatpush1.bf16.msra.mxu0 %v311
    %1126 = vmatprep.subr.bf16.mxu0 %v315
    %1127 = vmatpush1.bf16.msra.mxu0 %v314
    %1128 = vmatprep.subr.bf16.mxu0 %v318
    %1129 = vmatpush1.bf16.msra.mxu0 %v317
    %1130 = vmatprep.subr.bf16.mxu0 %v321
    %1131 = vmatpush1.bf16.msra.mxu0 %v320
    %1132 = vmatprep.subr.bf16.mxu0 0
    %1133 = vmatpush1.bf16.msra.mxu0 0
    %1134 = vmatprep.subr.bf16.mxu0 0
    %1135 = vmatpush1.bf16.msra.mxu0 0
    %1136 = vmatprep.subr.bf16.mxu0 0
    %1137 = vmatpush1.bf16.msra.mxu0 0
    %1138 = vmatprep.subr.bf16.mxu0 0
    %1139 = vmatpush1.bf16.msra.mxu0 0
    %1140 = vmatprep.subr.bf16.mxu0 0
    %1141 = vmatpush1.bf16.msra.mxu0 0
    %1142 = vmatprep.subr.bf16.mxu0 0
    %1143 = vmatpush1.bf16.msra.mxu0 0
    %1144 = vmatprep.subr.bf16.mxu0 0
    %1145 = vmatpush1.bf16.msra.mxu0 0
    %1146 = vmatprep.subr.bf16.mxu0 0
    %1147 = vmatpush1.bf16.msra.mxu0 0
    %1148 = vmatprep.mubr.bf16.mxu0 0
    %1149 = vmatmul.mubr.bf16.gmra.mrb[0].mxu0 %v1115
    %v1150 = vpop.f32.mrb[0].mxu0
    %v1151 = vadd.f32 0.0, %v1150
    %v1152 = vpop.f32.mrb[0].mxu0
    %v1153 = vadd.f32 0.0, %v1152
    %v1154 = vpop.f32.mrb[0].mxu0
    %v1155 = vpop.f32.mrb[0].mxu0
    %1156 = vdwg.mxu0
    %1157 = vmatprep.subr.bf16.mxu0 0
    %1158 = vmatpush1.bf16.msra.mxu0 %v301
    %1159 = vmatprep.subr.bf16.mxu0 0
    %1160 = vmatpush1.bf16.msra.mxu0 %v304
    %1161 = vmatprep.subr.bf16.mxu0 0
    %1162 = vmatpush1.bf16.msra.mxu0 %v307
    %1163 = vmatprep.subr.bf16.mxu0 0
    %1164 = vmatpush1.bf16.msra.mxu0 %v310
    %1165 = vmatprep.subr.bf16.mxu0 0
    %1166 = vmatpush1.bf16.msra.mxu0 %v313
    %1167 = vmatprep.subr.bf16.mxu0 0
    %1168 = vmatpush1.bf16.msra.mxu0 %v316
    %1169 = vmatprep.subr.bf16.mxu0 0
    %1170 = vmatpush1.bf16.msra.mxu0 %v319
    %1171 = vmatprep.subr.bf16.mxu0 0
    %1172 = vmatpush1.bf16.msra.mxu0 %v322
    %1173 = vmatprep.subr.bf16.mxu0 0
    %1174 = vmatpush1.bf16.msra.mxu0 0
    %1175 = vmatprep.subr.bf16.mxu0 0
    %1176 = vmatpush1.bf16.msra.mxu0 0
    %1177 = vmatprep.subr.bf16.mxu0 0
    %1178 = vmatpush1.bf16.msra.mxu0 0
    %1179 = vmatprep.subr.bf16.mxu0 0
    %1180 = vmatpush1.bf16.msra.mxu0 0
    %1181 = vmatprep.subr.bf16.mxu0 0
    %1182 = vmatpush1.bf16.msra.mxu0 0
    %1183 = vmatprep.subr.bf16.mxu0 0
    %1184 = vmatpush1.bf16.msra.mxu0 0
    %1185 = vmatprep.subr.bf16.mxu0 0
    %1186 = vmatpush1.bf16.msra.mxu0 0
    %1187 = vmatprep.subr.bf16.mxu0 0
    %1188 = vmatpush1.bf16.msra.mxu0 0
    %1189 = vmatprep.mubr.bf16.mxu0 0
    %1190 = vmatmul.mubr.bf16.gmra.mrb[0].mxu0 %v1115
    %v1191 = vpop.f32.mrb[0].mxu0
    %v1192 = vadd.f32 0.0, %v1191
    %v1193 = vpop.f32.mrb[0].mxu0
    %v1194 = vpop.f32.mrb[0].mxu0
    %v1195 = vpop.f32.mrb[0].mxu0
    %1196 = vdwg.mxu0
    %v1197 = vpack.c.bf16 %v1110, %v1110
    %1198 = vmatprep.subr.bf16.mxu0 %v510
    %1199 = vmatpush1.bf16.msra.mxu0 %v509
    %1200 = vmatprep.subr.bf16.mxu0 %v513
    %1201 = vmatpush1.bf16.msra.mxu0 %v512
    %1202 = vmatprep.subr.bf16.mxu0 %v516
    %1203 = vmatpush1.bf16.msra.mxu0 %v515
    %1204 = vmatprep.subr.bf16.mxu0 %v519
    %1205 = vmatpush1.bf16.msra.mxu0 %v518
    %1206 = vmatprep.subr.bf16.mxu0 %v522
    %1207 = vmatpush1.bf16.msra.mxu0 %v521
    %1208 = vmatprep.subr.bf16.mxu0 %v525
    %1209 = vmatpush1.bf16.msra.mxu0 %v524
    %1210 = vmatprep.subr.bf16.mxu0 %v528
    %1211 = vmatpush1.bf16.msra.mxu0 %v527
    %1212 = vmatprep.subr.bf16.mxu0 %v531
    %1213 = vmatpush1.bf16.msra.mxu0 %v530
    %1214 = vmatprep.subr.bf16.mxu0 0
    %1215 = vmatpush1.bf16.msra.mxu0 0
    %1216 = vmatprep.subr.bf16.mxu0 0
    %1217 = vmatpush1.bf16.msra.mxu0 0
    %1218 = vmatprep.subr.bf16.mxu0 0
    %1219 = vmatpush1.bf16.msra.mxu0 0
    %1220 = vmatprep.subr.bf16.mxu0 0
    %1221 = vmatpush1.bf16.msra.mxu0 0
    %1222 = vmatprep.subr.bf16.mxu0 0
    %1223 = vmatpush1.bf16.msra.mxu0 0
    %1224 = vmatprep.subr.bf16.mxu0 0
    %1225 = vmatpush1.bf16.msra.mxu0 0
    %1226 = vmatprep.subr.bf16.mxu0 0
    %1227 = vmatpush1.bf16.msra.mxu0 0
    %1228 = vmatprep.subr.bf16.mxu0 0
    %1229 = vmatpush1.bf16.msra.mxu0 0
    %1230 = vmatprep.mubr.bf16.mxu0 0
    %1231 = vmatmul.mubr.bf16.gmra.mrb[0].mxu0 %v1197
    %v1232 = vpop.f32.mrb[0].mxu0
    %v1233 = vadd.f32 0.0, %v1232
    %v1234 = vpop.f32.mrb[0].mxu0
    %v1235 = vadd.f32 0.0, %v1234
    %v1236 = vpop.f32.mrb[0].mxu0
    %v1237 = vpop.f32.mrb[0].mxu0
    %1238 = vdwg.mxu0
    %1239 = vmatprep.subr.bf16.mxu0 0
    %1240 = vmatpush1.bf16.msra.mxu0 %v511
    %1241 = vmatprep.subr.bf16.mxu0 0
    %1242 = vmatpush1.bf16.msra.mxu0 %v514
    %1243 = vmatprep.subr.bf16.mxu0 0
    %1244 = vmatpush1.bf16.msra.mxu0 %v517
    %1245 = vmatprep.subr.bf16.mxu0 0
    %1246 = vmatpush1.bf16.msra.mxu0 %v520
    %1247 = vmatprep.subr.bf16.mxu0 0
    %1248 = vmatpush1.bf16.msra.mxu0 %v523
    %1249 = vmatprep.subr.bf16.mxu0 0
    %1250 = vmatpush1.bf16.msra.mxu0 %v526
    %1251 = vmatprep.subr.bf16.mxu0 0
    %1252 = vmatpush1.bf16.msra.mxu0 %v529
    %1253 = vmatprep.subr.bf16.mxu0 0
    %1254 = vmatpush1.bf16.msra.mxu0 %v532
    %1255 = vmatprep.subr.bf16.mxu0 0
    %1256 = vmatpush1.bf16.msra.mxu0 0
    %1257 = vmatprep.subr.bf16.mxu0 0
    %1258 = vmatpush1.bf16.msra.mxu0 0
    %1259 = vmatprep.subr.bf16.mxu0 0
    %1260 = vmatpush1.bf16.msra.mxu0 0
    %1261 = vmatprep.subr.bf16.mxu0 0
    %1262 = vmatpush1.bf16.msra.mxu0 0
    %1263 = vmatprep.subr.bf16.mxu0 0
    %1264 = vmatpush1.bf16.msra.mxu0 0
    %1265 = vmatprep.subr.bf16.mxu0 0
    %1266 = vmatpush1.bf16.msra.mxu0 0
    %1267 = vmatprep.subr.bf16.mxu0 0
    %1268 = vmatpush1.bf16.msra.mxu0 0
    %1269 = vmatprep.subr.bf16.mxu0 0
    %1270 = vmatpush1.bf16.msra.mxu0 0
    %1271 = vmatprep.mubr.bf16.mxu0 0
    %1272 = vmatmul.mubr.bf16.gmra.mrb[0].mxu0 %v1197
    %v1273 = vpop.f32.mrb[0].mxu0
    %v1274 = vadd.f32 0.0, %v1273
    %v1275 = vpop.f32.mrb[0].mxu0
    %v1276 = vpop.f32.mrb[0].mxu0
    %v1277 = vpop.f32.mrb[0].mxu0
    %1278 = vdwg.mxu0
    %v1280 = vsel %vm702, %v1112, 0
    %1282 = vmatprep.subr.bf16.mxu0 %v679
    %1283 = vmatpush1.bf16.msra.mxu0 %v678
    %1284 = vmatprep.subr.bf16.mxu0 %v682
    %1285 = vmatpush1.bf16.msra.mxu0 %v681
    %1286 = vmatprep.subr.bf16.mxu0 %v685
    %1287 = vmatpush1.bf16.msra.mxu0 %v684
    %1288 = vmatprep.subr.bf16.mxu0 %v688
    %1289 = vmatpush1.bf16.msra.mxu0 %v687
    %1290 = vmatprep.subr.bf16.mxu0 0
    %1291 = vmatpush1.bf16.msra.mxu0 0
    %1292 = vmatprep.subr.bf16.mxu0 0
    %1293 = vmatpush1.bf16.msra.mxu0 0
    %1294 = vmatprep.subr.bf16.mxu0 0
    %1295 = vmatpush1.bf16.msra.mxu0 0
    %1296 = vmatprep.subr.bf16.mxu0 0
    %1297 = vmatpush1.bf16.msra.mxu0 0
    %1298 = vmatprep.subr.bf16.mxu0 0
    %1299 = vmatpush1.bf16.msra.mxu0 0
    %1300 = vmatprep.subr.bf16.mxu0 0
    %1301 = vmatpush1.bf16.msra.mxu0 0
    %1302 = vmatprep.subr.bf16.mxu0 0
    %1303 = vmatpush1.bf16.msra.mxu0 0
    %1304 = vmatprep.subr.bf16.mxu0 0
    %1305 = vmatpush1.bf16.msra.mxu0 0
    %1306 = vmatprep.subr.bf16.mxu0 0
    %1307 = vmatpush1.bf16.msra.mxu0 0
    %1308 = vmatprep.subr.bf16.mxu0 0
    %1309 = vmatpush1.bf16.msra.mxu0 0
    %1310 = vmatprep.subr.bf16.mxu0 0
    %1311 = vmatpush1.bf16.msra.mxu0 0
    %1312 = vmatprep.subr.bf16.mxu0 0
    %1313 = vmatpush1.bf16.msra.mxu0 0
    %1314 = vmatprep.mubr.bf16.mxu0 0
    %1315 = vmatmul.mubr.bf16.gmra.mrb[0].mxu0 %v1280
    %v1316 = vpop.f32.mrb[0].mxu0
    %v1317 = vadd.f32 %v206, %v1316
    %v1318 = vpop.f32.mrb[0].mxu0
    %v1319 = vadd.f32 %v207, %v1318
    %v1320 = vpop.f32.mrb[0].mxu0
    %v1321 = vpop.f32.mrb[0].mxu0
    %1322 = vdwg.mxu0
    %1323 = vmatprep.subr.bf16.mxu0 0
    %1324 = vmatpush1.bf16.msra.mxu0 %v680
    %1325 = vmatprep.subr.bf16.mxu0 0
    %1326 = vmatpush1.bf16.msra.mxu0 %v683
    %1327 = vmatprep.subr.bf16.mxu0 0
    %1328 = vmatpush1.bf16.msra.mxu0 %v686
    %1329 = vmatprep.subr.bf16.mxu0 0
    %1330 = vmatpush1.bf16.msra.mxu0 %v689
    %1331 = vmatprep.subr.bf16.mxu0 0
    %1332 = vmatpush1.bf16.msra.mxu0 0
    %1333 = vmatprep.subr.bf16.mxu0 0
    %1334 = vmatpush1.bf16.msra.mxu0 0
    %1335 = vmatprep.subr.bf16.mxu0 0
    %1336 = vmatpush1.bf16.msra.mxu0 0
    %1337 = vmatprep.subr.bf16.mxu0 0
    %1338 = vmatpush1.bf16.msra.mxu0 0
    %1339 = vmatprep.subr.bf16.mxu0 0
    %1340 = vmatpush1.bf16.msra.mxu0 0
    %1341 = vmatprep.subr.bf16.mxu0 0
    %1342 = vmatpush1.bf16.msra.mxu0 0
    %1343 = vmatprep.subr.bf16.mxu0 0
    %1344 = vmatpush1.bf16.msra.mxu0 0
    %1345 = vmatprep.subr.bf16.mxu0 0
    %1346 = vmatpush1.bf16.msra.mxu0 0
    %1347 = vmatprep.subr.bf16.mxu0 0
    %1348 = vmatpush1.bf16.msra.mxu0 0
    %1349 = vmatprep.subr.bf16.mxu0 0
    %1350 = vmatpush1.bf16.msra.mxu0 0
    %1351 = vmatprep.subr.bf16.mxu0 0
    %1352 = vmatpush1.bf16.msra.mxu0 0
    %1353 = vmatprep.subr.bf16.mxu0 0
    %1354 = vmatpush1.bf16.msra.mxu0 0
    %1355 = vmatprep.mubr.bf16.mxu0 0
    %1356 = vmatmul.mubr.bf16.gmra.mrb[0].mxu0 %v1280
    %v1357 = vpop.f32.mrb[0].mxu0
    %v1358 = vadd.f32 %v208, %v1357
    %v1359 = vpop.f32.mrb[0].mxu0
    %v1360 = vpop.f32.mrb[0].mxu0
    %v1361 = vpop.f32.mrb[0].mxu0
    %1362 = vdwg.mxu0
    %v1364 = vsel %vm702, %v1114, 0
    %1366 = vmatprep.subr.bf16.mxu0 %v828
    %1367 = vmatpush1.bf16.msra.mxu0 %v827
    %1368 = vmatprep.subr.bf16.mxu0 %v831
    %1369 = vmatpush1.bf16.msra.mxu0 %v830
    %1370 = vmatprep.subr.bf16.mxu0 %v834
    %1371 = vmatpush1.bf16.msra.mxu0 %v833
    %1372 = vmatprep.subr.bf16.mxu0 %v837
    %1373 = vmatpush1.bf16.msra.mxu0 %v836
    %1374 = vmatprep.subr.bf16.mxu0 0
    %1375 = vmatpush1.bf16.msra.mxu0 0
    %1376 = vmatprep.subr.bf16.mxu0 0
    %1377 = vmatpush1.bf16.msra.mxu0 0
    %1378 = vmatprep.subr.bf16.mxu0 0
    %1379 = vmatpush1.bf16.msra.mxu0 0
    %1380 = vmatprep.subr.bf16.mxu0 0
    %1381 = vmatpush1.bf16.msra.mxu0 0
    %1382 = vmatprep.subr.bf16.mxu0 0
    %1383 = vmatpush1.bf16.msra.mxu0 0
    %1384 = vmatprep.subr.bf16.mxu0 0
    %1385 = vmatpush1.bf16.msra.mxu0 0
    %1386 = vmatprep.subr.bf16.mxu0 0
    %1387 = vmatpush1.bf16.msra.mxu0 0
    %1388 = vmatprep.subr.bf16.mxu0 0
    %1389 = vmatpush1.bf16.msra.mxu0 0
    %1390 = vmatprep.subr.bf16.mxu0 0
    %1391 = vmatpush1.bf16.msra.mxu0 0
    %1392 = vmatprep.subr.bf16.mxu0 0
    %1393 = vmatpush1.bf16.msra.mxu0 0
    %1394 = vmatprep.subr.bf16.mxu0 0
    %1395 = vmatpush1.bf16.msra.mxu0 0
    %1396 = vmatprep.subr.bf16.mxu0 0
    %1397 = vmatpush1.bf16.msra.mxu0 0
    %1398 = vmatprep.mubr.bf16.mxu0 0
    %1399 = vmatmul.mubr.bf16.gmra.mrb[0].mxu0 %v1364
    %v1400 = vpop.f32.mrb[0].mxu0
    %v1401 = vadd.f32 %v210, %v1400
    %v1402 = vpop.f32.mrb[0].mxu0
    %v1403 = vadd.f32 %v211, %v1402
    %v1404 = vpop.f32.mrb[0].mxu0
    %v1405 = vpop.f32.mrb[0].mxu0
    %1406 = vdwg.mxu0
    %1407 = vmatprep.subr.bf16.mxu0 0
    %1408 = vmatpush1.bf16.msra.mxu0 %v829
    %1409 = vmatprep.subr.bf16.mxu0 0
    %1410 = vmatpush1.bf16.msra.mxu0 %v832
    %1411 = vmatprep.subr.bf16.mxu0 0
    %1412 = vmatpush1.bf16.msra.mxu0 %v835
    %1413 = vmatprep.subr.bf16.mxu0 0
    %1414 = vmatpush1.bf16.msra.mxu0 %v838
    %1415 = vmatprep.subr.bf16.mxu0 0
    %1416 = vmatpush1.bf16.msra.mxu0 0
    %1417 = vmatprep.subr.bf16.mxu0 0
    %1418 = vmatpush1.bf16.msra.mxu0 0
    %1419 = vmatprep.subr.bf16.mxu0 0
    %1420 = vmatpush1.bf16.msra.mxu0 0
    %1421 = vmatprep.subr.bf16.mxu0 0
    %1422 = vmatpush1.bf16.msra.mxu0 0
    %1423 = vmatprep.subr.bf16.mxu0 0
    %1424 = vmatpush1.bf16.msra.mxu0 0
    %1425 = vmatprep.subr.bf16.mxu0 0
    %1426 = vmatpush1.bf16.msra.mxu0 0
    %1427 = vmatprep.subr.bf16.mxu0 0
    %1428 = vmatpush1.bf16.msra.mxu0 0
    %1429 = vmatprep.subr.bf16.mxu0 0
    %1430 = vmatpush1.bf16.msra.mxu0 0
    %1431 = vmatprep.subr.bf16.mxu0 0
    %1432 = vmatpush1.bf16.msra.mxu0 0
    %1433 = vmatprep.subr.bf16.mxu0 0
    %1434 = vmatpush1.bf16.msra.mxu0 0
    %1435 = vmatprep.subr.bf16.mxu0 0
    %1436 = vmatpush1.bf16.msra.mxu0 0
    %1437 = vmatprep.subr.bf16.mxu0 0
    %1438 = vmatpush1.bf16.msra.mxu0 0
    %1439 = vmatprep.mubr.bf16.mxu0 0
    %1440 = vmatmul.mubr.bf16.gmra.mrb[0].mxu0 %v1364
    %v1441 = vpop.f32.mrb[0].mxu0
    %v1442 = vadd.f32 %v212, %v1441
    %v1443 = vpop.f32.mrb[0].mxu0
    %v1444 = vpop.f32.mrb[0].mxu0
    %v1445 = vpop.f32.mrb[0].mxu0
    %1446 = vdwg.mxu0
    %v1447 = vadd.f32 %v1317, %v1151
    %v1448 = vxor.u32 %v1447, 2147483648
    %v1449 = vmul.f32 %v1448, 1.442695
    %v1450 = vpow.pop %v1449
    %v1451 = vadd.f32 %v1450, 1.0
    %v1452 = vrcp.pop %v1451
    %v1453 = vmul.f32 1.0, %v1452
    %v1454 = vadd.f32 %v1319, %v1153
    %v1455 = vxor.u32 %v1454, 2147483648
    %v1456 = vmul.f32 %v1455, 1.442695
    %v1457 = vpow.pop %v1456
    %v1458 = vadd.f32 %v1457, 1.0
    %v1459 = vrcp.pop %v1458
    %v1460 = vmul.f32 1.0, %v1459
    %v1461 = vmul.f32 %v1453, %v1192
    %v1462 = vadd.f32 %v1358, %v1461
    %v1463 = vtanh.pop %v1462
    %v1464 = vsub.f32 %v1109, %v1463
    %v1465 = vmul.f32 %v1460, %v1464
    %v1466 = vadd.f32 %v1463, %v1465
    %v1467 = vadd.f32 %v1401, %v1233
    %v1468 = vxor.u32 %v1467, 2147483648
    %v1469 = vmul.f32 %v1468, 1.442695
    %v1470 = vpow.pop %v1469
    %v1471 = vadd.f32 %v1470, 1.0
    %v1472 = vrcp.pop %v1471
    %v1473 = vmul.f32 1.0, %v1472
    %v1474 = vadd.f32 %v1403, %v1235
    %v1475 = vxor.u32 %v1474, 2147483648
    %v1476 = vmul.f32 %v1475, 1.442695
    %v1477 = vpow.pop %v1476
    %v1478 = vadd.f32 %v1477, 1.0
    %v1479 = vrcp.pop %v1478
    %v1480 = vmul.f32 1.0, %v1479
    %v1481 = vmul.f32 %v1473, %v1274
    %v1482 = vadd.f32 %v1442, %v1481
    %v1483 = vtanh.pop %v1482
    %v1484 = vsub.f32 %v1110, %v1483
    %v1485 = vmul.f32 %v1480, %v1484
    %v1486 = vadd.f32 %v1483, %v1485
    %1487 = vst [vmem:[#allocation2] sm:$0xff] %v1466
    %1488 = vst [vmem:[#allocation3] sm:$0xff] %v1486
    %v1490 = vcombine.high %v1466, %v1466
    %v1492 = vunpack.c.l.s4 1966171168
    %v1493 = vunpack.c.0.s8 %v1492
    %v1494 = vlaneseq
    %v1495 = vshrl.u32 %v1494, 7
    %v1496 = vsub.s32 %v1493, %v1495
    %v1497 = vrot.slane %v1466, %v1496
    %v1499 = vunpack.c.l.s4 1966171168
    %v1500 = vunpack.c.0.s8 %v1499
    %v1501 = vlaneseq
    %v1502 = vshrl.u32 %v1501, 7
    %v1503 = vsub.s32 %v1500, %v1502
    %v1504 = vrot.slane %v1490, %v1503
    %v1505 = vcombine.high %v1497, %v1497
    %v1506 = vcombine.high %v1504, %v1504
    %v1508 = vunpack.c.l.s4 1966171168
    %v1509 = vunpack.c.0.s8 %v1508
    %v1510 = vlaneseq
    %v1511 = vshrl.u32 %v1510, 7
    %v1512 = vsub.s32 %v1509, %v1511
    %v1513 = vrot.slane %v1497, %v1512
    %v1515 = vunpack.c.l.s4 1966171168
    %v1516 = vunpack.c.0.s8 %v1515
    %v1517 = vlaneseq
    %v1518 = vshrl.u32 %v1517, 7
    %v1519 = vsub.s32 %v1516, %v1518
    %v1520 = vrot.slane %v1504, %v1519
    %v1522 = vunpack.c.l.s4 1966171168
    %v1523 = vunpack.c.0.s8 %v1522
    %v1524 = vlaneseq
    %v1525 = vshrl.u32 %v1524, 7
    %v1526 = vsub.s32 %v1523, %v1525
    %v1527 = vrot.slane %v1505, %v1526
    %v1529 = vunpack.c.l.s4 1966171168
    %v1530 = vunpack.c.0.s8 %v1529
    %v1531 = vlaneseq
    %v1532 = vshrl.u32 %v1531, 7
    %v1533 = vsub.s32 %v1530, %v1532
    %v1534 = vrot.slane %v1506, %v1533
    %v1535 = vcombine.high %v1513, %v1513
    %v1536 = vcombine.high %v1520, %v1520
    %v1537 = vcombine.high %v1527, %v1527
    %v1538 = vcombine.high %v1534, %v1534
    %1547 = vst [vmem:[#allocation13 + $0x1] sm:$0x1] %v1513
    %1548 = vst [vmem:[#allocation13 + $0x11] sm:$0x1] %v1527
    %1549 = vst [vmem:[#allocation13 + $0x21] sm:$0x1] %v1535
    %1550 = vst [vmem:[#allocation13 + $0x31] sm:$0x1] %v1537
    %1551 = vst [vmem:[#allocation13 + $0x41] sm:$0x1] %v1520
    %1552 = vst [vmem:[#allocation13 + $0x51] sm:$0x1] %v1534
    %1553 = vst [vmem:[#allocation13 + $0x61] sm:$0x1] %v1536
    %1554 = vst [vmem:[#allocation13 + $0x71] sm:$0x1] %v1538
    %v1556 = vcombine.high %v1486, %v1486
    %v1558 = vunpack.c.l.s4 1966171168
    %v1559 = vunpack.c.0.s8 %v1558
    %v1560 = vlaneseq
    %v1561 = vshrl.u32 %v1560, 7
    %v1562 = vsub.s32 %v1559, %v1561
    %v1563 = vrot.slane %v1486, %v1562
    %v1565 = vunpack.c.l.s4 1966171168
    %v1566 = vunpack.c.0.s8 %v1565
    %v1567 = vlaneseq
    %v1568 = vshrl.u32 %v1567, 7
    %v1569 = vsub.s32 %v1566, %v1568
    %v1570 = vrot.slane %v1556, %v1569
    %v1571 = vcombine.high %v1563, %v1563
    %v1572 = vcombine.high %v1570, %v1570
    %v1574 = vunpack.c.l.s4 1966171168
    %v1575 = vunpack.c.0.s8 %v1574
    %v1576 = vlaneseq
    %v1577 = vshrl.u32 %v1576, 7
    %v1578 = vsub.s32 %v1575, %v1577
    %v1579 = vrot.slane %v1563, %v1578
    %v1581 = vunpack.c.l.s4 1966171168
    %v1582 = vunpack.c.0.s8 %v1581
    %v1583 = vlaneseq
    %v1584 = vshrl.u32 %v1583, 7
    %v1585 = vsub.s32 %v1582, %v1584
    %v1586 = vrot.slane %v1570, %v1585
    %v1588 = vunpack.c.l.s4 1966171168
    %v1589 = vunpack.c.0.s8 %v1588
    %v1590 = vlaneseq
    %v1591 = vshrl.u32 %v1590, 7
    %v1592 = vsub.s32 %v1589, %v1591
    %v1593 = vrot.slane %v1571, %v1592
    %v1595 = vunpack.c.l.s4 1966171168
    %v1596 = vunpack.c.0.s8 %v1595
    %v1597 = vlaneseq
    %v1598 = vshrl.u32 %v1597, 7
    %v1599 = vsub.s32 %v1596, %v1598
    %v1600 = vrot.slane %v1572, %v1599
    %v1601 = vcombine.high %v1579, %v1579
    %v1602 = vcombine.high %v1586, %v1586
    %v1603 = vcombine.high %v1593, %v1593
    %v1604 = vcombine.high %v1600, %v1600
    %1613 = vst [vmem:[#allocation14 + $0xe] sm:$0x1] %v1579
    %1614 = vst [vmem:[#allocation14 + $0x1e] sm:$0x1] %v1593
    %1615 = vst [vmem:[#allocation14 + $0x2e] sm:$0x1] %v1601
    %1616 = vst [vmem:[#allocation14 + $0x3e] sm:$0x1] %v1603
    %1617 = vst [vmem:[#allocation14 + $0x4e] sm:$0x1] %v1586
    %1618 = vst [vmem:[#allocation14 + $0x5e] sm:$0x1] %v1600
    %1619 = vst [vmem:[#allocation14 + $0x6e] sm:$0x1] %v1602
    %1620 = vst [vmem:[#allocation14 + $0x7e] sm:$0x1] %v1604
    %v1621 = vld [vmem:[#allocation2] sm:$0xff]
    %v1622 = vld [vmem:[#allocation3] sm:$0xff]
    %s1623 = scalar_lea.vmem [#allocation4], 8
    %v1624 = vld [vmem:[%s1623] sm:$0xf]
    %s1625 = scalar_lea.vmem [#allocation7], 52
    %v1626 = vld [vmem:[%s1625] sm:$0xf]
    %v1627 = vpack.c.bf16 %v1621, %v1621
    %1628 = vmatprep.subr.bf16.mxu0 %v300
    %1629 = vmatpush1.bf16.msra.mxu0 %v299
    %1630 = vmatprep.subr.bf16.mxu0 %v303
    %1631 = vmatpush1.bf16.msra.mxu0 %v302
    %1632 = vmatprep.subr.bf16.mxu0 %v306
    %1633 = vmatpush1.bf16.msra.mxu0 %v305
    %1634 = vmatprep.subr.bf16.mxu0 %v309
    %1635 = vmatpush1.bf16.msra.mxu0 %v308
    %1636 = vmatprep.subr.bf16.mxu0 %v312
    %1637 = vmatpush1.bf16.msra.mxu0 %v311
    %1638 = vmatprep.subr.bf16.mxu0 %v315
    %1639 = vmatpush1.bf16.msra.mxu0 %v314
    %1640 = vmatprep.subr.bf16.mxu0 %v318
    %1641 = vmatpush1.bf16.msra.mxu0 %v317
    %1642 = vmatprep.subr.bf16.mxu0 %v321
    %1643 = vmatpush1.bf16.msra.mxu0 %v320
    %1644 = vmatprep.subr.bf16.mxu0 0
    %1645 = vmatpush1.bf16.msra.mxu0 0
    %1646 = vmatprep.subr.bf16.mxu0 0
    %1647 = vmatpush1.bf16.msra.mxu0 0
    %1648 = vmatprep.subr.bf16.mxu0 0
    %1649 = vmatpush1.bf16.msra.mxu0 0
    %1650 = vmatprep.subr.bf16.mxu0 0
    %1651 = vmatpush1.bf16.msra.mxu0 0
    %1652 = vmatprep.subr.bf16.mxu0 0
    %1653 = vmatpush1.bf16.msra.mxu0 0
    %1654 = vmatprep.subr.bf16.mxu0 0
    %1655 = vmatpush1.bf16.msra.mxu0 0
    %1656 = vmatprep.subr.bf16.mxu0 0
    %1657 = vmatpush1.bf16.msra.mxu0 0
    %1658 = vmatprep.subr.bf16.mxu0 0
    %1659 = vmatpush1.bf16.msra.mxu0 0
    %1660 = vmatprep.mubr.bf16.mxu0 0
    %1661 = vmatmul.mubr.bf16.gmra.mrb[0].mxu0 %v1627
    %v1662 = vpop.f32.mrb[0].mxu0
    %v1663 = vadd.f32 0.0, %v1662
    %v1664 = vpop.f32.mrb[0].mxu0
    %v1665 = vadd.f32 0.0, %v1664
    %v1666 = vpop.f32.mrb[0].mxu0
    %v1667 = vpop.f32.mrb[0].mxu0
    %1668 = vdwg.mxu0
    %1669 = vmatprep.subr.bf16.mxu0 0
    %1670 = vmatpush1.bf16.msra.mxu0 %v301
    %1671 = vmatprep.subr.bf16.mxu0 0
    %1672 = vmatpush1.bf16.msra.mxu0 %v304
    %1673 = vmatprep.subr.bf16.mxu0 0
    %1674 = vmatpush1.bf16.msra.mxu0 %v307
    %1675 = vmatprep.subr.bf16.mxu0 0
    %1676 = vmatpush1.bf16.msra.mxu0 %v310
    %1677 = vmatprep.subr.bf16.mxu0 0
    %1678 = vmatpush1.bf16.msra.mxu0 %v313
    %1679 = vmatprep.subr.bf16.mxu0 0
    %1680 = vmatpush1.bf16.msra.mxu0 %v316
    %1681 = vmatprep.subr.bf16.mxu0 0
    %1682 = vmatpush1.bf16.msra.mxu0 %v319
    %1683 = vmatprep.subr.bf16.mxu0 0
    %1684 = vmatpush1.bf16.msra.mxu0 %v322
    %1685 = vmatprep.subr.bf16.mxu0 0
    %1686 = vmatpush1.bf16.msra.mxu0 0
    %1687 = vmatprep.subr.bf16.mxu0 0
    %1688 = vmatpush1.bf16.msra.mxu0 0
    %1689 = vmatprep.subr.bf16.mxu0 0
    %1690 = vmatpush1.bf16.msra.mxu0 0
    %1691 = vmatprep.subr.bf16.mxu0 0
    %1692 = vmatpush1.bf16.msra.mxu0 0
    %1693 = vmatprep.subr.bf16.mxu0 0
    %1694 = vmatpush1.bf16.msra.mxu0 0
    %1695 = vmatprep.subr.bf16.mxu0 0
    %1696 = vmatpush1.bf16.msra.mxu0 0
    %1697 = vmatprep.subr.bf16.mxu0 0
    %1698 = vmatpush1.bf16.msra.mxu0 0
    %1699 = vmatprep.subr.bf16.mxu0 0
    %1700 = vmatpush1.bf16.msra.mxu0 0
    %1701 = vmatprep.mubr.bf16.mxu0 0
    %1702 = vmatmul.mubr.bf16.gmra.mrb[0].mxu0 %v1627
    %v1703 = vpop.f32.mrb[0].mxu0
    %v1704 = vadd.f32 0.0, %v1703
    %v1705 = vpop.f32.mrb[0].mxu0
    %v1706 = vpop.f32.mrb[0].mxu0
    %v1707 = vpop.f32.mrb[0].mxu0
    %1708 = vdwg.mxu0
    %v1709 = vpack.c.bf16 %v1622, %v1622
    %1710 = vmatprep.subr.bf16.mxu0 %v510
    %1711 = vmatpush1.bf16.msra.mxu0 %v509
    %1712 = vmatprep.subr.bf16.mxu0 %v513
    %1713 = vmatpush1.bf16.msra.mxu0 %v512
    %1714 = vmatprep.subr.bf16.mxu0 %v516
    %1715 = vmatpush1.bf16.msra.mxu0 %v515
    %1716 = vmatprep.subr.bf16.mxu0 %v519
    %1717 = vmatpush1.bf16.msra.mxu0 %v518
    %1718 = vmatprep.subr.bf16.mxu0 %v522
    %1719 = vmatpush1.bf16.msra.mxu0 %v521
    %1720 = vmatprep.subr.bf16.mxu0 %v525
    %1721 = vmatpush1.bf16.msra.mxu0 %v524
    %1722 = vmatprep.subr.bf16.mxu0 %v528
    %1723 = vmatpush1.bf16.msra.mxu0 %v527
    %1724 = vmatprep.subr.bf16.mxu0 %v531
    %1725 = vmatpush1.bf16.msra.mxu0 %v530
    %1726 = vmatprep.subr.bf16.mxu0 0
    %1727 = vmatpush1.bf16.msra.mxu0 0
    %1728 = vmatprep.subr.bf16.mxu0 0
    %1729 = vmatpush1.bf16.msra.mxu0 0
    %1730 = vmatprep.subr.bf16.mxu0 0
    %1731 = vmatpush1.bf16.msra.mxu0 0
    %1732 = vmatprep.subr.bf16.mxu0 0
    %1733 = vmatpush1.bf16.msra.mxu0 0
    %1734 = vmatprep.subr.bf16.mxu0 0
    %1735 = vmatpush1.bf16.msra.mxu0 0
    %1736 = vmatprep.subr.bf16.mxu0 0
    %1737 = vmatpush1.bf16.msra.mxu0 0
    %1738 = vmatprep.subr.bf16.mxu0 0
    %1739 = vmatpush1.bf16.msra.mxu0 0
    %1740 = vmatprep.subr.bf16.mxu0 0
    %1741 = vmatpush1.bf16.msra.mxu0 0
    %1742 = vmatprep.mubr.bf16.mxu0 0
    %1743 = vmatmul.mubr.bf16.gmra.mrb[0].mxu0 %v1709
    %v1744 = vpop.f32.mrb[0].mxu0
    %v1745 = vadd.f32 0.0, %v1744
    %v1746 = vpop.f32.mrb[0].mxu0
    %v1747 = vadd.f32 0.0, %v1746
    %v1748 = vpop.f32.mrb[0].mxu0
    %v1749 = vpop.f32.mrb[0].mxu0
    %1750 = vdwg.mxu0
    %1751 = vmatprep.subr.bf16.mxu0 0
    %1752 = vmatpush1.bf16.msra.mxu0 %v511
    %1753 = vmatprep.subr.bf16.mxu0 0
    %1754 = vmatpush1.bf16.msra.mxu0 %v514
    %1755 = vmatprep.subr.bf16.mxu0 0
    %1756 = vmatpush1.bf16.msra.mxu0 %v517
    %1757 = vmatprep.subr.bf16.mxu0 0
    %1758 = vmatpush1.bf16.msra.mxu0 %v520
    %1759 = vmatprep.subr.bf16.mxu0 0
    %1760 = vmatpush1.bf16.msra.mxu0 %v523
    %1761 = vmatprep.subr.bf16.mxu0 0
    %1762 = vmatpush1.bf16.msra.mxu0 %v526
    %1763 = vmatprep.subr.bf16.mxu0 0
    %1764 = vmatpush1.bf16.msra.mxu0 %v529
    %1765 = vmatprep.subr.bf16.mxu0 0
    %1766 = vmatpush1.bf16.msra.mxu0 %v532
    %1767 = vmatprep.subr.bf16.mxu0 0
    %1768 = vmatpush1.bf16.msra.mxu0 0
    %1769 = vmatprep.subr.bf16.mxu0 0
    %1770 = vmatpush1.bf16.msra.mxu0 0
    %1771 = vmatprep.subr.bf16.mxu0 0
    %1772 = vmatpush1.bf16.msra.mxu0 0
    %1773 = vmatprep.subr.bf16.mxu0 0
    %1774 = vmatpush1.bf16.msra.mxu0 0
    %1775 = vmatprep.subr.bf16.mxu0 0
    %1776 = vmatpush1.bf16.msra.mxu0 0
    %1777 = vmatprep.subr.bf16.mxu0 0
    %1778 = vmatpush1.bf16.msra.mxu0 0
    %1779 = vmatprep.subr.bf16.mxu0 0
    %1780 = vmatpush1.bf16.msra.mxu0 0
    %1781 = vmatprep.subr.bf16.mxu0 0
    %1782 = vmatpush1.bf16.msra.mxu0 0
    %1783 = vmatprep.mubr.bf16.mxu0 0
    %1784 = vmatmul.mubr.bf16.gmra.mrb[0].mxu0 %v1709
    %v1785 = vpop.f32.mrb[0].mxu0
    %v1786 = vadd.f32 0.0, %v1785
    %v1787 = vpop.f32.mrb[0].mxu0
    %v1788 = vpop.f32.mrb[0].mxu0
    %v1789 = vpop.f32.mrb[0].mxu0
    %1790 = vdwg.mxu0
    %v1792 = vsel %vm702, %v1624, 0
    %1794 = vmatprep.subr.bf16.mxu0 %v679
    %1795 = vmatpush1.bf16.msra.mxu0 %v678
    %1796 = vmatprep.subr.bf16.mxu0 %v682
    %1797 = vmatpush1.bf16.msra.mxu0 %v681
    %1798 = vmatprep.subr.bf16.mxu0 %v685
    %1799 = vmatpush1.bf16.msra.mxu0 %v684
    %1800 = vmatprep.subr.bf16.mxu0 %v688
    %1801 = vmatpush1.bf16.msra.mxu0 %v687
    %1802 = vmatprep.subr.bf16.mxu0 0
    %1803 = vmatpush1.bf16.msra.mxu0 0
    %1804 = vmatprep.subr.bf16.mxu0 0
    %1805 = vmatpush1.bf16.msra.mxu0 0
    %1806 = vmatprep.subr.bf16.mxu0 0
    %1807 = vmatpush1.bf16.msra.mxu0 0
    %1808 = vmatprep.subr.bf16.mxu0 0
    %1809 = vmatpush1.bf16.msra.mxu0 0
    %1810 = vmatprep.subr.bf16.mxu0 0
    %1811 = vmatpush1.bf16.msra.mxu0 0
    %1812 = vmatprep.subr.bf16.mxu0 0
    %1813 = vmatpush1.bf16.msra.mxu0 0
    %1814 = vmatprep.subr.bf16.mxu0 0
    %1815 = vmatpush1.bf16.msra.mxu0 0
    %1816 = vmatprep.subr.bf16.mxu0 0
    %1817 = vmatpush1.bf16.msra.mxu0 0
    %1818 = vmatprep.subr.bf16.mxu0 0
    %1819 = vmatpush1.bf16.msra.mxu0 0
    %1820 = vmatprep.subr.bf16.mxu0 0
    %1821 = vmatpush1.bf16.msra.mxu0 0
    %1822 = vmatprep.subr.bf16.mxu0 0
    %1823 = vmatpush1.bf16.msra.mxu0 0
    %1824 = vmatprep.subr.bf16.mxu0 0
    %1825 = vmatpush1.bf16.msra.mxu0 0
    %1826 = vmatprep.mubr.bf16.mxu0 0
    %1827 = vmatmul.mubr.bf16.gmra.mrb[0].mxu0 %v1792
    %v1828 = vpop.f32.mrb[0].mxu0
    %v1829 = vadd.f32 %v206, %v1828
    %v1830 = vpop.f32.mrb[0].mxu0
    %v1831 = vadd.f32 %v207, %v1830
    %v1832 = vpop.f32.mrb[0].mxu0
    %v1833 = vpop.f32.mrb[0].mxu0
    %1834 = vdwg.mxu0
    %1835 = vmatprep.subr.bf16.mxu0 0
    %1836 = vmatpush1.bf16.msra.mxu0 %v680
    %1837 = vmatprep.subr.bf16.mxu0 0
    %1838 = vmatpush1.bf16.msra.mxu0 %v683
    %1839 = vmatprep.subr.bf16.mxu0 0
    %1840 = vmatpush1.bf16.msra.mxu0 %v686
    %1841 = vmatprep.subr.bf16.mxu0 0
    %1842 = vmatpush1.bf16.msra.mxu0 %v689
    %1843 = vmatprep.subr.bf16.mxu0 0
    %1844 = vmatpush1.bf16.msra.mxu0 0
    %1845 = vmatprep.subr.bf16.mxu0 0
    %1846 = vmatpush1.bf16.msra.mxu0 0
    %1847 = vmatprep.subr.bf16.mxu0 0
    %1848 = vmatpush1.bf16.msra.mxu0 0
    %1849 = vmatprep.subr.bf16.mxu0 0
    %1850 = vmatpush1.bf16.msra.mxu0 0
    %1851 = vmatprep.subr.bf16.mxu0 0
    %1852 = vmatpush1.bf16.msra.mxu0 0
    %1853 = vmatprep.subr.bf16.mxu0 0
    %1854 = vmatpush1.bf16.msra.mxu0 0
    %1855 = vmatprep.subr.bf16.mxu0 0
    %1856 = vmatpush1.bf16.msra.mxu0 0
    %1857 = vmatprep.subr.bf16.mxu0 0
    %1858 = vmatpush1.bf16.msra.mxu0 0
    %1859 = vmatprep.subr.bf16.mxu0 0
    %1860 = vmatpush1.bf16.msra.mxu0 0
    %1861 = vmatprep.subr.bf16.mxu0 0
    %1862 = vmatpush1.bf16.msra.mxu0 0
    %1863 = vmatprep.subr.bf16.mxu0 0
    %1864 = vmatpush1.bf16.msra.mxu0 0
    %1865 = vmatprep.subr.bf16.mxu0 0
    %1866 = vmatpush1.bf16.msra.mxu0 0
    %1867 = vmatprep.mubr.bf16.mxu0 0
    %1868 = vmatmul.mubr.bf16.gmra.mrb[0].mxu0 %v1792
    %v1869 = vpop.f32.mrb[0].mxu0
    %v1870 = vadd.f32 %v208, %v1869
    %v1871 = vpop.f32.mrb[0].mxu0
    %v1872 = vpop.f32.mrb[0].mxu0
    %v1873 = vpop.f32.mrb[0].mxu0
    %1874 = vdwg.mxu0
    %v1876 = vsel %vm702, %v1626, 0
    %1878 = vmatprep.subr.bf16.mxu0 %v828
    %1879 = vmatpush1.bf16.msra.mxu0 %v827
    %1880 = vmatprep.subr.bf16.mxu0 %v831
    %1881 = vmatpush1.bf16.msra.mxu0 %v830
    %1882 = vmatprep.subr.bf16.mxu0 %v834
    %1883 = vmatpush1.bf16.msra.mxu0 %v833
    %1884 = vmatprep.subr.bf16.mxu0 %v837
    %1885 = vmatpush1.bf16.msra.mxu0 %v836
    %1886 = vmatprep.subr.bf16.mxu0 0
    %1887 = vmatpush1.bf16.msra.mxu0 0
    %1888 = vmatprep.subr.bf16.mxu0 0
    %1889 = vmatpush1.bf16.msra.mxu0 0
    %1890 = vmatprep.subr.bf16.mxu0 0
    %1891 = vmatpush1.bf16.msra.mxu0 0
    %1892 = vmatprep.subr.bf16.mxu0 0
    %1893 = vmatpush1.bf16.msra.mxu0 0
    %1894 = vmatprep.subr.bf16.mxu0 0
    %1895 = vmatpush1.bf16.msra.mxu0 0
    %1896 = vmatprep.subr.bf16.mxu0 0
    %1897 = vmatpush1.bf16.msra.mxu0 0
    %1898 = vmatprep.subr.bf16.mxu0 0
    %1899 = vmatpush1.bf16.msra.mxu0 0
    %1900 = vmatprep.subr.bf16.mxu0 0
    %1901 = vmatpush1.bf16.msra.mxu0 0
    %1902 = vmatprep.subr.bf16.mxu0 0
    %1903 = vmatpush1.bf16.msra.mxu0 0
    %1904 = vmatprep.subr.bf16.mxu0 0
    %1905 = vmatpush1.bf16.msra.mxu0 0
    %1906 = vmatprep.subr.bf16.mxu0 0
    %1907 = vmatpush1.bf16.msra.mxu0 0
    %1908 = vmatprep.subr.bf16.mxu0 0
    %1909 = vmatpush1.bf16.msra.mxu0 0
    %1910 = vmatprep.mubr.bf16.mxu0 0
    %1911 = vmatmul.mubr.bf16.gmra.mrb[0].mxu0 %v1876
    %v1912 = vpop.f32.mrb[0].mxu0
    %v1913 = vadd.f32 %v210, %v1912
    %v1914 = vpop.f32.mrb[0].mxu0
    %v1915 = vadd.f32 %v211, %v1914
    %v1916 = vpop.f32.mrb[0].mxu0
    %v1917 = vpop.f32.mrb[0].mxu0
    %1918 = vdwg.mxu0
    %1919 = vmatprep.subr.bf16.mxu0 0
    %1920 = vmatpush1.bf16.msra.mxu0 %v829
    %1921 = vmatprep.subr.bf16.mxu0 0
    %1922 = vmatpush1.bf16.msra.mxu0 %v832
    %1923 = vmatprep.subr.bf16.mxu0 0
    %1924 = vmatpush1.bf16.msra.mxu0 %v835
    %1925 = vmatprep.subr.bf16.mxu0 0
    %1926 = vmatpush1.bf16.msra.mxu0 %v838
    %1927 = vmatprep.subr.bf16.mxu0 0
    %1928 = vmatpush1.bf16.msra.mxu0 0
    %1929 = vmatprep.subr.bf16.mxu0 0
    %1930 = vmatpush1.bf16.msra.mxu0 0
    %1931 = vmatprep.subr.bf16.mxu0 0
    %1932 = vmatpush1.bf16.msra.mxu0 0
    %1933 = vmatprep.subr.bf16.mxu0 0
    %1934 = vmatpush1.bf16.msra.mxu0 0
    %1935 = vmatprep.subr.bf16.mxu0 0
    %1936 = vmatpush1.bf16.msra.mxu0 0
    %1937 = vmatprep.subr.bf16.mxu0 0
    %1938 = vmatpush1.bf16.msra.mxu0 0
    %1939 = vmatprep.subr.bf16.mxu0 0
    %1940 = vmatpush1.bf16.msra.mxu0 0
    %1941 = vmatprep.subr.bf16.mxu0 0
    %1942 = vmatpush1.bf16.msra.mxu0 0
    %1943 = vmatprep.subr.bf16.mxu0 0
    %1944 = vmatpush1.bf16.msra.mxu0 0
    %1945 = vmatprep.subr.bf16.mxu0 0
    %1946 = vmatpush1.bf16.msra.mxu0 0
    %1947 = vmatprep.subr.bf16.mxu0 0
    %1948 = vmatpush1.bf16.msra.mxu0 0
    %1949 = vmatprep.subr.bf16.mxu0 0
    %1950 = vmatpush1.bf16.msra.mxu0 0
    %1951 = vmatprep.mubr.bf16.mxu0 0
    %1952 = vmatmul.mubr.bf16.gmra.mrb[0].mxu0 %v1876
    %v1953 = vpop.f32.mrb[0].mxu0
    %v1954 = vadd.f32 %v212, %v1953
    %v1955 = vpop.f32.mrb[0].mxu0
    %v1956 = vpop.f32.mrb[0].mxu0
    %v1957 = vpop.f32.mrb[0].mxu0
    %1958 = vdwg.mxu0
    %v1959 = vadd.f32 %v1829, %v1663
    %v1960 = vxor.u32 %v1959, 2147483648
    %v1961 = vmul.f32 %v1960, 1.442695
    %v1962 = vpow.pop %v1961
    %v1963 = vadd.f32 %v1962, 1.0
    %v1964 = vrcp.pop %v1963
    %v1965 = vmul.f32 1.0, %v1964
    %v1966 = vadd.f32 %v1831, %v1665
    %v1967 = vxor.u32 %v1966, 2147483648
    %v1968 = vmul.f32 %v1967, 1.442695
    %v1969 = vpow.pop %v1968
    %v1970 = vadd.f32 %v1969, 1.0
    %v1971 = vrcp.pop %v1970
    %v1972 = vmul.f32 1.0, %v1971
    %v1973 = vmul.f32 %v1965, %v1704
    %v1974 = vadd.f32 %v1870, %v1973
    %v1975 = vtanh.pop %v1974
    %v1976 = vsub.f32 %v1621, %v1975
    %v1977 = vmul.f32 %v1972, %v1976
    %v1978 = vadd.f32 %v1975, %v1977
    %v1979 = vadd.f32 %v1913, %v1745
    %v1980 = vxor.u32 %v1979, 2147483648
    %v1981 = vmul.f32 %v1980, 1.442695
    %v1982 = vpow.pop %v1981
    %v1983 = vadd.f32 %v1982, 1.0
    %v1984 = vrcp.pop %v1983
    %v1985 = vmul.f32 1.0, %v1984
    %v1986 = vadd.f32 %v1915, %v1747
    %v1987 = vxor.u32 %v1986, 2147483648
    %v1988 = vmul.f32 %v1987, 1.442695
    %v1989 = vpow.pop %v1988
    %v1990 = vadd.f32 %v1989, 1.0
    %v1991 = vrcp.pop %v1990
    %v1992 = vmul.f32 1.0, %v1991
    %v1993 = vmul.f32 %v1985, %v1786
    %v1994 = vadd.f32 %v1954, %v1993
    %v1995 = vtanh.pop %v1994
    %v1996 = vsub.f32 %v1622, %v1995
    %v1997 = vmul.f32 %v1992, %v1996
    %v1998 = vadd.f32 %v1995, %v1997
    %1999 = vst [vmem:[#allocation2] sm:$0xff] %v1978
    %2000 = vst [vmem:[#allocation3] sm:$0xff] %v1998
    %v2002 = vcombine.high %v1978, %v1978
    %v2004 = vunpack.c.l.s4 1966171168
    %v2005 = vunpack.c.0.s8 %v2004
    %v2006 = vlaneseq
    %v2007 = vshrl.u32 %v2006, 7
    %v2008 = vsub.s32 %v2005, %v2007
    %v2009 = vrot.slane %v1978, %v2008
    %v2011 = vunpack.c.l.s4 1966171168
    %v2012 = vunpack.c.0.s8 %v2011
    %v2013 = vlaneseq
    %v2014 = vshrl.u32 %v2013, 7
    %v2015 = vsub.s32 %v2012, %v2014
    %v2016 = vrot.slane %v2002, %v2015
    %v2017 = vcombine.high %v2009, %v2009
    %v2018 = vcombine.high %v2016, %v2016
    %v2020 = vunpack.c.l.s4 1966171168
    %v2021 = vunpack.c.0.s8 %v2020
    %v2022 = vlaneseq
    %v2023 = vshrl.u32 %v2022, 7
    %v2024 = vsub.s32 %v2021, %v2023
    %v2025 = vrot.slane %v2009, %v2024
    %v2027 = vunpack.c.l.s4 1966171168
    %v2028 = vunpack.c.0.s8 %v2027
    %v2029 = vlaneseq
    %v2030 = vshrl.u32 %v2029, 7
    %v2031 = vsub.s32 %v2028, %v2030
    %v2032 = vrot.slane %v2016, %v2031
    %v2034 = vunpack.c.l.s4 1966171168
    %v2035 = vunpack.c.0.s8 %v2034
    %v2036 = vlaneseq
    %v2037 = vshrl.u32 %v2036, 7
    %v2038 = vsub.s32 %v2035, %v2037
    %v2039 = vrot.slane %v2017, %v2038
    %v2041 = vunpack.c.l.s4 1966171168
    %v2042 = vunpack.c.0.s8 %v2041
    %v2043 = vlaneseq
    %v2044 = vshrl.u32 %v2043, 7
    %v2045 = vsub.s32 %v2042, %v2044
    %v2046 = vrot.slane %v2018, %v2045
    %v2047 = vcombine.high %v2025, %v2025
    %v2048 = vcombine.high %v2032, %v2032
    %v2049 = vcombine.high %v2039, %v2039
    %v2050 = vcombine.high %v2046, %v2046
    %2059 = vst [vmem:[#allocation13 + $0x2] sm:$0x1] %v2025
    %2060 = vst [vmem:[#allocation13 + $0x12] sm:$0x1] %v2039
    %2061 = vst [vmem:[#allocation13 + $0x22] sm:$0x1] %v2047
    %2062 = vst [vmem:[#allocation13 + $0x32] sm:$0x1] %v2049
    %2063 = vst [vmem:[#allocation13 + $0x42] sm:$0x1] %v2032
    %2064 = vst [vmem:[#allocation13 + $0x52] sm:$0x1] %v2046
    %2065 = vst [vmem:[#allocation13 + $0x62] sm:$0x1] %v2048
    %2066 = vst [vmem:[#allocation13 + $0x72] sm:$0x1] %v2050
    %v2068 = vcombine.high %v1998, %v1998
    %v2070 = vunpack.c.l.s4 1966171168
    %v2071 = vunpack.c.0.s8 %v2070
    %v2072 = vlaneseq
    %v2073 = vshrl.u32 %v2072, 7
    %v2074 = vsub.s32 %v2071, %v2073
    %v2075 = vrot.slane %v1998, %v2074
    %v2077 = vunpack.c.l.s4 1966171168
    %v2078 = vunpack.c.0.s8 %v2077
    %v2079 = vlaneseq
    %v2080 = vshrl.u32 %v2079, 7
    %v2081 = vsub.s32 %v2078, %v2080
    %v2082 = vrot.slane %v2068, %v2081
    %v2083 = vcombine.high %v2075, %v2075
    %v2084 = vcombine.high %v2082, %v2082
    %v2086 = vunpack.c.l.s4 1966171168
    %v2087 = vunpack.c.0.s8 %v2086
    %v2088 = vlaneseq
    %v2089 = vshrl.u32 %v2088, 7
    %v2090 = vsub.s32 %v2087, %v2089
    %v2091 = vrot.slane %v2075, %v2090
    %v2093 = vunpack.c.l.s4 1966171168
    %v2094 = vunpack.c.0.s8 %v2093
    %v2095 = vlaneseq
    %v2096 = vshrl.u32 %v2095, 7
    %v2097 = vsub.s32 %v2094, %v2096
    %v2098 = vrot.slane %v2082, %v2097
    %v2100 = vunpack.c.l.s4 1966171168
    %v2101 = vunpack.c.0.s8 %v2100
    %v2102 = vlaneseq
    %v2103 = vshrl.u32 %v2102, 7
    %v2104 = vsub.s32 %v2101, %v2103
    %v2105 = vrot.slane %v2083, %v2104
    %v2107 = vunpack.c.l.s4 1966171168
    %v2108 = vunpack.c.0.s8 %v2107
    %v2109 = vlaneseq
    %v2110 = vshrl.u32 %v2109, 7
    %v2111 = vsub.s32 %v2108, %v2110
    %v2112 = vrot.slane %v2084, %v2111
    %v2113 = vcombine.high %v2091, %v2091
    %v2114 = vcombine.high %v2098, %v2098
    %v2115 = vcombine.high %v2105, %v2105
    %v2116 = vcombine.high %v2112, %v2112
    %2125 = vst [vmem:[#allocation14 + $0xd] sm:$0x1] %v2091
    %2126 = vst [vmem:[#allocation14 + $0x1d] sm:$0x1] %v2105
    %2127 = vst [vmem:[#allocation14 + $0x2d] sm:$0x1] %v2113
    %2128 = vst [vmem:[#allocation14 + $0x3d] sm:$0x1] %v2115
    %2129 = vst [vmem:[#allocation14 + $0x4d] sm:$0x1] %v2098
    %2130 = vst [vmem:[#allocation14 + $0x5d] sm:$0x1] %v2112
    %2131 = vst [vmem:[#allocation14 + $0x6d] sm:$0x1] %v2114
    %2132 = vst [vmem:[#allocation14 + $0x7d] sm:$0x1] %v2116
    %v2133 = vld [vmem:[#allocation2] sm:$0xff]
    %v2134 = vld [vmem:[#allocation3] sm:$0xff]
    %s2135 = scalar_lea.vmem [#allocation4], 12
    %v2136 = vld [vmem:[%s2135] sm:$0xf]
    %s2137 = scalar_lea.vmem [#allocation7], 48
    %v2138 = vld [vmem:[%s2137] sm:$0xf]
    %v2139 = vpack.c.bf16 %v2133, %v2133
    %2140 = vmatprep.subr.bf16.mxu0 %v300
    %2141 = vmatpush1.bf16.msra.mxu0 %v299
    %2142 = vmatprep.subr.bf16.mxu0 %v303
    %2143 = vmatpush1.bf16.msra.mxu0 %v302
    %2144 = vmatprep.subr.bf16.mxu0 %v306
    %2145 = vmatpush1.bf16.msra.mxu0 %v305
    %2146 = vmatprep.subr.bf16.mxu0 %v309
    %2147 = vmatpush1.bf16.msra.mxu0 %v308
    %2148 = vmatprep.subr.bf16.mxu0 %v312
    %2149 = vmatpush1.bf16.msra.mxu0 %v311
    %2150 = vmatprep.subr.bf16.mxu0 %v315
    %2151 = vmatpush1.bf16.msra.mxu0 %v314
    %2152 = vmatprep.subr.bf16.mxu0 %v318
    %2153 = vmatpush1.bf16.msra.mxu0 %v317
    %2154 = vmatprep.subr.bf16.mxu0 %v321
    %2155 = vmatpush1.bf16.msra.mxu0 %v320
    %2156 = vmatprep.subr.bf16.mxu0 0
    %2157 = vmatpush1.bf16.msra.mxu0 0
    %2158 = vmatprep.subr.bf16.mxu0 0
    %2159 = vmatpush1.bf16.msra.mxu0 0
    %2160 = vmatprep.subr.bf16.mxu0 0
    %2161 = vmatpush1.bf16.msra.mxu0 0
    %2162 = vmatprep.subr.bf16.mxu0 0
    %2163 = vmatpush1.bf16.msra.mxu0 0
    %2164 = vmatprep.subr.bf16.mxu0 0
    %2165 = vmatpush1.bf16.msra.mxu0 0
    %2166 = vmatprep.subr.bf16.mxu0 0
    %2167 = vmatpush1.bf16.msra.mxu0 0
    %2168 = vmatprep.subr.bf16.mxu0 0
    %2169 = vmatpush1.bf16.msra.mxu0 0
    %2170 = vmatprep.subr.bf16.mxu0 0
    %2171 = vmatpush1.bf16.msra.mxu0 0
    %2172 = vmatprep.mubr.bf16.mxu0 0
    %2173 = vmatmul.mubr.bf16.gmra.mrb[0].mxu0 %v2139
    %v2174 = vpop.f32.mrb[0].mxu0
    %v2175 = vadd.f32 0.0, %v2174
    %v2176 = vpop.f32.mrb[0].mxu0
    %v2177 = vadd.f32 0.0, %v2176
    %v2178 = vpop.f32.mrb[0].mxu0
    %v2179 = vpop.f32.mrb[0].mxu0
    %2180 = vdwg.mxu0
    %2181 = vmatprep.subr.bf16.mxu0 0
    %2182 = vmatpush1.bf16.msra.mxu0 %v301
    %2183 = vmatprep.subr.bf16.mxu0 0
    %2184 = vmatpush1.bf16.msra.mxu0 %v304
    %2185 = vmatprep.subr.bf16.mxu0 0
    %2186 = vmatpush1.bf16.msra.mxu0 %v307
    %2187 = vmatprep.subr.bf16.mxu0 0
    %2188 = vmatpush1.bf16.msra.mxu0 %v310
    %2189 = vmatprep.subr.bf16.mxu0 0
    %2190 = vmatpush1.bf16.msra.mxu0 %v313
    %2191 = vmatprep.subr.bf16.mxu0 0
    %2192 = vmatpush1.bf16.msra.mxu0 %v316
    %2193 = vmatprep.subr.bf16.mxu0 0
    %2194 = vmatpush1.bf16.msra.mxu0 %v319
    %2195 = vmatprep.subr.bf16.mxu0 0
    %2196 = vmatpush1.bf16.msra.mxu0 %v322
    %2197 = vmatprep.subr.bf16.mxu0 0
    %2198 = vmatpush1.bf16.msra.mxu0 0
    %2199 = vmatprep.subr.bf16.mxu0 0
    %2200 = vmatpush1.bf16.msra.mxu0 0
    %2201 = vmatprep.subr.bf16.mxu0 0
    %2202 = vmatpush1.bf16.msra.mxu0 0
    %2203 = vmatprep.subr.bf16.mxu0 0
    %2204 = vmatpush1.bf16.msra.mxu0 0
    %2205 = vmatprep.subr.bf16.mxu0 0
    %2206 = vmatpush1.bf16.msra.mxu0 0
    %2207 = vmatprep.subr.bf16.mxu0 0
    %2208 = vmatpush1.bf16.msra.mxu0 0
    %2209 = vmatprep.subr.bf16.mxu0 0
    %2210 = vmatpush1.bf16.msra.mxu0 0
    %2211 = vmatprep.subr.bf16.mxu0 0
    %2212 = vmatpush1.bf16.msra.mxu0 0
    %2213 = vmatprep.mubr.bf16.mxu0 0
    %2214 = vmatmul.mubr.bf16.gmra.mrb[0].mxu0 %v2139
    %v2215 = vpop.f32.mrb[0].mxu0
    %v2216 = vadd.f32 0.0, %v2215
    %v2217 = vpop.f32.mrb[0].mxu0
    %v2218 = vpop.f32.mrb[0].mxu0
    %v2219 = vpop.f32.mrb[0].mxu0
    %2220 = vdwg.mxu0
    %v2221 = vpack.c.bf16 %v2134, %v2134
    %2222 = vmatprep.subr.bf16.mxu0 %v510
    %2223 = vmatpush1.bf16.msra.mxu0 %v509
    %2224 = vmatprep.subr.bf16.mxu0 %v513
    %2225 = vmatpush1.bf16.msra.mxu0 %v512
    %2226 = vmatprep.subr.bf16.mxu0 %v516
    %2227 = vmatpush1.bf16.msra.mxu0 %v515
    %2228 = vmatprep.subr.bf16.mxu0 %v519
    %2229 = vmatpush1.bf16.msra.mxu0 %v518
    %2230 = vmatprep.subr.bf16.mxu0 %v522
    %2231 = vmatpush1.bf16.msra.mxu0 %v521
    %2232 = vmatprep.subr.bf16.mxu0 %v525
    %2233 = vmatpush1.bf16.msra.mxu0 %v524
    %2234 = vmatprep.subr.bf16.mxu0 %v528
    %2235 = vmatpush1.bf16.msra.mxu0 %v527
    %2236 = vmatprep.subr.bf16.mxu0 %v531
    %2237 = vmatpush1.bf16.msra.mxu0 %v530
    %2238 = vmatprep.subr.bf16.mxu0 0
    %2239 = vmatpush1.bf16.msra.mxu0 0
    %2240 = vmatprep.subr.bf16.mxu0 0
    %2241 = vmatpush1.bf16.msra.mxu0 0
    %2242 = vmatprep.subr.bf16.mxu0 0
    %2243 = vmatpush1.bf16.msra.mxu0 0
    %2244 = vmatprep.subr.bf16.mxu0 0
    %2245 = vmatpush1.bf16.msra.mxu0 0
    %2246 = vmatprep.subr.bf16.mxu0 0
    %2247 = vmatpush1.bf16.msra.mxu0 0
    %2248 = vmatprep.subr.bf16.mxu0 0
    %2249 = vmatpush1.bf16.msra.mxu0 0
    %2250 = vmatprep.subr.bf16.mxu0 0
    %2251 = vmatpush1.bf16.msra.mxu0 0
    %2252 = vmatprep.subr.bf16.mxu0 0
    %2253 = vmatpush1.bf16.msra.mxu0 0
    %2254 = vmatprep.mubr.bf16.mxu0 0
    %2255 = vmatmul.mubr.bf16.gmra.mrb[0].mxu0 %v2221
    %v2256 = vpop.f32.mrb[0].mxu0
    %v2257 = vadd.f32 0.0, %v2256
    %v2258 = vpop.f32.mrb[0].mxu0
    %v2259 = vadd.f32 0.0, %v2258
    %v2260 = vpop.f32.mrb[0].mxu0
    %v2261 = vpop.f32.mrb[0].mxu0
    %2262 = vdwg.mxu0
    %2263 = vmatprep.subr.bf16.mxu0 0
    %2264 = vmatpush1.bf16.msra.mxu0 %v511
    %2265 = vmatprep.subr.bf16.mxu0 0
    %2266 = vmatpush1.bf16.msra.mxu0 %v514
    %2267 = vmatprep.subr.bf16.mxu0 0
    %2268 = vmatpush1.bf16.msra.mxu0 %v517
    %2269 = vmatprep.subr.bf16.mxu0 0
    %2270 = vmatpush1.bf16.msra.mxu0 %v520
    %2271 = vmatprep.subr.bf16.mxu0 0
    %2272 = vmatpush1.bf16.msra.mxu0 %v523
    %2273 = vmatprep.subr.bf16.mxu0 0
    %2274 = vmatpush1.bf16.msra.mxu0 %v526
    %2275 = vmatprep.subr.bf16.mxu0 0
    %2276 = vmatpush1.bf16.msra.mxu0 %v529
    %2277 = vmatprep.subr.bf16.mxu0 0
    %2278 = vmatpush1.bf16.msra.mxu0 %v532
    %2279 = vmatprep.subr.bf16.mxu0 0
    %2280 = vmatpush1.bf16.msra.mxu0 0
    %2281 = vmatprep.subr.bf16.mxu0 0
    %2282 = vmatpush1.bf16.msra.mxu0 0
    %2283 = vmatprep.subr.bf16.mxu0 0
    %2284 = vmatpush1.bf16.msra.mxu0 0
    %2285 = vmatprep.subr.bf16.mxu0 0
    %2286 = vmatpush1.bf16.msra.mxu0 0
    %2287 = vmatprep.subr.bf16.mxu0 0
    %2288 = vmatpush1.bf16.msra.mxu0 0
    %2289 = vmatprep.subr.bf16.mxu0 0
    %2290 = vmatpush1.bf16.msra.mxu0 0
    %2291 = vmatprep.subr.bf16.mxu0 0
    %2292 = vmatpush1.bf16.msra.mxu0 0
    %2293 = vmatprep.subr.bf16.mxu0 0
    %2294 = vmatpush1.bf16.msra.mxu0 0
    %2295 = vmatprep.mubr.bf16.mxu0 0
    %2296 = vmatmul.mubr.bf16.gmra.mrb[0].mxu0 %v2221
    %v2297 = vpop.f32.mrb[0].mxu0
    %v2298 = vadd.f32 0.0, %v2297
    %v2299 = vpop.f32.mrb[0].mxu0
    %v2300 = vpop.f32.mrb[0].mxu0
    %v2301 = vpop.f32.mrb[0].mxu0
    %2302 = vdwg.mxu0
    %v2304 = vsel %vm702, %v2136, 0
    %2306 = vmatprep.subr.bf16.mxu0 %v679
    %2307 = vmatpush1.bf16.msra.mxu0 %v678
    %2308 = vmatprep.subr.bf16.mxu0 %v682
    %2309 = vmatpush1.bf16.msra.mxu0 %v681
    %2310 = vmatprep.subr.bf16.mxu0 %v685
    %2311 = vmatpush1.bf16.msra.mxu0 %v684
    %2312 = vmatprep.subr.bf16.mxu0 %v688
    %2313 = vmatpush1.bf16.msra.mxu0 %v687
    %2314 = vmatprep.subr.bf16.mxu0 0
    %2315 = vmatpush1.bf16.msra.mxu0 0
    %2316 = vmatprep.subr.bf16.mxu0 0
    %2317 = vmatpush1.bf16.msra.mxu0 0
    %2318 = vmatprep.subr.bf16.mxu0 0
    %2319 = vmatpush1.bf16.msra.mxu0 0
    %2320 = vmatprep.subr.bf16.mxu0 0
    %2321 = vmatpush1.bf16.msra.mxu0 0
    %2322 = vmatprep.subr.bf16.mxu0 0
    %2323 = vmatpush1.bf16.msra.mxu0 0
    %2324 = vmatprep.subr.bf16.mxu0 0
    %2325 = vmatpush1.bf16.msra.mxu0 0
    %2326 = vmatprep.subr.bf16.mxu0 0
    %2327 = vmatpush1.bf16.msra.mxu0 0
    %2328 = vmatprep.subr.bf16.mxu0 0
    %2329 = vmatpush1.bf16.msra.mxu0 0
    %2330 = vmatprep.subr.bf16.mxu0 0
    %2331 = vmatpush1.bf16.msra.mxu0 0
    %2332 = vmatprep.subr.bf16.mxu0 0
    %2333 = vmatpush1.bf16.msra.mxu0 0
    %2334 = vmatprep.subr.bf16.mxu0 0
    %2335 = vmatpush1.bf16.msra.mxu0 0
    %2336 = vmatprep.subr.bf16.mxu0 0
    %2337 = vmatpush1.bf16.msra.mxu0 0
    %2338 = vmatprep.mubr.bf16.mxu0 0
    %2339 = vmatmul.mubr.bf16.gmra.mrb[0].mxu0 %v2304
    %v2340 = vpop.f32.mrb[0].mxu0
    %v2341 = vadd.f32 %v206, %v2340
    %v2342 = vpop.f32.mrb[0].mxu0
    %v2343 = vadd.f32 %v207, %v2342
    %v2344 = vpop.f32.mrb[0].mxu0
    %v2345 = vpop.f32.mrb[0].mxu0
    %2346 = vdwg.mxu0
    %2347 = vmatprep.subr.bf16.mxu0 0
    %2348 = vmatpush1.bf16.msra.mxu0 %v680
    %2349 = vmatprep.subr.bf16.mxu0 0
    %2350 = vmatpush1.bf16.msra.mxu0 %v683
    %2351 = vmatprep.subr.bf16.mxu0 0
    %2352 = vmatpush1.bf16.msra.mxu0 %v686
    %2353 = vmatprep.subr.bf16.mxu0 0
    %2354 = vmatpush1.bf16.msra.mxu0 %v689
    %2355 = vmatprep.subr.bf16.mxu0 0
    %2356 = vmatpush1.bf16.msra.mxu0 0
    %2357 = vmatprep.subr.bf16.mxu0 0
    %2358 = vmatpush1.bf16.msra.mxu0 0
    %2359 = vmatprep.subr.bf16.mxu0 0
    %2360 = vmatpush1.bf16.msra.mxu0 0
    %2361 = vmatprep.subr.bf16.mxu0 0
    %2362 = vmatpush1.bf16.msra.mxu0 0
    %2363 = vmatprep.subr.bf16.mxu0 0
    %2364 = vmatpush1.bf16.msra.mxu0 0
    %2365 = vmatprep.subr.bf16.mxu0 0
    %2366 = vmatpush1.bf16.msra.mxu0 0
    %2367 = vmatprep.subr.bf16.mxu0 0
    %2368 = vmatpush1.bf16.msra.mxu0 0
    %2369 = vmatprep.subr.bf16.mxu0 0
    %2370 = vmatpush1.bf16.msra.mxu0 0
    %2371 = vmatprep.subr.bf16.mxu0 0
    %2372 = vmatpush1.bf16.msra.mxu0 0
    %2373 = vmatprep.subr.bf16.mxu0 0
    %2374 = vmatpush1.bf16.msra.mxu0 0
    %2375 = vmatprep.subr.bf16.mxu0 0
    %2376 = vmatpush1.bf16.msra.mxu0 0
    %2377 = vmatprep.subr.bf16.mxu0 0
    %2378 = vmatpush1.bf16.msra.mxu0 0
    %2379 = vmatprep.mubr.bf16.mxu0 0
    %2380 = vmatmul.mubr.bf16.gmra.mrb[0].mxu0 %v2304
    %v2381 = vpop.f32.mrb[0].mxu0
    %v2382 = vadd.f32 %v208, %v2381
    %v2383 = vpop.f32.mrb[0].mxu0
    %v2384 = vpop.f32.mrb[0].mxu0
    %v2385 = vpop.f32.mrb[0].mxu0
    %2386 = vdwg.mxu0
    %v2388 = vsel %vm702, %v2138, 0
    %2390 = vmatprep.subr.bf16.mxu0 %v828
    %2391 = vmatpush1.bf16.msra.mxu0 %v827
    %2392 = vmatprep.subr.bf16.mxu0 %v831
    %2393 = vmatpush1.bf16.msra.mxu0 %v830
    %2394 = vmatprep.subr.bf16.mxu0 %v834
    %2395 = vmatpush1.bf16.msra.mxu0 %v833
    %2396 = vmatprep.subr.bf16.mxu0 %v837
    %2397 = vmatpush1.bf16.msra.mxu0 %v836
    %2398 = vmatprep.subr.bf16.mxu0 0
    %2399 = vmatpush1.bf16.msra.mxu0 0
    %2400 = vmatprep.subr.bf16.mxu0 0
    %2401 = vmatpush1.bf16.msra.mxu0 0
    %2402 = vmatprep.subr.bf16.mxu0 0
    %2403 = vmatpush1.bf16.msra.mxu0 0
    %2404 = vmatprep.subr.bf16.mxu0 0
    %2405 = vmatpush1.bf16.msra.mxu0 0
    %2406 = vmatprep.subr.bf16.mxu0 0
    %2407 = vmatpush1.bf16.msra.mxu0 0
    %2408 = vmatprep.subr.bf16.mxu0 0
    %2409 = vmatpush1.bf16.msra.mxu0 0
    %2410 = vmatprep.subr.bf16.mxu0 0
    %2411 = vmatpush1.bf16.msra.mxu0 0
    %2412 = vmatprep.subr.bf16.mxu0 0
    %2413 = vmatpush1.bf16.msra.mxu0 0
    %2414 = vmatprep.subr.bf16.mxu0 0
    %2415 = vmatpush1.bf16.msra.mxu0 0
    %2416 = vmatprep.subr.bf16.mxu0 0
    %2417 = vmatpush1.bf16.msra.mxu0 0
    %2418 = vmatprep.subr.bf16.mxu0 0
    %2419 = vmatpush1.bf16.msra.mxu0 0
    %2420 = vmatprep.subr.bf16.mxu0 0
    %2421 = vmatpush1.bf16.msra.mxu0 0
    %2422 = vmatprep.mubr.bf16.mxu0 0
    %2423 = vmatmul.mubr.bf16.gmra.mrb[0].mxu0 %v2388
    %v2424 = vpop.f32.mrb[0].mxu0
    %v2425 = vadd.f32 %v210, %v2424
    %v2426 = vpop.f32.mrb[0].mxu0
    %v2427 = vadd.f32 %v211, %v2426
    %v2428 = vpop.f32.mrb[0].mxu0
    %v2429 = vpop.f32.mrb[0].mxu0
    %2430 = vdwg.mxu0
    %2431 = vmatprep.subr.bf16.mxu0 0
    %2432 = vmatpush1.bf16.msra.mxu0 %v829
    %2433 = vmatprep.subr.bf16.mxu0 0
    %2434 = vmatpush1.bf16.msra.mxu0 %v832
    %2435 = vmatprep.subr.bf16.mxu0 0
    %2436 = vmatpush1.bf16.msra.mxu0 %v835
    %2437 = vmatprep.subr.bf16.mxu0 0
    %2438 = vmatpush1.bf16.msra.mxu0 %v838
    %2439 = vmatprep.subr.bf16.mxu0 0
    %2440 = vmatpush1.bf16.msra.mxu0 0
    %2441 = vmatprep.subr.bf16.mxu0 0
    %2442 = vmatpush1.bf16.msra.mxu0 0
    %2443 = vmatprep.subr.bf16.mxu0 0
    %2444 = vmatpush1.bf16.msra.mxu0 0
    %2445 = vmatprep.subr.bf16.mxu0 0
    %2446 = vmatpush1.bf16.msra.mxu0 0
    %2447 = vmatprep.subr.bf16.mxu0 0
    %2448 = vmatpush1.bf16.msra.mxu0 0
    %2449 = vmatprep.subr.bf16.mxu0 0
    %2450 = vmatpush1.bf16.msra.mxu0 0
    %2451 = vmatprep.subr.bf16.mxu0 0
    %2452 = vmatpush1.bf16.msra.mxu0 0
    %2453 = vmatprep.subr.bf16.mxu0 0
    %2454 = vmatpush1.bf16.msra.mxu0 0
    %2455 = vmatprep.subr.bf16.mxu0 0
    %2456 = vmatpush1.bf16.msra.mxu0 0
    %2457 = vmatprep.subr.bf16.mxu0 0
    %2458 = vmatpush1.bf16.msra.mxu0 0
    %2459 = vmatprep.subr.bf16.mxu0 0
    %2460 = vmatpush1.bf16.msra.mxu0 0
    %2461 = vmatprep.subr.bf16.mxu0 0
    %2462 = vmatpush1.bf16.msra.mxu0 0
    %2463 = vmatprep.mubr.bf16.mxu0 0
    %2464 = vmatmul.mubr.bf16.gmra.mrb[0].mxu0 %v2388
    %v2465 = vpop.f32.mrb[0].mxu0
    %v2466 = vadd.f32 %v212, %v2465
    %v2467 = vpop.f32.mrb[0].mxu0
    %v2468 = vpop.f32.mrb[0].mxu0
    %v2469 = vpop.f32.mrb[0].mxu0
    %2470 = vdwg.mxu0
    %v2471 = vadd.f32 %v2341, %v2175
    %v2472 = vxor.u32 %v2471, 2147483648
    %v2473 = vmul.f32 %v2472, 1.442695
    %v2474 = vpow.pop %v2473
    %v2475 = vadd.f32 %v2474, 1.0
    %v2476 = vrcp.pop %v2475
    %v2477 = vmul.f32 1.0, %v2476
    %v2478 = vadd.f32 %v2343, %v2177
    %v2479 = vxor.u32 %v2478, 2147483648
    %v2480 = vmul.f32 %v2479, 1.442695
    %v2481 = vpow.pop %v2480
    %v2482 = vadd.f32 %v2481, 1.0
    %v2483 = vrcp.pop %v2482
    %v2484 = vmul.f32 1.0, %v2483
    %v2485 = vmul.f32 %v2477, %v2216
    %v2486 = vadd.f32 %v2382, %v2485
    %v2487 = vtanh.pop %v2486
    %v2488 = vsub.f32 %v2133, %v2487
    %v2489 = vmul.f32 %v2484, %v2488
    %v2490 = vadd.f32 %v2487, %v2489
    %v2491 = vadd.f32 %v2425, %v2257
    %v2492 = vxor.u32 %v2491, 2147483648
    %v2493 = vmul.f32 %v2492, 1.442695
    %v2494 = vpow.pop %v2493
    %v2495 = vadd.f32 %v2494, 1.0
    %v2496 = vrcp.pop %v2495
    %v2497 = vmul.f32 1.0, %v2496
    %v2498 = vadd.f32 %v2427, %v2259
    %v2499 = vxor.u32 %v2498, 2147483648
    %v2500 = vmul.f32 %v2499, 1.442695
    %v2501 = vpow.pop %v2500
    %v2502 = vadd.f32 %v2501, 1.0
    %v2503 = vrcp.pop %v2502
    %v2504 = vmul.f32 1.0, %v2503
    %v2505 = vmul.f32 %v2497, %v2298
    %v2506 = vadd.f32 %v2466, %v2505
    %v2507 = vtanh.pop %v2506
    %v2508 = vsub.f32 %v2134, %v2507
    %v2509 = vmul.f32 %v2504, %v2508
    %v2510 = vadd.f32 %v2507, %v2509
    %2511 = vst [vmem:[#allocation2] sm:$0xff] %v2490
    %2512 = vst [vmem:[#allocation3] sm:$0xff] %v2510
    %v2514 = vcombine.high %v2490, %v2490
    %v2516 = vunpack.c.l.s4 1966171168
    %v2517 = vunpack.c.0.s8 %v2516
    %v2518 = vlaneseq
    %v2519 = vshrl.u32 %v2518, 7
    %v2520 = vsub.s32 %v2517, %v2519
    %v2521 = vrot.slane %v2490, %v2520
    %v2523 = vunpack.c.l.s4 1966171168
    %v2524 = vunpack.c.0.s8 %v2523
    %v2525 = vlaneseq
    %v2526 = vshrl.u32 %v2525, 7
    %v2527 = vsub.s32 %v2524, %v2526
    %v2528 = vrot.slane %v2514, %v2527
    %v2529 = vcombine.high %v2521, %v2521
    %v2530 = vcombine.high %v2528, %v2528
    %v2532 = vunpack.c.l.s4 1966171168
    %v2533 = vunpack.c.0.s8 %v2532
    %v2534 = vlaneseq
    %v2535 = vshrl.u32 %v2534, 7
    %v2536 = vsub.s32 %v2533, %v2535
    %v2537 = vrot.slane %v2521, %v2536
    %v2539 = vunpack.c.l.s4 1966171168
    %v2540 = vunpack.c.0.s8 %v2539
    %v2541 = vlaneseq
    %v2542 = vshrl.u32 %v2541, 7
    %v2543 = vsub.s32 %v2540, %v2542
    %v2544 = vrot.slane %v2528, %v2543
    %v2546 = vunpack.c.l.s4 1966171168
    %v2547 = vunpack.c.0.s8 %v2546
    %v2548 = vlaneseq
    %v2549 = vshrl.u32 %v2548, 7
    %v2550 = vsub.s32 %v2547, %v2549
    %v2551 = vrot.slane %v2529, %v2550
    %v2553 = vunpack.c.l.s4 1966171168
    %v2554 = vunpack.c.0.s8 %v2553
    %v2555 = vlaneseq
    %v2556 = vshrl.u32 %v2555, 7
    %v2557 = vsub.s32 %v2554, %v2556
    %v2558 = vrot.slane %v2530, %v2557
    %v2559 = vcombine.high %v2537, %v2537
    %v2560 = vcombine.high %v2544, %v2544
    %v2561 = vcombine.high %v2551, %v2551
    %v2562 = vcombine.high %v2558, %v2558
    %2571 = vst [vmem:[#allocation13 + $0x3] sm:$0x1] %v2537
    %2572 = vst [vmem:[#allocation13 + $0x13] sm:$0x1] %v2551
    %2573 = vst [vmem:[#allocation13 + $0x23] sm:$0x1] %v2559
    %2574 = vst [vmem:[#allocation13 + $0x33] sm:$0x1] %v2561
    %2575 = vst [vmem:[#allocation13 + $0x43] sm:$0x1] %v2544
    %2576 = vst [vmem:[#allocation13 + $0x53] sm:$0x1] %v2558
    %2577 = vst [vmem:[#allocation13 + $0x63] sm:$0x1] %v2560
    %2578 = vst [vmem:[#allocation13 + $0x73] sm:$0x1] %v2562
    %v2580 = vcombine.high %v2510, %v2510
    %v2582 = vunpack.c.l.s4 1966171168
    %v2583 = vunpack.c.0.s8 %v2582
    %v2584 = vlaneseq
    %v2585 = vshrl.u32 %v2584, 7
    %v2586 = vsub.s32 %v2583, %v2585
    %v2587 = vrot.slane %v2510, %v2586
    %v2589 = vunpack.c.l.s4 1966171168
    %v2590 = vunpack.c.0.s8 %v2589
    %v2591 = vlaneseq
    %v2592 = vshrl.u32 %v2591, 7
    %v2593 = vsub.s32 %v2590, %v2592
    %v2594 = vrot.slane %v2580, %v2593
    %v2595 = vcombine.high %v2587, %v2587
    %v2596 = vcombine.high %v2594, %v2594
    %v2598 = vunpack.c.l.s4 1966171168
    %v2599 = vunpack.c.0.s8 %v2598
    %v2600 = vlaneseq
    %v2601 = vshrl.u32 %v2600, 7
    %v2602 = vsub.s32 %v2599, %v2601
    %v2603 = vrot.slane %v2587, %v2602
    %v2605 = vunpack.c.l.s4 1966171168
    %v2606 = vunpack.c.0.s8 %v2605
    %v2607 = vlaneseq
    %v2608 = vshrl.u32 %v2607, 7
    %v2609 = vsub.s32 %v2606, %v2608
    %v2610 = vrot.slane %v2594, %v2609
    %v2612 = vunpack.c.l.s4 1966171168
    %v2613 = vunpack.c.0.s8 %v2612
    %v2614 = vlaneseq
    %v2615 = vshrl.u32 %v2614, 7
    %v2616 = vsub.s32 %v2613, %v2615
    %v2617 = vrot.slane %v2595, %v2616
    %v2619 = vunpack.c.l.s4 1966171168
    %v2620 = vunpack.c.0.s8 %v2619
    %v2621 = vlaneseq
    %v2622 = vshrl.u32 %v2621, 7
    %v2623 = vsub.s32 %v2620, %v2622
    %v2624 = vrot.slane %v2596, %v2623
    %v2625 = vcombine.high %v2603, %v2603
    %v2626 = vcombine.high %v2610, %v2610
    %v2627 = vcombine.high %v2617, %v2617
    %v2628 = vcombine.high %v2624, %v2624
    %2637 = vst [vmem:[#allocation14 + $0xc] sm:$0x1] %v2603
    %2638 = vst [vmem:[#allocation14 + $0x1c] sm:$0x1] %v2617
    %2639 = vst [vmem:[#allocation14 + $0x2c] sm:$0x1] %v2625
    %2640 = vst [vmem:[#allocation14 + $0x3c] sm:$0x1] %v2627
    %2641 = vst [vmem:[#allocation14 + $0x4c] sm:$0x1] %v2610
    %2642 = vst [vmem:[#allocation14 + $0x5c] sm:$0x1] %v2624
    %2643 = vst [vmem:[#allocation14 + $0x6c] sm:$0x1] %v2626
    %2644 = vst [vmem:[#allocation14 + $0x7c] sm:$0x1] %v2628
    %v2645 = vld [vmem:[#allocation2] sm:$0xff]
    %v2646 = vld [vmem:[#allocation3] sm:$0xff]
    %s2647 = scalar_lea.vmem [#allocation4], 16
    %v2648 = vld [vmem:[%s2647] sm:$0xf]
    %s2649 = scalar_lea.vmem [#allocation7], 44
    %v2650 = vld [vmem:[%s2649] sm:$0xf]
    %v2651 = vpack.c.bf16 %v2645, %v2645
    %2652 = vmatprep.subr.bf16.mxu0 %v300
    %2653 = vmatpush1.bf16.msra.mxu0 %v299
    %2654 = vmatprep.subr.bf16.mxu0 %v303
    %2655 = vmatpush1.bf16.msra.mxu0 %v302
    %2656 = vmatprep.subr.bf16.mxu0 %v306
    %2657 = vmatpush1.bf16.msra.mxu0 %v305
    %2658 = vmatprep.subr.bf16.mxu0 %v309
    %2659 = vmatpush1.bf16.msra.mxu0 %v308
    %2660 = vmatprep.subr.bf16.mxu0 %v312
    %2661 = vmatpush1.bf16.msra.mxu0 %v311
    %2662 = vmatprep.subr.bf16.mxu0 %v315
    %2663 = vmatpush1.bf16.msra.mxu0 %v314
    %2664 = vmatprep.subr.bf16.mxu0 %v318
    %2665 = vmatpush1.bf16.msra.mxu0 %v317
    %2666 = vmatprep.subr.bf16.mxu0 %v321
    %2667 = vmatpush1.bf16.msra.mxu0 %v320
    %2668 = vmatprep.subr.bf16.mxu0 0
    %2669 = vmatpush1.bf16.msra.mxu0 0
    %2670 = vmatprep.subr.bf16.mxu0 0
    %2671 = vmatpush1.bf16.msra.mxu0 0
    %2672 = vmatprep.subr.bf16.mxu0 0
    %2673 = vmatpush1.bf16.msra.mxu0 0
    %2674 = vmatprep.subr.bf16.mxu0 0
    %2675 = vmatpush1.bf16.msra.mxu0 0
    %2676 = vmatprep.subr.bf16.mxu0 0
    %2677 = vmatpush1.bf16.msra.mxu0 0
    %2678 = vmatprep.subr.bf16.mxu0 0
    %2679 = vmatpush1.bf16.msra.mxu0 0
    %2680 = vmatprep.subr.bf16.mxu0 0
    %2681 = vmatpush1.bf16.msra.mxu0 0
    %2682 = vmatprep.subr.bf16.mxu0 0
    %2683 = vmatpush1.bf16.msra.mxu0 0
    %2684 = vmatprep.mubr.bf16.mxu0 0
    %2685 = vmatmul.mubr.bf16.gmra.mrb[0].mxu0 %v2651
    %v2686 = vpop.f32.mrb[0].mxu0
    %v2687 = vadd.f32 0.0, %v2686
    %v2688 = vpop.f32.mrb[0].mxu0
    %v2689 = vadd.f32 0.0, %v2688
    %v2690 = vpop.f32.mrb[0].mxu0
    %v2691 = vpop.f32.mrb[0].mxu0
    %2692 = vdwg.mxu0
    %2693 = vmatprep.subr.bf16.mxu0 0
    %2694 = vmatpush1.bf16.msra.mxu0 %v301
    %2695 = vmatprep.subr.bf16.mxu0 0
    %2696 = vmatpush1.bf16.msra.mxu0 %v304
    %2697 = vmatprep.subr.bf16.mxu0 0
    %2698 = vmatpush1.bf16.msra.mxu0 %v307
    %2699 = vmatprep.subr.bf16.mxu0 0
    %2700 = vmatpush1.bf16.msra.mxu0 %v310
    %2701 = vmatprep.subr.bf16.mxu0 0
    %2702 = vmatpush1.bf16.msra.mxu0 %v313
    %2703 = vmatprep.subr.bf16.mxu0 0
    %2704 = vmatpush1.bf16.msra.mxu0 %v316
    %2705 = vmatprep.subr.bf16.mxu0 0
    %2706 = vmatpush1.bf16.msra.mxu0 %v319
    %2707 = vmatprep.subr.bf16.mxu0 0
    %2708 = vmatpush1.bf16.msra.mxu0 %v322
    %2709 = vmatprep.subr.bf16.mxu0 0
    %2710 = vmatpush1.bf16.msra.mxu0 0
    %2711 = vmatprep.subr.bf16.mxu0 0
    %2712 = vmatpush1.bf16.msra.mxu0 0
    %2713 = vmatprep.subr.bf16.mxu0 0
    %2714 = vmatpush1.bf16.msra.mxu0 0
    %2715 = vmatprep.subr.bf16.mxu0 0
    %2716 = vmatpush1.bf16.msra.mxu0 0
    %2717 = vmatprep.subr.bf16.mxu0 0
    %2718 = vmatpush1.bf16.msra.mxu0 0
    %2719 = vmatprep.subr.bf16.mxu0 0
    %2720 = vmatpush1.bf16.msra.mxu0 0
    %2721 = vmatprep.subr.bf16.mxu0 0
    %2722 = vmatpush1.bf16.msra.mxu0 0
    %2723 = vmatprep.subr.bf16.mxu0 0
    %2724 = vmatpush1.bf16.msra.mxu0 0
    %2725 = vmatprep.mubr.bf16.mxu0 0
    %2726 = vmatmul.mubr.bf16.gmra.mrb[0].mxu0 %v2651
    %v2727 = vpop.f32.mrb[0].mxu0
    %v2728 = vadd.f32 0.0, %v2727
    %v2729 = vpop.f32.mrb[0].mxu0
    %v2730 = vpop.f32.mrb[0].mxu0
    %v2731 = vpop.f32.mrb[0].mxu0
    %2732 = vdwg.mxu0
    %v2733 = vpack.c.bf16 %v2646, %v2646
    %2734 = vmatprep.subr.bf16.mxu0 %v510
    %2735 = vmatpush1.bf16.msra.mxu0 %v509
    %2736 = vmatprep.subr.bf16.mxu0 %v513
    %2737 = vmatpush1.bf16.msra.mxu0 %v512
    %2738 = vmatprep.subr.bf16.mxu0 %v516
    %2739 = vmatpush1.bf16.msra.mxu0 %v515
    %2740 = vmatprep.subr.bf16.mxu0 %v519
    %2741 = vmatpush1.bf16.msra.mxu0 %v518
    %2742 = vmatprep.subr.bf16.mxu0 %v522
    %2743 = vmatpush1.bf16.msra.mxu0 %v521
    %2744 = vmatprep.subr.bf16.mxu0 %v525
    %2745 = vmatpush1.bf16.msra.mxu0 %v524
    %2746 = vmatprep.subr.bf16.mxu0 %v528
    %2747 = vmatpush1.bf16.msra.mxu0 %v527
    %2748 = vmatprep.subr.bf16.mxu0 %v531
    %2749 = vmatpush1.bf16.msra.mxu0 %v530
    %2750 = vmatprep.subr.bf16.mxu0 0
    %2751 = vmatpush1.bf16.msra.mxu0 0
    %2752 = vmatprep.subr.bf16.mxu0 0
    %2753 = vmatpush1.bf16.msra.mxu0 0
    %2754 = vmatprep.subr.bf16.mxu0 0
    %2755 = vmatpush1.bf16.msra.mxu0 0
    %2756 = vmatprep.subr.bf16.mxu0 0
    %2757 = vmatpush1.bf16.msra.mxu0 0
    %2758 = vmatprep.subr.bf16.mxu0 0
    %2759 = vmatpush1.bf16.msra.mxu0 0
    %2760 = vmatprep.subr.bf16.mxu0 0
    %2761 = vmatpush1.bf16.msra.mxu0 0
    %2762 = vmatprep.subr.bf16.mxu0 0
    %2763 = vmatpush1.bf16.msra.mxu0 0
    %2764 = vmatprep.subr.bf16.mxu0 0
    %2765 = vmatpush1.bf16.msra.mxu0 0
    %2766 = vmatprep.mubr.bf16.mxu0 0
    %2767 = vmatmul.mubr.bf16.gmra.mrb[0].mxu0 %v2733
    %v2768 = vpop.f32.mrb[0].mxu0
    %v2769 = vadd.f32 0.0, %v2768
    %v2770 = vpop.f32.mrb[0].mxu0
    %v2771 = vadd.f32 0.0, %v2770
    %v2772 = vpop.f32.mrb[0].mxu0
    %v2773 = vpop.f32.mrb[0].mxu0
    %2774 = vdwg.mxu0
    %2775 = vmatprep.subr.bf16.mxu0 0
    %2776 = vmatpush1.bf16.msra.mxu0 %v511
    %2777 = vmatprep.subr.bf16.mxu0 0
    %2778 = vmatpush1.bf16.msra.mxu0 %v514
    %2779 = vmatprep.subr.bf16.mxu0 0
    %2780 = vmatpush1.bf16.msra.mxu0 %v517
    %2781 = vmatprep.subr.bf16.mxu0 0
    %2782 = vmatpush1.bf16.msra.mxu0 %v520
    %2783 = vmatprep.subr.bf16.mxu0 0
    %2784 = vmatpush1.bf16.msra.mxu0 %v523
    %2785 = vmatprep.subr.bf16.mxu0 0
    %2786 = vmatpush1.bf16.msra.mxu0 %v526
    %2787 = vmatprep.subr.bf16.mxu0 0
    %2788 = vmatpush1.bf16.msra.mxu0 %v529
    %2789 = vmatprep.subr.bf16.mxu0 0
    %2790 = vmatpush1.bf16.msra.mxu0 %v532
    %2791 = vmatprep.subr.bf16.mxu0 0
    %2792 = vmatpush1.bf16.msra.mxu0 0
    %2793 = vmatprep.subr.bf16.mxu0 0
    %2794 = vmatpush1.bf16.msra.mxu0 0
    %2795 = vmatprep.subr.bf16.mxu0 0
    %2796 = vmatpush1.bf16.msra.mxu0 0
    %2797 = vmatprep.subr.bf16.mxu0 0
    %2798 = vmatpush1.bf16.msra.mxu0 0
    %2799 = vmatprep.subr.bf16.mxu0 0
    %2800 = vmatpush1.bf16.msra.mxu0 0
    %2801 = vmatprep.subr.bf16.mxu0 0
    %2802 = vmatpush1.bf16.msra.mxu0 0
    %2803 = vmatprep.subr.bf16.mxu0 0
    %2804 = vmatpush1.bf16.msra.mxu0 0
    %2805 = vmatprep.subr.bf16.mxu0 0
    %2806 = vmatpush1.bf16.msra.mxu0 0
    %2807 = vmatprep.mubr.bf16.mxu0 0
    %2808 = vmatmul.mubr.bf16.gmra.mrb[0].mxu0 %v2733
    %v2809 = vpop.f32.mrb[0].mxu0
    %v2810 = vadd.f32 0.0, %v2809
    %v2811 = vpop.f32.mrb[0].mxu0
    %v2812 = vpop.f32.mrb[0].mxu0
    %v2813 = vpop.f32.mrb[0].mxu0
    %2814 = vdwg.mxu0
    %v2816 = vsel %vm702, %v2648, 0
    %2818 = vmatprep.subr.bf16.mxu0 %v679
    %2819 = vmatpush1.bf16.msra.mxu0 %v678
    %2820 = vmatprep.subr.bf16.mxu0 %v682
    %2821 = vmatpush1.bf16.msra.mxu0 %v681
    %2822 = vmatprep.subr.bf16.mxu0 %v685
    %2823 = vmatpush1.bf16.msra.mxu0 %v684
    %2824 = vmatprep.subr.bf16.mxu0 %v688
    %2825 = vmatpush1.bf16.msra.mxu0 %v687
    %2826 = vmatprep.subr.bf16.mxu0 0
    %2827 = vmatpush1.bf16.msra.mxu0 0
    %2828 = vmatprep.subr.bf16.mxu0 0
    %2829 = vmatpush1.bf16.msra.mxu0 0
    %2830 = vmatprep.subr.bf16.mxu0 0
    %2831 = vmatpush1.bf16.msra.mxu0 0
    %2832 = vmatprep.subr.bf16.mxu0 0
    %2833 = vmatpush1.bf16.msra.mxu0 0
    %2834 = vmatprep.subr.bf16.mxu0 0
    %2835 = vmatpush1.bf16.msra.mxu0 0
    %2836 = vmatprep.subr.bf16.mxu0 0
    %2837 = vmatpush1.bf16.msra.mxu0 0
    %2838 = vmatprep.subr.bf16.mxu0 0
    %2839 = vmatpush1.bf16.msra.mxu0 0
    %2840 = vmatprep.subr.bf16.mxu0 0
    %2841 = vmatpush1.bf16.msra.mxu0 0
    %2842 = vmatprep.subr.bf16.mxu0 0
    %2843 = vmatpush1.bf16.msra.mxu0 0
    %2844 = vmatprep.subr.bf16.mxu0 0
    %2845 = vmatpush1.bf16.msra.mxu0 0
    %2846 = vmatprep.subr.bf16.mxu0 0
    %2847 = vmatpush1.bf16.msra.mxu0 0
    %2848 = vmatprep.subr.bf16.mxu0 0
    %2849 = vmatpush1.bf16.msra.mxu0 0
    %2850 = vmatprep.mubr.bf16.mxu0 0
    %2851 = vmatmul.mubr.bf16.gmra.mrb[0].mxu0 %v2816
    %v2852 = vpop.f32.mrb[0].mxu0
    %v2853 = vadd.f32 %v206, %v2852
    %v2854 = vpop.f32.mrb[0].mxu0
    %v2855 = vadd.f32 %v207, %v2854
    %v2856 = vpop.f32.mrb[0].mxu0
    %v2857 = vpop.f32.mrb[0].mxu0
    %2858 = vdwg.mxu0
    %2859 = vmatprep.subr.bf16.mxu0 0
    %2860 = vmatpush1.bf16.msra.mxu0 %v680
    %2861 = vmatprep.subr.bf16.mxu0 0
    %2862 = vmatpush1.bf16.msra.mxu0 %v683
    %2863 = vmatprep.subr.bf16.mxu0 0
    %2864 = vmatpush1.bf16.msra.mxu0 %v686
    %2865 = vmatprep.subr.bf16.mxu0 0
    %2866 = vmatpush1.bf16.msra.mxu0 %v689
    %2867 = vmatprep.subr.bf16.mxu0 0
    %2868 = vmatpush1.bf16.msra.mxu0 0
    %2869 = vmatprep.subr.bf16.mxu0 0
    %2870 = vmatpush1.bf16.msra.mxu0 0
    %2871 = vmatprep.subr.bf16.mxu0 0
    %2872 = vmatpush1.bf16.msra.mxu0 0
    %2873 = vmatprep.subr.bf16.mxu0 0
    %2874 = vmatpush1.bf16.msra.mxu0 0
    %2875 = vmatprep.subr.bf16.mxu0 0
    %2876 = vmatpush1.bf16.msra.mxu0 0
    %2877 = vmatprep.subr.bf16.mxu0 0
    %2878 = vmatpush1.bf16.msra.mxu0 0
    %2879 = vmatprep.subr.bf16.mxu0 0
    %2880 = vmatpush1.bf16.msra.mxu0 0
    %2881 = vmatprep.subr.bf16.mxu0 0
    %2882 = vmatpush1.bf16.msra.mxu0 0
    %2883 = vmatprep.subr.bf16.mxu0 0
    %2884 = vmatpush1.bf16.msra.mxu0 0
    %2885 = vmatprep.subr.bf16.mxu0 0
    %2886 = vmatpush1.bf16.msra.mxu0 0
    %2887 = vmatprep.subr.bf16.mxu0 0
    %2888 = vmatpush1.bf16.msra.mxu0 0
    %2889 = vmatprep.subr.bf16.mxu0 0
    %2890 = vmatpush1.bf16.msra.mxu0 0
    %2891 = vmatprep.mubr.bf16.mxu0 0
    %2892 = vmatmul.mubr.bf16.gmra.mrb[0].mxu0 %v2816
    %v2893 = vpop.f32.mrb[0].mxu0
    %v2894 = vadd.f32 %v208, %v2893
    %v2895 = vpop.f32.mrb[0].mxu0
    %v2896 = vpop.f32.mrb[0].mxu0
    %v2897 = vpop.f32.mrb[0].mxu0
    %2898 = vdwg.mxu0
    %v2900 = vsel %vm702, %v2650, 0
    %2902 = vmatprep.subr.bf16.mxu0 %v828
    %2903 = vmatpush1.bf16.msra.mxu0 %v827
    %2904 = vmatprep.subr.bf16.mxu0 %v831
    %2905 = vmatpush1.bf16.msra.mxu0 %v830
    %2906 = vmatprep.subr.bf16.mxu0 %v834
    %2907 = vmatpush1.bf16.msra.mxu0 %v833
    %2908 = vmatprep.subr.bf16.mxu0 %v837
    %2909 = vmatpush1.bf16.msra.mxu0 %v836
    %2910 = vmatprep.subr.bf16.mxu0 0
    %2911 = vmatpush1.bf16.msra.mxu0 0
    %2912 = vmatprep.subr.bf16.mxu0 0
    %2913 = vmatpush1.bf16.msra.mxu0 0
    %2914 = vmatprep.subr.bf16.mxu0 0
    %2915 = vmatpush1.bf16.msra.mxu0 0
    %2916 = vmatprep.subr.bf16.mxu0 0
    %2917 = vmatpush1.bf16.msra.mxu0 0
    %2918 = vmatprep.subr.bf16.mxu0 0
    %2919 = vmatpush1.bf16.msra.mxu0 0
    %2920 = vmatprep.subr.bf16.mxu0 0
    %2921 = vmatpush1.bf16.msra.mxu0 0
    %2922 = vmatprep.subr.bf16.mxu0 0
    %2923 = vmatpush1.bf16.msra.mxu0 0
    %2924 = vmatprep.subr.bf16.mxu0 0
    %2925 = vmatpush1.bf16.msra.mxu0 0
    %2926 = vmatprep.subr.bf16.mxu0 0
    %2927 = vmatpush1.bf16.msra.mxu0 0
    %2928 = vmatprep.subr.bf16.mxu0 0
    %2929 = vmatpush1.bf16.msra.mxu0 0
    %2930 = vmatprep.subr.bf16.mxu0 0
    %2931 = vmatpush1.bf16.msra.mxu0 0
    %2932 = vmatprep.subr.bf16.mxu0 0
    %2933 = vmatpush1.bf16.msra.mxu0 0
    %2934 = vmatprep.mubr.bf16.mxu0 0
    %2935 = vmatmul.mubr.bf16.gmra.mrb[0].mxu0 %v2900
    %v2936 = vpop.f32.mrb[0].mxu0
    %v2937 = vadd.f32 %v210, %v2936
    %v2938 = vpop.f32.mrb[0].mxu0
    %v2939 = vadd.f32 %v211, %v2938
    %v2940 = vpop.f32.mrb[0].mxu0
    %v2941 = vpop.f32.mrb[0].mxu0
    %2942 = vdwg.mxu0
    %2943 = vmatprep.subr.bf16.mxu0 0
    %2944 = vmatpush1.bf16.msra.mxu0 %v829
    %2945 = vmatprep.subr.bf16.mxu0 0
    %2946 = vmatpush1.bf16.msra.mxu0 %v832
    %2947 = vmatprep.subr.bf16.mxu0 0
    %2948 = vmatpush1.bf16.msra.mxu0 %v835
    %2949 = vmatprep.subr.bf16.mxu0 0
    %2950 = vmatpush1.bf16.msra.mxu0 %v838
    %2951 = vmatprep.subr.bf16.mxu0 0
    %2952 = vmatpush1.bf16.msra.mxu0 0
    %2953 = vmatprep.subr.bf16.mxu0 0
    %2954 = vmatpush1.bf16.msra.mxu0 0
    %2955 = vmatprep.subr.bf16.mxu0 0
    %2956 = vmatpush1.bf16.msra.mxu0 0
    %2957 = vmatprep.subr.bf16.mxu0 0
    %2958 = vmatpush1.bf16.msra.mxu0 0
    %2959 = vmatprep.subr.bf16.mxu0 0
    %2960 = vmatpush1.bf16.msra.mxu0 0
    %2961 = vmatprep.subr.bf16.mxu0 0
    %2962 = vmatpush1.bf16.msra.mxu0 0
    %2963 = vmatprep.subr.bf16.mxu0 0
    %2964 = vmatpush1.bf16.msra.mxu0 0
    %2965 = vmatprep.subr.bf16.mxu0 0
    %2966 = vmatpush1.bf16.msra.mxu0 0
    %2967 = vmatprep.subr.bf16.mxu0 0
    %2968 = vmatpush1.bf16.msra.mxu0 0
    %2969 = vmatprep.subr.bf16.mxu0 0
    %2970 = vmatpush1.bf16.msra.mxu0 0
    %2971 = vmatprep.subr.bf16.mxu0 0
    %2972 = vmatpush1.bf16.msra.mxu0 0
    %2973 = vmatprep.subr.bf16.mxu0 0
    %2974 = vmatpush1.bf16.msra.mxu0 0
    %2975 = vmatprep.mubr.bf16.mxu0 0
    %2976 = vmatmul.mubr.bf16.gmra.mrb[0].mxu0 %v2900
    %v2977 = vpop.f32.mrb[0].mxu0
    %v2978 = vadd.f32 %v212, %v2977
    %v2979 = vpop.f32.mrb[0].mxu0
    %v2980 = vpop.f32.mrb[0].mxu0
    %v2981 = vpop.f32.mrb[0].mxu0
    %2982 = vdwg.mxu0
    %v2983 = vadd.f32 %v2853, %v2687
    %v2984 = vxor.u32 %v2983, 2147483648
    %v2985 = vmul.f32 %v2984, 1.442695
    %v2986 = vpow.pop %v2985
    %v2987 = vadd.f32 %v2986, 1.0
    %v2988 = vrcp.pop %v2987
    %v2989 = vmul.f32 1.0, %v2988
    %v2990 = vadd.f32 %v2855, %v2689
    %v2991 = vxor.u32 %v2990, 2147483648
    %v2992 = vmul.f32 %v2991, 1.442695
    %v2993 = vpow.pop %v2992
    %v2994 = vadd.f32 %v2993, 1.0
    %v2995 = vrcp.pop %v2994
    %v2996 = vmul.f32 1.0, %v2995
    %v2997 = vmul.f32 %v2989, %v2728
    %v2998 = vadd.f32 %v2894, %v2997
    %v2999 = vtanh.pop %v2998
    %v3000 = vsub.f32 %v2645, %v2999
    %v3001 = vmul.f32 %v2996, %v3000
    %v3002 = vadd.f32 %v2999, %v3001
    %v3003 = vadd.f32 %v2937, %v2769
    %v3004 = vxor.u32 %v3003, 2147483648
    %v3005 = vmul.f32 %v3004, 1.442695
    %v3006 = vpow.pop %v3005
    %v3007 = vadd.f32 %v3006, 1.0
    %v3008 = vrcp.pop %v3007
    %v3009 = vmul.f32 1.0, %v3008
    %v3010 = vadd.f32 %v2939, %v2771
    %v3011 = vxor.u32 %v3010, 2147483648
    %v3012 = vmul.f32 %v3011, 1.442695
    %v3013 = vpow.pop %v3012
    %v3014 = vadd.f32 %v3013, 1.0
    %v3015 = vrcp.pop %v3014
    %v3016 = vmul.f32 1.0, %v3015
    %v3017 = vmul.f32 %v3009, %v2810
    %v3018 = vadd.f32 %v2978, %v3017
    %v3019 = vtanh.pop %v3018
    %v3020 = vsub.f32 %v2646, %v3019
    %v3021 = vmul.f32 %v3016, %v3020
    %v3022 = vadd.f32 %v3019, %v3021
    %3023 = vst [vmem:[#allocation2] sm:$0xff] %v3002
    %3024 = vst [vmem:[#allocation3] sm:$0xff] %v3022
    %v3026 = vcombine.high %v3002, %v3002
    %v3028 = vunpack.c.l.s4 1966171168
    %v3029 = vunpack.c.0.s8 %v3028
    %v3030 = vlaneseq
    %v3031 = vshrl.u32 %v3030, 7
    %v3032 = vsub.s32 %v3029, %v3031
    %v3033 = vrot.slane %v3002, %v3032
    %v3035 = vunpack.c.l.s4 1966171168
    %v3036 = vunpack.c.0.s8 %v3035
    %v3037 = vlaneseq
    %v3038 = vshrl.u32 %v3037, 7
    %v3039 = vsub.s32 %v3036, %v3038
    %v3040 = vrot.slane %v3026, %v3039
    %v3041 = vcombine.high %v3033, %v3033
    %v3042 = vcombine.high %v3040, %v3040
    %v3044 = vunpack.c.l.s4 1966171168
    %v3045 = vunpack.c.0.s8 %v3044
    %v3046 = vlaneseq
    %v3047 = vshrl.u32 %v3046, 7
    %v3048 = vsub.s32 %v3045, %v3047
    %v3049 = vrot.slane %v3033, %v3048
    %v3051 = vunpack.c.l.s4 1966171168
    %v3052 = vunpack.c.0.s8 %v3051
    %v3053 = vlaneseq
    %v3054 = vshrl.u32 %v3053, 7
    %v3055 = vsub.s32 %v3052, %v3054
    %v3056 = vrot.slane %v3040, %v3055
    %v3058 = vunpack.c.l.s4 1966171168
    %v3059 = vunpack.c.0.s8 %v3058
    %v3060 = vlaneseq
    %v3061 = vshrl.u32 %v3060, 7
    %v3062 = vsub.s32 %v3059, %v3061
    %v3063 = vrot.slane %v3041, %v3062
    %v3065 = vunpack.c.l.s4 1966171168
    %v3066 = vunpack.c.0.s8 %v3065
    %v3067 = vlaneseq
    %v3068 = vshrl.u32 %v3067, 7
    %v3069 = vsub.s32 %v3066, %v3068
    %v3070 = vrot.slane %v3042, %v3069
    %v3071 = vcombine.high %v3049, %v3049
    %v3072 = vcombine.high %v3056, %v3056
    %v3073 = vcombine.high %v3063, %v3063
    %v3074 = vcombine.high %v3070, %v3070
    %3083 = vst [vmem:[#allocation13 + $0x4] sm:$0x1] %v3049
    %3084 = vst [vmem:[#allocation13 + $0x14] sm:$0x1] %v3063
    %3085 = vst [vmem:[#allocation13 + $0x24] sm:$0x1] %v3071
    %3086 = vst [vmem:[#allocation13 + $0x34] sm:$0x1] %v3073
    %3087 = vst [vmem:[#allocation13 + $0x44] sm:$0x1] %v3056
    %3088 = vst [vmem:[#allocation13 + $0x54] sm:$0x1] %v3070
    %3089 = vst [vmem:[#allocation13 + $0x64] sm:$0x1] %v3072
    %3090 = vst [vmem:[#allocation13 + $0x74] sm:$0x1] %v3074
    %v3092 = vcombine.high %v3022, %v3022
    %v3094 = vunpack.c.l.s4 1966171168
    %v3095 = vunpack.c.0.s8 %v3094
    %v3096 = vlaneseq
    %v3097 = vshrl.u32 %v3096, 7
    %v3098 = vsub.s32 %v3095, %v3097
    %v3099 = vrot.slane %v3022, %v3098
    %v3101 = vunpack.c.l.s4 1966171168
    %v3102 = vunpack.c.0.s8 %v3101
    %v3103 = vlaneseq
    %v3104 = vshrl.u32 %v3103, 7
    %v3105 = vsub.s32 %v3102, %v3104
    %v3106 = vrot.slane %v3092, %v3105
    %v3107 = vcombine.high %v3099, %v3099
    %v3108 = vcombine.high %v3106, %v3106
    %v3110 = vunpack.c.l.s4 1966171168
    %v3111 = vunpack.c.0.s8 %v3110
    %v3112 = vlaneseq
    %v3113 = vshrl.u32 %v3112, 7
    %v3114 = vsub.s32 %v3111, %v3113
    %v3115 = vrot.slane %v3099, %v3114
    %v3117 = vunpack.c.l.s4 1966171168
    %v3118 = vunpack.c.0.s8 %v3117
    %v3119 = vlaneseq
    %v3120 = vshrl.u32 %v3119, 7
    %v3121 = vsub.s32 %v3118, %v3120
    %v3122 = vrot.slane %v3106, %v3121
    %v3124 = vunpack.c.l.s4 1966171168
    %v3125 = vunpack.c.0.s8 %v3124
    %v3126 = vlaneseq
    %v3127 = vshrl.u32 %v3126, 7
    %v3128 = vsub.s32 %v3125, %v3127
    %v3129 = vrot.slane %v3107, %v3128
    %v3131 = vunpack.c.l.s4 1966171168
    %v3132 = vunpack.c.0.s8 %v3131
    %v3133 = vlaneseq
    %v3134 = vshrl.u32 %v3133, 7
    %v3135 = vsub.s32 %v3132, %v3134
    %v3136 = vrot.slane %v3108, %v3135
    %v3137 = vcombine.high %v3115, %v3115
    %v3138 = vcombine.high %v3122, %v3122
    %v3139 = vcombine.high %v3129, %v3129
    %v3140 = vcombine.high %v3136, %v3136
    %3149 = vst [vmem:[#allocation14 + $0xb] sm:$0x1] %v3115
    %3150 = vst [vmem:[#allocation14 + $0x1b] sm:$0x1] %v3129
    %3151 = vst [vmem:[#allocation14 + $0x2b] sm:$0x1] %v3137
    %3152 = vst [vmem:[#allocation14 + $0x3b] sm:$0x1] %v3139
    %3153 = vst [vmem:[#allocation14 + $0x4b] sm:$0x1] %v3122
    %3154 = vst [vmem:[#allocation14 + $0x5b] sm:$0x1] %v3136
    %3155 = vst [vmem:[#allocation14 + $0x6b] sm:$0x1] %v3138
    %3156 = vst [vmem:[#allocation14 + $0x7b] sm:$0x1] %v3140
    %v3157 = vld [vmem:[#allocation2] sm:$0xff]
    %v3158 = vld [vmem:[#allocation3] sm:$0xff]
    %s3159 = scalar_lea.vmem [#allocation4], 20
    %v3160 = vld [vmem:[%s3159] sm:$0xf]
    %s3161 = scalar_lea.vmem [#allocation7], 40
    %v3162 = vld [vmem:[%s3161] sm:$0xf]
    %v3163 = vpack.c.bf16 %v3157, %v3157
    %3164 = vmatprep.subr.bf16.mxu0 %v300
    %3165 = vmatpush1.bf16.msra.mxu0 %v299
    %3166 = vmatprep.subr.bf16.mxu0 %v303
    %3167 = vmatpush1.bf16.msra.mxu0 %v302
    %3168 = vmatprep.subr.bf16.mxu0 %v306
    %3169 = vmatpush1.bf16.msra.mxu0 %v305
    %3170 = vmatprep.subr.bf16.mxu0 %v309
    %3171 = vmatpush1.bf16.msra.mxu0 %v308
    %3172 = vmatprep.subr.bf16.mxu0 %v312
    %3173 = vmatpush1.bf16.msra.mxu0 %v311
    %3174 = vmatprep.subr.bf16.mxu0 %v315
    %3175 = vmatpush1.bf16.msra.mxu0 %v314
    %3176 = vmatprep.subr.bf16.mxu0 %v318
    %3177 = vmatpush1.bf16.msra.mxu0 %v317
    %3178 = vmatprep.subr.bf16.mxu0 %v321
    %3179 = vmatpush1.bf16.msra.mxu0 %v320
    %3180 = vmatprep.subr.bf16.mxu0 0
    %3181 = vmatpush1.bf16.msra.mxu0 0
    %3182 = vmatprep.subr.bf16.mxu0 0
    %3183 = vmatpush1.bf16.msra.mxu0 0
    %3184 = vmatprep.subr.bf16.mxu0 0
    %3185 = vmatpush1.bf16.msra.mxu0 0
    %3186 = vmatprep.subr.bf16.mxu0 0
    %3187 = vmatpush1.bf16.msra.mxu0 0
    %3188 = vmatprep.subr.bf16.mxu0 0
    %3189 = vmatpush1.bf16.msra.mxu0 0
    %3190 = vmatprep.subr.bf16.mxu0 0
    %3191 = vmatpush1.bf16.msra.mxu0 0
    %3192 = vmatprep.subr.bf16.mxu0 0
    %3193 = vmatpush1.bf16.msra.mxu0 0
    %3194 = vmatprep.subr.bf16.mxu0 0
    %3195 = vmatpush1.bf16.msra.mxu0 0
    %3196 = vmatprep.mubr.bf16.mxu0 0
    %3197 = vmatmul.mubr.bf16.gmra.mrb[0].mxu0 %v3163
    %v3198 = vpop.f32.mrb[0].mxu0
    %v3199 = vadd.f32 0.0, %v3198
    %v3200 = vpop.f32.mrb[0].mxu0
    %v3201 = vadd.f32 0.0, %v3200
    %v3202 = vpop.f32.mrb[0].mxu0
    %v3203 = vpop.f32.mrb[0].mxu0
    %3204 = vdwg.mxu0
    %3205 = vmatprep.subr.bf16.mxu0 0
    %3206 = vmatpush1.bf16.msra.mxu0 %v301
    %3207 = vmatprep.subr.bf16.mxu0 0
    %3208 = vmatpush1.bf16.msra.mxu0 %v304
    %3209 = vmatprep.subr.bf16.mxu0 0
    %3210 = vmatpush1.bf16.msra.mxu0 %v307
    %3211 = vmatprep.subr.bf16.mxu0 0
    %3212 = vmatpush1.bf16.msra.mxu0 %v310
    %3213 = vmatprep.subr.bf16.mxu0 0
    %3214 = vmatpush1.bf16.msra.mxu0 %v313
    %3215 = vmatprep.subr.bf16.mxu0 0
    %3216 = vmatpush1.bf16.msra.mxu0 %v316
    %3217 = vmatprep.subr.bf16.mxu0 0
    %3218 = vmatpush1.bf16.msra.mxu0 %v319
    %3219 = vmatprep.subr.bf16.mxu0 0
    %3220 = vmatpush1.bf16.msra.mxu0 %v322
    %3221 = vmatprep.subr.bf16.mxu0 0
    %3222 = vmatpush1.bf16.msra.mxu0 0
    %3223 = vmatprep.subr.bf16.mxu0 0
    %3224 = vmatpush1.bf16.msra.mxu0 0
    %3225 = vmatprep.subr.bf16.mxu0 0
    %3226 = vmatpush1.bf16.msra.mxu0 0
    %3227 = vmatprep.subr.bf16.mxu0 0
    %3228 = vmatpush1.bf16.msra.mxu0 0
    %3229 = vmatprep.subr.bf16.mxu0 0
    %3230 = vmatpush1.bf16.msra.mxu0 0
    %3231 = vmatprep.subr.bf16.mxu0 0
    %3232 = vmatpush1.bf16.msra.mxu0 0
    %3233 = vmatprep.subr.bf16.mxu0 0
    %3234 = vmatpush1.bf16.msra.mxu0 0
    %3235 = vmatprep.subr.bf16.mxu0 0
    %3236 = vmatpush1.bf16.msra.mxu0 0
    %3237 = vmatprep.mubr.bf16.mxu0 0
    %3238 = vmatmul.mubr.bf16.gmra.mrb[0].mxu0 %v3163
    %v3239 = vpop.f32.mrb[0].mxu0
    %v3240 = vadd.f32 0.0, %v3239
    %v3241 = vpop.f32.mrb[0].mxu0
    %v3242 = vpop.f32.mrb[0].mxu0
    %v3243 = vpop.f32.mrb[0].mxu0
    %3244 = vdwg.mxu0
    %v3245 = vpack.c.bf16 %v3158, %v3158
    %3246 = vmatprep.subr.bf16.mxu0 %v510
    %3247 = vmatpush1.bf16.msra.mxu0 %v509
    %3248 = vmatprep.subr.bf16.mxu0 %v513
    %3249 = vmatpush1.bf16.msra.mxu0 %v512
    %3250 = vmatprep.subr.bf16.mxu0 %v516
    %3251 = vmatpush1.bf16.msra.mxu0 %v515
    %3252 = vmatprep.subr.bf16.mxu0 %v519
    %3253 = vmatpush1.bf16.msra.mxu0 %v518
    %3254 = vmatprep.subr.bf16.mxu0 %v522
    %3255 = vmatpush1.bf16.msra.mxu0 %v521
    %3256 = vmatprep.subr.bf16.mxu0 %v525
    %3257 = vmatpush1.bf16.msra.mxu0 %v524
    %3258 = vmatprep.subr.bf16.mxu0 %v528
    %3259 = vmatpush1.bf16.msra.mxu0 %v527
    %3260 = vmatprep.subr.bf16.mxu0 %v531
    %3261 = vmatpush1.bf16.msra.mxu0 %v530
    %3262 = vmatprep.subr.bf16.mxu0 0
    %3263 = vmatpush1.bf16.msra.mxu0 0
    %3264 = vmatprep.subr.bf16.mxu0 0
    %3265 = vmatpush1.bf16.msra.mxu0 0
    %3266 = vmatprep.subr.bf16.mxu0 0
    %3267 = vmatpush1.bf16.msra.mxu0 0
    %3268 = vmatprep.subr.bf16.mxu0 0
    %3269 = vmatpush1.bf16.msra.mxu0 0
    %3270 = vmatprep.subr.bf16.mxu0 0
    %3271 = vmatpush1.bf16.msra.mxu0 0
    %3272 = vmatprep.subr.bf16.mxu0 0
    %3273 = vmatpush1.bf16.msra.mxu0 0
    %3274 = vmatprep.subr.bf16.mxu0 0
    %3275 = vmatpush1.bf16.msra.mxu0 0
    %3276 = vmatprep.subr.bf16.mxu0 0
    %3277 = vmatpush1.bf16.msra.mxu0 0
    %3278 = vmatprep.mubr.bf16.mxu0 0
    %3279 = vmatmul.mubr.bf16.gmra.mrb[0].mxu0 %v3245
    %v3280 = vpop.f32.mrb[0].mxu0
    %v3281 = vadd.f32 0.0, %v3280
    %v3282 = vpop.f32.mrb[0].mxu0
    %v3283 = vadd.f32 0.0, %v3282
    %v3284 = vpop.f32.mrb[0].mxu0
    %v3285 = vpop.f32.mrb[0].mxu0
    %3286 = vdwg.mxu0
    %3287 = vmatprep.subr.bf16.mxu0 0
    %3288 = vmatpush1.bf16.msra.mxu0 %v511
    %3289 = vmatprep.subr.bf16.mxu0 0
    %3290 = vmatpush1.bf16.msra.mxu0 %v514
    %3291 = vmatprep.subr.bf16.mxu0 0
    %3292 = vmatpush1.bf16.msra.mxu0 %v517
    %3293 = vmatprep.subr.bf16.mxu0 0
    %3294 = vmatpush1.bf16.msra.mxu0 %v520
    %3295 = vmatprep.subr.bf16.mxu0 0
    %3296 = vmatpush1.bf16.msra.mxu0 %v523
    %3297 = vmatprep.subr.bf16.mxu0 0
    %3298 = vmatpush1.bf16.msra.mxu0 %v526
    %3299 = vmatprep.subr.bf16.mxu0 0
    %3300 = vmatpush1.bf16.msra.mxu0 %v529
    %3301 = vmatprep.subr.bf16.mxu0 0
    %3302 = vmatpush1.bf16.msra.mxu0 %v532
    %3303 = vmatprep.subr.bf16.mxu0 0
    %3304 = vmatpush1.bf16.msra.mxu0 0
    %3305 = vmatprep.subr.bf16.mxu0 0
    %3306 = vmatpush1.bf16.msra.mxu0 0
    %3307 = vmatprep.subr.bf16.mxu0 0
    %3308 = vmatpush1.bf16.msra.mxu0 0
    %3309 = vmatprep.subr.bf16.mxu0 0
    %3310 = vmatpush1.bf16.msra.mxu0 0
    %3311 = vmatprep.subr.bf16.mxu0 0
    %3312 = vmatpush1.bf16.msra.mxu0 0
    %3313 = vmatprep.subr.bf16.mxu0 0
    %3314 = vmatpush1.bf16.msra.mxu0 0
    %3315 = vmatprep.subr.bf16.mxu0 0
    %3316 = vmatpush1.bf16.msra.mxu0 0
    %3317 = vmatprep.subr.bf16.mxu0 0
    %3318 = vmatpush1.bf16.msra.mxu0 0
    %3319 = vmatprep.mubr.bf16.mxu0 0
    %3320 = vmatmul.mubr.bf16.gmra.mrb[0].mxu0 %v3245
    %v3321 = vpop.f32.mrb[0].mxu0
    %v3322 = vadd.f32 0.0, %v3321
    %v3323 = vpop.f32.mrb[0].mxu0
    %v3324 = vpop.f32.mrb[0].mxu0
    %v3325 = vpop.f32.mrb[0].mxu0
    %3326 = vdwg.mxu0
    %v3328 = vsel %vm702, %v3160, 0
    %3330 = vmatprep.subr.bf16.mxu0 %v679
    %3331 = vmatpush1.bf16.msra.mxu0 %v678
    %3332 = vmatprep.subr.bf16.mxu0 %v682
    %3333 = vmatpush1.bf16.msra.mxu0 %v681
    %3334 = vmatprep.subr.bf16.mxu0 %v685
    %3335 = vmatpush1.bf16.msra.mxu0 %v684
    %3336 = vmatprep.subr.bf16.mxu0 %v688
    %3337 = vmatpush1.bf16.msra.mxu0 %v687
    %3338 = vmatprep.subr.bf16.mxu0 0
    %3339 = vmatpush1.bf16.msra.mxu0 0
    %3340 = vmatprep.subr.bf16.mxu0 0
    %3341 = vmatpush1.bf16.msra.mxu0 0
    %3342 = vmatprep.subr.bf16.mxu0 0
    %3343 = vmatpush1.bf16.msra.mxu0 0
    %3344 = vmatprep.subr.bf16.mxu0 0
    %3345 = vmatpush1.bf16.msra.mxu0 0
    %3346 = vmatprep.subr.bf16.mxu0 0
    %3347 = vmatpush1.bf16.msra.mxu0 0
    %3348 = vmatprep.subr.bf16.mxu0 0
    %3349 = vmatpush1.bf16.msra.mxu0 0
    %3350 = vmatprep.subr.bf16.mxu0 0
    %3351 = vmatpush1.bf16.msra.mxu0 0
    %3352 = vmatprep.subr.bf16.mxu0 0
    %3353 = vmatpush1.bf16.msra.mxu0 0
    %3354 = vmatprep.subr.bf16.mxu0 0
    %3355 = vmatpush1.bf16.msra.mxu0 0
    %3356 = vmatprep.subr.bf16.mxu0 0
    %3357 = vmatpush1.bf16.msra.mxu0 0
    %3358 = vmatprep.subr.bf16.mxu0 0
    %3359 = vmatpush1.bf16.msra.mxu0 0
    %3360 = vmatprep.subr.bf16.mxu0 0
    %3361 = vmatpush1.bf16.msra.mxu0 0
    %3362 = vmatprep.mubr.bf16.mxu0 0
    %3363 = vmatmul.mubr.bf16.gmra.mrb[0].mxu0 %v3328
    %v3364 = vpop.f32.mrb[0].mxu0
    %v3365 = vadd.f32 %v206, %v3364
    %v3366 = vpop.f32.mrb[0].mxu0
    %v3367 = vadd.f32 %v207, %v3366
    %v3368 = vpop.f32.mrb[0].mxu0
    %v3369 = vpop.f32.mrb[0].mxu0
    %3370 = vdwg.mxu0
    %3371 = vmatprep.subr.bf16.mxu0 0
    %3372 = vmatpush1.bf16.msra.mxu0 %v680
    %3373 = vmatprep.subr.bf16.mxu0 0
    %3374 = vmatpush1.bf16.msra.mxu0 %v683
    %3375 = vmatprep.subr.bf16.mxu0 0
    %3376 = vmatpush1.bf16.msra.mxu0 %v686
    %3377 = vmatprep.subr.bf16.mxu0 0
    %3378 = vmatpush1.bf16.msra.mxu0 %v689
    %3379 = vmatprep.subr.bf16.mxu0 0
    %3380 = vmatpush1.bf16.msra.mxu0 0
    %3381 = vmatprep.subr.bf16.mxu0 0
    %3382 = vmatpush1.bf16.msra.mxu0 0
    %3383 = vmatprep.subr.bf16.mxu0 0
    %3384 = vmatpush1.bf16.msra.mxu0 0
    %3385 = vmatprep.subr.bf16.mxu0 0
    %3386 = vmatpush1.bf16.msra.mxu0 0
    %3387 = vmatprep.subr.bf16.mxu0 0
    %3388 = vmatpush1.bf16.msra.mxu0 0
    %3389 = vmatprep.subr.bf16.mxu0 0
    %3390 = vmatpush1.bf16.msra.mxu0 0
    %3391 = vmatprep.subr.bf16.mxu0 0
    %3392 = vmatpush1.bf16.msra.mxu0 0
    %3393 = vmatprep.subr.bf16.mxu0 0
    %3394 = vmatpush1.bf16.msra.mxu0 0
    %3395 = vmatprep.subr.bf16.mxu0 0
    %3396 = vmatpush1.bf16.msra.mxu0 0
    %3397 = vmatprep.subr.bf16.mxu0 0
    %3398 = vmatpush1.bf16.msra.mxu0 0
    %3399 = vmatprep.subr.bf16.mxu0 0
    %3400 = vmatpush1.bf16.msra.mxu0 0
    %3401 = vmatprep.subr.bf16.mxu0 0
    %3402 = vmatpush1.bf16.msra.mxu0 0
    %3403 = vmatprep.mubr.bf16.mxu0 0
    %3404 = vmatmul.mubr.bf16.gmra.mrb[0].mxu0 %v3328
    %v3405 = vpop.f32.mrb[0].mxu0
    %v3406 = vadd.f32 %v208, %v3405
    %v3407 = vpop.f32.mrb[0].mxu0
    %v3408 = vpop.f32.mrb[0].mxu0
    %v3409 = vpop.f32.mrb[0].mxu0
    %3410 = vdwg.mxu0
    %v3412 = vsel %vm702, %v3162, 0
    %3414 = vmatprep.subr.bf16.mxu0 %v828
    %3415 = vmatpush1.bf16.msra.mxu0 %v827
    %3416 = vmatprep.subr.bf16.mxu0 %v831
    %3417 = vmatpush1.bf16.msra.mxu0 %v830
    %3418 = vmatprep.subr.bf16.mxu0 %v834
    %3419 = vmatpush1.bf16.msra.mxu0 %v833
    %3420 = vmatprep.subr.bf16.mxu0 %v837
    %3421 = vmatpush1.bf16.msra.mxu0 %v836
    %3422 = vmatprep.subr.bf16.mxu0 0
    %3423 = vmatpush1.bf16.msra.mxu0 0
    %3424 = vmatprep.subr.bf16.mxu0 0
    %3425 = vmatpush1.bf16.msra.mxu0 0
    %3426 = vmatprep.subr.bf16.mxu0 0
    %3427 = vmatpush1.bf16.msra.mxu0 0
    %3428 = vmatprep.subr.bf16.mxu0 0
    %3429 = vmatpush1.bf16.msra.mxu0 0
    %3430 = vmatprep.subr.bf16.mxu0 0
    %3431 = vmatpush1.bf16.msra.mxu0 0
    %3432 = vmatprep.subr.bf16.mxu0 0
    %3433 = vmatpush1.bf16.msra.mxu0 0
    %3434 = vmatprep.subr.bf16.mxu0 0
    %3435 = vmatpush1.bf16.msra.mxu0 0
    %3436 = vmatprep.subr.bf16.mxu0 0
    %3437 = vmatpush1.bf16.msra.mxu0 0
    %3438 = vmatprep.subr.bf16.mxu0 0
    %3439 = vmatpush1.bf16.msra.mxu0 0
    %3440 = vmatprep.subr.bf16.mxu0 0
    %3441 = vmatpush1.bf16.msra.mxu0 0
    %3442 = vmatprep.subr.bf16.mxu0 0
    %3443 = vmatpush1.bf16.msra.mxu0 0
    %3444 = vmatprep.subr.bf16.mxu0 0
    %3445 = vmatpush1.bf16.msra.mxu0 0
    %3446 = vmatprep.mubr.bf16.mxu0 0
    %3447 = vmatmul.mubr.bf16.gmra.mrb[0].mxu0 %v3412
    %v3448 = vpop.f32.mrb[0].mxu0
    %v3449 = vadd.f32 %v210, %v3448
    %v3450 = vpop.f32.mrb[0].mxu0
    %v3451 = vadd.f32 %v211, %v3450
    %v3452 = vpop.f32.mrb[0].mxu0
    %v3453 = vpop.f32.mrb[0].mxu0
    %3454 = vdwg.mxu0
    %3455 = vmatprep.subr.bf16.mxu0 0
    %3456 = vmatpush1.bf16.msra.mxu0 %v829
    %3457 = vmatprep.subr.bf16.mxu0 0
    %3458 = vmatpush1.bf16.msra.mxu0 %v832
    %3459 = vmatprep.subr.bf16.mxu0 0
    %3460 = vmatpush1.bf16.msra.mxu0 %v835
    %3461 = vmatprep.subr.bf16.mxu0 0
    %3462 = vmatpush1.bf16.msra.mxu0 %v838
    %3463 = vmatprep.subr.bf16.mxu0 0
    %3464 = vmatpush1.bf16.msra.mxu0 0
    %3465 = vmatprep.subr.bf16.mxu0 0
    %3466 = vmatpush1.bf16.msra.mxu0 0
    %3467 = vmatprep.subr.bf16.mxu0 0
    %3468 = vmatpush1.bf16.msra.mxu0 0
    %3469 = vmatprep.subr.bf16.mxu0 0
    %3470 = vmatpush1.bf16.msra.mxu0 0
    %3471 = vmatprep.subr.bf16.mxu0 0
    %3472 = vmatpush1.bf16.msra.mxu0 0
    %3473 = vmatprep.subr.bf16.mxu0 0
    %3474 = vmatpush1.bf16.msra.mxu0 0
    %3475 = vmatprep.subr.bf16.mxu0 0
    %3476 = vmatpush1.bf16.msra.mxu0 0
    %3477 = vmatprep.subr.bf16.mxu0 0
    %3478 = vmatpush1.bf16.msra.mxu0 0
    %3479 = vmatprep.subr.bf16.mxu0 0
    %3480 = vmatpush1.bf16.msra.mxu0 0
    %3481 = vmatprep.subr.bf16.mxu0 0
    %3482 = vmatpush1.bf16.msra.mxu0 0
    %3483 = vmatprep.subr.bf16.mxu0 0
    %3484 = vmatpush1.bf16.msra.mxu0 0
    %3485 = vmatprep.subr.bf16.mxu0 0
    %3486 = vmatpush1.bf16.msra.mxu0 0
    %3487 = vmatprep.mubr.bf16.mxu0 0
    %3488 = vmatmul.mubr.bf16.gmra.mrb[0].mxu0 %v3412
    %v3489 = vpop.f32.mrb[0].mxu0
    %v3490 = vadd.f32 %v212, %v3489
    %v3491 = vpop.f32.mrb[0].mxu0
    %v3492 = vpop.f32.mrb[0].mxu0
    %v3493 = vpop.f32.mrb[0].mxu0
    %3494 = vdwg.mxu0
    %v3495 = vadd.f32 %v3365, %v3199
    %v3496 = vxor.u32 %v3495, 2147483648
    %v3497 = vmul.f32 %v3496, 1.442695
    %v3498 = vpow.pop %v3497
    %v3499 = vadd.f32 %v3498, 1.0
    %v3500 = vrcp.pop %v3499
    %v3501 = vmul.f32 1.0, %v3500
    %v3502 = vadd.f32 %v3367, %v3201
    %v3503 = vxor.u32 %v3502, 2147483648
    %v3504 = vmul.f32 %v3503, 1.442695
    %v3505 = vpow.pop %v3504
    %v3506 = vadd.f32 %v3505, 1.0
    %v3507 = vrcp.pop %v3506
    %v3508 = vmul.f32 1.0, %v3507
    %v3509 = vmul.f32 %v3501, %v3240
    %v3510 = vadd.f32 %v3406, %v3509
    %v3511 = vtanh.pop %v3510
    %v3512 = vsub.f32 %v3157, %v3511
    %v3513 = vmul.f32 %v3508, %v3512
    %v3514 = vadd.f32 %v3511, %v3513
    %v3515 = vadd.f32 %v3449, %v3281
    %v3516 = vxor.u32 %v3515, 2147483648
    %v3517 = vmul.f32 %v3516, 1.442695
    %v3518 = vpow.pop %v3517
    %v3519 = vadd.f32 %v3518, 1.0
    %v3520 = vrcp.pop %v3519
    %v3521 = vmul.f32 1.0, %v3520
    %v3522 = vadd.f32 %v3451, %v3283
    %v3523 = vxor.u32 %v3522, 2147483648
    %v3524 = vmul.f32 %v3523, 1.442695
    %v3525 = vpow.pop %v3524
    %v3526 = vadd.f32 %v3525, 1.0
    %v3527 = vrcp.pop %v3526
    %v3528 = vmul.f32 1.0, %v3527
    %v3529 = vmul.f32 %v3521, %v3322
    %v3530 = vadd.f32 %v3490, %v3529
    %v3531 = vtanh.pop %v3530
    %v3532 = vsub.f32 %v3158, %v3531
    %v3533 = vmul.f32 %v3528, %v3532
    %v3534 = vadd.f32 %v3531, %v3533
    %3535 = vst [vmem:[#allocation2] sm:$0xff] %v3514
    %3536 = vst [vmem:[#allocation3] sm:$0xff] %v3534
    %v3538 = vcombine.high %v3514, %v3514
    %v3540 = vunpack.c.l.s4 1966171168
    %v3541 = vunpack.c.0.s8 %v3540
    %v3542 = vlaneseq
    %v3543 = vshrl.u32 %v3542, 7
    %v3544 = vsub.s32 %v3541, %v3543
    %v3545 = vrot.slane %v3514, %v3544
    %v3547 = vunpack.c.l.s4 1966171168
    %v3548 = vunpack.c.0.s8 %v3547
    %v3549 = vlaneseq
    %v3550 = vshrl.u32 %v3549, 7
    %v3551 = vsub.s32 %v3548, %v3550
    %v3552 = vrot.slane %v3538, %v3551
    %v3553 = vcombine.high %v3545, %v3545
    %v3554 = vcombine.high %v3552, %v3552
    %v3556 = vunpack.c.l.s4 1966171168
    %v3557 = vunpack.c.0.s8 %v3556
    %v3558 = vlaneseq
    %v3559 = vshrl.u32 %v3558, 7
    %v3560 = vsub.s32 %v3557, %v3559
    %v3561 = vrot.slane %v3545, %v3560
    %v3563 = vunpack.c.l.s4 1966171168
    %v3564 = vunpack.c.0.s8 %v3563
    %v3565 = vlaneseq
    %v3566 = vshrl.u32 %v3565, 7
    %v3567 = vsub.s32 %v3564, %v3566
    %v3568 = vrot.slane %v3552, %v3567
    %v3570 = vunpack.c.l.s4 1966171168
    %v3571 = vunpack.c.0.s8 %v3570
    %v3572 = vlaneseq
    %v3573 = vshrl.u32 %v3572, 7
    %v3574 = vsub.s32 %v3571, %v3573
    %v3575 = vrot.slane %v3553, %v3574
    %v3577 = vunpack.c.l.s4 1966171168
    %v3578 = vunpack.c.0.s8 %v3577
    %v3579 = vlaneseq
    %v3580 = vshrl.u32 %v3579, 7
    %v3581 = vsub.s32 %v3578, %v3580
    %v3582 = vrot.slane %v3554, %v3581
    %v3583 = vcombine.high %v3561, %v3561
    %v3584 = vcombine.high %v3568, %v3568
    %v3585 = vcombine.high %v3575, %v3575
    %v3586 = vcombine.high %v3582, %v3582
    %3595 = vst [vmem:[#allocation13 + $0x5] sm:$0x1] %v3561
    %3596 = vst [vmem:[#allocation13 + $0x15] sm:$0x1] %v3575
    %3597 = vst [vmem:[#allocation13 + $0x25] sm:$0x1] %v3583
    %3598 = vst [vmem:[#allocation13 + $0x35] sm:$0x1] %v3585
    %3599 = vst [vmem:[#allocation13 + $0x45] sm:$0x1] %v3568
    %3600 = vst [vmem:[#allocation13 + $0x55] sm:$0x1] %v3582
    %3601 = vst [vmem:[#allocation13 + $0x65] sm:$0x1] %v3584
    %3602 = vst [vmem:[#allocation13 + $0x75] sm:$0x1] %v3586
    %v3604 = vcombine.high %v3534, %v3534
    %v3606 = vunpack.c.l.s4 1966171168
    %v3607 = vunpack.c.0.s8 %v3606
    %v3608 = vlaneseq
    %v3609 = vshrl.u32 %v3608, 7
    %v3610 = vsub.s32 %v3607, %v3609
    %v3611 = vrot.slane %v3534, %v3610
    %v3613 = vunpack.c.l.s4 1966171168
    %v3614 = vunpack.c.0.s8 %v3613
    %v3615 = vlaneseq
    %v3616 = vshrl.u32 %v3615, 7
    %v3617 = vsub.s32 %v3614, %v3616
    %v3618 = vrot.slane %v3604, %v3617
    %v3619 = vcombine.high %v3611, %v3611
    %v3620 = vcombine.high %v3618, %v3618
    %v3622 = vunpack.c.l.s4 1966171168
    %v3623 = vunpack.c.0.s8 %v3622
    %v3624 = vlaneseq
    %v3625 = vshrl.u32 %v3624, 7
    %v3626 = vsub.s32 %v3623, %v3625
    %v3627 = vrot.slane %v3611, %v3626
    %v3629 = vunpack.c.l.s4 1966171168
    %v3630 = vunpack.c.0.s8 %v3629
    %v3631 = vlaneseq
    %v3632 = vshrl.u32 %v3631, 7
    %v3633 = vsub.s32 %v3630, %v3632
    %v3634 = vrot.slane %v3618, %v3633
    %v3636 = vunpack.c.l.s4 1966171168
    %v3637 = vunpack.c.0.s8 %v3636
    %v3638 = vlaneseq
    %v3639 = vshrl.u32 %v3638, 7
    %v3640 = vsub.s32 %v3637, %v3639
    %v3641 = vrot.slane %v3619, %v3640
    %v3643 = vunpack.c.l.s4 1966171168
    %v3644 = vunpack.c.0.s8 %v3643
    %v3645 = vlaneseq
    %v3646 = vshrl.u32 %v3645, 7
    %v3647 = vsub.s32 %v3644, %v3646
    %v3648 = vrot.slane %v3620, %v3647
    %v3649 = vcombine.high %v3627, %v3627
    %v3650 = vcombine.high %v3634, %v3634
    %v3651 = vcombine.high %v3641, %v3641
    %v3652 = vcombine.high %v3648, %v3648
    %3661 = vst [vmem:[#allocation14 + $0xa] sm:$0x1] %v3627
    %3662 = vst [vmem:[#allocation14 + $0x1a] sm:$0x1] %v3641
    %3663 = vst [vmem:[#allocation14 + $0x2a] sm:$0x1] %v3649
    %3664 = vst [vmem:[#allocation14 + $0x3a] sm:$0x1] %v3651
    %3665 = vst [vmem:[#allocation14 + $0x4a] sm:$0x1] %v3634
    %3666 = vst [vmem:[#allocation14 + $0x5a] sm:$0x1] %v3648
    %3667 = vst [vmem:[#allocation14 + $0x6a] sm:$0x1] %v3650
    %3668 = vst [vmem:[#allocation14 + $0x7a] sm:$0x1] %v3652
    %v3669 = vld [vmem:[#allocation2] sm:$0xff]
    %v3670 = vld [vmem:[#allocation3] sm:$0xff]
    %s3671 = scalar_lea.vmem [#allocation4], 24
    %v3672 = vld [vmem:[%s3671] sm:$0xf]
    %s3673 = scalar_lea.vmem [#allocation7], 36
    %v3674 = vld [vmem:[%s3673] sm:$0xf]
    %v3675 = vpack.c.bf16 %v3669, %v3669
    %3676 = vmatprep.subr.bf16.mxu0 %v300
    %3677 = vmatpush1.bf16.msra.mxu0 %v299
    %3678 = vmatprep.subr.bf16.mxu0 %v303
    %3679 = vmatpush1.bf16.msra.mxu0 %v302
    %3680 = vmatprep.subr.bf16.mxu0 %v306
    %3681 = vmatpush1.bf16.msra.mxu0 %v305
    %3682 = vmatprep.subr.bf16.mxu0 %v309
    %3683 = vmatpush1.bf16.msra.mxu0 %v308
    %3684 = vmatprep.subr.bf16.mxu0 %v312
    %3685 = vmatpush1.bf16.msra.mxu0 %v311
    %3686 = vmatprep.subr.bf16.mxu0 %v315
    %3687 = vmatpush1.bf16.msra.mxu0 %v314
    %3688 = vmatprep.subr.bf16.mxu0 %v318
    %3689 = vmatpush1.bf16.msra.mxu0 %v317
    %3690 = vmatprep.subr.bf16.mxu0 %v321
    %3691 = vmatpush1.bf16.msra.mxu0 %v320
    %3692 = vmatprep.subr.bf16.mxu0 0
    %3693 = vmatpush1.bf16.msra.mxu0 0
    %3694 = vmatprep.subr.bf16.mxu0 0
    %3695 = vmatpush1.bf16.msra.mxu0 0
    %3696 = vmatprep.subr.bf16.mxu0 0
    %3697 = vmatpush1.bf16.msra.mxu0 0
    %3698 = vmatprep.subr.bf16.mxu0 0
    %3699 = vmatpush1.bf16.msra.mxu0 0
    %3700 = vmatprep.subr.bf16.mxu0 0
    %3701 = vmatpush1.bf16.msra.mxu0 0
    %3702 = vmatprep.subr.bf16.mxu0 0
    %3703 = vmatpush1.bf16.msra.mxu0 0
    %3704 = vmatprep.subr.bf16.mxu0 0
    %3705 = vmatpush1.bf16.msra.mxu0 0
    %3706 = vmatprep.subr.bf16.mxu0 0
    %3707 = vmatpush1.bf16.msra.mxu0 0
    %3708 = vmatprep.mubr.bf16.mxu0 0
    %3709 = vmatmul.mubr.bf16.gmra.mrb[0].mxu0 %v3675
    %v3710 = vpop.f32.mrb[0].mxu0
    %v3711 = vadd.f32 0.0, %v3710
    %v3712 = vpop.f32.mrb[0].mxu0
    %v3713 = vadd.f32 0.0, %v3712
    %v3714 = vpop.f32.mrb[0].mxu0
    %v3715 = vpop.f32.mrb[0].mxu0
    %3716 = vdwg.mxu0
    %3717 = vmatprep.subr.bf16.mxu0 0
    %3718 = vmatpush1.bf16.msra.mxu0 %v301
    %3719 = vmatprep.subr.bf16.mxu0 0
    %3720 = vmatpush1.bf16.msra.mxu0 %v304
    %3721 = vmatprep.subr.bf16.mxu0 0
    %3722 = vmatpush1.bf16.msra.mxu0 %v307
    %3723 = vmatprep.subr.bf16.mxu0 0
    %3724 = vmatpush1.bf16.msra.mxu0 %v310
    %3725 = vmatprep.subr.bf16.mxu0 0
    %3726 = vmatpush1.bf16.msra.mxu0 %v313
    %3727 = vmatprep.subr.bf16.mxu0 0
    %3728 = vmatpush1.bf16.msra.mxu0 %v316
    %3729 = vmatprep.subr.bf16.mxu0 0
    %3730 = vmatpush1.bf16.msra.mxu0 %v319
    %3731 = vmatprep.subr.bf16.mxu0 0
    %3732 = vmatpush1.bf16.msra.mxu0 %v322
    %3733 = vmatprep.subr.bf16.mxu0 0
    %3734 = vmatpush1.bf16.msra.mxu0 0
    %3735 = vmatprep.subr.bf16.mxu0 0
    %3736 = vmatpush1.bf16.msra.mxu0 0
    %3737 = vmatprep.subr.bf16.mxu0 0
    %3738 = vmatpush1.bf16.msra.mxu0 0
    %3739 = vmatprep.subr.bf16.mxu0 0
    %3740 = vmatpush1.bf16.msra.mxu0 0
    %3741 = vmatprep.subr.bf16.mxu0 0
    %3742 = vmatpush1.bf16.msra.mxu0 0
    %3743 = vmatprep.subr.bf16.mxu0 0
    %3744 = vmatpush1.bf16.msra.mxu0 0
    %3745 = vmatprep.subr.bf16.mxu0 0
    %3746 = vmatpush1.bf16.msra.mxu0 0
    %3747 = vmatprep.subr.bf16.mxu0 0
    %3748 = vmatpush1.bf16.msra.mxu0 0
    %3749 = vmatprep.mubr.bf16.mxu0 0
    %3750 = vmatmul.mubr.bf16.gmra.mrb[0].mxu0 %v3675
    %v3751 = vpop.f32.mrb[0].mxu0
    %v3752 = vadd.f32 0.0, %v3751
    %v3753 = vpop.f32.mrb[0].mxu0
    %v3754 = vpop.f32.mrb[0].mxu0
    %v3755 = vpop.f32.mrb[0].mxu0
    %3756 = vdwg.mxu0
    %v3757 = vpack.c.bf16 %v3670, %v3670
    %3758 = vmatprep.subr.bf16.mxu0 %v510
    %3759 = vmatpush1.bf16.msra.mxu0 %v509
    %3760 = vmatprep.subr.bf16.mxu0 %v513
    %3761 = vmatpush1.bf16.msra.mxu0 %v512
    %3762 = vmatprep.subr.bf16.mxu0 %v516
    %3763 = vmatpush1.bf16.msra.mxu0 %v515
    %3764 = vmatprep.subr.bf16.mxu0 %v519
    %3765 = vmatpush1.bf16.msra.mxu0 %v518
    %3766 = vmatprep.subr.bf16.mxu0 %v522
    %3767 = vmatpush1.bf16.msra.mxu0 %v521
    %3768 = vmatprep.subr.bf16.mxu0 %v525
    %3769 = vmatpush1.bf16.msra.mxu0 %v524
    %3770 = vmatprep.subr.bf16.mxu0 %v528
    %3771 = vmatpush1.bf16.msra.mxu0 %v527
    %3772 = vmatprep.subr.bf16.mxu0 %v531
    %3773 = vmatpush1.bf16.msra.mxu0 %v530
    %3774 = vmatprep.subr.bf16.mxu0 0
    %3775 = vmatpush1.bf16.msra.mxu0 0
    %3776 = vmatprep.subr.bf16.mxu0 0
    %3777 = vmatpush1.bf16.msra.mxu0 0
    %3778 = vmatprep.subr.bf16.mxu0 0
    %3779 = vmatpush1.bf16.msra.mxu0 0
    %3780 = vmatprep.subr.bf16.mxu0 0
    %3781 = vmatpush1.bf16.msra.mxu0 0
    %3782 = vmatprep.subr.bf16.mxu0 0
    %3783 = vmatpush1.bf16.msra.mxu0 0
    %3784 = vmatprep.subr.bf16.mxu0 0
    %3785 = vmatpush1.bf16.msra.mxu0 0
    %3786 = vmatprep.subr.bf16.mxu0 0
    %3787 = vmatpush1.bf16.msra.mxu0 0
    %3788 = vmatprep.subr.bf16.mxu0 0
    %3789 = vmatpush1.bf16.msra.mxu0 0
    %3790 = vmatprep.mubr.bf16.mxu0 0
    %3791 = vmatmul.mubr.bf16.gmra.mrb[0].mxu0 %v3757
    %v3792 = vpop.f32.mrb[0].mxu0
    %v3793 = vadd.f32 0.0, %v3792
    %v3794 = vpop.f32.mrb[0].mxu0
    %v3795 = vadd.f32 0.0, %v3794
    %v3796 = vpop.f32.mrb[0].mxu0
    %v3797 = vpop.f32.mrb[0].mxu0
    %3798 = vdwg.mxu0
    %3799 = vmatprep.subr.bf16.mxu0 0
    %3800 = vmatpush1.bf16.msra.mxu0 %v511
    %3801 = vmatprep.subr.bf16.mxu0 0
    %3802 = vmatpush1.bf16.msra.mxu0 %v514
    %3803 = vmatprep.subr.bf16.mxu0 0
    %3804 = vmatpush1.bf16.msra.mxu0 %v517
    %3805 = vmatprep.subr.bf16.mxu0 0
    %3806 = vmatpush1.bf16.msra.mxu0 %v520
    %3807 = vmatprep.subr.bf16.mxu0 0
    %3808 = vmatpush1.bf16.msra.mxu0 %v523
    %3809 = vmatprep.subr.bf16.mxu0 0
    %3810 = vmatpush1.bf16.msra.mxu0 %v526
    %3811 = vmatprep.subr.bf16.mxu0 0
    %3812 = vmatpush1.bf16.msra.mxu0 %v529
    %3813 = vmatprep.subr.bf16.mxu0 0
    %3814 = vmatpush1.bf16.msra.mxu0 %v532
    %3815 = vmatprep.subr.bf16.mxu0 0
    %3816 = vmatpush1.bf16.msra.mxu0 0
    %3817 = vmatprep.subr.bf16.mxu0 0
    %3818 = vmatpush1.bf16.msra.mxu0 0
    %3819 = vmatprep.subr.bf16.mxu0 0
    %3820 = vmatpush1.bf16.msra.mxu0 0
    %3821 = vmatprep.subr.bf16.mxu0 0
    %3822 = vmatpush1.bf16.msra.mxu0 0
    %3823 = vmatprep.subr.bf16.mxu0 0
    %3824 = vmatpush1.bf16.msra.mxu0 0
    %3825 = vmatprep.subr.bf16.mxu0 0
    %3826 = vmatpush1.bf16.msra.mxu0 0
    %3827 = vmatprep.subr.bf16.mxu0 0
    %3828 = vmatpush1.bf16.msra.mxu0 0
    %3829 = vmatprep.subr.bf16.mxu0 0
    %3830 = vmatpush1.bf16.msra.mxu0 0
    %3831 = vmatprep.mubr.bf16.mxu0 0
    %3832 = vmatmul.mubr.bf16.gmra.mrb[0].mxu0 %v3757
    %v3833 = vpop.f32.mrb[0].mxu0
    %v3834 = vadd.f32 0.0, %v3833
    %v3835 = vpop.f32.mrb[0].mxu0
    %v3836 = vpop.f32.mrb[0].mxu0
    %v3837 = vpop.f32.mrb[0].mxu0
    %3838 = vdwg.mxu0
    %v3840 = vsel %vm702, %v3672, 0
    %3842 = vmatprep.subr.bf16.mxu0 %v679
    %3843 = vmatpush1.bf16.msra.mxu0 %v678
    %3844 = vmatprep.subr.bf16.mxu0 %v682
    %3845 = vmatpush1.bf16.msra.mxu0 %v681
    %3846 = vmatprep.subr.bf16.mxu0 %v685
    %3847 = vmatpush1.bf16.msra.mxu0 %v684
    %3848 = vmatprep.subr.bf16.mxu0 %v688
    %3849 = vmatpush1.bf16.msra.mxu0 %v687
    %3850 = vmatprep.subr.bf16.mxu0 0
    %3851 = vmatpush1.bf16.msra.mxu0 0
    %3852 = vmatprep.subr.bf16.mxu0 0
    %3853 = vmatpush1.bf16.msra.mxu0 0
    %3854 = vmatprep.subr.bf16.mxu0 0
    %3855 = vmatpush1.bf16.msra.mxu0 0
    %3856 = vmatprep.subr.bf16.mxu0 0
    %3857 = vmatpush1.bf16.msra.mxu0 0
    %3858 = vmatprep.subr.bf16.mxu0 0
    %3859 = vmatpush1.bf16.msra.mxu0 0
    %3860 = vmatprep.subr.bf16.mxu0 0
    %3861 = vmatpush1.bf16.msra.mxu0 0
    %3862 = vmatprep.subr.bf16.mxu0 0
    %3863 = vmatpush1.bf16.msra.mxu0 0
    %3864 = vmatprep.subr.bf16.mxu0 0
    %3865 = vmatpush1.bf16.msra.mxu0 0
    %3866 = vmatprep.subr.bf16.mxu0 0
    %3867 = vmatpush1.bf16.msra.mxu0 0
    %3868 = vmatprep.subr.bf16.mxu0 0
    %3869 = vmatpush1.bf16.msra.mxu0 0
    %3870 = vmatprep.subr.bf16.mxu0 0
    %3871 = vmatpush1.bf16.msra.mxu0 0
    %3872 = vmatprep.subr.bf16.mxu0 0
    %3873 = vmatpush1.bf16.msra.mxu0 0
    %3874 = vmatprep.mubr.bf16.mxu0 0
    %3875 = vmatmul.mubr.bf16.gmra.mrb[0].mxu0 %v3840
    %v3876 = vpop.f32.mrb[0].mxu0
    %v3877 = vadd.f32 %v206, %v3876
    %v3878 = vpop.f32.mrb[0].mxu0
    %v3879 = vadd.f32 %v207, %v3878
    %v3880 = vpop.f32.mrb[0].mxu0
    %v3881 = vpop.f32.mrb[0].mxu0
    %3882 = vdwg.mxu0
    %3883 = vmatprep.subr.bf16.mxu0 0
    %3884 = vmatpush1.bf16.msra.mxu0 %v680
    %3885 = vmatprep.subr.bf16.mxu0 0
    %3886 = vmatpush1.bf16.msra.mxu0 %v683
    %3887 = vmatprep.subr.bf16.mxu0 0
    %3888 = vmatpush1.bf16.msra.mxu0 %v686
    %3889 = vmatprep.subr.bf16.mxu0 0
    %3890 = vmatpush1.bf16.msra.mxu0 %v689
    %3891 = vmatprep.subr.bf16.mxu0 0
    %3892 = vmatpush1.bf16.msra.mxu0 0
    %3893 = vmatprep.subr.bf16.mxu0 0
    %3894 = vmatpush1.bf16.msra.mxu0 0
    %3895 = vmatprep.subr.bf16.mxu0 0
    %3896 = vmatpush1.bf16.msra.mxu0 0
    %3897 = vmatprep.subr.bf16.mxu0 0
    %3898 = vmatpush1.bf16.msra.mxu0 0
    %3899 = vmatprep.subr.bf16.mxu0 0
    %3900 = vmatpush1.bf16.msra.mxu0 0
    %3901 = vmatprep.subr.bf16.mxu0 0
    %3902 = vmatpush1.bf16.msra.mxu0 0
    %3903 = vmatprep.subr.bf16.mxu0 0
    %3904 = vmatpush1.bf16.msra.mxu0 0
    %3905 = vmatprep.subr.bf16.mxu0 0
    %3906 = vmatpush1.bf16.msra.mxu0 0
    %3907 = vmatprep.subr.bf16.mxu0 0
    %3908 = vmatpush1.bf16.msra.mxu0 0
    %3909 = vmatprep.subr.bf16.mxu0 0
    %3910 = vmatpush1.bf16.msra.mxu0 0
    %3911 = vmatprep.subr.bf16.mxu0 0
    %3912 = vmatpush1.bf16.msra.mxu0 0
    %3913 = vmatprep.subr.bf16.mxu0 0
    %3914 = vmatpush1.bf16.msra.mxu0 0
    %3915 = vmatprep.mubr.bf16.mxu0 0
    %3916 = vmatmul.mubr.bf16.gmra.mrb[0].mxu0 %v3840
    %v3917 = vpop.f32.mrb[0].mxu0
    %v3918 = vadd.f32 %v208, %v3917
    %v3919 = vpop.f32.mrb[0].mxu0
    %v3920 = vpop.f32.mrb[0].mxu0
    %v3921 = vpop.f32.mrb[0].mxu0
    %3922 = vdwg.mxu0
    %v3924 = vsel %vm702, %v3674, 0
    %3926 = vmatprep.subr.bf16.mxu0 %v828
    %3927 = vmatpush1.bf16.msra.mxu0 %v827
    %3928 = vmatprep.subr.bf16.mxu0 %v831
    %3929 = vmatpush1.bf16.msra.mxu0 %v830
    %3930 = vmatprep.subr.bf16.mxu0 %v834
    %3931 = vmatpush1.bf16.msra.mxu0 %v833
    %3932 = vmatprep.subr.bf16.mxu0 %v837
    %3933 = vmatpush1.bf16.msra.mxu0 %v836
    %3934 = vmatprep.subr.bf16.mxu0 0
    %3935 = vmatpush1.bf16.msra.mxu0 0
    %3936 = vmatprep.subr.bf16.mxu0 0
    %3937 = vmatpush1.bf16.msra.mxu0 0
    %3938 = vmatprep.subr.bf16.mxu0 0
    %3939 = vmatpush1.bf16.msra.mxu0 0
    %3940 = vmatprep.subr.bf16.mxu0 0
    %3941 = vmatpush1.bf16.msra.mxu0 0
    %3942 = vmatprep.subr.bf16.mxu0 0
    %3943 = vmatpush1.bf16.msra.mxu0 0
    %3944 = vmatprep.subr.bf16.mxu0 0
    %3945 = vmatpush1.bf16.msra.mxu0 0
    %3946 = vmatprep.subr.bf16.mxu0 0
    %3947 = vmatpush1.bf16.msra.mxu0 0
    %3948 = vmatprep.subr.bf16.mxu0 0
    %3949 = vmatpush1.bf16.msra.mxu0 0
    %3950 = vmatprep.subr.bf16.mxu0 0
    %3951 = vmatpush1.bf16.msra.mxu0 0
    %3952 = vmatprep.subr.bf16.mxu0 0
    %3953 = vmatpush1.bf16.msra.mxu0 0
    %3954 = vmatprep.subr.bf16.mxu0 0
    %3955 = vmatpush1.bf16.msra.mxu0 0
    %3956 = vmatprep.subr.bf16.mxu0 0
    %3957 = vmatpush1.bf16.msra.mxu0 0
    %3958 = vmatprep.mubr.bf16.mxu0 0
    %3959 = vmatmul.mubr.bf16.gmra.mrb[0].mxu0 %v3924
    %v3960 = vpop.f32.mrb[0].mxu0
    %v3961 = vadd.f32 %v210, %v3960
    %v3962 = vpop.f32.mrb[0].mxu0
    %v3963 = vadd.f32 %v211, %v3962
    %v3964 = vpop.f32.mrb[0].mxu0
    %v3965 = vpop.f32.mrb[0].mxu0
    %3966 = vdwg.mxu0
    %3967 = vmatprep.subr.bf16.mxu0 0
    %3968 = vmatpush1.bf16.msra.mxu0 %v829
    %3969 = vmatprep.subr.bf16.mxu0 0
    %3970 = vmatpush1.bf16.msra.mxu0 %v832
    %3971 = vmatprep.subr.bf16.mxu0 0
    %3972 = vmatpush1.bf16.msra.mxu0 %v835
    %3973 = vmatprep.subr.bf16.mxu0 0
    %3974 = vmatpush1.bf16.msra.mxu0 %v838
    %3975 = vmatprep.subr.bf16.mxu0 0
    %3976 = vmatpush1.bf16.msra.mxu0 0
    %3977 = vmatprep.subr.bf16.mxu0 0
    %3978 = vmatpush1.bf16.msra.mxu0 0
    %3979 = vmatprep.subr.bf16.mxu0 0
    %3980 = vmatpush1.bf16.msra.mxu0 0
    %3981 = vmatprep.subr.bf16.mxu0 0
    %3982 = vmatpush1.bf16.msra.mxu0 0
    %3983 = vmatprep.subr.bf16.mxu0 0
    %3984 = vmatpush1.bf16.msra.mxu0 0
    %3985 = vmatprep.subr.bf16.mxu0 0
    %3986 = vmatpush1.bf16.msra.mxu0 0
    %3987 = vmatprep.subr.bf16.mxu0 0
    %3988 = vmatpush1.bf16.msra.mxu0 0
    %3989 = vmatprep.subr.bf16.mxu0 0
    %3990 = vmatpush1.bf16.msra.mxu0 0
    %3991 = vmatprep.subr.bf16.mxu0 0
    %3992 = vmatpush1.bf16.msra.mxu0 0
    %3993 = vmatprep.subr.bf16.mxu0 0
    %3994 = vmatpush1.bf16.msra.mxu0 0
    %3995 = vmatprep.subr.bf16.mxu0 0
    %3996 = vmatpush1.bf16.msra.mxu0 0
    %3997 = vmatprep.subr.bf16.mxu0 0
    %3998 = vmatpush1.bf16.msra.mxu0 0
    %3999 = vmatprep.mubr.bf16.mxu0 0
    %4000 = vmatmul.mubr.bf16.gmra.mrb[0].mxu0 %v3924
    %v4001 = vpop.f32.mrb[0].mxu0
    %v4002 = vadd.f32 %v212, %v4001
    %v4003 = vpop.f32.mrb[0].mxu0
    %v4004 = vpop.f32.mrb[0].mxu0
    %v4005 = vpop.f32.mrb[0].mxu0
    %4006 = vdwg.mxu0
    %v4007 = vadd.f32 %v3877, %v3711
    %v4008 = vxor.u32 %v4007, 2147483648
    %v4009 = vmul.f32 %v4008, 1.442695
    %v4010 = vpow.pop %v4009
    %v4011 = vadd.f32 %v4010, 1.0
    %v4012 = vrcp.pop %v4011
    %v4013 = vmul.f32 1.0, %v4012
    %v4014 = vadd.f32 %v3879, %v3713
    %v4015 = vxor.u32 %v4014, 2147483648
    %v4016 = vmul.f32 %v4015, 1.442695
    %v4017 = vpow.pop %v4016
    %v4018 = vadd.f32 %v4017, 1.0
    %v4019 = vrcp.pop %v4018
    %v4020 = vmul.f32 1.0, %v4019
    %v4021 = vmul.f32 %v4013, %v3752
    %v4022 = vadd.f32 %v3918, %v4021
    %v4023 = vtanh.pop %v4022
    %v4024 = vsub.f32 %v3669, %v4023
    %v4025 = vmul.f32 %v4020, %v4024
    %v4026 = vadd.f32 %v4023, %v4025
    %v4027 = vadd.f32 %v3961, %v3793
    %v4028 = vxor.u32 %v4027, 2147483648
    %v4029 = vmul.f32 %v4028, 1.442695
    %v4030 = vpow.pop %v4029
    %v4031 = vadd.f32 %v4030, 1.0
    %v4032 = vrcp.pop %v4031
    %v4033 = vmul.f32 1.0, %v4032
    %v4034 = vadd.f32 %v3963, %v3795
    %v4035 = vxor.u32 %v4034, 2147483648
    %v4036 = vmul.f32 %v4035, 1.442695
    %v4037 = vpow.pop %v4036
    %v4038 = vadd.f32 %v4037, 1.0
    %v4039 = vrcp.pop %v4038
    %v4040 = vmul.f32 1.0, %v4039
    %v4041 = vmul.f32 %v4033, %v3834
    %v4042 = vadd.f32 %v4002, %v4041
    %v4043 = vtanh.pop %v4042
    %v4044 = vsub.f32 %v3670, %v4043
    %v4045 = vmul.f32 %v4040, %v4044
    %v4046 = vadd.f32 %v4043, %v4045
    %4047 = vst [vmem:[#allocation2] sm:$0xff] %v4026
    %4048 = vst [vmem:[#allocation3] sm:$0xff] %v4046
    %v4050 = vcombine.high %v4026, %v4026
    %v4052 = vunpack.c.l.s4 1966171168
    %v4053 = vunpack.c.0.s8 %v4052
    %v4054 = vlaneseq
    %v4055 = vshrl.u32 %v4054, 7
    %v4056 = vsub.s32 %v4053, %v4055
    %v4057 = vrot.slane %v4026, %v4056
    %v4059 = vunpack.c.l.s4 1966171168
    %v4060 = vunpack.c.0.s8 %v4059
    %v4061 = vlaneseq
    %v4062 = vshrl.u32 %v4061, 7
    %v4063 = vsub.s32 %v4060, %v4062
    %v4064 = vrot.slane %v4050, %v4063
    %v4065 = vcombine.high %v4057, %v4057
    %v4066 = vcombine.high %v4064, %v4064
    %v4068 = vunpack.c.l.s4 1966171168
    %v4069 = vunpack.c.0.s8 %v4068
    %v4070 = vlaneseq
    %v4071 = vshrl.u32 %v4070, 7
    %v4072 = vsub.s32 %v4069, %v4071
    %v4073 = vrot.slane %v4057, %v4072
    %v4075 = vunpack.c.l.s4 1966171168
    %v4076 = vunpack.c.0.s8 %v4075
    %v4077 = vlaneseq
    %v4078 = vshrl.u32 %v4077, 7
    %v4079 = vsub.s32 %v4076, %v4078
    %v4080 = vrot.slane %v4064, %v4079
    %v4082 = vunpack.c.l.s4 1966171168
    %v4083 = vunpack.c.0.s8 %v4082
    %v4084 = vlaneseq
    %v4085 = vshrl.u32 %v4084, 7
    %v4086 = vsub.s32 %v4083, %v4085
    %v4087 = vrot.slane %v4065, %v4086
    %v4089 = vunpack.c.l.s4 1966171168
    %v4090 = vunpack.c.0.s8 %v4089
    %v4091 = vlaneseq
    %v4092 = vshrl.u32 %v4091, 7
    %v4093 = vsub.s32 %v4090, %v4092
    %v4094 = vrot.slane %v4066, %v4093
    %v4095 = vcombine.high %v4073, %v4073
    %v4096 = vcombine.high %v4080, %v4080
    %v4097 = vcombine.high %v4087, %v4087
    %v4098 = vcombine.high %v4094, %v4094
    %4107 = vst [vmem:[#allocation13 + $0x6] sm:$0x1] %v4073
    %4108 = vst [vmem:[#allocation13 + $0x16] sm:$0x1] %v4087
    %4109 = vst [vmem:[#allocation13 + $0x26] sm:$0x1] %v4095
    %4110 = vst [vmem:[#allocation13 + $0x36] sm:$0x1] %v4097
    %4111 = vst [vmem:[#allocation13 + $0x46] sm:$0x1] %v4080
    %4112 = vst [vmem:[#allocation13 + $0x56] sm:$0x1] %v4094
    %4113 = vst [vmem:[#allocation13 + $0x66] sm:$0x1] %v4096
    %4114 = vst [vmem:[#allocation13 + $0x76] sm:$0x1] %v4098
    %v4116 = vcombine.high %v4046, %v4046
    %v4118 = vunpack.c.l.s4 1966171168
    %v4119 = vunpack.c.0.s8 %v4118
    %v4120 = vlaneseq
    %v4121 = vshrl.u32 %v4120, 7
    %v4122 = vsub.s32 %v4119, %v4121
    %v4123 = vrot.slane %v4046, %v4122
    %v4125 = vunpack.c.l.s4 1966171168
    %v4126 = vunpack.c.0.s8 %v4125
    %v4127 = vlaneseq
    %v4128 = vshrl.u32 %v4127, 7
    %v4129 = vsub.s32 %v4126, %v4128
    %v4130 = vrot.slane %v4116, %v4129
    %v4131 = vcombine.high %v4123, %v4123
    %v4132 = vcombine.high %v4130, %v4130
    %v4134 = vunpack.c.l.s4 1966171168
    %v4135 = vunpack.c.0.s8 %v4134
    %v4136 = vlaneseq
    %v4137 = vshrl.u32 %v4136, 7
    %v4138 = vsub.s32 %v4135, %v4137
    %v4139 = vrot.slane %v4123, %v4138
    %v4141 = vunpack.c.l.s4 1966171168
    %v4142 = vunpack.c.0.s8 %v4141
    %v4143 = vlaneseq
    %v4144 = vshrl.u32 %v4143, 7
    %v4145 = vsub.s32 %v4142, %v4144
    %v4146 = vrot.slane %v4130, %v4145
    %v4148 = vunpack.c.l.s4 1966171168
    %v4149 = vunpack.c.0.s8 %v4148
    %v4150 = vlaneseq
    %v4151 = vshrl.u32 %v4150, 7
    %v4152 = vsub.s32 %v4149, %v4151
    %v4153 = vrot.slane %v4131, %v4152
    %v4155 = vunpack.c.l.s4 1966171168
    %v4156 = vunpack.c.0.s8 %v4155
    %v4157 = vlaneseq
    %v4158 = vshrl.u32 %v4157, 7
    %v4159 = vsub.s32 %v4156, %v4158
    %v4160 = vrot.slane %v4132, %v4159
    %v4161 = vcombine.high %v4139, %v4139
    %v4162 = vcombine.high %v4146, %v4146
    %v4163 = vcombine.high %v4153, %v4153
    %v4164 = vcombine.high %v4160, %v4160
    %4173 = vst [vmem:[#allocation14 + $0x9] sm:$0x1] %v4139
    %4174 = vst [vmem:[#allocation14 + $0x19] sm:$0x1] %v4153
    %4175 = vst [vmem:[#allocation14 + $0x29] sm:$0x1] %v4161
    %4176 = vst [vmem:[#allocation14 + $0x39] sm:$0x1] %v4163
    %4177 = vst [vmem:[#allocation14 + $0x49] sm:$0x1] %v4146
    %4178 = vst [vmem:[#allocation14 + $0x59] sm:$0x1] %v4160
    %4179 = vst [vmem:[#allocation14 + $0x69] sm:$0x1] %v4162
    %4180 = vst [vmem:[#allocation14 + $0x79] sm:$0x1] %v4164
    %v4181 = vld [vmem:[#allocation2] sm:$0xff]
    %v4182 = vld [vmem:[#allocation3] sm:$0xff]
    %s4183 = scalar_lea.vmem [#allocation4], 28
    %v4184 = vld [vmem:[%s4183] sm:$0xf]
    %s4185 = scalar_lea.vmem [#allocation7], 32
    %v4186 = vld [vmem:[%s4185] sm:$0xf]
    %v4187 = vpack.c.bf16 %v4181, %v4181
    %4188 = vmatprep.subr.bf16.mxu0 %v300
    %4189 = vmatpush1.bf16.msra.mxu0 %v299
    %4190 = vmatprep.subr.bf16.mxu0 %v303
    %4191 = vmatpush1.bf16.msra.mxu0 %v302
    %4192 = vmatprep.subr.bf16.mxu0 %v306
    %4193 = vmatpush1.bf16.msra.mxu0 %v305
    %4194 = vmatprep.subr.bf16.mxu0 %v309
    %4195 = vmatpush1.bf16.msra.mxu0 %v308
    %4196 = vmatprep.subr.bf16.mxu0 %v312
    %4197 = vmatpush1.bf16.msra.mxu0 %v311
    %4198 = vmatprep.subr.bf16.mxu0 %v315
    %4199 = vmatpush1.bf16.msra.mxu0 %v314
    %4200 = vmatprep.subr.bf16.mxu0 %v318
    %4201 = vmatpush1.bf16.msra.mxu0 %v317
    %4202 = vmatprep.subr.bf16.mxu0 %v321
    %4203 = vmatpush1.bf16.msra.mxu0 %v320
    %4204 = vmatprep.subr.bf16.mxu0 0
    %4205 = vmatpush1.bf16.msra.mxu0 0
    %4206 = vmatprep.subr.bf16.mxu0 0
    %4207 = vmatpush1.bf16.msra.mxu0 0
    %4208 = vmatprep.subr.bf16.mxu0 0
    %4209 = vmatpush1.bf16.msra.mxu0 0
    %4210 = vmatprep.subr.bf16.mxu0 0
    %4211 = vmatpush1.bf16.msra.mxu0 0
    %4212 = vmatprep.subr.bf16.mxu0 0
    %4213 = vmatpush1.bf16.msra.mxu0 0
    %4214 = vmatprep.subr.bf16.mxu0 0
    %4215 = vmatpush1.bf16.msra.mxu0 0
    %4216 = vmatprep.subr.bf16.mxu0 0
    %4217 = vmatpush1.bf16.msra.mxu0 0
    %4218 = vmatprep.subr.bf16.mxu0 0
    %4219 = vmatpush1.bf16.msra.mxu0 0
    %4220 = vmatprep.mubr.bf16.mxu0 0
    %4221 = vmatmul.mubr.bf16.gmra.mrb[0].mxu0 %v4187
    %v4222 = vpop.f32.mrb[0].mxu0
    %v4223 = vadd.f32 0.0, %v4222
    %v4224 = vpop.f32.mrb[0].mxu0
    %v4225 = vadd.f32 0.0, %v4224
    %v4226 = vpop.f32.mrb[0].mxu0
    %v4227 = vpop.f32.mrb[0].mxu0
    %4228 = vdwg.mxu0
    %4229 = vmatprep.subr.bf16.mxu0 0
    %4230 = vmatpush1.bf16.msra.mxu0 %v301
    %4231 = vmatprep.subr.bf16.mxu0 0
    %4232 = vmatpush1.bf16.msra.mxu0 %v304
    %4233 = vmatprep.subr.bf16.mxu0 0
    %4234 = vmatpush1.bf16.msra.mxu0 %v307
    %4235 = vmatprep.subr.bf16.mxu0 0
    %4236 = vmatpush1.bf16.msra.mxu0 %v310
    %4237 = vmatprep.subr.bf16.mxu0 0
    %4238 = vmatpush1.bf16.msra.mxu0 %v313
    %4239 = vmatprep.subr.bf16.mxu0 0
    %4240 = vmatpush1.bf16.msra.mxu0 %v316
    %4241 = vmatprep.subr.bf16.mxu0 0
    %4242 = vmatpush1.bf16.msra.mxu0 %v319
    %4243 = vmatprep.subr.bf16.mxu0 0
    %4244 = vmatpush1.bf16.msra.mxu0 %v322
    %4245 = vmatprep.subr.bf16.mxu0 0
    %4246 = vmatpush1.bf16.msra.mxu0 0
    %4247 = vmatprep.subr.bf16.mxu0 0
    %4248 = vmatpush1.bf16.msra.mxu0 0
    %4249 = vmatprep.subr.bf16.mxu0 0
    %4250 = vmatpush1.bf16.msra.mxu0 0
    %4251 = vmatprep.subr.bf16.mxu0 0
    %4252 = vmatpush1.bf16.msra.mxu0 0
    %4253 = vmatprep.subr.bf16.mxu0 0
    %4254 = vmatpush1.bf16.msra.mxu0 0
    %4255 = vmatprep.subr.bf16.mxu0 0
    %4256 = vmatpush1.bf16.msra.mxu0 0
    %4257 = vmatprep.subr.bf16.mxu0 0
    %4258 = vmatpush1.bf16.msra.mxu0 0
    %4259 = vmatprep.subr.bf16.mxu0 0
    %4260 = vmatpush1.bf16.msra.mxu0 0
    %4261 = vmatprep.mubr.bf16.mxu0 0
    %4262 = vmatmul.mubr.bf16.gmra.mrb[0].mxu0 %v4187
    %v4263 = vpop.f32.mrb[0].mxu0
    %v4264 = vadd.f32 0.0, %v4263
    %v4265 = vpop.f32.mrb[0].mxu0
    %v4266 = vpop.f32.mrb[0].mxu0
    %v4267 = vpop.f32.mrb[0].mxu0
    %4268 = vdwg.mxu0
    %v4269 = vpack.c.bf16 %v4182, %v4182
    %4270 = vmatprep.subr.bf16.mxu0 %v510
    %4271 = vmatpush1.bf16.msra.mxu0 %v509
    %4272 = vmatprep.subr.bf16.mxu0 %v513
    %4273 = vmatpush1.bf16.msra.mxu0 %v512
    %4274 = vmatprep.subr.bf16.mxu0 %v516
    %4275 = vmatpush1.bf16.msra.mxu0 %v515
    %4276 = vmatprep.subr.bf16.mxu0 %v519
    %4277 = vmatpush1.bf16.msra.mxu0 %v518
    %4278 = vmatprep.subr.bf16.mxu0 %v522
    %4279 = vmatpush1.bf16.msra.mxu0 %v521
    %4280 = vmatprep.subr.bf16.mxu0 %v525
    %4281 = vmatpush1.bf16.msra.mxu0 %v524
    %4282 = vmatprep.subr.bf16.mxu0 %v528
    %4283 = vmatpush1.bf16.msra.mxu0 %v527
    %4284 = vmatprep.subr.bf16.mxu0 %v531
    %4285 = vmatpush1.bf16.msra.mxu0 %v530
    %4286 = vmatprep.subr.bf16.mxu0 0
    %4287 = vmatpush1.bf16.msra.mxu0 0
    %4288 = vmatprep.subr.bf16.mxu0 0
    %4289 = vmatpush1.bf16.msra.mxu0 0
    %4290 = vmatprep.subr.bf16.mxu0 0
    %4291 = vmatpush1.bf16.msra.mxu0 0
    %4292 = vmatprep.subr.bf16.mxu0 0
    %4293 = vmatpush1.bf16.msra.mxu0 0
    %4294 = vmatprep.subr.bf16.mxu0 0
    %4295 = vmatpush1.bf16.msra.mxu0 0
    %4296 = vmatprep.subr.bf16.mxu0 0
    %4297 = vmatpush1.bf16.msra.mxu0 0
    %4298 = vmatprep.subr.bf16.mxu0 0
    %4299 = vmatpush1.bf16.msra.mxu0 0
    %4300 = vmatprep.subr.bf16.mxu0 0
    %4301 = vmatpush1.bf16.msra.mxu0 0
    %4302 = vmatprep.mubr.bf16.mxu0 0
    %4303 = vmatmul.mubr.bf16.gmra.mrb[0].mxu0 %v4269
    %v4304 = vpop.f32.mrb[0].mxu0
    %v4305 = vadd.f32 0.0, %v4304
    %v4306 = vpop.f32.mrb[0].mxu0
    %v4307 = vadd.f32 0.0, %v4306
    %v4308 = vpop.f32.mrb[0].mxu0
    %v4309 = vpop.f32.mrb[0].mxu0
    %4310 = vdwg.mxu0
    %4311 = vmatprep.subr.bf16.mxu0 0
    %4312 = vmatpush1.bf16.msra.mxu0 %v511
    %4313 = vmatprep.subr.bf16.mxu0 0
    %4314 = vmatpush1.bf16.msra.mxu0 %v514
    %4315 = vmatprep.subr.bf16.mxu0 0
    %4316 = vmatpush1.bf16.msra.mxu0 %v517
    %4317 = vmatprep.subr.bf16.mxu0 0
    %4318 = vmatpush1.bf16.msra.mxu0 %v520
    %4319 = vmatprep.subr.bf16.mxu0 0
    %4320 = vmatpush1.bf16.msra.mxu0 %v523
    %4321 = vmatprep.subr.bf16.mxu0 0
    %4322 = vmatpush1.bf16.msra.mxu0 %v526
    %4323 = vmatprep.subr.bf16.mxu0 0
    %4324 = vmatpush1.bf16.msra.mxu0 %v529
    %4325 = vmatprep.subr.bf16.mxu0 0
    %4326 = vmatpush1.bf16.msra.mxu0 %v532
    %4327 = vmatprep.subr.bf16.mxu0 0
    %4328 = vmatpush1.bf16.msra.mxu0 0
    %4329 = vmatprep.subr.bf16.mxu0 0
    %4330 = vmatpush1.bf16.msra.mxu0 0
    %4331 = vmatprep.subr.bf16.mxu0 0
    %4332 = vmatpush1.bf16.msra.mxu0 0
    %4333 = vmatprep.subr.bf16.mxu0 0
    %4334 = vmatpush1.bf16.msra.mxu0 0
    %4335 = vmatprep.subr.bf16.mxu0 0
    %4336 = vmatpush1.bf16.msra.mxu0 0
    %4337 = vmatprep.subr.bf16.mxu0 0
    %4338 = vmatpush1.bf16.msra.mxu0 0
    %4339 = vmatprep.subr.bf16.mxu0 0
    %4340 = vmatpush1.bf16.msra.mxu0 0
    %4341 = vmatprep.subr.bf16.mxu0 0
    %4342 = vmatpush1.bf16.msra.mxu0 0
    %4343 = vmatprep.mubr.bf16.mxu0 0
    %4344 = vmatmul.mubr.bf16.gmra.mrb[0].mxu0 %v4269
    %v4345 = vpop.f32.mrb[0].mxu0
    %v4346 = vadd.f32 0.0, %v4345
    %v4347 = vpop.f32.mrb[0].mxu0
    %v4348 = vpop.f32.mrb[0].mxu0
    %v4349 = vpop.f32.mrb[0].mxu0
    %4350 = vdwg.mxu0
    %v4352 = vsel %vm702, %v4184, 0
    %4354 = vmatprep.subr.bf16.mxu0 %v679
    %4355 = vmatpush1.bf16.msra.mxu0 %v678
    %4356 = vmatprep.subr.bf16.mxu0 %v682
    %4357 = vmatpush1.bf16.msra.mxu0 %v681
    %4358 = vmatprep.subr.bf16.mxu0 %v685
    %4359 = vmatpush1.bf16.msra.mxu0 %v684
    %4360 = vmatprep.subr.bf16.mxu0 %v688
    %4361 = vmatpush1.bf16.msra.mxu0 %v687
    %4362 = vmatprep.subr.bf16.mxu0 0
    %4363 = vmatpush1.bf16.msra.mxu0 0
    %4364 = vmatprep.subr.bf16.mxu0 0
    %4365 = vmatpush1.bf16.msra.mxu0 0
    %4366 = vmatprep.subr.bf16.mxu0 0
    %4367 = vmatpush1.bf16.msra.mxu0 0
    %4368 = vmatprep.subr.bf16.mxu0 0
    %4369 = vmatpush1.bf16.msra.mxu0 0
    %4370 = vmatprep.subr.bf16.mxu0 0
    %4371 = vmatpush1.bf16.msra.mxu0 0
    %4372 = vmatprep.subr.bf16.mxu0 0
    %4373 = vmatpush1.bf16.msra.mxu0 0
    %4374 = vmatprep.subr.bf16.mxu0 0
    %4375 = vmatpush1.bf16.msra.mxu0 0
    %4376 = vmatprep.subr.bf16.mxu0 0
    %4377 = vmatpush1.bf16.msra.mxu0 0
    %4378 = vmatprep.subr.bf16.mxu0 0
    %4379 = vmatpush1.bf16.msra.mxu0 0
    %4380 = vmatprep.subr.bf16.mxu0 0
    %4381 = vmatpush1.bf16.msra.mxu0 0
    %4382 = vmatprep.subr.bf16.mxu0 0
    %4383 = vmatpush1.bf16.msra.mxu0 0
    %4384 = vmatprep.subr.bf16.mxu0 0
    %4385 = vmatpush1.bf16.msra.mxu0 0
    %4386 = vmatprep.mubr.bf16.mxu0 0
    %4387 = vmatmul.mubr.bf16.gmra.mrb[0].mxu0 %v4352
    %v4388 = vpop.f32.mrb[0].mxu0
    %v4389 = vadd.f32 %v206, %v4388
    %v4390 = vpop.f32.mrb[0].mxu0
    %v4391 = vadd.f32 %v207, %v4390
    %v4392 = vpop.f32.mrb[0].mxu0
    %v4393 = vpop.f32.mrb[0].mxu0
    %4394 = vdwg.mxu0
    %4395 = vmatprep.subr.bf16.mxu0 0
    %4396 = vmatpush1.bf16.msra.mxu0 %v680
    %4397 = vmatprep.subr.bf16.mxu0 0
    %4398 = vmatpush1.bf16.msra.mxu0 %v683
    %4399 = vmatprep.subr.bf16.mxu0 0
    %4400 = vmatpush1.bf16.msra.mxu0 %v686
    %4401 = vmatprep.subr.bf16.mxu0 0
    %4402 = vmatpush1.bf16.msra.mxu0 %v689
    %4403 = vmatprep.subr.bf16.mxu0 0
    %4404 = vmatpush1.bf16.msra.mxu0 0
    %4405 = vmatprep.subr.bf16.mxu0 0
    %4406 = vmatpush1.bf16.msra.mxu0 0
    %4407 = vmatprep.subr.bf16.mxu0 0
    %4408 = vmatpush1.bf16.msra.mxu0 0
    %4409 = vmatprep.subr.bf16.mxu0 0
    %4410 = vmatpush1.bf16.msra.mxu0 0
    %4411 = vmatprep.subr.bf16.mxu0 0
    %4412 = vmatpush1.bf16.msra.mxu0 0
    %4413 = vmatprep.subr.bf16.mxu0 0
    %4414 = vmatpush1.bf16.msra.mxu0 0
    %4415 = vmatprep.subr.bf16.mxu0 0
    %4416 = vmatpush1.bf16.msra.mxu0 0
    %4417 = vmatprep.subr.bf16.mxu0 0
    %4418 = vmatpush1.bf16.msra.mxu0 0
    %4419 = vmatprep.subr.bf16.mxu0 0
    %4420 = vmatpush1.bf16.msra.mxu0 0
    %4421 = vmatprep.subr.bf16.mxu0 0
    %4422 = vmatpush1.bf16.msra.mxu0 0
    %4423 = vmatprep.subr.bf16.mxu0 0
    %4424 = vmatpush1.bf16.msra.mxu0 0
    %4425 = vmatprep.subr.bf16.mxu0 0
    %4426 = vmatpush1.bf16.msra.mxu0 0
    %4427 = vmatprep.mubr.bf16.mxu0 0
    %4428 = vmatmul.mubr.bf16.gmra.mrb[0].mxu0 %v4352
    %v4429 = vpop.f32.mrb[0].mxu0
    %v4430 = vadd.f32 %v208, %v4429
    %v4431 = vpop.f32.mrb[0].mxu0
    %v4432 = vpop.f32.mrb[0].mxu0
    %v4433 = vpop.f32.mrb[0].mxu0
    %4434 = vdwg.mxu0
    %v4436 = vsel %vm702, %v4186, 0
    %4438 = vmatprep.subr.bf16.mxu0 %v828
    %4439 = vmatpush1.bf16.msra.mxu0 %v827
    %4440 = vmatprep.subr.bf16.mxu0 %v831
    %4441 = vmatpush1.bf16.msra.mxu0 %v830
    %4442 = vmatprep.subr.bf16.mxu0 %v834
    %4443 = vmatpush1.bf16.msra.mxu0 %v833
    %4444 = vmatprep.subr.bf16.mxu0 %v837
    %4445 = vmatpush1.bf16.msra.mxu0 %v836
    %4446 = vmatprep.subr.bf16.mxu0 0
    %4447 = vmatpush1.bf16.msra.mxu0 0
    %4448 = vmatprep.subr.bf16.mxu0 0
    %4449 = vmatpush1.bf16.msra.mxu0 0
    %4450 = vmatprep.subr.bf16.mxu0 0
    %4451 = vmatpush1.bf16.msra.mxu0 0
    %4452 = vmatprep.subr.bf16.mxu0 0
    %4453 = vmatpush1.bf16.msra.mxu0 0
    %4454 = vmatprep.subr.bf16.mxu0 0
    %4455 = vmatpush1.bf16.msra.mxu0 0
    %4456 = vmatprep.subr.bf16.mxu0 0
    %4457 = vmatpush1.bf16.msra.mxu0 0
    %4458 = vmatprep.subr.bf16.mxu0 0
    %4459 = vmatpush1.bf16.msra.mxu0 0
    %4460 = vmatprep.subr.bf16.mxu0 0
    %4461 = vmatpush1.bf16.msra.mxu0 0
    %4462 = vmatprep.subr.bf16.mxu0 0
    %4463 = vmatpush1.bf16.msra.mxu0 0
    %4464 = vmatprep.subr.bf16.mxu0 0
    %4465 = vmatpush1.bf16.msra.mxu0 0
    %4466 = vmatprep.subr.bf16.mxu0 0
    %4467 = vmatpush1.bf16.msra.mxu0 0
    %4468 = vmatprep.subr.bf16.mxu0 0
    %4469 = vmatpush1.bf16.msra.mxu0 0
    %4470 = vmatprep.mubr.bf16.mxu0 0
    %4471 = vmatmul.mubr.bf16.gmra.mrb[0].mxu0 %v4436
    %v4472 = vpop.f32.mrb[0].mxu0
    %v4473 = vadd.f32 %v210, %v4472
    %v4474 = vpop.f32.mrb[0].mxu0
    %v4475 = vadd.f32 %v211, %v4474
    %v4476 = vpop.f32.mrb[0].mxu0
    %v4477 = vpop.f32.mrb[0].mxu0
    %4478 = vdwg.mxu0
    %4479 = vmatprep.subr.bf16.mxu0 0
    %4480 = vmatpush1.bf16.msra.mxu0 %v829
    %4481 = vmatprep.subr.bf16.mxu0 0
    %4482 = vmatpush1.bf16.msra.mxu0 %v832
    %4483 = vmatprep.subr.bf16.mxu0 0
    %4484 = vmatpush1.bf16.msra.mxu0 %v835
    %4485 = vmatprep.subr.bf16.mxu0 0
    %4486 = vmatpush1.bf16.msra.mxu0 %v838
    %4487 = vmatprep.subr.bf16.mxu0 0
    %4488 = vmatpush1.bf16.msra.mxu0 0
    %4489 = vmatprep.subr.bf16.mxu0 0
    %4490 = vmatpush1.bf16.msra.mxu0 0
    %4491 = vmatprep.subr.bf16.mxu0 0
    %4492 = vmatpush1.bf16.msra.mxu0 0
    %4493 = vmatprep.subr.bf16.mxu0 0
    %4494 = vmatpush1.bf16.msra.mxu0 0
    %4495 = vmatprep.subr.bf16.mxu0 0
    %4496 = vmatpush1.bf16.msra.mxu0 0
    %4497 = vmatprep.subr.bf16.mxu0 0
    %4498 = vmatpush1.bf16.msra.mxu0 0
    %4499 = vmatprep.subr.bf16.mxu0 0
    %4500 = vmatpush1.bf16.msra.mxu0 0
    %4501 = vmatprep.subr.bf16.mxu0 0
    %4502 = vmatpush1.bf16.msra.mxu0 0
    %4503 = vmatprep.subr.bf16.mxu0 0
    %4504 = vmatpush1.bf16.msra.mxu0 0
    %4505 = vmatprep.subr.bf16.mxu0 0
    %4506 = vmatpush1.bf16.msra.mxu0 0
    %4507 = vmatprep.subr.bf16.mxu0 0
    %4508 = vmatpush1.bf16.msra.mxu0 0
    %4509 = vmatprep.subr.bf16.mxu0 0
    %4510 = vmatpush1.bf16.msra.mxu0 0
    %4511 = vmatprep.mubr.bf16.mxu0 0
    %4512 = vmatmul.mubr.bf16.gmra.mrb[0].mxu0 %v4436
    %v4513 = vpop.f32.mrb[0].mxu0
    %v4514 = vadd.f32 %v212, %v4513
    %v4515 = vpop.f32.mrb[0].mxu0
    %v4516 = vpop.f32.mrb[0].mxu0
    %v4517 = vpop.f32.mrb[0].mxu0
    %4518 = vdwg.mxu0
    %v4519 = vadd.f32 %v4389, %v4223
    %v4520 = vxor.u32 %v4519, 2147483648
    %v4521 = vmul.f32 %v4520, 1.442695
    %v4522 = vpow.pop %v4521
    %v4523 = vadd.f32 %v4522, 1.0
    %v4524 = vrcp.pop %v4523
    %v4525 = vmul.f32 1.0, %v4524
    %v4526 = vadd.f32 %v4391, %v4225
    %v4527 = vxor.u32 %v4526, 2147483648
    %v4528 = vmul.f32 %v4527, 1.442695
    %v4529 = vpow.pop %v4528
    %v4530 = vadd.f32 %v4529, 1.0
    %v4531 = vrcp.pop %v4530
    %v4532 = vmul.f32 1.0, %v4531
    %v4533 = vmul.f32 %v4525, %v4264
    %v4534 = vadd.f32 %v4430, %v4533
    %v4535 = vtanh.pop %v4534
    %v4536 = vsub.f32 %v4181, %v4535
    %v4537 = vmul.f32 %v4532, %v4536
    %v4538 = vadd.f32 %v4535, %v4537
    %v4539 = vadd.f32 %v4473, %v4305
    %v4540 = vxor.u32 %v4539, 2147483648
    %v4541 = vmul.f32 %v4540, 1.442695
    %v4542 = vpow.pop %v4541
    %v4543 = vadd.f32 %v4542, 1.0
    %v4544 = vrcp.pop %v4543
    %v4545 = vmul.f32 1.0, %v4544
    %v4546 = vadd.f32 %v4475, %v4307
    %v4547 = vxor.u32 %v4546, 2147483648
    %v4548 = vmul.f32 %v4547, 1.442695
    %v4549 = vpow.pop %v4548
    %v4550 = vadd.f32 %v4549, 1.0
    %v4551 = vrcp.pop %v4550
    %v4552 = vmul.f32 1.0, %v4551
    %v4553 = vmul.f32 %v4545, %v4346
    %v4554 = vadd.f32 %v4514, %v4553
    %v4555 = vtanh.pop %v4554
    %v4556 = vsub.f32 %v4182, %v4555
    %v4557 = vmul.f32 %v4552, %v4556
    %v4558 = vadd.f32 %v4555, %v4557
    %4559 = vst [vmem:[#allocation2] sm:$0xff] %v4538
    %4560 = vst [vmem:[#allocation3] sm:$0xff] %v4558
    %v4562 = vcombine.high %v4538, %v4538
    %v4564 = vunpack.c.l.s4 1966171168
    %v4565 = vunpack.c.0.s8 %v4564
    %v4566 = vlaneseq
    %v4567 = vshrl.u32 %v4566, 7
    %v4568 = vsub.s32 %v4565, %v4567
    %v4569 = vrot.slane %v4538, %v4568
    %v4571 = vunpack.c.l.s4 1966171168
    %v4572 = vunpack.c.0.s8 %v4571
    %v4573 = vlaneseq
    %v4574 = vshrl.u32 %v4573, 7
    %v4575 = vsub.s32 %v4572, %v4574
    %v4576 = vrot.slane %v4562, %v4575
    %v4577 = vcombine.high %v4569, %v4569
    %v4578 = vcombine.high %v4576, %v4576
    %v4580 = vunpack.c.l.s4 1966171168
    %v4581 = vunpack.c.0.s8 %v4580
    %v4582 = vlaneseq
    %v4583 = vshrl.u32 %v4582, 7
    %v4584 = vsub.s32 %v4581, %v4583
    %v4585 = vrot.slane %v4569, %v4584
    %v4587 = vunpack.c.l.s4 1966171168
    %v4588 = vunpack.c.0.s8 %v4587
    %v4589 = vlaneseq
    %v4590 = vshrl.u32 %v4589, 7
    %v4591 = vsub.s32 %v4588, %v4590
    %v4592 = vrot.slane %v4576, %v4591
    %v4594 = vunpack.c.l.s4 1966171168
    %v4595 = vunpack.c.0.s8 %v4594
    %v4596 = vlaneseq
    %v4597 = vshrl.u32 %v4596, 7
    %v4598 = vsub.s32 %v4595, %v4597
    %v4599 = vrot.slane %v4577, %v4598
    %v4601 = vunpack.c.l.s4 1966171168
    %v4602 = vunpack.c.0.s8 %v4601
    %v4603 = vlaneseq
    %v4604 = vshrl.u32 %v4603, 7
    %v4605 = vsub.s32 %v4602, %v4604
    %v4606 = vrot.slane %v4578, %v4605
    %v4607 = vcombine.high %v4585, %v4585
    %v4608 = vcombine.high %v4592, %v4592
    %v4609 = vcombine.high %v4599, %v4599
    %v4610 = vcombine.high %v4606, %v4606
    %4619 = vst [vmem:[#allocation13 + $0x7] sm:$0x1] %v4585
    %4620 = vst [vmem:[#allocation13 + $0x17] sm:$0x1] %v4599
    %4621 = vst [vmem:[#allocation13 + $0x27] sm:$0x1] %v4607
    %4622 = vst [vmem:[#allocation13 + $0x37] sm:$0x1] %v4609
    %4623 = vst [vmem:[#allocation13 + $0x47] sm:$0x1] %v4592
    %4624 = vst [vmem:[#allocation13 + $0x57] sm:$0x1] %v4606
    %4625 = vst [vmem:[#allocation13 + $0x67] sm:$0x1] %v4608
    %4626 = vst [vmem:[#allocation13 + $0x77] sm:$0x1] %v4610
    %v4628 = vcombine.high %v4558, %v4558
    %v4630 = vunpack.c.l.s4 1966171168
    %v4631 = vunpack.c.0.s8 %v4630
    %v4632 = vlaneseq
    %v4633 = vshrl.u32 %v4632, 7
    %v4634 = vsub.s32 %v4631, %v4633
    %v4635 = vrot.slane %v4558, %v4634
    %v4637 = vunpack.c.l.s4 1966171168
    %v4638 = vunpack.c.0.s8 %v4637
    %v4639 = vlaneseq
    %v4640 = vshrl.u32 %v4639, 7
    %v4641 = vsub.s32 %v4638, %v4640
    %v4642 = vrot.slane %v4628, %v4641
    %v4643 = vcombine.high %v4635, %v4635
    %v4644 = vcombine.high %v4642, %v4642
    %v4646 = vunpack.c.l.s4 1966171168
    %v4647 = vunpack.c.0.s8 %v4646
    %v4648 = vlaneseq
    %v4649 = vshrl.u32 %v4648, 7
    %v4650 = vsub.s32 %v4647, %v4649
    %v4651 = vrot.slane %v4635, %v4650
    %v4653 = vunpack.c.l.s4 1966171168
    %v4654 = vunpack.c.0.s8 %v4653
    %v4655 = vlaneseq
    %v4656 = vshrl.u32 %v4655, 7
    %v4657 = vsub.s32 %v4654, %v4656
    %v4658 = vrot.slane %v4642, %v4657
    %v4660 = vunpack.c.l.s4 1966171168
    %v4661 = vunpack.c.0.s8 %v4660
    %v4662 = vlaneseq
    %v4663 = vshrl.u32 %v4662, 7
    %v4664 = vsub.s32 %v4661, %v4663
    %v4665 = vrot.slane %v4643, %v4664
    %v4667 = vunpack.c.l.s4 1966171168
    %v4668 = vunpack.c.0.s8 %v4667
    %v4669 = vlaneseq
    %v4670 = vshrl.u32 %v4669, 7
    %v4671 = vsub.s32 %v4668, %v4670
    %v4672 = vrot.slane %v4644, %v4671
    %v4673 = vcombine.high %v4651, %v4651
    %v4674 = vcombine.high %v4658, %v4658
    %v4675 = vcombine.high %v4665, %v4665
    %v4676 = vcombine.high %v4672, %v4672
    %4685 = vst [vmem:[#allocation14 + $0x8] sm:$0x1] %v4651
    %4686 = vst [vmem:[#allocation14 + $0x18] sm:$0x1] %v4665
    %4687 = vst [vmem:[#allocation14 + $0x28] sm:$0x1] %v4673
    %4688 = vst [vmem:[#allocation14 + $0x38] sm:$0x1] %v4675
    %4689 = vst [vmem:[#allocation14 + $0x48] sm:$0x1] %v4658
    %4690 = vst [vmem:[#allocation14 + $0x58] sm:$0x1] %v4672
    %4691 = vst [vmem:[#allocation14 + $0x68] sm:$0x1] %v4674
    %4692 = vst [vmem:[#allocation14 + $0x78] sm:$0x1] %v4676
    %v4693 = vld [vmem:[#allocation2] sm:$0xff]
    %v4694 = vld [vmem:[#allocation3] sm:$0xff]
    %s4695 = scalar_lea.vmem [#allocation4], 32
    %v4696 = vld [vmem:[%s4695] sm:$0xf]
    %s4697 = scalar_lea.vmem [#allocation7], 28
    %v4698 = vld [vmem:[%s4697] sm:$0xf]
    %v4699 = vpack.c.bf16 %v4693, %v4693
    %4700 = vmatprep.subr.bf16.mxu0 %v300
    %4701 = vmatpush1.bf16.msra.mxu0 %v299
    %4702 = vmatprep.subr.bf16.mxu0 %v303
    %4703 = vmatpush1.bf16.msra.mxu0 %v302
    %4704 = vmatprep.subr.bf16.mxu0 %v306
    %4705 = vmatpush1.bf16.msra.mxu0 %v305
    %4706 = vmatprep.subr.bf16.mxu0 %v309
    %4707 = vmatpush1.bf16.msra.mxu0 %v308
    %4708 = vmatprep.subr.bf16.mxu0 %v312
    %4709 = vmatpush1.bf16.msra.mxu0 %v311
    %4710 = vmatprep.subr.bf16.mxu0 %v315
    %4711 = vmatpush1.bf16.msra.mxu0 %v314
    %4712 = vmatprep.subr.bf16.mxu0 %v318
    %4713 = vmatpush1.bf16.msra.mxu0 %v317
    %4714 = vmatprep.subr.bf16.mxu0 %v321
    %4715 = vmatpush1.bf16.msra.mxu0 %v320
    %4716 = vmatprep.subr.bf16.mxu0 0
    %4717 = vmatpush1.bf16.msra.mxu0 0
    %4718 = vmatprep.subr.bf16.mxu0 0
    %4719 = vmatpush1.bf16.msra.mxu0 0
    %4720 = vmatprep.subr.bf16.mxu0 0
    %4721 = vmatpush1.bf16.msra.mxu0 0
    %4722 = vmatprep.subr.bf16.mxu0 0
    %4723 = vmatpush1.bf16.msra.mxu0 0
    %4724 = vmatprep.subr.bf16.mxu0 0
    %4725 = vmatpush1.bf16.msra.mxu0 0
    %4726 = vmatprep.subr.bf16.mxu0 0
    %4727 = vmatpush1.bf16.msra.mxu0 0
    %4728 = vmatprep.subr.bf16.mxu0 0
    %4729 = vmatpush1.bf16.msra.mxu0 0
    %4730 = vmatprep.subr.bf16.mxu0 0
    %4731 = vmatpush1.bf16.msra.mxu0 0
    %4732 = vmatprep.mubr.bf16.mxu0 0
    %4733 = vmatmul.mubr.bf16.gmra.mrb[0].mxu0 %v4699
    %v4734 = vpop.f32.mrb[0].mxu0
    %v4735 = vadd.f32 0.0, %v4734
    %v4736 = vpop.f32.mrb[0].mxu0
    %v4737 = vadd.f32 0.0, %v4736
    %v4738 = vpop.f32.mrb[0].mxu0
    %v4739 = vpop.f32.mrb[0].mxu0
    %4740 = vdwg.mxu0
    %4741 = vmatprep.subr.bf16.mxu0 0
    %4742 = vmatpush1.bf16.msra.mxu0 %v301
    %4743 = vmatprep.subr.bf16.mxu0 0
    %4744 = vmatpush1.bf16.msra.mxu0 %v304
    %4745 = vmatprep.subr.bf16.mxu0 0
    %4746 = vmatpush1.bf16.msra.mxu0 %v307
    %4747 = vmatprep.subr.bf16.mxu0 0
    %4748 = vmatpush1.bf16.msra.mxu0 %v310
    %4749 = vmatprep.subr.bf16.mxu0 0
    %4750 = vmatpush1.bf16.msra.mxu0 %v313
    %4751 = vmatprep.subr.bf16.mxu0 0
    %4752 = vmatpush1.bf16.msra.mxu0 %v316
    %4753 = vmatprep.subr.bf16.mxu0 0
    %4754 = vmatpush1.bf16.msra.mxu0 %v319
    %4755 = vmatprep.subr.bf16.mxu0 0
    %4756 = vmatpush1.bf16.msra.mxu0 %v322
    %4757 = vmatprep.subr.bf16.mxu0 0
    %4758 = vmatpush1.bf16.msra.mxu0 0
    %4759 = vmatprep.subr.bf16.mxu0 0
    %4760 = vmatpush1.bf16.msra.mxu0 0
    %4761 = vmatprep.subr.bf16.mxu0 0
    %4762 = vmatpush1.bf16.msra.mxu0 0
    %4763 = vmatprep.subr.bf16.mxu0 0
    %4764 = vmatpush1.bf16.msra.mxu0 0
    %4765 = vmatprep.subr.bf16.mxu0 0
    %4766 = vmatpush1.bf16.msra.mxu0 0
    %4767 = vmatprep.subr.bf16.mxu0 0
    %4768 = vmatpush1.bf16.msra.mxu0 0
    %4769 = vmatprep.subr.bf16.mxu0 0
    %4770 = vmatpush1.bf16.msra.mxu0 0
    %4771 = vmatprep.subr.bf16.mxu0 0
    %4772 = vmatpush1.bf16.msra.mxu0 0
    %4773 = vmatprep.mubr.bf16.mxu0 0
    %4774 = vmatmul.mubr.bf16.gmra.mrb[0].mxu0 %v4699
    %v4775 = vpop.f32.mrb[0].mxu0
    %v4776 = vadd.f32 0.0, %v4775
    %v4777 = vpop.f32.mrb[0].mxu0
    %v4778 = vpop.f32.mrb[0].mxu0
    %v4779 = vpop.f32.mrb[0].mxu0
    %4780 = vdwg.mxu0
    %v4781 = vpack.c.bf16 %v4694, %v4694
    %4782 = vmatprep.subr.bf16.mxu0 %v510
    %4783 = vmatpush1.bf16.msra.mxu0 %v509
    %4784 = vmatprep.subr.bf16.mxu0 %v513
    %4785 = vmatpush1.bf16.msra.mxu0 %v512
    %4786 = vmatprep.subr.bf16.mxu0 %v516
    %4787 = vmatpush1.bf16.msra.mxu0 %v515
    %4788 = vmatprep.subr.bf16.mxu0 %v519
    %4789 = vmatpush1.bf16.msra.mxu0 %v518
    %4790 = vmatprep.subr.bf16.mxu0 %v522
    %4791 = vmatpush1.bf16.msra.mxu0 %v521
    %4792 = vmatprep.subr.bf16.mxu0 %v525
    %4793 = vmatpush1.bf16.msra.mxu0 %v524
    %4794 = vmatprep.subr.bf16.mxu0 %v528
    %4795 = vmatpush1.bf16.msra.mxu0 %v527
    %4796 = vmatprep.subr.bf16.mxu0 %v531
    %4797 = vmatpush1.bf16.msra.mxu0 %v530
    %4798 = vmatprep.subr.bf16.mxu0 0
    %4799 = vmatpush1.bf16.msra.mxu0 0
    %4800 = vmatprep.subr.bf16.mxu0 0
    %4801 = vmatpush1.bf16.msra.mxu0 0
    %4802 = vmatprep.subr.bf16.mxu0 0
    %4803 = vmatpush1.bf16.msra.mxu0 0
    %4804 = vmatprep.subr.bf16.mxu0 0
    %4805 = vmatpush1.bf16.msra.mxu0 0
    %4806 = vmatprep.subr.bf16.mxu0 0
    %4807 = vmatpush1.bf16.msra.mxu0 0
    %4808 = vmatprep.subr.bf16.mxu0 0
    %4809 = vmatpush1.bf16.msra.mxu0 0
    %4810 = vmatprep.subr.bf16.mxu0 0
    %4811 = vmatpush1.bf16.msra.mxu0 0
    %4812 = vmatprep.subr.bf16.mxu0 0
    %4813 = vmatpush1.bf16.msra.mxu0 0
    %4814 = vmatprep.mubr.bf16.mxu0 0
    %4815 = vmatmul.mubr.bf16.gmra.mrb[0].mxu0 %v4781
    %v4816 = vpop.f32.mrb[0].mxu0
    %v4817 = vadd.f32 0.0, %v4816
    %v4818 = vpop.f32.mrb[0].mxu0
    %v4819 = vadd.f32 0.0, %v4818
    %v4820 = vpop.f32.mrb[0].mxu0
    %v4821 = vpop.f32.mrb[0].mxu0
    %4822 = vdwg.mxu0
    %4823 = vmatprep.subr.bf16.mxu0 0
    %4824 = vmatpush1.bf16.msra.mxu0 %v511
    %4825 = vmatprep.subr.bf16.mxu0 0
    %4826 = vmatpush1.bf16.msra.mxu0 %v514
    %4827 = vmatprep.subr.bf16.mxu0 0
    %4828 = vmatpush1.bf16.msra.mxu0 %v517
    %4829 = vmatprep.subr.bf16.mxu0 0
    %4830 = vmatpush1.bf16.msra.mxu0 %v520
    %4831 = vmatprep.subr.bf16.mxu0 0
    %4832 = vmatpush1.bf16.msra.mxu0 %v523
    %4833 = vmatprep.subr.bf16.mxu0 0
    %4834 = vmatpush1.bf16.msra.mxu0 %v526
    %4835 = vmatprep.subr.bf16.mxu0 0
    %4836 = vmatpush1.bf16.msra.mxu0 %v529
    %4837 = vmatprep.subr.bf16.mxu0 0
    %4838 = vmatpush1.bf16.msra.mxu0 %v532
    %4839 = vmatprep.subr.bf16.mxu0 0
    %4840 = vmatpush1.bf16.msra.mxu0 0
    %4841 = vmatprep.subr.bf16.mxu0 0
    %4842 = vmatpush1.bf16.msra.mxu0 0
    %4843 = vmatprep.subr.bf16.mxu0 0
    %4844 = vmatpush1.bf16.msra.mxu0 0
    %4845 = vmatprep.subr.bf16.mxu0 0
    %4846 = vmatpush1.bf16.msra.mxu0 0
    %4847 = vmatprep.subr.bf16.mxu0 0
    %4848 = vmatpush1.bf16.msra.mxu0 0
    %4849 = vmatprep.subr.bf16.mxu0 0
    %4850 = vmatpush1.bf16.msra.mxu0 0
    %4851 = vmatprep.subr.bf16.mxu0 0
    %4852 = vmatpush1.bf16.msra.mxu0 0
    %4853 = vmatprep.subr.bf16.mxu0 0
    %4854 = vmatpush1.bf16.msra.mxu0 0
    %4855 = vmatprep.mubr.bf16.mxu0 0
    %4856 = vmatmul.mubr.bf16.gmra.mrb[0].mxu0 %v4781
    %v4857 = vpop.f32.mrb[0].mxu0
    %v4858 = vadd.f32 0.0, %v4857
    %v4859 = vpop.f32.mrb[0].mxu0
    %v4860 = vpop.f32.mrb[0].mxu0
    %v4861 = vpop.f32.mrb[0].mxu0
    %4862 = vdwg.mxu0
    %v4864 = vsel %vm702, %v4696, 0
    %4866 = vmatprep.subr.bf16.mxu0 %v679
    %4867 = vmatpush1.bf16.msra.mxu0 %v678
    %4868 = vmatprep.subr.bf16.mxu0 %v682
    %4869 = vmatpush1.bf16.msra.mxu0 %v681
    %4870 = vmatprep.subr.bf16.mxu0 %v685
    %4871 = vmatpush1.bf16.msra.mxu0 %v684
    %4872 = vmatprep.subr.bf16.mxu0 %v688
    %4873 = vmatpush1.bf16.msra.mxu0 %v687
    %4874 = vmatprep.subr.bf16.mxu0 0
    %4875 = vmatpush1.bf16.msra.mxu0 0
    %4876 = vmatprep.subr.bf16.mxu0 0
    %4877 = vmatpush1.bf16.msra.mxu0 0
    %4878 = vmatprep.subr.bf16.mxu0 0
    %4879 = vmatpush1.bf16.msra.mxu0 0
    %4880 = vmatprep.subr.bf16.mxu0 0
    %4881 = vmatpush1.bf16.msra.mxu0 0
    %4882 = vmatprep.subr.bf16.mxu0 0
    %4883 = vmatpush1.bf16.msra.mxu0 0
    %4884 = vmatprep.subr.bf16.mxu0 0
    %4885 = vmatpush1.bf16.msra.mxu0 0
    %4886 = vmatprep.subr.bf16.mxu0 0
    %4887 = vmatpush1.bf16.msra.mxu0 0
    %4888 = vmatprep.subr.bf16.mxu0 0
    %4889 = vmatpush1.bf16.msra.mxu0 0
    %4890 = vmatprep.subr.bf16.mxu0 0
    %4891 = vmatpush1.bf16.msra.mxu0 0
    %4892 = vmatprep.subr.bf16.mxu0 0
    %4893 = vmatpush1.bf16.msra.mxu0 0
    %4894 = vmatprep.subr.bf16.mxu0 0
    %4895 = vmatpush1.bf16.msra.mxu0 0
    %4896 = vmatprep.subr.bf16.mxu0 0
    %4897 = vmatpush1.bf16.msra.mxu0 0
    %4898 = vmatprep.mubr.bf16.mxu0 0
    %4899 = vmatmul.mubr.bf16.gmra.mrb[0].mxu0 %v4864
    %v4900 = vpop.f32.mrb[0].mxu0
    %v4901 = vadd.f32 %v206, %v4900
    %v4902 = vpop.f32.mrb[0].mxu0
    %v4903 = vadd.f32 %v207, %v4902
    %v4904 = vpop.f32.mrb[0].mxu0
    %v4905 = vpop.f32.mrb[0].mxu0
    %4906 = vdwg.mxu0
    %4907 = vmatprep.subr.bf16.mxu0 0
    %4908 = vmatpush1.bf16.msra.mxu0 %v680
    %4909 = vmatprep.subr.bf16.mxu0 0
    %4910 = vmatpush1.bf16.msra.mxu0 %v683
    %4911 = vmatprep.subr.bf16.mxu0 0
    %4912 = vmatpush1.bf16.msra.mxu0 %v686
    %4913 = vmatprep.subr.bf16.mxu0 0
    %4914 = vmatpush1.bf16.msra.mxu0 %v689
    %4915 = vmatprep.subr.bf16.mxu0 0
    %4916 = vmatpush1.bf16.msra.mxu0 0
    %4917 = vmatprep.subr.bf16.mxu0 0
    %4918 = vmatpush1.bf16.msra.mxu0 0
    %4919 = vmatprep.subr.bf16.mxu0 0
    %4920 = vmatpush1.bf16.msra.mxu0 0
    %4921 = vmatprep.subr.bf16.mxu0 0
    %4922 = vmatpush1.bf16.msra.mxu0 0
    %4923 = vmatprep.subr.bf16.mxu0 0
    %4924 = vmatpush1.bf16.msra.mxu0 0
    %4925 = vmatprep.subr.bf16.mxu0 0
    %4926 = vmatpush1.bf16.msra.mxu0 0
    %4927 = vmatprep.subr.bf16.mxu0 0
    %4928 = vmatpush1.bf16.msra.mxu0 0
    %4929 = vmatprep.subr.bf16.mxu0 0
    %4930 = vmatpush1.bf16.msra.mxu0 0
    %4931 = vmatprep.subr.bf16.mxu0 0
    %4932 = vmatpush1.bf16.msra.mxu0 0
    %4933 = vmatprep.subr.bf16.mxu0 0
    %4934 = vmatpush1.bf16.msra.mxu0 0
    %4935 = vmatprep.subr.bf16.mxu0 0
    %4936 = vmatpush1.bf16.msra.mxu0 0
    %4937 = vmatprep.subr.bf16.mxu0 0
    %4938 = vmatpush1.bf16.msra.mxu0 0
    %4939 = vmatprep.mubr.bf16.mxu0 0
    %4940 = vmatmul.mubr.bf16.gmra.mrb[0].mxu0 %v4864
    %v4941 = vpop.f32.mrb[0].mxu0
    %v4942 = vadd.f32 %v208, %v4941
    %v4943 = vpop.f32.mrb[0].mxu0
    %v4944 = vpop.f32.mrb[0].mxu0
    %v4945 = vpop.f32.mrb[0].mxu0
    %4946 = vdwg.mxu0
    %v4948 = vsel %vm702, %v4698, 0
    %4950 = vmatprep.subr.bf16.mxu0 %v828
    %4951 = vmatpush1.bf16.msra.mxu0 %v827
    %4952 = vmatprep.subr.bf16.mxu0 %v831
    %4953 = vmatpush1.bf16.msra.mxu0 %v830
    %4954 = vmatprep.subr.bf16.mxu0 %v834
    %4955 = vmatpush1.bf16.msra.mxu0 %v833
    %4956 = vmatprep.subr.bf16.mxu0 %v837
    %4957 = vmatpush1.bf16.msra.mxu0 %v836
    %4958 = vmatprep.subr.bf16.mxu0 0
    %4959 = vmatpush1.bf16.msra.mxu0 0
    %4960 = vmatprep.subr.bf16.mxu0 0
    %4961 = vmatpush1.bf16.msra.mxu0 0
    %4962 = vmatprep.subr.bf16.mxu0 0
    %4963 = vmatpush1.bf16.msra.mxu0 0
    %4964 = vmatprep.subr.bf16.mxu0 0
    %4965 = vmatpush1.bf16.msra.mxu0 0
    %4966 = vmatprep.subr.bf16.mxu0 0
    %4967 = vmatpush1.bf16.msra.mxu0 0
    %4968 = vmatprep.subr.bf16.mxu0 0
    %4969 = vmatpush1.bf16.msra.mxu0 0
    %4970 = vmatprep.subr.bf16.mxu0 0
    %4971 = vmatpush1.bf16.msra.mxu0 0
    %4972 = vmatprep.subr.bf16.mxu0 0
    %4973 = vmatpush1.bf16.msra.mxu0 0
    %4974 = vmatprep.subr.bf16.mxu0 0
    %4975 = vmatpush1.bf16.msra.mxu0 0
    %4976 = vmatprep.subr.bf16.mxu0 0
    %4977 = vmatpush1.bf16.msra.mxu0 0
    %4978 = vmatprep.subr.bf16.mxu0 0
    %4979 = vmatpush1.bf16.msra.mxu0 0
    %4980 = vmatprep.subr.bf16.mxu0 0
    %4981 = vmatpush1.bf16.msra.mxu0 0
    %4982 = vmatprep.mubr.bf16.mxu0 0
    %4983 = vmatmul.mubr.bf16.gmra.mrb[0].mxu0 %v4948
    %v4984 = vpop.f32.mrb[0].mxu0
    %v4985 = vadd.f32 %v210, %v4984
    %v4986 = vpop.f32.mrb[0].mxu0
    %v4987 = vadd.f32 %v211, %v4986
    %v4988 = vpop.f32.mrb[0].mxu0
    %v4989 = vpop.f32.mrb[0].mxu0
    %4990 = vdwg.mxu0
    %4991 = vmatprep.subr.bf16.mxu0 0
    %4992 = vmatpush1.bf16.msra.mxu0 %v829
    %4993 = vmatprep.subr.bf16.mxu0 0
    %4994 = vmatpush1.bf16.msra.mxu0 %v832
    %4995 = vmatprep.subr.bf16.mxu0 0
    %4996 = vmatpush1.bf16.msra.mxu0 %v835
    %4997 = vmatprep.subr.bf16.mxu0 0
    %4998 = vmatpush1.bf16.msra.mxu0 %v838
    %4999 = vmatprep.subr.bf16.mxu0 0
    %5000 = vmatpush1.bf16.msra.mxu0 0
    %5001 = vmatprep.subr.bf16.mxu0 0
    %5002 = vmatpush1.bf16.msra.mxu0 0
    %5003 = vmatprep.subr.bf16.mxu0 0
    %5004 = vmatpush1.bf16.msra.mxu0 0
    %5005 = vmatprep.subr.bf16.mxu0 0
    %5006 = vmatpush1.bf16.msra.mxu0 0
    %5007 = vmatprep.subr.bf16.mxu0 0
    %5008 = vmatpush1.bf16.msra.mxu0 0
    %5009 = vmatprep.subr.bf16.mxu0 0
    %5010 = vmatpush1.bf16.msra.mxu0 0
    %5011 = vmatprep.subr.bf16.mxu0 0
    %5012 = vmatpush1.bf16.msra.mxu0 0
    %5013 = vmatprep.subr.bf16.mxu0 0
    %5014 = vmatpush1.bf16.msra.mxu0 0
    %5015 = vmatprep.subr.bf16.mxu0 0
    %5016 = vmatpush1.bf16.msra.mxu0 0
    %5017 = vmatprep.subr.bf16.mxu0 0
    %5018 = vmatpush1.bf16.msra.mxu0 0
    %5019 = vmatprep.subr.bf16.mxu0 0
    %5020 = vmatpush1.bf16.msra.mxu0 0
    %5021 = vmatprep.subr.bf16.mxu0 0
    %5022 = vmatpush1.bf16.msra.mxu0 0
    %5023 = vmatprep.mubr.bf16.mxu0 0
    %5024 = vmatmul.mubr.bf16.gmra.mrb[0].mxu0 %v4948
    %v5025 = vpop.f32.mrb[0].mxu0
    %v5026 = vadd.f32 %v212, %v5025
    %v5027 = vpop.f32.mrb[0].mxu0
    %v5028 = vpop.f32.mrb[0].mxu0
    %v5029 = vpop.f32.mrb[0].mxu0
    %5030 = vdwg.mxu0
    %v5031 = vadd.f32 %v4901, %v4735
    %v5032 = vxor.u32 %v5031, 2147483648
    %v5033 = vmul.f32 %v5032, 1.442695
    %v5034 = vpow.pop %v5033
    %v5035 = vadd.f32 %v5034, 1.0
    %v5036 = vrcp.pop %v5035
    %v5037 = vmul.f32 1.0, %v5036
    %v5038 = vadd.f32 %v4903, %v4737
    %v5039 = vxor.u32 %v5038, 2147483648
    %v5040 = vmul.f32 %v5039, 1.442695
    %v5041 = vpow.pop %v5040
    %v5042 = vadd.f32 %v5041, 1.0
    %v5043 = vrcp.pop %v5042
    %v5044 = vmul.f32 1.0, %v5043
    %v5045 = vmul.f32 %v5037, %v4776
    %v5046 = vadd.f32 %v4942, %v5045
    %v5047 = vtanh.pop %v5046
    %v5048 = vsub.f32 %v4693, %v5047
    %v5049 = vmul.f32 %v5044, %v5048
    %v5050 = vadd.f32 %v5047, %v5049
    %v5051 = vadd.f32 %v4985, %v4817
    %v5052 = vxor.u32 %v5051, 2147483648
    %v5053 = vmul.f32 %v5052, 1.442695
    %v5054 = vpow.pop %v5053
    %v5055 = vadd.f32 %v5054, 1.0
    %v5056 = vrcp.pop %v5055
    %v5057 = vmul.f32 1.0, %v5056
    %v5058 = vadd.f32 %v4987, %v4819
    %v5059 = vxor.u32 %v5058, 2147483648
    %v5060 = vmul.f32 %v5059, 1.442695
    %v5061 = vpow.pop %v5060
    %v5062 = vadd.f32 %v5061, 1.0
    %v5063 = vrcp.pop %v5062
    %v5064 = vmul.f32 1.0, %v5063
    %v5065 = vmul.f32 %v5057, %v4858
    %v5066 = vadd.f32 %v5026, %v5065
    %v5067 = vtanh.pop %v5066
    %v5068 = vsub.f32 %v4694, %v5067
    %v5069 = vmul.f32 %v5064, %v5068
    %v5070 = vadd.f32 %v5067, %v5069
    %5071 = vst [vmem:[#allocation2] sm:$0xff] %v5050
    %5072 = vst [vmem:[#allocation3] sm:$0xff] %v5070
    %v5074 = vcombine.high %v5050, %v5050
    %v5076 = vunpack.c.l.s4 1966171168
    %v5077 = vunpack.c.0.s8 %v5076
    %v5078 = vlaneseq
    %v5079 = vshrl.u32 %v5078, 7
    %v5080 = vsub.s32 %v5077, %v5079
    %v5081 = vrot.slane %v5050, %v5080
    %v5083 = vunpack.c.l.s4 1966171168
    %v5084 = vunpack.c.0.s8 %v5083
    %v5085 = vlaneseq
    %v5086 = vshrl.u32 %v5085, 7
    %v5087 = vsub.s32 %v5084, %v5086
    %v5088 = vrot.slane %v5074, %v5087
    %v5089 = vcombine.high %v5081, %v5081
    %v5090 = vcombine.high %v5088, %v5088
    %v5092 = vunpack.c.l.s4 1966171168
    %v5093 = vunpack.c.0.s8 %v5092
    %v5094 = vlaneseq
    %v5095 = vshrl.u32 %v5094, 7
    %v5096 = vsub.s32 %v5093, %v5095
    %v5097 = vrot.slane %v5081, %v5096
    %v5099 = vunpack.c.l.s4 1966171168
    %v5100 = vunpack.c.0.s8 %v5099
    %v5101 = vlaneseq
    %v5102 = vshrl.u32 %v5101, 7
    %v5103 = vsub.s32 %v5100, %v5102
    %v5104 = vrot.slane %v5088, %v5103
    %v5106 = vunpack.c.l.s4 1966171168
    %v5107 = vunpack.c.0.s8 %v5106
    %v5108 = vlaneseq
    %v5109 = vshrl.u32 %v5108, 7
    %v5110 = vsub.s32 %v5107, %v5109
    %v5111 = vrot.slane %v5089, %v5110
    %v5113 = vunpack.c.l.s4 1966171168
    %v5114 = vunpack.c.0.s8 %v5113
    %v5115 = vlaneseq
    %v5116 = vshrl.u32 %v5115, 7
    %v5117 = vsub.s32 %v5114, %v5116
    %v5118 = vrot.slane %v5090, %v5117
    %v5119 = vcombine.high %v5097, %v5097
    %v5120 = vcombine.high %v5104, %v5104
    %v5121 = vcombine.high %v5111, %v5111
    %v5122 = vcombine.high %v5118, %v5118
    %5131 = vst [vmem:[#allocation13 + $0x8] sm:$0x1] %v5097
    %5132 = vst [vmem:[#allocation13 + $0x18] sm:$0x1] %v5111
    %5133 = vst [vmem:[#allocation13 + $0x28] sm:$0x1] %v5119
    %5134 = vst [vmem:[#allocation13 + $0x38] sm:$0x1] %v5121
    %5135 = vst [vmem:[#allocation13 + $0x48] sm:$0x1] %v5104
    %5136 = vst [vmem:[#allocation13 + $0x58] sm:$0x1] %v5118
    %5137 = vst [vmem:[#allocation13 + $0x68] sm:$0x1] %v5120
    %5138 = vst [vmem:[#allocation13 + $0x78] sm:$0x1] %v5122
    %v5140 = vcombine.high %v5070, %v5070
    %v5142 = vunpack.c.l.s4 1966171168
    %v5143 = vunpack.c.0.s8 %v5142
    %v5144 = vlaneseq
    %v5145 = vshrl.u32 %v5144, 7
    %v5146 = vsub.s32 %v5143, %v5145
    %v5147 = vrot.slane %v5070, %v5146
    %v5149 = vunpack.c.l.s4 1966171168
    %v5150 = vunpack.c.0.s8 %v5149
    %v5151 = vlaneseq
    %v5152 = vshrl.u32 %v5151, 7
    %v5153 = vsub.s32 %v5150, %v5152
    %v5154 = vrot.slane %v5140, %v5153
    %v5155 = vcombine.high %v5147, %v5147
    %v5156 = vcombine.high %v5154, %v5154
    %v5158 = vunpack.c.l.s4 1966171168
    %v5159 = vunpack.c.0.s8 %v5158
    %v5160 = vlaneseq
    %v5161 = vshrl.u32 %v5160, 7
    %v5162 = vsub.s32 %v5159, %v5161
    %v5163 = vrot.slane %v5147, %v5162
    %v5165 = vunpack.c.l.s4 1966171168
    %v5166 = vunpack.c.0.s8 %v5165
    %v5167 = vlaneseq
    %v5168 = vshrl.u32 %v5167, 7
    %v5169 = vsub.s32 %v5166, %v5168
    %v5170 = vrot.slane %v5154, %v5169
    %v5172 = vunpack.c.l.s4 1966171168
    %v5173 = vunpack.c.0.s8 %v5172
    %v5174 = vlaneseq
    %v5175 = vshrl.u32 %v5174, 7
    %v5176 = vsub.s32 %v5173, %v5175
    %v5177 = vrot.slane %v5155, %v5176
    %v5179 = vunpack.c.l.s4 1966171168
    %v5180 = vunpack.c.0.s8 %v5179
    %v5181 = vlaneseq
    %v5182 = vshrl.u32 %v5181, 7
    %v5183 = vsub.s32 %v5180, %v5182
    %v5184 = vrot.slane %v5156, %v5183
    %v5185 = vcombine.high %v5163, %v5163
    %v5186 = vcombine.high %v5170, %v5170
    %v5187 = vcombine.high %v5177, %v5177
    %v5188 = vcombine.high %v5184, %v5184
    %5197 = vst [vmem:[#allocation14 + $0x7] sm:$0x1] %v5163
    %5198 = vst [vmem:[#allocation14 + $0x17] sm:$0x1] %v5177
    %5199 = vst [vmem:[#allocation14 + $0x27] sm:$0x1] %v5185
    %5200 = vst [vmem:[#allocation14 + $0x37] sm:$0x1] %v5187
    %5201 = vst [vmem:[#allocation14 + $0x47] sm:$0x1] %v5170
    %5202 = vst [vmem:[#allocation14 + $0x57] sm:$0x1] %v5184
    %5203 = vst [vmem:[#allocation14 + $0x67] sm:$0x1] %v5186
    %5204 = vst [vmem:[#allocation14 + $0x77] sm:$0x1] %v5188
    %v5205 = vld [vmem:[#allocation2] sm:$0xff]
    %v5206 = vld [vmem:[#allocation3] sm:$0xff]
    %s5207 = scalar_lea.vmem [#allocation4], 36
    %v5208 = vld [vmem:[%s5207] sm:$0xf]
    %s5209 = scalar_lea.vmem [#allocation7], 24
    %v5210 = vld [vmem:[%s5209] sm:$0xf]
    %v5211 = vpack.c.bf16 %v5205, %v5205
    %5212 = vmatprep.subr.bf16.mxu0 %v300
    %5213 = vmatpush1.bf16.msra.mxu0 %v299
    %5214 = vmatprep.subr.bf16.mxu0 %v303
    %5215 = vmatpush1.bf16.msra.mxu0 %v302
    %5216 = vmatprep.subr.bf16.mxu0 %v306
    %5217 = vmatpush1.bf16.msra.mxu0 %v305
    %5218 = vmatprep.subr.bf16.mxu0 %v309
    %5219 = vmatpush1.bf16.msra.mxu0 %v308
    %5220 = vmatprep.subr.bf16.mxu0 %v312
    %5221 = vmatpush1.bf16.msra.mxu0 %v311
    %5222 = vmatprep.subr.bf16.mxu0 %v315
    %5223 = vmatpush1.bf16.msra.mxu0 %v314
    %5224 = vmatprep.subr.bf16.mxu0 %v318
    %5225 = vmatpush1.bf16.msra.mxu0 %v317
    %5226 = vmatprep.subr.bf16.mxu0 %v321
    %5227 = vmatpush1.bf16.msra.mxu0 %v320
    %5228 = vmatprep.subr.bf16.mxu0 0
    %5229 = vmatpush1.bf16.msra.mxu0 0
    %5230 = vmatprep.subr.bf16.mxu0 0
    %5231 = vmatpush1.bf16.msra.mxu0 0
    %5232 = vmatprep.subr.bf16.mxu0 0
    %5233 = vmatpush1.bf16.msra.mxu0 0
    %5234 = vmatprep.subr.bf16.mxu0 0
    %5235 = vmatpush1.bf16.msra.mxu0 0
    %5236 = vmatprep.subr.bf16.mxu0 0
    %5237 = vmatpush1.bf16.msra.mxu0 0
    %5238 = vmatprep.subr.bf16.mxu0 0
    %5239 = vmatpush1.bf16.msra.mxu0 0
    %5240 = vmatprep.subr.bf16.mxu0 0
    %5241 = vmatpush1.bf16.msra.mxu0 0
    %5242 = vmatprep.subr.bf16.mxu0 0
    %5243 = vmatpush1.bf16.msra.mxu0 0
    %5244 = vmatprep.mubr.bf16.mxu0 0
    %5245 = vmatmul.mubr.bf16.gmra.mrb[0].mxu0 %v5211
    %v5246 = vpop.f32.mrb[0].mxu0
    %v5247 = vadd.f32 0.0, %v5246
    %v5248 = vpop.f32.mrb[0].mxu0
    %v5249 = vadd.f32 0.0, %v5248
    %v5250 = vpop.f32.mrb[0].mxu0
    %v5251 = vpop.f32.mrb[0].mxu0
    %5252 = vdwg.mxu0
    %5253 = vmatprep.subr.bf16.mxu0 0
    %5254 = vmatpush1.bf16.msra.mxu0 %v301
    %5255 = vmatprep.subr.bf16.mxu0 0
    %5256 = vmatpush1.bf16.msra.mxu0 %v304
    %5257 = vmatprep.subr.bf16.mxu0 0
    %5258 = vmatpush1.bf16.msra.mxu0 %v307
    %5259 = vmatprep.subr.bf16.mxu0 0
    %5260 = vmatpush1.bf16.msra.mxu0 %v310
    %5261 = vmatprep.subr.bf16.mxu0 0
    %5262 = vmatpush1.bf16.msra.mxu0 %v313
    %5263 = vmatprep.subr.bf16.mxu0 0
    %5264 = vmatpush1.bf16.msra.mxu0 %v316
    %5265 = vmatprep.subr.bf16.mxu0 0
    %5266 = vmatpush1.bf16.msra.mxu0 %v319
    %5267 = vmatprep.subr.bf16.mxu0 0
    %5268 = vmatpush1.bf16.msra.mxu0 %v322
    %5269 = vmatprep.subr.bf16.mxu0 0
    %5270 = vmatpush1.bf16.msra.mxu0 0
    %5271 = vmatprep.subr.bf16.mxu0 0
    %5272 = vmatpush1.bf16.msra.mxu0 0
    %5273 = vmatprep.subr.bf16.mxu0 0
    %5274 = vmatpush1.bf16.msra.mxu0 0
    %5275 = vmatprep.subr.bf16.mxu0 0
    %5276 = vmatpush1.bf16.msra.mxu0 0
    %5277 = vmatprep.subr.bf16.mxu0 0
    %5278 = vmatpush1.bf16.msra.mxu0 0
    %5279 = vmatprep.subr.bf16.mxu0 0
    %5280 = vmatpush1.bf16.msra.mxu0 0
    %5281 = vmatprep.subr.bf16.mxu0 0
    %5282 = vmatpush1.bf16.msra.mxu0 0
    %5283 = vmatprep.subr.bf16.mxu0 0
    %5284 = vmatpush1.bf16.msra.mxu0 0
    %5285 = vmatprep.mubr.bf16.mxu0 0
    %5286 = vmatmul.mubr.bf16.gmra.mrb[0].mxu0 %v5211
    %v5287 = vpop.f32.mrb[0].mxu0
    %v5288 = vadd.f32 0.0, %v5287
    %v5289 = vpop.f32.mrb[0].mxu0
    %v5290 = vpop.f32.mrb[0].mxu0
    %v5291 = vpop.f32.mrb[0].mxu0
    %5292 = vdwg.mxu0
    %v5293 = vpack.c.bf16 %v5206, %v5206
    %5294 = vmatprep.subr.bf16.mxu0 %v510
    %5295 = vmatpush1.bf16.msra.mxu0 %v509
    %5296 = vmatprep.subr.bf16.mxu0 %v513
    %5297 = vmatpush1.bf16.msra.mxu0 %v512
    %5298 = vmatprep.subr.bf16.mxu0 %v516
    %5299 = vmatpush1.bf16.msra.mxu0 %v515
    %5300 = vmatprep.subr.bf16.mxu0 %v519
    %5301 = vmatpush1.bf16.msra.mxu0 %v518
    %5302 = vmatprep.subr.bf16.mxu0 %v522
    %5303 = vmatpush1.bf16.msra.mxu0 %v521
    %5304 = vmatprep.subr.bf16.mxu0 %v525
    %5305 = vmatpush1.bf16.msra.mxu0 %v524
    %5306 = vmatprep.subr.bf16.mxu0 %v528
    %5307 = vmatpush1.bf16.msra.mxu0 %v527
    %5308 = vmatprep.subr.bf16.mxu0 %v531
    %5309 = vmatpush1.bf16.msra.mxu0 %v530
    %5310 = vmatprep.subr.bf16.mxu0 0
    %5311 = vmatpush1.bf16.msra.mxu0 0
    %5312 = vmatprep.subr.bf16.mxu0 0
    %5313 = vmatpush1.bf16.msra.mxu0 0
    %5314 = vmatprep.subr.bf16.mxu0 0
    %5315 = vmatpush1.bf16.msra.mxu0 0
    %5316 = vmatprep.subr.bf16.mxu0 0
    %5317 = vmatpush1.bf16.msra.mxu0 0
    %5318 = vmatprep.subr.bf16.mxu0 0
    %5319 = vmatpush1.bf16.msra.mxu0 0
    %5320 = vmatprep.subr.bf16.mxu0 0
    %5321 = vmatpush1.bf16.msra.mxu0 0
    %5322 = vmatprep.subr.bf16.mxu0 0
    %5323 = vmatpush1.bf16.msra.mxu0 0
    %5324 = vmatprep.subr.bf16.mxu0 0
    %5325 = vmatpush1.bf16.msra.mxu0 0
    %5326 = vmatprep.mubr.bf16.mxu0 0
    %5327 = vmatmul.mubr.bf16.gmra.mrb[0].mxu0 %v5293
    %v5328 = vpop.f32.mrb[0].mxu0
    %v5329 = vadd.f32 0.0, %v5328
    %v5330 = vpop.f32.mrb[0].mxu0
    %v5331 = vadd.f32 0.0, %v5330
    %v5332 = vpop.f32.mrb[0].mxu0
    %v5333 = vpop.f32.mrb[0].mxu0
    %5334 = vdwg.mxu0
    %5335 = vmatprep.subr.bf16.mxu0 0
    %5336 = vmatpush1.bf16.msra.mxu0 %v511
    %5337 = vmatprep.subr.bf16.mxu0 0
    %5338 = vmatpush1.bf16.msra.mxu0 %v514
    %5339 = vmatprep.subr.bf16.mxu0 0
    %5340 = vmatpush1.bf16.msra.mxu0 %v517
    %5341 = vmatprep.subr.bf16.mxu0 0
    %5342 = vmatpush1.bf16.msra.mxu0 %v520
    %5343 = vmatprep.subr.bf16.mxu0 0
    %5344 = vmatpush1.bf16.msra.mxu0 %v523
    %5345 = vmatprep.subr.bf16.mxu0 0
    %5346 = vmatpush1.bf16.msra.mxu0 %v526
    %5347 = vmatprep.subr.bf16.mxu0 0
    %5348 = vmatpush1.bf16.msra.mxu0 %v529
    %5349 = vmatprep.subr.bf16.mxu0 0
    %5350 = vmatpush1.bf16.msra.mxu0 %v532
    %5351 = vmatprep.subr.bf16.mxu0 0
    %5352 = vmatpush1.bf16.msra.mxu0 0
    %5353 = vmatprep.subr.bf16.mxu0 0
    %5354 = vmatpush1.bf16.msra.mxu0 0
    %5355 = vmatprep.subr.bf16.mxu0 0
    %5356 = vmatpush1.bf16.msra.mxu0 0
    %5357 = vmatprep.subr.bf16.mxu0 0
    %5358 = vmatpush1.bf16.msra.mxu0 0
    %5359 = vmatprep.subr.bf16.mxu0 0
    %5360 = vmatpush1.bf16.msra.mxu0 0
    %5361 = vmatprep.subr.bf16.mxu0 0
    %5362 = vmatpush1.bf16.msra.mxu0 0
    %5363 = vmatprep.subr.bf16.mxu0 0
    %5364 = vmatpush1.bf16.msra.mxu0 0
    %5365 = vmatprep.subr.bf16.mxu0 0
    %5366 = vmatpush1.bf16.msra.mxu0 0
    %5367 = vmatprep.mubr.bf16.mxu0 0
    %5368 = vmatmul.mubr.bf16.gmra.mrb[0].mxu0 %v5293
    %v5369 = vpop.f32.mrb[0].mxu0
    %v5370 = vadd.f32 0.0, %v5369
    %v5371 = vpop.f32.mrb[0].mxu0
    %v5372 = vpop.f32.mrb[0].mxu0
    %v5373 = vpop.f32.mrb[0].mxu0
    %5374 = vdwg.mxu0
    %v5376 = vsel %vm702, %v5208, 0
    %5378 = vmatprep.subr.bf16.mxu0 %v679
    %5379 = vmatpush1.bf16.msra.mxu0 %v678
    %5380 = vmatprep.subr.bf16.mxu0 %v682
    %5381 = vmatpush1.bf16.msra.mxu0 %v681
    %5382 = vmatprep.subr.bf16.mxu0 %v685
    %5383 = vmatpush1.bf16.msra.mxu0 %v684
    %5384 = vmatprep.subr.bf16.mxu0 %v688
    %5385 = vmatpush1.bf16.msra.mxu0 %v687
    %5386 = vmatprep.subr.bf16.mxu0 0
    %5387 = vmatpush1.bf16.msra.mxu0 0
    %5388 = vmatprep.subr.bf16.mxu0 0
    %5389 = vmatpush1.bf16.msra.mxu0 0
    %5390 = vmatprep.subr.bf16.mxu0 0
    %5391 = vmatpush1.bf16.msra.mxu0 0
    %5392 = vmatprep.subr.bf16.mxu0 0
    %5393 = vmatpush1.bf16.msra.mxu0 0
    %5394 = vmatprep.subr.bf16.mxu0 0
    %5395 = vmatpush1.bf16.msra.mxu0 0
    %5396 = vmatprep.subr.bf16.mxu0 0
    %5397 = vmatpush1.bf16.msra.mxu0 0
    %5398 = vmatprep.subr.bf16.mxu0 0
    %5399 = vmatpush1.bf16.msra.mxu0 0
    %5400 = vmatprep.subr.bf16.mxu0 0
    %5401 = vmatpush1.bf16.msra.mxu0 0
    %5402 = vmatprep.subr.bf16.mxu0 0
    %5403 = vmatpush1.bf16.msra.mxu0 0
    %5404 = vmatprep.subr.bf16.mxu0 0
    %5405 = vmatpush1.bf16.msra.mxu0 0
    %5406 = vmatprep.subr.bf16.mxu0 0
    %5407 = vmatpush1.bf16.msra.mxu0 0
    %5408 = vmatprep.subr.bf16.mxu0 0
    %5409 = vmatpush1.bf16.msra.mxu0 0
    %5410 = vmatprep.mubr.bf16.mxu0 0
    %5411 = vmatmul.mubr.bf16.gmra.mrb[0].mxu0 %v5376
    %v5412 = vpop.f32.mrb[0].mxu0
    %v5413 = vadd.f32 %v206, %v5412
    %v5414 = vpop.f32.mrb[0].mxu0
    %v5415 = vadd.f32 %v207, %v5414
    %v5416 = vpop.f32.mrb[0].mxu0
    %v5417 = vpop.f32.mrb[0].mxu0
    %5418 = vdwg.mxu0
    %5419 = vmatprep.subr.bf16.mxu0 0
    %5420 = vmatpush1.bf16.msra.mxu0 %v680
    %5421 = vmatprep.subr.bf16.mxu0 0
    %5422 = vmatpush1.bf16.msra.mxu0 %v683
    %5423 = vmatprep.subr.bf16.mxu0 0
    %5424 = vmatpush1.bf16.msra.mxu0 %v686
    %5425 = vmatprep.subr.bf16.mxu0 0
    %5426 = vmatpush1.bf16.msra.mxu0 %v689
    %5427 = vmatprep.subr.bf16.mxu0 0
    %5428 = vmatpush1.bf16.msra.mxu0 0
    %5429 = vmatprep.subr.bf16.mxu0 0
    %5430 = vmatpush1.bf16.msra.mxu0 0
    %5431 = vmatprep.subr.bf16.mxu0 0
    %5432 = vmatpush1.bf16.msra.mxu0 0
    %5433 = vmatprep.subr.bf16.mxu0 0
    %5434 = vmatpush1.bf16.msra.mxu0 0
    %5435 = vmatprep.subr.bf16.mxu0 0
    %5436 = vmatpush1.bf16.msra.mxu0 0
    %5437 = vmatprep.subr.bf16.mxu0 0
    %5438 = vmatpush1.bf16.msra.mxu0 0
    %5439 = vmatprep.subr.bf16.mxu0 0
    %5440 = vmatpush1.bf16.msra.mxu0 0
    %5441 = vmatprep.subr.bf16.mxu0 0
    %5442 = vmatpush1.bf16.msra.mxu0 0
    %5443 = vmatprep.subr.bf16.mxu0 0
    %5444 = vmatpush1.bf16.msra.mxu0 0
    %5445 = vmatprep.subr.bf16.mxu0 0
    %5446 = vmatpush1.bf16.msra.mxu0 0
    %5447 = vmatprep.subr.bf16.mxu0 0
    %5448 = vmatpush1.bf16.msra.mxu0 0
    %5449 = vmatprep.subr.bf16.mxu0 0
    %5450 = vmatpush1.bf16.msra.mxu0 0
    %5451 = vmatprep.mubr.bf16.mxu0 0
    %5452 = vmatmul.mubr.bf16.gmra.mrb[0].mxu0 %v5376
    %v5453 = vpop.f32.mrb[0].mxu0
    %v5454 = vadd.f32 %v208, %v5453
    %v5455 = vpop.f32.mrb[0].mxu0
    %v5456 = vpop.f32.mrb[0].mxu0
    %v5457 = vpop.f32.mrb[0].mxu0
    %5458 = vdwg.mxu0
    %v5460 = vsel %vm702, %v5210, 0
    %5462 = vmatprep.subr.bf16.mxu0 %v828
    %5463 = vmatpush1.bf16.msra.mxu0 %v827
    %5464 = vmatprep.subr.bf16.mxu0 %v831
    %5465 = vmatpush1.bf16.msra.mxu0 %v830
    %5466 = vmatprep.subr.bf16.mxu0 %v834
    %5467 = vmatpush1.bf16.msra.mxu0 %v833
    %5468 = vmatprep.subr.bf16.mxu0 %v837
    %5469 = vmatpush1.bf16.msra.mxu0 %v836
    %5470 = vmatprep.subr.bf16.mxu0 0
    %5471 = vmatpush1.bf16.msra.mxu0 0
    %5472 = vmatprep.subr.bf16.mxu0 0
    %5473 = vmatpush1.bf16.msra.mxu0 0
    %5474 = vmatprep.subr.bf16.mxu0 0
    %5475 = vmatpush1.bf16.msra.mxu0 0
    %5476 = vmatprep.subr.bf16.mxu0 0
    %5477 = vmatpush1.bf16.msra.mxu0 0
    %5478 = vmatprep.subr.bf16.mxu0 0
    %5479 = vmatpush1.bf16.msra.mxu0 0
    %5480 = vmatprep.subr.bf16.mxu0 0
    %5481 = vmatpush1.bf16.msra.mxu0 0
    %5482 = vmatprep.subr.bf16.mxu0 0
    %5483 = vmatpush1.bf16.msra.mxu0 0
    %5484 = vmatprep.subr.bf16.mxu0 0
    %5485 = vmatpush1.bf16.msra.mxu0 0
    %5486 = vmatprep.subr.bf16.mxu0 0
    %5487 = vmatpush1.bf16.msra.mxu0 0
    %5488 = vmatprep.subr.bf16.mxu0 0
    %5489 = vmatpush1.bf16.msra.mxu0 0
    %5490 = vmatprep.subr.bf16.mxu0 0
    %5491 = vmatpush1.bf16.msra.mxu0 0
    %5492 = vmatprep.subr.bf16.mxu0 0
    %5493 = vmatpush1.bf16.msra.mxu0 0
    %5494 = vmatprep.mubr.bf16.mxu0 0
    %5495 = vmatmul.mubr.bf16.gmra.mrb[0].mxu0 %v5460
    %v5496 = vpop.f32.mrb[0].mxu0
    %v5497 = vadd.f32 %v210, %v5496
    %v5498 = vpop.f32.mrb[0].mxu0
    %v5499 = vadd.f32 %v211, %v5498
    %v5500 = vpop.f32.mrb[0].mxu0
    %v5501 = vpop.f32.mrb[0].mxu0
    %5502 = vdwg.mxu0
    %5503 = vmatprep.subr.bf16.mxu0 0
    %5504 = vmatpush1.bf16.msra.mxu0 %v829
    %5505 = vmatprep.subr.bf16.mxu0 0
    %5506 = vmatpush1.bf16.msra.mxu0 %v832
    %5507 = vmatprep.subr.bf16.mxu0 0
    %5508 = vmatpush1.bf16.msra.mxu0 %v835
    %5509 = vmatprep.subr.bf16.mxu0 0
    %5510 = vmatpush1.bf16.msra.mxu0 %v838
    %5511 = vmatprep.subr.bf16.mxu0 0
    %5512 = vmatpush1.bf16.msra.mxu0 0
    %5513 = vmatprep.subr.bf16.mxu0 0
    %5514 = vmatpush1.bf16.msra.mxu0 0
    %5515 = vmatprep.subr.bf16.mxu0 0
    %5516 = vmatpush1.bf16.msra.mxu0 0
    %5517 = vmatprep.subr.bf16.mxu0 0
    %5518 = vmatpush1.bf16.msra.mxu0 0
    %5519 = vmatprep.subr.bf16.mxu0 0
    %5520 = vmatpush1.bf16.msra.mxu0 0
    %5521 = vmatprep.subr.bf16.mxu0 0
    %5522 = vmatpush1.bf16.msra.mxu0 0
    %5523 = vmatprep.subr.bf16.mxu0 0
    %5524 = vmatpush1.bf16.msra.mxu0 0
    %5525 = vmatprep.subr.bf16.mxu0 0
    %5526 = vmatpush1.bf16.msra.mxu0 0
    %5527 = vmatprep.subr.bf16.mxu0 0
    %5528 = vmatpush1.bf16.msra.mxu0 0
    %5529 = vmatprep.subr.bf16.mxu0 0
    %5530 = vmatpush1.bf16.msra.mxu0 0
    %5531 = vmatprep.subr.bf16.mxu0 0
    %5532 = vmatpush1.bf16.msra.mxu0 0
    %5533 = vmatprep.subr.bf16.mxu0 0
    %5534 = vmatpush1.bf16.msra.mxu0 0
    %5535 = vmatprep.mubr.bf16.mxu0 0
    %5536 = vmatmul.mubr.bf16.gmra.mrb[0].mxu0 %v5460
    %v5537 = vpop.f32.mrb[0].mxu0
    %v5538 = vadd.f32 %v212, %v5537
    %v5539 = vpop.f32.mrb[0].mxu0
    %v5540 = vpop.f32.mrb[0].mxu0
    %v5541 = vpop.f32.mrb[0].mxu0
    %5542 = vdwg.mxu0
    %v5543 = vadd.f32 %v5413, %v5247
    %v5544 = vxor.u32 %v5543, 2147483648
    %v5545 = vmul.f32 %v5544, 1.442695
    %v5546 = vpow.pop %v5545
    %v5547 = vadd.f32 %v5546, 1.0
    %v5548 = vrcp.pop %v5547
    %v5549 = vmul.f32 1.0, %v5548
    %v5550 = vadd.f32 %v5415, %v5249
    %v5551 = vxor.u32 %v5550, 2147483648
    %v5552 = vmul.f32 %v5551, 1.442695
    %v5553 = vpow.pop %v5552
    %v5554 = vadd.f32 %v5553, 1.0
    %v5555 = vrcp.pop %v5554
    %v5556 = vmul.f32 1.0, %v5555
    %v5557 = vmul.f32 %v5549, %v5288
    %v5558 = vadd.f32 %v5454, %v5557
    %v5559 = vtanh.pop %v5558
    %v5560 = vsub.f32 %v5205, %v5559
    %v5561 = vmul.f32 %v5556, %v5560
    %v5562 = vadd.f32 %v5559, %v5561
    %v5563 = vadd.f32 %v5497, %v5329
    %v5564 = vxor.u32 %v5563, 2147483648
    %v5565 = vmul.f32 %v5564, 1.442695
    %v5566 = vpow.pop %v5565
    %v5567 = vadd.f32 %v5566, 1.0
    %v5568 = vrcp.pop %v5567
    %v5569 = vmul.f32 1.0, %v5568
    %v5570 = vadd.f32 %v5499, %v5331
    %v5571 = vxor.u32 %v5570, 2147483648
    %v5572 = vmul.f32 %v5571, 1.442695
    %v5573 = vpow.pop %v5572
    %v5574 = vadd.f32 %v5573, 1.0
    %v5575 = vrcp.pop %v5574
    %v5576 = vmul.f32 1.0, %v5575
    %v5577 = vmul.f32 %v5569, %v5370
    %v5578 = vadd.f32 %v5538, %v5577
    %v5579 = vtanh.pop %v5578
    %v5580 = vsub.f32 %v5206, %v5579
    %v5581 = vmul.f32 %v5576, %v5580
    %v5582 = vadd.f32 %v5579, %v5581
    %5583 = vst [vmem:[#allocation2] sm:$0xff] %v5562
    %5584 = vst [vmem:[#allocation3] sm:$0xff] %v5582
    %v5586 = vcombine.high %v5562, %v5562
    %v5588 = vunpack.c.l.s4 1966171168
    %v5589 = vunpack.c.0.s8 %v5588
    %v5590 = vlaneseq
    %v5591 = vshrl.u32 %v5590, 7
    %v5592 = vsub.s32 %v5589, %v5591
    %v5593 = vrot.slane %v5562, %v5592
    %v5595 = vunpack.c.l.s4 1966171168
    %v5596 = vunpack.c.0.s8 %v5595
    %v5597 = vlaneseq
    %v5598 = vshrl.u32 %v5597, 7
    %v5599 = vsub.s32 %v5596, %v5598
    %v5600 = vrot.slane %v5586, %v5599
    %v5601 = vcombine.high %v5593, %v5593
    %v5602 = vcombine.high %v5600, %v5600
    %v5604 = vunpack.c.l.s4 1966171168
    %v5605 = vunpack.c.0.s8 %v5604
    %v5606 = vlaneseq
    %v5607 = vshrl.u32 %v5606, 7
    %v5608 = vsub.s32 %v5605, %v5607
    %v5609 = vrot.slane %v5593, %v5608
    %v5611 = vunpack.c.l.s4 1966171168
    %v5612 = vunpack.c.0.s8 %v5611
    %v5613 = vlaneseq
    %v5614 = vshrl.u32 %v5613, 7
    %v5615 = vsub.s32 %v5612, %v5614
    %v5616 = vrot.slane %v5600, %v5615
    %v5618 = vunpack.c.l.s4 1966171168
    %v5619 = vunpack.c.0.s8 %v5618
    %v5620 = vlaneseq
    %v5621 = vshrl.u32 %v5620, 7
    %v5622 = vsub.s32 %v5619, %v5621
    %v5623 = vrot.slane %v5601, %v5622
    %v5625 = vunpack.c.l.s4 1966171168
    %v5626 = vunpack.c.0.s8 %v5625
    %v5627 = vlaneseq
    %v5628 = vshrl.u32 %v5627, 7
    %v5629 = vsub.s32 %v5626, %v5628
    %v5630 = vrot.slane %v5602, %v5629
    %v5631 = vcombine.high %v5609, %v5609
    %v5632 = vcombine.high %v5616, %v5616
    %v5633 = vcombine.high %v5623, %v5623
    %v5634 = vcombine.high %v5630, %v5630
    %5643 = vst [vmem:[#allocation13 + $0x9] sm:$0x1] %v5609
    %5644 = vst [vmem:[#allocation13 + $0x19] sm:$0x1] %v5623
    %5645 = vst [vmem:[#allocation13 + $0x29] sm:$0x1] %v5631
    %5646 = vst [vmem:[#allocation13 + $0x39] sm:$0x1] %v5633
    %5647 = vst [vmem:[#allocation13 + $0x49] sm:$0x1] %v5616
    %5648 = vst [vmem:[#allocation13 + $0x59] sm:$0x1] %v5630
    %5649 = vst [vmem:[#allocation13 + $0x69] sm:$0x1] %v5632
    %5650 = vst [vmem:[#allocation13 + $0x79] sm:$0x1] %v5634
    %v5652 = vcombine.high %v5582, %v5582
    %v5654 = vunpack.c.l.s4 1966171168
    %v5655 = vunpack.c.0.s8 %v5654
    %v5656 = vlaneseq
    %v5657 = vshrl.u32 %v5656, 7
    %v5658 = vsub.s32 %v5655, %v5657
    %v5659 = vrot.slane %v5582, %v5658
    %v5661 = vunpack.c.l.s4 1966171168
    %v5662 = vunpack.c.0.s8 %v5661
    %v5663 = vlaneseq
    %v5664 = vshrl.u32 %v5663, 7
    %v5665 = vsub.s32 %v5662, %v5664
    %v5666 = vrot.slane %v5652, %v5665
    %v5667 = vcombine.high %v5659, %v5659
    %v5668 = vcombine.high %v5666, %v5666
    %v5670 = vunpack.c.l.s4 1966171168
    %v5671 = vunpack.c.0.s8 %v5670
    %v5672 = vlaneseq
    %v5673 = vshrl.u32 %v5672, 7
    %v5674 = vsub.s32 %v5671, %v5673
    %v5675 = vrot.slane %v5659, %v5674
    %v5677 = vunpack.c.l.s4 1966171168
    %v5678 = vunpack.c.0.s8 %v5677
    %v5679 = vlaneseq
    %v5680 = vshrl.u32 %v5679, 7
    %v5681 = vsub.s32 %v5678, %v5680
    %v5682 = vrot.slane %v5666, %v5681
    %v5684 = vunpack.c.l.s4 1966171168
    %v5685 = vunpack.c.0.s8 %v5684
    %v5686 = vlaneseq
    %v5687 = vshrl.u32 %v5686, 7
    %v5688 = vsub.s32 %v5685, %v5687
    %v5689 = vrot.slane %v5667, %v5688
    %v5691 = vunpack.c.l.s4 1966171168
    %v5692 = vunpack.c.0.s8 %v5691
    %v5693 = vlaneseq
    %v5694 = vshrl.u32 %v5693, 7
    %v5695 = vsub.s32 %v5692, %v5694
    %v5696 = vrot.slane %v5668, %v5695
    %v5697 = vcombine.high %v5675, %v5675
    %v5698 = vcombine.high %v5682, %v5682
    %v5699 = vcombine.high %v5689, %v5689
    %v5700 = vcombine.high %v5696, %v5696
    %5709 = vst [vmem:[#allocation14 + $0x6] sm:$0x1] %v5675
    %5710 = vst [vmem:[#allocation14 + $0x16] sm:$0x1] %v5689
    %5711 = vst [vmem:[#allocation14 + $0x26] sm:$0x1] %v5697
    %5712 = vst [vmem:[#allocation14 + $0x36] sm:$0x1] %v5699
    %5713 = vst [vmem:[#allocation14 + $0x46] sm:$0x1] %v5682
    %5714 = vst [vmem:[#allocation14 + $0x56] sm:$0x1] %v5696
    %5715 = vst [vmem:[#allocation14 + $0x66] sm:$0x1] %v5698
    %5716 = vst [vmem:[#allocation14 + $0x76] sm:$0x1] %v5700
    %v5717 = vld [vmem:[#allocation2] sm:$0xff]
    %v5718 = vld [vmem:[#allocation3] sm:$0xff]
    %s5719 = scalar_lea.vmem [#allocation4], 40
    %v5720 = vld [vmem:[%s5719] sm:$0xf]
    %s5721 = scalar_lea.vmem [#allocation7], 20
    %v5722 = vld [vmem:[%s5721] sm:$0xf]
    %v5723 = vpack.c.bf16 %v5717, %v5717
    %5724 = vmatprep.subr.bf16.mxu0 %v300
    %5725 = vmatpush1.bf16.msra.mxu0 %v299
    %5726 = vmatprep.subr.bf16.mxu0 %v303
    %5727 = vmatpush1.bf16.msra.mxu0 %v302
    %5728 = vmatprep.subr.bf16.mxu0 %v306
    %5729 = vmatpush1.bf16.msra.mxu0 %v305
    %5730 = vmatprep.subr.bf16.mxu0 %v309
    %5731 = vmatpush1.bf16.msra.mxu0 %v308
    %5732 = vmatprep.subr.bf16.mxu0 %v312
    %5733 = vmatpush1.bf16.msra.mxu0 %v311
    %5734 = vmatprep.subr.bf16.mxu0 %v315
    %5735 = vmatpush1.bf16.msra.mxu0 %v314
    %5736 = vmatprep.subr.bf16.mxu0 %v318
    %5737 = vmatpush1.bf16.msra.mxu0 %v317
    %5738 = vmatprep.subr.bf16.mxu0 %v321
    %5739 = vmatpush1.bf16.msra.mxu0 %v320
    %5740 = vmatprep.subr.bf16.mxu0 0
    %5741 = vmatpush1.bf16.msra.mxu0 0
    %5742 = vmatprep.subr.bf16.mxu0 0
    %5743 = vmatpush1.bf16.msra.mxu0 0
    %5744 = vmatprep.subr.bf16.mxu0 0
    %5745 = vmatpush1.bf16.msra.mxu0 0
    %5746 = vmatprep.subr.bf16.mxu0 0
    %5747 = vmatpush1.bf16.msra.mxu0 0
    %5748 = vmatprep.subr.bf16.mxu0 0
    %5749 = vmatpush1.bf16.msra.mxu0 0
    %5750 = vmatprep.subr.bf16.mxu0 0
    %5751 = vmatpush1.bf16.msra.mxu0 0
    %5752 = vmatprep.subr.bf16.mxu0 0
    %5753 = vmatpush1.bf16.msra.mxu0 0
    %5754 = vmatprep.subr.bf16.mxu0 0
    %5755 = vmatpush1.bf16.msra.mxu0 0
    %5756 = vmatprep.mubr.bf16.mxu0 0
    %5757 = vmatmul.mubr.bf16.gmra.mrb[0].mxu0 %v5723
    %v5758 = vpop.f32.mrb[0].mxu0
    %v5759 = vadd.f32 0.0, %v5758
    %v5760 = vpop.f32.mrb[0].mxu0
    %v5761 = vadd.f32 0.0, %v5760
    %v5762 = vpop.f32.mrb[0].mxu0
    %v5763 = vpop.f32.mrb[0].mxu0
    %5764 = vdwg.mxu0
    %5765 = vmatprep.subr.bf16.mxu0 0
    %5766 = vmatpush1.bf16.msra.mxu0 %v301
    %5767 = vmatprep.subr.bf16.mxu0 0
    %5768 = vmatpush1.bf16.msra.mxu0 %v304
    %5769 = vmatprep.subr.bf16.mxu0 0
    %5770 = vmatpush1.bf16.msra.mxu0 %v307
    %5771 = vmatprep.subr.bf16.mxu0 0
    %5772 = vmatpush1.bf16.msra.mxu0 %v310
    %5773 = vmatprep.subr.bf16.mxu0 0
    %5774 = vmatpush1.bf16.msra.mxu0 %v313
    %5775 = vmatprep.subr.bf16.mxu0 0
    %5776 = vmatpush1.bf16.msra.mxu0 %v316
    %5777 = vmatprep.subr.bf16.mxu0 0
    %5778 = vmatpush1.bf16.msra.mxu0 %v319
    %5779 = vmatprep.subr.bf16.mxu0 0
    %5780 = vmatpush1.bf16.msra.mxu0 %v322
    %5781 = vmatprep.subr.bf16.mxu0 0
    %5782 = vmatpush1.bf16.msra.mxu0 0
    %5783 = vmatprep.subr.bf16.mxu0 0
    %5784 = vmatpush1.bf16.msra.mxu0 0
    %5785 = vmatprep.subr.bf16.mxu0 0
    %5786 = vmatpush1.bf16.msra.mxu0 0
    %5787 = vmatprep.subr.bf16.mxu0 0
    %5788 = vmatpush1.bf16.msra.mxu0 0
    %5789 = vmatprep.subr.bf16.mxu0 0
    %5790 = vmatpush1.bf16.msra.mxu0 0
    %5791 = vmatprep.subr.bf16.mxu0 0
    %5792 = vmatpush1.bf16.msra.mxu0 0
    %5793 = vmatprep.subr.bf16.mxu0 0
    %5794 = vmatpush1.bf16.msra.mxu0 0
    %5795 = vmatprep.subr.bf16.mxu0 0
    %5796 = vmatpush1.bf16.msra.mxu0 0
    %5797 = vmatprep.mubr.bf16.mxu0 0
    %5798 = vmatmul.mubr.bf16.gmra.mrb[0].mxu0 %v5723
    %v5799 = vpop.f32.mrb[0].mxu0
    %v5800 = vadd.f32 0.0, %v5799
    %v5801 = vpop.f32.mrb[0].mxu0
    %v5802 = vpop.f32.mrb[0].mxu0
    %v5803 = vpop.f32.mrb[0].mxu0
    %5804 = vdwg.mxu0
    %v5805 = vpack.c.bf16 %v5718, %v5718
    %5806 = vmatprep.subr.bf16.mxu0 %v510
    %5807 = vmatpush1.bf16.msra.mxu0 %v509
    %5808 = vmatprep.subr.bf16.mxu0 %v513
    %5809 = vmatpush1.bf16.msra.mxu0 %v512
    %5810 = vmatprep.subr.bf16.mxu0 %v516
    %5811 = vmatpush1.bf16.msra.mxu0 %v515
    %5812 = vmatprep.subr.bf16.mxu0 %v519
    %5813 = vmatpush1.bf16.msra.mxu0 %v518
    %5814 = vmatprep.subr.bf16.mxu0 %v522
    %5815 = vmatpush1.bf16.msra.mxu0 %v521
    %5816 = vmatprep.subr.bf16.mxu0 %v525
    %5817 = vmatpush1.bf16.msra.mxu0 %v524
    %5818 = vmatprep.subr.bf16.mxu0 %v528
    %5819 = vmatpush1.bf16.msra.mxu0 %v527
    %5820 = vmatprep.subr.bf16.mxu0 %v531
    %5821 = vmatpush1.bf16.msra.mxu0 %v530
    %5822 = vmatprep.subr.bf16.mxu0 0
    %5823 = vmatpush1.bf16.msra.mxu0 0
    %5824 = vmatprep.subr.bf16.mxu0 0
    %5825 = vmatpush1.bf16.msra.mxu0 0
    %5826 = vmatprep.subr.bf16.mxu0 0
    %5827 = vmatpush1.bf16.msra.mxu0 0
    %5828 = vmatprep.subr.bf16.mxu0 0
    %5829 = vmatpush1.bf16.msra.mxu0 0
    %5830 = vmatprep.subr.bf16.mxu0 0
    %5831 = vmatpush1.bf16.msra.mxu0 0
    %5832 = vmatprep.subr.bf16.mxu0 0
    %5833 = vmatpush1.bf16.msra.mxu0 0
    %5834 = vmatprep.subr.bf16.mxu0 0
    %5835 = vmatpush1.bf16.msra.mxu0 0
    %5836 = vmatprep.subr.bf16.mxu0 0
    %5837 = vmatpush1.bf16.msra.mxu0 0
    %5838 = vmatprep.mubr.bf16.mxu0 0
    %5839 = vmatmul.mubr.bf16.gmra.mrb[0].mxu0 %v5805
    %v5840 = vpop.f32.mrb[0].mxu0
    %v5841 = vadd.f32 0.0, %v5840
    %v5842 = vpop.f32.mrb[0].mxu0
    %v5843 = vadd.f32 0.0, %v5842
    %v5844 = vpop.f32.mrb[0].mxu0
    %v5845 = vpop.f32.mrb[0].mxu0
    %5846 = vdwg.mxu0
    %5847 = vmatprep.subr.bf16.mxu0 0
    %5848 = vmatpush1.bf16.msra.mxu0 %v511
    %5849 = vmatprep.subr.bf16.mxu0 0
    %5850 = vmatpush1.bf16.msra.mxu0 %v514
    %5851 = vmatprep.subr.bf16.mxu0 0
    %5852 = vmatpush1.bf16.msra.mxu0 %v517
    %5853 = vmatprep.subr.bf16.mxu0 0
    %5854 = vmatpush1.bf16.msra.mxu0 %v520
    %5855 = vmatprep.subr.bf16.mxu0 0
    %5856 = vmatpush1.bf16.msra.mxu0 %v523
    %5857 = vmatprep.subr.bf16.mxu0 0
    %5858 = vmatpush1.bf16.msra.mxu0 %v526
    %5859 = vmatprep.subr.bf16.mxu0 0
    %5860 = vmatpush1.bf16.msra.mxu0 %v529
    %5861 = vmatprep.subr.bf16.mxu0 0
    %5862 = vmatpush1.bf16.msra.mxu0 %v532
    %5863 = vmatprep.subr.bf16.mxu0 0
    %5864 = vmatpush1.bf16.msra.mxu0 0
    %5865 = vmatprep.subr.bf16.mxu0 0
    %5866 = vmatpush1.bf16.msra.mxu0 0
    %5867 = vmatprep.subr.bf16.mxu0 0
    %5868 = vmatpush1.bf16.msra.mxu0 0
    %5869 = vmatprep.subr.bf16.mxu0 0
    %5870 = vmatpush1.bf16.msra.mxu0 0
    %5871 = vmatprep.subr.bf16.mxu0 0
    %5872 = vmatpush1.bf16.msra.mxu0 0
    %5873 = vmatprep.subr.bf16.mxu0 0
    %5874 = vmatpush1.bf16.msra.mxu0 0
    %5875 = vmatprep.subr.bf16.mxu0 0
    %5876 = vmatpush1.bf16.msra.mxu0 0
    %5877 = vmatprep.subr.bf16.mxu0 0
    %5878 = vmatpush1.bf16.msra.mxu0 0
    %5879 = vmatprep.mubr.bf16.mxu0 0
    %5880 = vmatmul.mubr.bf16.gmra.mrb[0].mxu0 %v5805
    %v5881 = vpop.f32.mrb[0].mxu0
    %v5882 = vadd.f32 0.0, %v5881
    %v5883 = vpop.f32.mrb[0].mxu0
    %v5884 = vpop.f32.mrb[0].mxu0
    %v5885 = vpop.f32.mrb[0].mxu0
    %5886 = vdwg.mxu0
    %v5888 = vsel %vm702, %v5720, 0
    %5890 = vmatprep.subr.bf16.mxu0 %v679
    %5891 = vmatpush1.bf16.msra.mxu0 %v678
    %5892 = vmatprep.subr.bf16.mxu0 %v682
    %5893 = vmatpush1.bf16.msra.mxu0 %v681
    %5894 = vmatprep.subr.bf16.mxu0 %v685
    %5895 = vmatpush1.bf16.msra.mxu0 %v684
    %5896 = vmatprep.subr.bf16.mxu0 %v688
    %5897 = vmatpush1.bf16.msra.mxu0 %v687
    %5898 = vmatprep.subr.bf16.mxu0 0
    %5899 = vmatpush1.bf16.msra.mxu0 0
    %5900 = vmatprep.subr.bf16.mxu0 0
    %5901 = vmatpush1.bf16.msra.mxu0 0
    %5902 = vmatprep.subr.bf16.mxu0 0
    %5903 = vmatpush1.bf16.msra.mxu0 0
    %5904 = vmatprep.subr.bf16.mxu0 0
    %5905 = vmatpush1.bf16.msra.mxu0 0
    %5906 = vmatprep.subr.bf16.mxu0 0
    %5907 = vmatpush1.bf16.msra.mxu0 0
    %5908 = vmatprep.subr.bf16.mxu0 0
    %5909 = vmatpush1.bf16.msra.mxu0 0
    %5910 = vmatprep.subr.bf16.mxu0 0
    %5911 = vmatpush1.bf16.msra.mxu0 0
    %5912 = vmatprep.subr.bf16.mxu0 0
    %5913 = vmatpush1.bf16.msra.mxu0 0
    %5914 = vmatprep.subr.bf16.mxu0 0
    %5915 = vmatpush1.bf16.msra.mxu0 0
    %5916 = vmatprep.subr.bf16.mxu0 0
    %5917 = vmatpush1.bf16.msra.mxu0 0
    %5918 = vmatprep.subr.bf16.mxu0 0
    %5919 = vmatpush1.bf16.msra.mxu0 0
    %5920 = vmatprep.subr.bf16.mxu0 0
    %5921 = vmatpush1.bf16.msra.mxu0 0
    %5922 = vmatprep.mubr.bf16.mxu0 0
    %5923 = vmatmul.mubr.bf16.gmra.mrb[0].mxu0 %v5888
    %v5924 = vpop.f32.mrb[0].mxu0
    %v5925 = vadd.f32 %v206, %v5924
    %v5926 = vpop.f32.mrb[0].mxu0
    %v5927 = vadd.f32 %v207, %v5926
    %v5928 = vpop.f32.mrb[0].mxu0
    %v5929 = vpop.f32.mrb[0].mxu0
    %5930 = vdwg.mxu0
    %5931 = vmatprep.subr.bf16.mxu0 0
    %5932 = vmatpush1.bf16.msra.mxu0 %v680
    %5933 = vmatprep.subr.bf16.mxu0 0
    %5934 = vmatpush1.bf16.msra.mxu0 %v683
    %5935 = vmatprep.subr.bf16.mxu0 0
    %5936 = vmatpush1.bf16.msra.mxu0 %v686
    %5937 = vmatprep.subr.bf16.mxu0 0
    %5938 = vmatpush1.bf16.msra.mxu0 %v689
    %5939 = vmatprep.subr.bf16.mxu0 0
    %5940 = vmatpush1.bf16.msra.mxu0 0
    %5941 = vmatprep.subr.bf16.mxu0 0
    %5942 = vmatpush1.bf16.msra.mxu0 0
    %5943 = vmatprep.subr.bf16.mxu0 0
    %5944 = vmatpush1.bf16.msra.mxu0 0
    %5945 = vmatprep.subr.bf16.mxu0 0
    %5946 = vmatpush1.bf16.msra.mxu0 0
    %5947 = vmatprep.subr.bf16.mxu0 0
    %5948 = vmatpush1.bf16.msra.mxu0 0
    %5949 = vmatprep.subr.bf16.mxu0 0
    %5950 = vmatpush1.bf16.msra.mxu0 0
    %5951 = vmatprep.subr.bf16.mxu0 0
    %5952 = vmatpush1.bf16.msra.mxu0 0
    %5953 = vmatprep.subr.bf16.mxu0 0
    %5954 = vmatpush1.bf16.msra.mxu0 0
    %5955 = vmatprep.subr.bf16.mxu0 0
    %5956 = vmatpush1.bf16.msra.mxu0 0
    %5957 = vmatprep.subr.bf16.mxu0 0
    %5958 = vmatpush1.bf16.msra.mxu0 0
    %5959 = vmatprep.subr.bf16.mxu0 0
    %5960 = vmatpush1.bf16.msra.mxu0 0
    %5961 = vmatprep.subr.bf16.mxu0 0
    %5962 = vmatpush1.bf16.msra.mxu0 0
    %5963 = vmatprep.mubr.bf16.mxu0 0
    %5964 = vmatmul.mubr.bf16.gmra.mrb[0].mxu0 %v5888
    %v5965 = vpop.f32.mrb[0].mxu0
    %v5966 = vadd.f32 %v208, %v5965
    %v5967 = vpop.f32.mrb[0].mxu0
    %v5968 = vpop.f32.mrb[0].mxu0
    %v5969 = vpop.f32.mrb[0].mxu0
    %5970 = vdwg.mxu0
    %v5972 = vsel %vm702, %v5722, 0
    %5974 = vmatprep.subr.bf16.mxu0 %v828
    %5975 = vmatpush1.bf16.msra.mxu0 %v827
    %5976 = vmatprep.subr.bf16.mxu0 %v831
    %5977 = vmatpush1.bf16.msra.mxu0 %v830
    %5978 = vmatprep.subr.bf16.mxu0 %v834
    %5979 = vmatpush1.bf16.msra.mxu0 %v833
    %5980 = vmatprep.subr.bf16.mxu0 %v837
    %5981 = vmatpush1.bf16.msra.mxu0 %v836
    %5982 = vmatprep.subr.bf16.mxu0 0
    %5983 = vmatpush1.bf16.msra.mxu0 0
    %5984 = vmatprep.subr.bf16.mxu0 0
    %5985 = vmatpush1.bf16.msra.mxu0 0
    %5986 = vmatprep.subr.bf16.mxu0 0
    %5987 = vmatpush1.bf16.msra.mxu0 0
    %5988 = vmatprep.subr.bf16.mxu0 0
    %5989 = vmatpush1.bf16.msra.mxu0 0
    %5990 = vmatprep.subr.bf16.mxu0 0
    %5991 = vmatpush1.bf16.msra.mxu0 0
    %5992 = vmatprep.subr.bf16.mxu0 0
    %5993 = vmatpush1.bf16.msra.mxu0 0
    %5994 = vmatprep.subr.bf16.mxu0 0
    %5995 = vmatpush1.bf16.msra.mxu0 0
    %5996 = vmatprep.subr.bf16.mxu0 0
    %5997 = vmatpush1.bf16.msra.mxu0 0
    %5998 = vmatprep.subr.bf16.mxu0 0
    %5999 = vmatpush1.bf16.msra.mxu0 0
    %6000 = vmatprep.subr.bf16.mxu0 0
    %6001 = vmatpush1.bf16.msra.mxu0 0
    %6002 = vmatprep.subr.bf16.mxu0 0
    %6003 = vmatpush1.bf16.msra.mxu0 0
    %6004 = vmatprep.subr.bf16.mxu0 0
    %6005 = vmatpush1.bf16.msra.mxu0 0
    %6006 = vmatprep.mubr.bf16.mxu0 0
    %6007 = vmatmul.mubr.bf16.gmra.mrb[0].mxu0 %v5972
    %v6008 = vpop.f32.mrb[0].mxu0
    %v6009 = vadd.f32 %v210, %v6008
    %v6010 = vpop.f32.mrb[0].mxu0
    %v6011 = vadd.f32 %v211, %v6010
    %v6012 = vpop.f32.mrb[0].mxu0
    %v6013 = vpop.f32.mrb[0].mxu0
    %6014 = vdwg.mxu0
    %6015 = vmatprep.subr.bf16.mxu0 0
    %6016 = vmatpush1.bf16.msra.mxu0 %v829
    %6017 = vmatprep.subr.bf16.mxu0 0
    %6018 = vmatpush1.bf16.msra.mxu0 %v832
    %6019 = vmatprep.subr.bf16.mxu0 0
    %6020 = vmatpush1.bf16.msra.mxu0 %v835
    %6021 = vmatprep.subr.bf16.mxu0 0
    %6022 = vmatpush1.bf16.msra.mxu0 %v838
    %6023 = vmatprep.subr.bf16.mxu0 0
    %6024 = vmatpush1.bf16.msra.mxu0 0
    %6025 = vmatprep.subr.bf16.mxu0 0
    %6026 = vmatpush1.bf16.msra.mxu0 0
    %6027 = vmatprep.subr.bf16.mxu0 0
    %6028 = vmatpush1.bf16.msra.mxu0 0
    %6029 = vmatprep.subr.bf16.mxu0 0
    %6030 = vmatpush1.bf16.msra.mxu0 0
    %6031 = vmatprep.subr.bf16.mxu0 0
    %6032 = vmatpush1.bf16.msra.mxu0 0
    %6033 = vmatprep.subr.bf16.mxu0 0
    %6034 = vmatpush1.bf16.msra.mxu0 0
    %6035 = vmatprep.subr.bf16.mxu0 0
    %6036 = vmatpush1.bf16.msra.mxu0 0
    %6037 = vmatprep.subr.bf16.mxu0 0
    %6038 = vmatpush1.bf16.msra.mxu0 0
    %6039 = vmatprep.subr.bf16.mxu0 0
    %6040 = vmatpush1.bf16.msra.mxu0 0
    %6041 = vmatprep.subr.bf16.mxu0 0
    %6042 = vmatpush1.bf16.msra.mxu0 0
    %6043 = vmatprep.subr.bf16.mxu0 0
    %6044 = vmatpush1.bf16.msra.mxu0 0
    %6045 = vmatprep.subr.bf16.mxu0 0
    %6046 = vmatpush1.bf16.msra.mxu0 0
    %6047 = vmatprep.mubr.bf16.mxu0 0
    %6048 = vmatmul.mubr.bf16.gmra.mrb[0].mxu0 %v5972
    %v6049 = vpop.f32.mrb[0].mxu0
    %v6050 = vadd.f32 %v212, %v6049
    %v6051 = vpop.f32.mrb[0].mxu0
    %v6052 = vpop.f32.mrb[0].mxu0
    %v6053 = vpop.f32.mrb[0].mxu0
    %6054 = vdwg.mxu0
    %v6055 = vadd.f32 %v5925, %v5759
    %v6056 = vxor.u32 %v6055, 2147483648
    %v6057 = vmul.f32 %v6056, 1.442695
    %v6058 = vpow.pop %v6057
    %v6059 = vadd.f32 %v6058, 1.0
    %v6060 = vrcp.pop %v6059
    %v6061 = vmul.f32 1.0, %v6060
    %v6062 = vadd.f32 %v5927, %v5761
    %v6063 = vxor.u32 %v6062, 2147483648
    %v6064 = vmul.f32 %v6063, 1.442695
    %v6065 = vpow.pop %v6064
    %v6066 = vadd.f32 %v6065, 1.0
    %v6067 = vrcp.pop %v6066
    %v6068 = vmul.f32 1.0, %v6067
    %v6069 = vmul.f32 %v6061, %v5800
    %v6070 = vadd.f32 %v5966, %v6069
    %v6071 = vtanh.pop %v6070
    %v6072 = vsub.f32 %v5717, %v6071
    %v6073 = vmul.f32 %v6068, %v6072
    %v6074 = vadd.f32 %v6071, %v6073
    %v6075 = vadd.f32 %v6009, %v5841
    %v6076 = vxor.u32 %v6075, 2147483648
    %v6077 = vmul.f32 %v6076, 1.442695
    %v6078 = vpow.pop %v6077
    %v6079 = vadd.f32 %v6078, 1.0
    %v6080 = vrcp.pop %v6079
    %v6081 = vmul.f32 1.0, %v6080
    %v6082 = vadd.f32 %v6011, %v5843
    %v6083 = vxor.u32 %v6082, 2147483648
    %v6084 = vmul.f32 %v6083, 1.442695
    %v6085 = vpow.pop %v6084
    %v6086 = vadd.f32 %v6085, 1.0
    %v6087 = vrcp.pop %v6086
    %v6088 = vmul.f32 1.0, %v6087
    %v6089 = vmul.f32 %v6081, %v5882
    %v6090 = vadd.f32 %v6050, %v6089
    %v6091 = vtanh.pop %v6090
    %v6092 = vsub.f32 %v5718, %v6091
    %v6093 = vmul.f32 %v6088, %v6092
    %v6094 = vadd.f32 %v6091, %v6093
    %6095 = vst [vmem:[#allocation2] sm:$0xff] %v6074
    %6096 = vst [vmem:[#allocation3] sm:$0xff] %v6094
    %v6098 = vcombine.high %v6074, %v6074
    %v6100 = vunpack.c.l.s4 1966171168
    %v6101 = vunpack.c.0.s8 %v6100
    %v6102 = vlaneseq
    %v6103 = vshrl.u32 %v6102, 7
    %v6104 = vsub.s32 %v6101, %v6103
    %v6105 = vrot.slane %v6074, %v6104
    %v6107 = vunpack.c.l.s4 1966171168
    %v6108 = vunpack.c.0.s8 %v6107
    %v6109 = vlaneseq
    %v6110 = vshrl.u32 %v6109, 7
    %v6111 = vsub.s32 %v6108, %v6110
    %v6112 = vrot.slane %v6098, %v6111
    %v6113 = vcombine.high %v6105, %v6105
    %v6114 = vcombine.high %v6112, %v6112
    %v6116 = vunpack.c.l.s4 1966171168
    %v6117 = vunpack.c.0.s8 %v6116
    %v6118 = vlaneseq
    %v6119 = vshrl.u32 %v6118, 7
    %v6120 = vsub.s32 %v6117, %v6119
    %v6121 = vrot.slane %v6105, %v6120
    %v6123 = vunpack.c.l.s4 1966171168
    %v6124 = vunpack.c.0.s8 %v6123
    %v6125 = vlaneseq
    %v6126 = vshrl.u32 %v6125, 7
    %v6127 = vsub.s32 %v6124, %v6126
    %v6128 = vrot.slane %v6112, %v6127
    %v6130 = vunpack.c.l.s4 1966171168
    %v6131 = vunpack.c.0.s8 %v6130
    %v6132 = vlaneseq
    %v6133 = vshrl.u32 %v6132, 7
    %v6134 = vsub.s32 %v6131, %v6133
    %v6135 = vrot.slane %v6113, %v6134
    %v6137 = vunpack.c.l.s4 1966171168
    %v6138 = vunpack.c.0.s8 %v6137
    %v6139 = vlaneseq
    %v6140 = vshrl.u32 %v6139, 7
    %v6141 = vsub.s32 %v6138, %v6140
    %v6142 = vrot.slane %v6114, %v6141
    %v6143 = vcombine.high %v6121, %v6121
    %v6144 = vcombine.high %v6128, %v6128
    %v6145 = vcombine.high %v6135, %v6135
    %v6146 = vcombine.high %v6142, %v6142
    %6155 = vst [vmem:[#allocation13 + $0xa] sm:$0x1] %v6121
    %6156 = vst [vmem:[#allocation13 + $0x1a] sm:$0x1] %v6135
    %6157 = vst [vmem:[#allocation13 + $0x2a] sm:$0x1] %v6143
    %6158 = vst [vmem:[#allocation13 + $0x3a] sm:$0x1] %v6145
    %6159 = vst [vmem:[#allocation13 + $0x4a] sm:$0x1] %v6128
    %6160 = vst [vmem:[#allocation13 + $0x5a] sm:$0x1] %v6142
    %6161 = vst [vmem:[#allocation13 + $0x6a] sm:$0x1] %v6144
    %6162 = vst [vmem:[#allocation13 + $0x7a] sm:$0x1] %v6146
    %v6164 = vcombine.high %v6094, %v6094
    %v6166 = vunpack.c.l.s4 1966171168
    %v6167 = vunpack.c.0.s8 %v6166
    %v6168 = vlaneseq
    %v6169 = vshrl.u32 %v6168, 7
    %v6170 = vsub.s32 %v6167, %v6169
    %v6171 = vrot.slane %v6094, %v6170
    %v6173 = vunpack.c.l.s4 1966171168
    %v6174 = vunpack.c.0.s8 %v6173
    %v6175 = vlaneseq
    %v6176 = vshrl.u32 %v6175, 7
    %v6177 = vsub.s32 %v6174, %v6176
    %v6178 = vrot.slane %v6164, %v6177
    %v6179 = vcombine.high %v6171, %v6171
    %v6180 = vcombine.high %v6178, %v6178
    %v6182 = vunpack.c.l.s4 1966171168
    %v6183 = vunpack.c.0.s8 %v6182
    %v6184 = vlaneseq
    %v6185 = vshrl.u32 %v6184, 7
    %v6186 = vsub.s32 %v6183, %v6185
    %v6187 = vrot.slane %v6171, %v6186
    %v6189 = vunpack.c.l.s4 1966171168
    %v6190 = vunpack.c.0.s8 %v6189
    %v6191 = vlaneseq
    %v6192 = vshrl.u32 %v6191, 7
    %v6193 = vsub.s32 %v6190, %v6192
    %v6194 = vrot.slane %v6178, %v6193
    %v6196 = vunpack.c.l.s4 1966171168
    %v6197 = vunpack.c.0.s8 %v6196
    %v6198 = vlaneseq
    %v6199 = vshrl.u32 %v6198, 7
    %v6200 = vsub.s32 %v6197, %v6199
    %v6201 = vrot.slane %v6179, %v6200
    %v6203 = vunpack.c.l.s4 1966171168
    %v6204 = vunpack.c.0.s8 %v6203
    %v6205 = vlaneseq
    %v6206 = vshrl.u32 %v6205, 7
    %v6207 = vsub.s32 %v6204, %v6206
    %v6208 = vrot.slane %v6180, %v6207
    %v6209 = vcombine.high %v6187, %v6187
    %v6210 = vcombine.high %v6194, %v6194
    %v6211 = vcombine.high %v6201, %v6201
    %v6212 = vcombine.high %v6208, %v6208
    %6221 = vst [vmem:[#allocation14 + $0x5] sm:$0x1] %v6187
    %6222 = vst [vmem:[#allocation14 + $0x15] sm:$0x1] %v6201
    %6223 = vst [vmem:[#allocation14 + $0x25] sm:$0x1] %v6209
    %6224 = vst [vmem:[#allocation14 + $0x35] sm:$0x1] %v6211
    %6225 = vst [vmem:[#allocation14 + $0x45] sm:$0x1] %v6194
    %6226 = vst [vmem:[#allocation14 + $0x55] sm:$0x1] %v6208
    %6227 = vst [vmem:[#allocation14 + $0x65] sm:$0x1] %v6210
    %6228 = vst [vmem:[#allocation14 + $0x75] sm:$0x1] %v6212
    %v6229 = vld [vmem:[#allocation2] sm:$0xff]
    %v6230 = vld [vmem:[#allocation3] sm:$0xff]
    %s6231 = scalar_lea.vmem [#allocation4], 44
    %v6232 = vld [vmem:[%s6231] sm:$0xf]
    %s6233 = scalar_lea.vmem [#allocation7], 16
    %v6234 = vld [vmem:[%s6233] sm:$0xf]
    %v6235 = vpack.c.bf16 %v6229, %v6229
    %6236 = vmatprep.subr.bf16.mxu0 %v300
    %6237 = vmatpush1.bf16.msra.mxu0 %v299
    %6238 = vmatprep.subr.bf16.mxu0 %v303
    %6239 = vmatpush1.bf16.msra.mxu0 %v302
    %6240 = vmatprep.subr.bf16.mxu0 %v306
    %6241 = vmatpush1.bf16.msra.mxu0 %v305
    %6242 = vmatprep.subr.bf16.mxu0 %v309
    %6243 = vmatpush1.bf16.msra.mxu0 %v308
    %6244 = vmatprep.subr.bf16.mxu0 %v312
    %6245 = vmatpush1.bf16.msra.mxu0 %v311
    %6246 = vmatprep.subr.bf16.mxu0 %v315
    %6247 = vmatpush1.bf16.msra.mxu0 %v314
    %6248 = vmatprep.subr.bf16.mxu0 %v318
    %6249 = vmatpush1.bf16.msra.mxu0 %v317
    %6250 = vmatprep.subr.bf16.mxu0 %v321
    %6251 = vmatpush1.bf16.msra.mxu0 %v320
    %6252 = vmatprep.subr.bf16.mxu0 0
    %6253 = vmatpush1.bf16.msra.mxu0 0
    %6254 = vmatprep.subr.bf16.mxu0 0
    %6255 = vmatpush1.bf16.msra.mxu0 0
    %6256 = vmatprep.subr.bf16.mxu0 0
    %6257 = vmatpush1.bf16.msra.mxu0 0
    %6258 = vmatprep.subr.bf16.mxu0 0
    %6259 = vmatpush1.bf16.msra.mxu0 0
    %6260 = vmatprep.subr.bf16.mxu0 0
    %6261 = vmatpush1.bf16.msra.mxu0 0
    %6262 = vmatprep.subr.bf16.mxu0 0
    %6263 = vmatpush1.bf16.msra.mxu0 0
    %6264 = vmatprep.subr.bf16.mxu0 0
    %6265 = vmatpush1.bf16.msra.mxu0 0
    %6266 = vmatprep.subr.bf16.mxu0 0
    %6267 = vmatpush1.bf16.msra.mxu0 0
    %6268 = vmatprep.mubr.bf16.mxu0 0
    %6269 = vmatmul.mubr.bf16.gmra.mrb[0].mxu0 %v6235
    %v6270 = vpop.f32.mrb[0].mxu0
    %v6271 = vadd.f32 0.0, %v6270
    %v6272 = vpop.f32.mrb[0].mxu0
    %v6273 = vadd.f32 0.0, %v6272
    %v6274 = vpop.f32.mrb[0].mxu0
    %v6275 = vpop.f32.mrb[0].mxu0
    %6276 = vdwg.mxu0
    %6277 = vmatprep.subr.bf16.mxu0 0
    %6278 = vmatpush1.bf16.msra.mxu0 %v301
    %6279 = vmatprep.subr.bf16.mxu0 0
    %6280 = vmatpush1.bf16.msra.mxu0 %v304
    %6281 = vmatprep.subr.bf16.mxu0 0
    %6282 = vmatpush1.bf16.msra.mxu0 %v307
    %6283 = vmatprep.subr.bf16.mxu0 0
    %6284 = vmatpush1.bf16.msra.mxu0 %v310
    %6285 = vmatprep.subr.bf16.mxu0 0
    %6286 = vmatpush1.bf16.msra.mxu0 %v313
    %6287 = vmatprep.subr.bf16.mxu0 0
    %6288 = vmatpush1.bf16.msra.mxu0 %v316
    %6289 = vmatprep.subr.bf16.mxu0 0
    %6290 = vmatpush1.bf16.msra.mxu0 %v319
    %6291 = vmatprep.subr.bf16.mxu0 0
    %6292 = vmatpush1.bf16.msra.mxu0 %v322
    %6293 = vmatprep.subr.bf16.mxu0 0
    %6294 = vmatpush1.bf16.msra.mxu0 0
    %6295 = vmatprep.subr.bf16.mxu0 0
    %6296 = vmatpush1.bf16.msra.mxu0 0
    %6297 = vmatprep.subr.bf16.mxu0 0
    %6298 = vmatpush1.bf16.msra.mxu0 0
    %6299 = vmatprep.subr.bf16.mxu0 0
    %6300 = vmatpush1.bf16.msra.mxu0 0
    %6301 = vmatprep.subr.bf16.mxu0 0
    %6302 = vmatpush1.bf16.msra.mxu0 0
    %6303 = vmatprep.subr.bf16.mxu0 0
    %6304 = vmatpush1.bf16.msra.mxu0 0
    %6305 = vmatprep.subr.bf16.mxu0 0
    %6306 = vmatpush1.bf16.msra.mxu0 0
    %6307 = vmatprep.subr.bf16.mxu0 0
    %6308 = vmatpush1.bf16.msra.mxu0 0
    %6309 = vmatprep.mubr.bf16.mxu0 0
    %6310 = vmatmul.mubr.bf16.gmra.mrb[0].mxu0 %v6235
    %v6311 = vpop.f32.mrb[0].mxu0
    %v6312 = vadd.f32 0.0, %v6311
    %v6313 = vpop.f32.mrb[0].mxu0
    %v6314 = vpop.f32.mrb[0].mxu0
    %v6315 = vpop.f32.mrb[0].mxu0
    %6316 = vdwg.mxu0
    %v6317 = vpack.c.bf16 %v6230, %v6230
    %6318 = vmatprep.subr.bf16.mxu0 %v510
    %6319 = vmatpush1.bf16.msra.mxu0 %v509
    %6320 = vmatprep.subr.bf16.mxu0 %v513
    %6321 = vmatpush1.bf16.msra.mxu0 %v512
    %6322 = vmatprep.subr.bf16.mxu0 %v516
    %6323 = vmatpush1.bf16.msra.mxu0 %v515
    %6324 = vmatprep.subr.bf16.mxu0 %v519
    %6325 = vmatpush1.bf16.msra.mxu0 %v518
    %6326 = vmatprep.subr.bf16.mxu0 %v522
    %6327 = vmatpush1.bf16.msra.mxu0 %v521
    %6328 = vmatprep.subr.bf16.mxu0 %v525
    %6329 = vmatpush1.bf16.msra.mxu0 %v524
    %6330 = vmatprep.subr.bf16.mxu0 %v528
    %6331 = vmatpush1.bf16.msra.mxu0 %v527
    %6332 = vmatprep.subr.bf16.mxu0 %v531
    %6333 = vmatpush1.bf16.msra.mxu0 %v530
    %6334 = vmatprep.subr.bf16.mxu0 0
    %6335 = vmatpush1.bf16.msra.mxu0 0
    %6336 = vmatprep.subr.bf16.mxu0 0
    %6337 = vmatpush1.bf16.msra.mxu0 0
    %6338 = vmatprep.subr.bf16.mxu0 0
    %6339 = vmatpush1.bf16.msra.mxu0 0
    %6340 = vmatprep.subr.bf16.mxu0 0
    %6341 = vmatpush1.bf16.msra.mxu0 0
    %6342 = vmatprep.subr.bf16.mxu0 0
    %6343 = vmatpush1.bf16.msra.mxu0 0
    %6344 = vmatprep.subr.bf16.mxu0 0
    %6345 = vmatpush1.bf16.msra.mxu0 0
    %6346 = vmatprep.subr.bf16.mxu0 0
    %6347 = vmatpush1.bf16.msra.mxu0 0
    %6348 = vmatprep.subr.bf16.mxu0 0
    %6349 = vmatpush1.bf16.msra.mxu0 0
    %6350 = vmatprep.mubr.bf16.mxu0 0
    %6351 = vmatmul.mubr.bf16.gmra.mrb[0].mxu0 %v6317
    %v6352 = vpop.f32.mrb[0].mxu0
    %v6353 = vadd.f32 0.0, %v6352
    %v6354 = vpop.f32.mrb[0].mxu0
    %v6355 = vadd.f32 0.0, %v6354
    %v6356 = vpop.f32.mrb[0].mxu0
    %v6357 = vpop.f32.mrb[0].mxu0
    %6358 = vdwg.mxu0
    %6359 = vmatprep.subr.bf16.mxu0 0
    %6360 = vmatpush1.bf16.msra.mxu0 %v511
    %6361 = vmatprep.subr.bf16.mxu0 0
    %6362 = vmatpush1.bf16.msra.mxu0 %v514
    %6363 = vmatprep.subr.bf16.mxu0 0
    %6364 = vmatpush1.bf16.msra.mxu0 %v517
    %6365 = vmatprep.subr.bf16.mxu0 0
    %6366 = vmatpush1.bf16.msra.mxu0 %v520
    %6367 = vmatprep.subr.bf16.mxu0 0
    %6368 = vmatpush1.bf16.msra.mxu0 %v523
    %6369 = vmatprep.subr.bf16.mxu0 0
    %6370 = vmatpush1.bf16.msra.mxu0 %v526
    %6371 = vmatprep.subr.bf16.mxu0 0
    %6372 = vmatpush1.bf16.msra.mxu0 %v529
    %6373 = vmatprep.subr.bf16.mxu0 0
    %6374 = vmatpush1.bf16.msra.mxu0 %v532
    %6375 = vmatprep.subr.bf16.mxu0 0
    %6376 = vmatpush1.bf16.msra.mxu0 0
    %6377 = vmatprep.subr.bf16.mxu0 0
    %6378 = vmatpush1.bf16.msra.mxu0 0
    %6379 = vmatprep.subr.bf16.mxu0 0
    %6380 = vmatpush1.bf16.msra.mxu0 0
    %6381 = vmatprep.subr.bf16.mxu0 0
    %6382 = vmatpush1.bf16.msra.mxu0 0
    %6383 = vmatprep.subr.bf16.mxu0 0
    %6384 = vmatpush1.bf16.msra.mxu0 0
    %6385 = vmatprep.subr.bf16.mxu0 0
    %6386 = vmatpush1.bf16.msra.mxu0 0
    %6387 = vmatprep.subr.bf16.mxu0 0
    %6388 = vmatpush1.bf16.msra.mxu0 0
    %6389 = vmatprep.subr.bf16.mxu0 0
    %6390 = vmatpush1.bf16.msra.mxu0 0
    %6391 = vmatprep.mubr.bf16.mxu0 0
    %6392 = vmatmul.mubr.bf16.gmra.mrb[0].mxu0 %v6317
    %v6393 = vpop.f32.mrb[0].mxu0
    %v6394 = vadd.f32 0.0, %v6393
    %v6395 = vpop.f32.mrb[0].mxu0
    %v6396 = vpop.f32.mrb[0].mxu0
    %v6397 = vpop.f32.mrb[0].mxu0
    %6398 = vdwg.mxu0
    %v6400 = vsel %vm702, %v6232, 0
    %6402 = vmatprep.subr.bf16.mxu0 %v679
    %6403 = vmatpush1.bf16.msra.mxu0 %v678
    %6404 = vmatprep.subr.bf16.mxu0 %v682
    %6405 = vmatpush1.bf16.msra.mxu0 %v681
    %6406 = vmatprep.subr.bf16.mxu0 %v685
    %6407 = vmatpush1.bf16.msra.mxu0 %v684
    %6408 = vmatprep.subr.bf16.mxu0 %v688
    %6409 = vmatpush1.bf16.msra.mxu0 %v687
    %6410 = vmatprep.subr.bf16.mxu0 0
    %6411 = vmatpush1.bf16.msra.mxu0 0
    %6412 = vmatprep.subr.bf16.mxu0 0
    %6413 = vmatpush1.bf16.msra.mxu0 0
    %6414 = vmatprep.subr.bf16.mxu0 0
    %6415 = vmatpush1.bf16.msra.mxu0 0
    %6416 = vmatprep.subr.bf16.mxu0 0
    %6417 = vmatpush1.bf16.msra.mxu0 0
    %6418 = vmatprep.subr.bf16.mxu0 0
    %6419 = vmatpush1.bf16.msra.mxu0 0
    %6420 = vmatprep.subr.bf16.mxu0 0
    %6421 = vmatpush1.bf16.msra.mxu0 0
    %6422 = vmatprep.subr.bf16.mxu0 0
    %6423 = vmatpush1.bf16.msra.mxu0 0
    %6424 = vmatprep.subr.bf16.mxu0 0
    %6425 = vmatpush1.bf16.msra.mxu0 0
    %6426 = vmatprep.subr.bf16.mxu0 0
    %6427 = vmatpush1.bf16.msra.mxu0 0
    %6428 = vmatprep.subr.bf16.mxu0 0
    %6429 = vmatpush1.bf16.msra.mxu0 0
    %6430 = vmatprep.subr.bf16.mxu0 0
    %6431 = vmatpush1.bf16.msra.mxu0 0
    %6432 = vmatprep.subr.bf16.mxu0 0
    %6433 = vmatpush1.bf16.msra.mxu0 0
    %6434 = vmatprep.mubr.bf16.mxu0 0
    %6435 = vmatmul.mubr.bf16.gmra.mrb[0].mxu0 %v6400
    %v6436 = vpop.f32.mrb[0].mxu0
    %v6437 = vadd.f32 %v206, %v6436
    %v6438 = vpop.f32.mrb[0].mxu0
    %v6439 = vadd.f32 %v207, %v6438
    %v6440 = vpop.f32.mrb[0].mxu0
    %v6441 = vpop.f32.mrb[0].mxu0
    %6442 = vdwg.mxu0
    %6443 = vmatprep.subr.bf16.mxu0 0
    %6444 = vmatpush1.bf16.msra.mxu0 %v680
    %6445 = vmatprep.subr.bf16.mxu0 0
    %6446 = vmatpush1.bf16.msra.mxu0 %v683
    %6447 = vmatprep.subr.bf16.mxu0 0
    %6448 = vmatpush1.bf16.msra.mxu0 %v686
    %6449 = vmatprep.subr.bf16.mxu0 0
    %6450 = vmatpush1.bf16.msra.mxu0 %v689
    %6451 = vmatprep.subr.bf16.mxu0 0
    %6452 = vmatpush1.bf16.msra.mxu0 0
    %6453 = vmatprep.subr.bf16.mxu0 0
    %6454 = vmatpush1.bf16.msra.mxu0 0
    %6455 = vmatprep.subr.bf16.mxu0 0
    %6456 = vmatpush1.bf16.msra.mxu0 0
    %6457 = vmatprep.subr.bf16.mxu0 0
    %6458 = vmatpush1.bf16.msra.mxu0 0
    %6459 = vmatprep.subr.bf16.mxu0 0
    %6460 = vmatpush1.bf16.msra.mxu0 0
    %6461 = vmatprep.subr.bf16.mxu0 0
    %6462 = vmatpush1.bf16.msra.mxu0 0
    %6463 = vmatprep.subr.bf16.mxu0 0
    %6464 = vmatpush1.bf16.msra.mxu0 0
    %6465 = vmatprep.subr.bf16.mxu0 0
    %6466 = vmatpush1.bf16.msra.mxu0 0
    %6467 = vmatprep.subr.bf16.mxu0 0
    %6468 = vmatpush1.bf16.msra.mxu0 0
    %6469 = vmatprep.subr.bf16.mxu0 0
    %6470 = vmatpush1.bf16.msra.mxu0 0
    %6471 = vmatprep.subr.bf16.mxu0 0
    %6472 = vmatpush1.bf16.msra.mxu0 0
    %6473 = vmatprep.subr.bf16.mxu0 0
    %6474 = vmatpush1.bf16.msra.mxu0 0
    %6475 = vmatprep.mubr.bf16.mxu0 0
    %6476 = vmatmul.mubr.bf16.gmra.mrb[0].mxu0 %v6400
    %v6477 = vpop.f32.mrb[0].mxu0
    %v6478 = vadd.f32 %v208, %v6477
    %v6479 = vpop.f32.mrb[0].mxu0
    %v6480 = vpop.f32.mrb[0].mxu0
    %v6481 = vpop.f32.mrb[0].mxu0
    %6482 = vdwg.mxu0
    %v6484 = vsel %vm702, %v6234, 0
    %6486 = vmatprep.subr.bf16.mxu0 %v828
    %6487 = vmatpush1.bf16.msra.mxu0 %v827
    %6488 = vmatprep.subr.bf16.mxu0 %v831
    %6489 = vmatpush1.bf16.msra.mxu0 %v830
    %6490 = vmatprep.subr.bf16.mxu0 %v834
    %6491 = vmatpush1.bf16.msra.mxu0 %v833
    %6492 = vmatprep.subr.bf16.mxu0 %v837
    %6493 = vmatpush1.bf16.msra.mxu0 %v836
    %6494 = vmatprep.subr.bf16.mxu0 0
    %6495 = vmatpush1.bf16.msra.mxu0 0
    %6496 = vmatprep.subr.bf16.mxu0 0
    %6497 = vmatpush1.bf16.msra.mxu0 0
    %6498 = vmatprep.subr.bf16.mxu0 0
    %6499 = vmatpush1.bf16.msra.mxu0 0
    %6500 = vmatprep.subr.bf16.mxu0 0
    %6501 = vmatpush1.bf16.msra.mxu0 0
    %6502 = vmatprep.subr.bf16.mxu0 0
    %6503 = vmatpush1.bf16.msra.mxu0 0
    %6504 = vmatprep.subr.bf16.mxu0 0
    %6505 = vmatpush1.bf16.msra.mxu0 0
    %6506 = vmatprep.subr.bf16.mxu0 0
    %6507 = vmatpush1.bf16.msra.mxu0 0
    %6508 = vmatprep.subr.bf16.mxu0 0
    %6509 = vmatpush1.bf16.msra.mxu0 0
    %6510 = vmatprep.subr.bf16.mxu0 0
    %6511 = vmatpush1.bf16.msra.mxu0 0
    %6512 = vmatprep.subr.bf16.mxu0 0
    %6513 = vmatpush1.bf16.msra.mxu0 0
    %6514 = vmatprep.subr.bf16.mxu0 0
    %6515 = vmatpush1.bf16.msra.mxu0 0
    %6516 = vmatprep.subr.bf16.mxu0 0
    %6517 = vmatpush1.bf16.msra.mxu0 0
    %6518 = vmatprep.mubr.bf16.mxu0 0
    %6519 = vmatmul.mubr.bf16.gmra.mrb[0].mxu0 %v6484
    %v6520 = vpop.f32.mrb[0].mxu0
    %v6521 = vadd.f32 %v210, %v6520
    %v6522 = vpop.f32.mrb[0].mxu0
    %v6523 = vadd.f32 %v211, %v6522
    %v6524 = vpop.f32.mrb[0].mxu0
    %v6525 = vpop.f32.mrb[0].mxu0
    %6526 = vdwg.mxu0
    %6527 = vmatprep.subr.bf16.mxu0 0
    %6528 = vmatpush1.bf16.msra.mxu0 %v829
    %6529 = vmatprep.subr.bf16.mxu0 0
    %6530 = vmatpush1.bf16.msra.mxu0 %v832
    %6531 = vmatprep.subr.bf16.mxu0 0
    %6532 = vmatpush1.bf16.msra.mxu0 %v835
    %6533 = vmatprep.subr.bf16.mxu0 0
    %6534 = vmatpush1.bf16.msra.mxu0 %v838
    %6535 = vmatprep.subr.bf16.mxu0 0
    %6536 = vmatpush1.bf16.msra.mxu0 0
    %6537 = vmatprep.subr.bf16.mxu0 0
    %6538 = vmatpush1.bf16.msra.mxu0 0
    %6539 = vmatprep.subr.bf16.mxu0 0
    %6540 = vmatpush1.bf16.msra.mxu0 0
    %6541 = vmatprep.subr.bf16.mxu0 0
    %6542 = vmatpush1.bf16.msra.mxu0 0
    %6543 = vmatprep.subr.bf16.mxu0 0
    %6544 = vmatpush1.bf16.msra.mxu0 0
    %6545 = vmatprep.subr.bf16.mxu0 0
    %6546 = vmatpush1.bf16.msra.mxu0 0
    %6547 = vmatprep.subr.bf16.mxu0 0
    %6548 = vmatpush1.bf16.msra.mxu0 0
    %6549 = vmatprep.subr.bf16.mxu0 0
    %6550 = vmatpush1.bf16.msra.mxu0 0
    %6551 = vmatprep.subr.bf16.mxu0 0
    %6552 = vmatpush1.bf16.msra.mxu0 0
    %6553 = vmatprep.subr.bf16.mxu0 0
    %6554 = vmatpush1.bf16.msra.mxu0 0
    %6555 = vmatprep.subr.bf16.mxu0 0
    %6556 = vmatpush1.bf16.msra.mxu0 0
    %6557 = vmatprep.subr.bf16.mxu0 0
    %6558 = vmatpush1.bf16.msra.mxu0 0
    %6559 = vmatprep.mubr.bf16.mxu0 0
    %6560 = vmatmul.mubr.bf16.gmra.mrb[0].mxu0 %v6484
    %v6561 = vpop.f32.mrb[0].mxu0
    %v6562 = vadd.f32 %v212, %v6561
    %v6563 = vpop.f32.mrb[0].mxu0
    %v6564 = vpop.f32.mrb[0].mxu0
    %v6565 = vpop.f32.mrb[0].mxu0
    %6566 = vdwg.mxu0
    %v6567 = vadd.f32 %v6437, %v6271
    %v6568 = vxor.u32 %v6567, 2147483648
    %v6569 = vmul.f32 %v6568, 1.442695
    %v6570 = vpow.pop %v6569
    %v6571 = vadd.f32 %v6570, 1.0
    %v6572 = vrcp.pop %v6571
    %v6573 = vmul.f32 1.0, %v6572
    %v6574 = vadd.f32 %v6439, %v6273
    %v6575 = vxor.u32 %v6574, 2147483648
    %v6576 = vmul.f32 %v6575, 1.442695
    %v6577 = vpow.pop %v6576
    %v6578 = vadd.f32 %v6577, 1.0
    %v6579 = vrcp.pop %v6578
    %v6580 = vmul.f32 1.0, %v6579
    %v6581 = vmul.f32 %v6573, %v6312
    %v6582 = vadd.f32 %v6478, %v6581
    %v6583 = vtanh.pop %v6582
    %v6584 = vsub.f32 %v6229, %v6583
    %v6585 = vmul.f32 %v6580, %v6584
    %v6586 = vadd.f32 %v6583, %v6585
    %v6587 = vadd.f32 %v6521, %v6353
    %v6588 = vxor.u32 %v6587, 2147483648
    %v6589 = vmul.f32 %v6588, 1.442695
    %v6590 = vpow.pop %v6589
    %v6591 = vadd.f32 %v6590, 1.0
    %v6592 = vrcp.pop %v6591
    %v6593 = vmul.f32 1.0, %v6592
    %v6594 = vadd.f32 %v6523, %v6355
    %v6595 = vxor.u32 %v6594, 2147483648
    %v6596 = vmul.f32 %v6595, 1.442695
    %v6597 = vpow.pop %v6596
    %v6598 = vadd.f32 %v6597, 1.0
    %v6599 = vrcp.pop %v6598
    %v6600 = vmul.f32 1.0, %v6599
    %v6601 = vmul.f32 %v6593, %v6394
    %v6602 = vadd.f32 %v6562, %v6601
    %v6603 = vtanh.pop %v6602
    %v6604 = vsub.f32 %v6230, %v6603
    %v6605 = vmul.f32 %v6600, %v6604
    %v6606 = vadd.f32 %v6603, %v6605
    %6607 = vst [vmem:[#allocation2] sm:$0xff] %v6586
    %6608 = vst [vmem:[#allocation3] sm:$0xff] %v6606
    %v6610 = vcombine.high %v6586, %v6586
    %v6612 = vunpack.c.l.s4 1966171168
    %v6613 = vunpack.c.0.s8 %v6612
    %v6614 = vlaneseq
    %v6615 = vshrl.u32 %v6614, 7
    %v6616 = vsub.s32 %v6613, %v6615
    %v6617 = vrot.slane %v6586, %v6616
    %v6619 = vunpack.c.l.s4 1966171168
    %v6620 = vunpack.c.0.s8 %v6619
    %v6621 = vlaneseq
    %v6622 = vshrl.u32 %v6621, 7
    %v6623 = vsub.s32 %v6620, %v6622
    %v6624 = vrot.slane %v6610, %v6623
    %v6625 = vcombine.high %v6617, %v6617
    %v6626 = vcombine.high %v6624, %v6624
    %v6628 = vunpack.c.l.s4 1966171168
    %v6629 = vunpack.c.0.s8 %v6628
    %v6630 = vlaneseq
    %v6631 = vshrl.u32 %v6630, 7
    %v6632 = vsub.s32 %v6629, %v6631
    %v6633 = vrot.slane %v6617, %v6632
    %v6635 = vunpack.c.l.s4 1966171168
    %v6636 = vunpack.c.0.s8 %v6635
    %v6637 = vlaneseq
    %v6638 = vshrl.u32 %v6637, 7
    %v6639 = vsub.s32 %v6636, %v6638
    %v6640 = vrot.slane %v6624, %v6639
    %v6642 = vunpack.c.l.s4 1966171168
    %v6643 = vunpack.c.0.s8 %v6642
    %v6644 = vlaneseq
    %v6645 = vshrl.u32 %v6644, 7
    %v6646 = vsub.s32 %v6643, %v6645
    %v6647 = vrot.slane %v6625, %v6646
    %v6649 = vunpack.c.l.s4 1966171168
    %v6650 = vunpack.c.0.s8 %v6649
    %v6651 = vlaneseq
    %v6652 = vshrl.u32 %v6651, 7
    %v6653 = vsub.s32 %v6650, %v6652
    %v6654 = vrot.slane %v6626, %v6653
    %v6655 = vcombine.high %v6633, %v6633
    %v6656 = vcombine.high %v6640, %v6640
    %v6657 = vcombine.high %v6647, %v6647
    %v6658 = vcombine.high %v6654, %v6654
    %6667 = vst [vmem:[#allocation13 + $0xb] sm:$0x1] %v6633
    %6668 = vst [vmem:[#allocation13 + $0x1b] sm:$0x1] %v6647
    %6669 = vst [vmem:[#allocation13 + $0x2b] sm:$0x1] %v6655
    %6670 = vst [vmem:[#allocation13 + $0x3b] sm:$0x1] %v6657
    %6671 = vst [vmem:[#allocation13 + $0x4b] sm:$0x1] %v6640
    %6672 = vst [vmem:[#allocation13 + $0x5b] sm:$0x1] %v6654
    %6673 = vst [vmem:[#allocation13 + $0x6b] sm:$0x1] %v6656
    %6674 = vst [vmem:[#allocation13 + $0x7b] sm:$0x1] %v6658
    %v6676 = vcombine.high %v6606, %v6606
    %v6678 = vunpack.c.l.s4 1966171168
    %v6679 = vunpack.c.0.s8 %v6678
    %v6680 = vlaneseq
    %v6681 = vshrl.u32 %v6680, 7
    %v6682 = vsub.s32 %v6679, %v6681
    %v6683 = vrot.slane %v6606, %v6682
    %v6685 = vunpack.c.l.s4 1966171168
    %v6686 = vunpack.c.0.s8 %v6685
    %v6687 = vlaneseq
    %v6688 = vshrl.u32 %v6687, 7
    %v6689 = vsub.s32 %v6686, %v6688
    %v6690 = vrot.slane %v6676, %v6689
    %v6691 = vcombine.high %v6683, %v6683
    %v6692 = vcombine.high %v6690, %v6690
    %v6694 = vunpack.c.l.s4 1966171168
    %v6695 = vunpack.c.0.s8 %v6694
    %v6696 = vlaneseq
    %v6697 = vshrl.u32 %v6696, 7
    %v6698 = vsub.s32 %v6695, %v6697
    %v6699 = vrot.slane %v6683, %v6698
    %v6701 = vunpack.c.l.s4 1966171168
    %v6702 = vunpack.c.0.s8 %v6701
    %v6703 = vlaneseq
    %v6704 = vshrl.u32 %v6703, 7
    %v6705 = vsub.s32 %v6702, %v6704
    %v6706 = vrot.slane %v6690, %v6705
    %v6708 = vunpack.c.l.s4 1966171168
    %v6709 = vunpack.c.0.s8 %v6708
    %v6710 = vlaneseq
    %v6711 = vshrl.u32 %v6710, 7
    %v6712 = vsub.s32 %v6709, %v6711
    %v6713 = vrot.slane %v6691, %v6712
    %v6715 = vunpack.c.l.s4 1966171168
    %v6716 = vunpack.c.0.s8 %v6715
    %v6717 = vlaneseq
    %v6718 = vshrl.u32 %v6717, 7
    %v6719 = vsub.s32 %v6716, %v6718
    %v6720 = vrot.slane %v6692, %v6719
    %v6721 = vcombine.high %v6699, %v6699
    %v6722 = vcombine.high %v6706, %v6706
    %v6723 = vcombine.high %v6713, %v6713
    %v6724 = vcombine.high %v6720, %v6720
    %6733 = vst [vmem:[#allocation14 + $0x4] sm:$0x1] %v6699
    %6734 = vst [vmem:[#allocation14 + $0x14] sm:$0x1] %v6713
    %6735 = vst [vmem:[#allocation14 + $0x24] sm:$0x1] %v6721
    %6736 = vst [vmem:[#allocation14 + $0x34] sm:$0x1] %v6723
    %6737 = vst [vmem:[#allocation14 + $0x44] sm:$0x1] %v6706
    %6738 = vst [vmem:[#allocation14 + $0x54] sm:$0x1] %v6720
    %6739 = vst [vmem:[#allocation14 + $0x64] sm:$0x1] %v6722
    %6740 = vst [vmem:[#allocation14 + $0x74] sm:$0x1] %v6724
    %v6741 = vld [vmem:[#allocation2] sm:$0xff]
    %v6742 = vld [vmem:[#allocation3] sm:$0xff]
    %s6743 = scalar_lea.vmem [#allocation4], 48
    %v6744 = vld [vmem:[%s6743] sm:$0xf]
    %s6745 = scalar_lea.vmem [#allocation7], 12
    %v6746 = vld [vmem:[%s6745] sm:$0xf]
    %v6747 = vpack.c.bf16 %v6741, %v6741
    %6748 = vmatprep.subr.bf16.mxu0 %v300
    %6749 = vmatpush1.bf16.msra.mxu0 %v299
    %6750 = vmatprep.subr.bf16.mxu0 %v303
    %6751 = vmatpush1.bf16.msra.mxu0 %v302
    %6752 = vmatprep.subr.bf16.mxu0 %v306
    %6753 = vmatpush1.bf16.msra.mxu0 %v305
    %6754 = vmatprep.subr.bf16.mxu0 %v309
    %6755 = vmatpush1.bf16.msra.mxu0 %v308
    %6756 = vmatprep.subr.bf16.mxu0 %v312
    %6757 = vmatpush1.bf16.msra.mxu0 %v311
    %6758 = vmatprep.subr.bf16.mxu0 %v315
    %6759 = vmatpush1.bf16.msra.mxu0 %v314
    %6760 = vmatprep.subr.bf16.mxu0 %v318
    %6761 = vmatpush1.bf16.msra.mxu0 %v317
    %6762 = vmatprep.subr.bf16.mxu0 %v321
    %6763 = vmatpush1.bf16.msra.mxu0 %v320
    %6764 = vmatprep.subr.bf16.mxu0 0
    %6765 = vmatpush1.bf16.msra.mxu0 0
    %6766 = vmatprep.subr.bf16.mxu0 0
    %6767 = vmatpush1.bf16.msra.mxu0 0
    %6768 = vmatprep.subr.bf16.mxu0 0
    %6769 = vmatpush1.bf16.msra.mxu0 0
    %6770 = vmatprep.subr.bf16.mxu0 0
    %6771 = vmatpush1.bf16.msra.mxu0 0
    %6772 = vmatprep.subr.bf16.mxu0 0
    %6773 = vmatpush1.bf16.msra.mxu0 0
    %6774 = vmatprep.subr.bf16.mxu0 0
    %6775 = vmatpush1.bf16.msra.mxu0 0
    %6776 = vmatprep.subr.bf16.mxu0 0
    %6777 = vmatpush1.bf16.msra.mxu0 0
    %6778 = vmatprep.subr.bf16.mxu0 0
    %6779 = vmatpush1.bf16.msra.mxu0 0
    %6780 = vmatprep.mubr.bf16.mxu0 0
    %6781 = vmatmul.mubr.bf16.gmra.mrb[0].mxu0 %v6747
    %v6782 = vpop.f32.mrb[0].mxu0
    %v6783 = vadd.f32 0.0, %v6782
    %v6784 = vpop.f32.mrb[0].mxu0
    %v6785 = vadd.f32 0.0, %v6784
    %v6786 = vpop.f32.mrb[0].mxu0
    %v6787 = vpop.f32.mrb[0].mxu0
    %6788 = vdwg.mxu0
    %6789 = vmatprep.subr.bf16.mxu0 0
    %6790 = vmatpush1.bf16.msra.mxu0 %v301
    %6791 = vmatprep.subr.bf16.mxu0 0
    %6792 = vmatpush1.bf16.msra.mxu0 %v304
    %6793 = vmatprep.subr.bf16.mxu0 0
    %6794 = vmatpush1.bf16.msra.mxu0 %v307
    %6795 = vmatprep.subr.bf16.mxu0 0
    %6796 = vmatpush1.bf16.msra.mxu0 %v310
    %6797 = vmatprep.subr.bf16.mxu0 0
    %6798 = vmatpush1.bf16.msra.mxu0 %v313
    %6799 = vmatprep.subr.bf16.mxu0 0
    %6800 = vmatpush1.bf16.msra.mxu0 %v316
    %6801 = vmatprep.subr.bf16.mxu0 0
    %6802 = vmatpush1.bf16.msra.mxu0 %v319
    %6803 = vmatprep.subr.bf16.mxu0 0
    %6804 = vmatpush1.bf16.msra.mxu0 %v322
    %6805 = vmatprep.subr.bf16.mxu0 0
    %6806 = vmatpush1.bf16.msra.mxu0 0
    %6807 = vmatprep.subr.bf16.mxu0 0
    %6808 = vmatpush1.bf16.msra.mxu0 0
    %6809 = vmatprep.subr.bf16.mxu0 0
    %6810 = vmatpush1.bf16.msra.mxu0 0
    %6811 = vmatprep.subr.bf16.mxu0 0
    %6812 = vmatpush1.bf16.msra.mxu0 0
    %6813 = vmatprep.subr.bf16.mxu0 0
    %6814 = vmatpush1.bf16.msra.mxu0 0
    %6815 = vmatprep.subr.bf16.mxu0 0
    %6816 = vmatpush1.bf16.msra.mxu0 0
    %6817 = vmatprep.subr.bf16.mxu0 0
    %6818 = vmatpush1.bf16.msra.mxu0 0
    %6819 = vmatprep.subr.bf16.mxu0 0
    %6820 = vmatpush1.bf16.msra.mxu0 0
    %6821 = vmatprep.mubr.bf16.mxu0 0
    %6822 = vmatmul.mubr.bf16.gmra.mrb[0].mxu0 %v6747
    %v6823 = vpop.f32.mrb[0].mxu0
    %v6824 = vadd.f32 0.0, %v6823
    %v6825 = vpop.f32.mrb[0].mxu0
    %v6826 = vpop.f32.mrb[0].mxu0
    %v6827 = vpop.f32.mrb[0].mxu0
    %6828 = vdwg.mxu0
    %v6829 = vpack.c.bf16 %v6742, %v6742
    %6830 = vmatprep.subr.bf16.mxu0 %v510
    %6831 = vmatpush1.bf16.msra.mxu0 %v509
    %6832 = vmatprep.subr.bf16.mxu0 %v513
    %6833 = vmatpush1.bf16.msra.mxu0 %v512
    %6834 = vmatprep.subr.bf16.mxu0 %v516
    %6835 = vmatpush1.bf16.msra.mxu0 %v515
    %6836 = vmatprep.subr.bf16.mxu0 %v519
    %6837 = vmatpush1.bf16.msra.mxu0 %v518
    %6838 = vmatprep.subr.bf16.mxu0 %v522
    %6839 = vmatpush1.bf16.msra.mxu0 %v521
    %6840 = vmatprep.subr.bf16.mxu0 %v525
    %6841 = vmatpush1.bf16.msra.mxu0 %v524
    %6842 = vmatprep.subr.bf16.mxu0 %v528
    %6843 = vmatpush1.bf16.msra.mxu0 %v527
    %6844 = vmatprep.subr.bf16.mxu0 %v531
    %6845 = vmatpush1.bf16.msra.mxu0 %v530
    %6846 = vmatprep.subr.bf16.mxu0 0
    %6847 = vmatpush1.bf16.msra.mxu0 0
    %6848 = vmatprep.subr.bf16.mxu0 0
    %6849 = vmatpush1.bf16.msra.mxu0 0
    %6850 = vmatprep.subr.bf16.mxu0 0
    %6851 = vmatpush1.bf16.msra.mxu0 0
    %6852 = vmatprep.subr.bf16.mxu0 0
    %6853 = vmatpush1.bf16.msra.mxu0 0
    %6854 = vmatprep.subr.bf16.mxu0 0
    %6855 = vmatpush1.bf16.msra.mxu0 0
    %6856 = vmatprep.subr.bf16.mxu0 0
    %6857 = vmatpush1.bf16.msra.mxu0 0
    %6858 = vmatprep.subr.bf16.mxu0 0
    %6859 = vmatpush1.bf16.msra.mxu0 0
    %6860 = vmatprep.subr.bf16.mxu0 0
    %6861 = vmatpush1.bf16.msra.mxu0 0
    %6862 = vmatprep.mubr.bf16.mxu0 0
    %6863 = vmatmul.mubr.bf16.gmra.mrb[0].mxu0 %v6829
    %v6864 = vpop.f32.mrb[0].mxu0
    %v6865 = vadd.f32 0.0, %v6864
    %v6866 = vpop.f32.mrb[0].mxu0
    %v6867 = vadd.f32 0.0, %v6866
    %v6868 = vpop.f32.mrb[0].mxu0
    %v6869 = vpop.f32.mrb[0].mxu0
    %6870 = vdwg.mxu0
    %6871 = vmatprep.subr.bf16.mxu0 0
    %6872 = vmatpush1.bf16.msra.mxu0 %v511
    %6873 = vmatprep.subr.bf16.mxu0 0
    %6874 = vmatpush1.bf16.msra.mxu0 %v514
    %6875 = vmatprep.subr.bf16.mxu0 0
    %6876 = vmatpush1.bf16.msra.mxu0 %v517
    %6877 = vmatprep.subr.bf16.mxu0 0
    %6878 = vmatpush1.bf16.msra.mxu0 %v520
    %6879 = vmatprep.subr.bf16.mxu0 0
    %6880 = vmatpush1.bf16.msra.mxu0 %v523
    %6881 = vmatprep.subr.bf16.mxu0 0
    %6882 = vmatpush1.bf16.msra.mxu0 %v526
    %6883 = vmatprep.subr.bf16.mxu0 0
    %6884 = vmatpush1.bf16.msra.mxu0 %v529
    %6885 = vmatprep.subr.bf16.mxu0 0
    %6886 = vmatpush1.bf16.msra.mxu0 %v532
    %6887 = vmatprep.subr.bf16.mxu0 0
    %6888 = vmatpush1.bf16.msra.mxu0 0
    %6889 = vmatprep.subr.bf16.mxu0 0
    %6890 = vmatpush1.bf16.msra.mxu0 0
    %6891 = vmatprep.subr.bf16.mxu0 0
    %6892 = vmatpush1.bf16.msra.mxu0 0
    %6893 = vmatprep.subr.bf16.mxu0 0
    %6894 = vmatpush1.bf16.msra.mxu0 0
    %6895 = vmatprep.subr.bf16.mxu0 0
    %6896 = vmatpush1.bf16.msra.mxu0 0
    %6897 = vmatprep.subr.bf16.mxu0 0
    %6898 = vmatpush1.bf16.msra.mxu0 0
    %6899 = vmatprep.subr.bf16.mxu0 0
    %6900 = vmatpush1.bf16.msra.mxu0 0
    %6901 = vmatprep.subr.bf16.mxu0 0
    %6902 = vmatpush1.bf16.msra.mxu0 0
    %6903 = vmatprep.mubr.bf16.mxu0 0
    %6904 = vmatmul.mubr.bf16.gmra.mrb[0].mxu0 %v6829
    %v6905 = vpop.f32.mrb[0].mxu0
    %v6906 = vadd.f32 0.0, %v6905
    %v6907 = vpop.f32.mrb[0].mxu0
    %v6908 = vpop.f32.mrb[0].mxu0
    %v6909 = vpop.f32.mrb[0].mxu0
    %6910 = vdwg.mxu0
    %v6912 = vsel %vm702, %v6744, 0
    %6914 = vmatprep.subr.bf16.mxu0 %v679
    %6915 = vmatpush1.bf16.msra.mxu0 %v678
    %6916 = vmatprep.subr.bf16.mxu0 %v682
    %6917 = vmatpush1.bf16.msra.mxu0 %v681
    %6918 = vmatprep.subr.bf16.mxu0 %v685
    %6919 = vmatpush1.bf16.msra.mxu0 %v684
    %6920 = vmatprep.subr.bf16.mxu0 %v688
    %6921 = vmatpush1.bf16.msra.mxu0 %v687
    %6922 = vmatprep.subr.bf16.mxu0 0
    %6923 = vmatpush1.bf16.msra.mxu0 0
    %6924 = vmatprep.subr.bf16.mxu0 0
    %6925 = vmatpush1.bf16.msra.mxu0 0
    %6926 = vmatprep.subr.bf16.mxu0 0
    %6927 = vmatpush1.bf16.msra.mxu0 0
    %6928 = vmatprep.subr.bf16.mxu0 0
    %6929 = vmatpush1.bf16.msra.mxu0 0
    %6930 = vmatprep.subr.bf16.mxu0 0
    %6931 = vmatpush1.bf16.msra.mxu0 0
    %6932 = vmatprep.subr.bf16.mxu0 0
    %6933 = vmatpush1.bf16.msra.mxu0 0
    %6934 = vmatprep.subr.bf16.mxu0 0
    %6935 = vmatpush1.bf16.msra.mxu0 0
    %6936 = vmatprep.subr.bf16.mxu0 0
    %6937 = vmatpush1.bf16.msra.mxu0 0
    %6938 = vmatprep.subr.bf16.mxu0 0
    %6939 = vmatpush1.bf16.msra.mxu0 0
    %6940 = vmatprep.subr.bf16.mxu0 0
    %6941 = vmatpush1.bf16.msra.mxu0 0
    %6942 = vmatprep.subr.bf16.mxu0 0
    %6943 = vmatpush1.bf16.msra.mxu0 0
    %6944 = vmatprep.subr.bf16.mxu0 0
    %6945 = vmatpush1.bf16.msra.mxu0 0
    %6946 = vmatprep.mubr.bf16.mxu0 0
    %6947 = vmatmul.mubr.bf16.gmra.mrb[0].mxu0 %v6912
    %v6948 = vpop.f32.mrb[0].mxu0
    %v6949 = vadd.f32 %v206, %v6948
    %v6950 = vpop.f32.mrb[0].mxu0
    %v6951 = vadd.f32 %v207, %v6950
    %v6952 = vpop.f32.mrb[0].mxu0
    %v6953 = vpop.f32.mrb[0].mxu0
    %6954 = vdwg.mxu0
    %6955 = vmatprep.subr.bf16.mxu0 0
    %6956 = vmatpush1.bf16.msra.mxu0 %v680
    %6957 = vmatprep.subr.bf16.mxu0 0
    %6958 = vmatpush1.bf16.msra.mxu0 %v683
    %6959 = vmatprep.subr.bf16.mxu0 0
    %6960 = vmatpush1.bf16.msra.mxu0 %v686
    %6961 = vmatprep.subr.bf16.mxu0 0
    %6962 = vmatpush1.bf16.msra.mxu0 %v689
    %6963 = vmatprep.subr.bf16.mxu0 0
    %6964 = vmatpush1.bf16.msra.mxu0 0
    %6965 = vmatprep.subr.bf16.mxu0 0
    %6966 = vmatpush1.bf16.msra.mxu0 0
    %6967 = vmatprep.subr.bf16.mxu0 0
    %6968 = vmatpush1.bf16.msra.mxu0 0
    %6969 = vmatprep.subr.bf16.mxu0 0
    %6970 = vmatpush1.bf16.msra.mxu0 0
    %6971 = vmatprep.subr.bf16.mxu0 0
    %6972 = vmatpush1.bf16.msra.mxu0 0
    %6973 = vmatprep.subr.bf16.mxu0 0
    %6974 = vmatpush1.bf16.msra.mxu0 0
    %6975 = vmatprep.subr.bf16.mxu0 0
    %6976 = vmatpush1.bf16.msra.mxu0 0
    %6977 = vmatprep.subr.bf16.mxu0 0
    %6978 = vmatpush1.bf16.msra.mxu0 0
    %6979 = vmatprep.subr.bf16.mxu0 0
    %6980 = vmatpush1.bf16.msra.mxu0 0
    %6981 = vmatprep.subr.bf16.mxu0 0
    %6982 = vmatpush1.bf16.msra.mxu0 0
    %6983 = vmatprep.subr.bf16.mxu0 0
    %6984 = vmatpush1.bf16.msra.mxu0 0
    %6985 = vmatprep.subr.bf16.mxu0 0
    %6986 = vmatpush1.bf16.msra.mxu0 0
    %6987 = vmatprep.mubr.bf16.mxu0 0
    %6988 = vmatmul.mubr.bf16.gmra.mrb[0].mxu0 %v6912
    %v6989 = vpop.f32.mrb[0].mxu0
    %v6990 = vadd.f32 %v208, %v6989
    %v6991 = vpop.f32.mrb[0].mxu0
    %v6992 = vpop.f32.mrb[0].mxu0
    %v6993 = vpop.f32.mrb[0].mxu0
    %6994 = vdwg.mxu0
    %v6996 = vsel %vm702, %v6746, 0
    %6998 = vmatprep.subr.bf16.mxu0 %v828
    %6999 = vmatpush1.bf16.msra.mxu0 %v827
    %7000 = vmatprep.subr.bf16.mxu0 %v831
    %7001 = vmatpush1.bf16.msra.mxu0 %v830
    %7002 = vmatprep.subr.bf16.mxu0 %v834
    %7003 = vmatpush1.bf16.msra.mxu0 %v833
    %7004 = vmatprep.subr.bf16.mxu0 %v837
    %7005 = vmatpush1.bf16.msra.mxu0 %v836
    %7006 = vmatprep.subr.bf16.mxu0 0
    %7007 = vmatpush1.bf16.msra.mxu0 0
    %7008 = vmatprep.subr.bf16.mxu0 0
    %7009 = vmatpush1.bf16.msra.mxu0 0
    %7010 = vmatprep.subr.bf16.mxu0 0
    %7011 = vmatpush1.bf16.msra.mxu0 0
    %7012 = vmatprep.subr.bf16.mxu0 0
    %7013 = vmatpush1.bf16.msra.mxu0 0
    %7014 = vmatprep.subr.bf16.mxu0 0
    %7015 = vmatpush1.bf16.msra.mxu0 0
    %7016 = vmatprep.subr.bf16.mxu0 0
    %7017 = vmatpush1.bf16.msra.mxu0 0
    %7018 = vmatprep.subr.bf16.mxu0 0
    %7019 = vmatpush1.bf16.msra.mxu0 0
    %7020 = vmatprep.subr.bf16.mxu0 0
    %7021 = vmatpush1.bf16.msra.mxu0 0
    %7022 = vmatprep.subr.bf16.mxu0 0
    %7023 = vmatpush1.bf16.msra.mxu0 0
    %7024 = vmatprep.subr.bf16.mxu0 0
    %7025 = vmatpush1.bf16.msra.mxu0 0
    %7026 = vmatprep.subr.bf16.mxu0 0
    %7027 = vmatpush1.bf16.msra.mxu0 0
    %7028 = vmatprep.subr.bf16.mxu0 0
    %7029 = vmatpush1.bf16.msra.mxu0 0
    %7030 = vmatprep.mubr.bf16.mxu0 0
    %7031 = vmatmul.mubr.bf16.gmra.mrb[0].mxu0 %v6996
    %v7032 = vpop.f32.mrb[0].mxu0
    %v7033 = vadd.f32 %v210, %v7032
    %v7034 = vpop.f32.mrb[0].mxu0
    %v7035 = vadd.f32 %v211, %v7034
    %v7036 = vpop.f32.mrb[0].mxu0
    %v7037 = vpop.f32.mrb[0].mxu0
    %7038 = vdwg.mxu0
    %7039 = vmatprep.subr.bf16.mxu0 0
    %7040 = vmatpush1.bf16.msra.mxu0 %v829
    %7041 = vmatprep.subr.bf16.mxu0 0
    %7042 = vmatpush1.bf16.msra.mxu0 %v832
    %7043 = vmatprep.subr.bf16.mxu0 0
    %7044 = vmatpush1.bf16.msra.mxu0 %v835
    %7045 = vmatprep.subr.bf16.mxu0 0
    %7046 = vmatpush1.bf16.msra.mxu0 %v838
    %7047 = vmatprep.subr.bf16.mxu0 0
    %7048 = vmatpush1.bf16.msra.mxu0 0
    %7049 = vmatprep.subr.bf16.mxu0 0
    %7050 = vmatpush1.bf16.msra.mxu0 0
    %7051 = vmatprep.subr.bf16.mxu0 0
    %7052 = vmatpush1.bf16.msra.mxu0 0
    %7053 = vmatprep.subr.bf16.mxu0 0
    %7054 = vmatpush1.bf16.msra.mxu0 0
    %7055 = vmatprep.subr.bf16.mxu0 0
    %7056 = vmatpush1.bf16.msra.mxu0 0
    %7057 = vmatprep.subr.bf16.mxu0 0
    %7058 = vmatpush1.bf16.msra.mxu0 0
    %7059 = vmatprep.subr.bf16.mxu0 0
    %7060 = vmatpush1.bf16.msra.mxu0 0
    %7061 = vmatprep.subr.bf16.mxu0 0
    %7062 = vmatpush1.bf16.msra.mxu0 0
    %7063 = vmatprep.subr.bf16.mxu0 0
    %7064 = vmatpush1.bf16.msra.mxu0 0
    %7065 = vmatprep.subr.bf16.mxu0 0
    %7066 = vmatpush1.bf16.msra.mxu0 0
    %7067 = vmatprep.subr.bf16.mxu0 0
    %7068 = vmatpush1.bf16.msra.mxu0 0
    %7069 = vmatprep.subr.bf16.mxu0 0
    %7070 = vmatpush1.bf16.msra.mxu0 0
    %7071 = vmatprep.mubr.bf16.mxu0 0
    %7072 = vmatmul.mubr.bf16.gmra.mrb[0].mxu0 %v6996
    %v7073 = vpop.f32.mrb[0].mxu0
    %v7074 = vadd.f32 %v212, %v7073
    %v7075 = vpop.f32.mrb[0].mxu0
    %v7076 = vpop.f32.mrb[0].mxu0
    %v7077 = vpop.f32.mrb[0].mxu0
    %7078 = vdwg.mxu0
    %v7079 = vadd.f32 %v6949, %v6783
    %v7080 = vxor.u32 %v7079, 2147483648
    %v7081 = vmul.f32 %v7080, 1.442695
    %v7082 = vpow.pop %v7081
    %v7083 = vadd.f32 %v7082, 1.0
    %v7084 = vrcp.pop %v7083
    %v7085 = vmul.f32 1.0, %v7084
    %v7086 = vadd.f32 %v6951, %v6785
    %v7087 = vxor.u32 %v7086, 2147483648
    %v7088 = vmul.f32 %v7087, 1.442695
    %v7089 = vpow.pop %v7088
    %v7090 = vadd.f32 %v7089, 1.0
    %v7091 = vrcp.pop %v7090
    %v7092 = vmul.f32 1.0, %v7091
    %v7093 = vmul.f32 %v7085, %v6824
    %v7094 = vadd.f32 %v6990, %v7093
    %v7095 = vtanh.pop %v7094
    %v7096 = vsub.f32 %v6741, %v7095
    %v7097 = vmul.f32 %v7092, %v7096
    %v7098 = vadd.f32 %v7095, %v7097
    %v7099 = vadd.f32 %v7033, %v6865
    %v7100 = vxor.u32 %v7099, 2147483648
    %v7101 = vmul.f32 %v7100, 1.442695
    %v7102 = vpow.pop %v7101
    %v7103 = vadd.f32 %v7102, 1.0
    %v7104 = vrcp.pop %v7103
    %v7105 = vmul.f32 1.0, %v7104
    %v7106 = vadd.f32 %v7035, %v6867
    %v7107 = vxor.u32 %v7106, 2147483648
    %v7108 = vmul.f32 %v7107, 1.442695
    %v7109 = vpow.pop %v7108
    %v7110 = vadd.f32 %v7109, 1.0
    %v7111 = vrcp.pop %v7110
    %v7112 = vmul.f32 1.0, %v7111
    %v7113 = vmul.f32 %v7105, %v6906
    %v7114 = vadd.f32 %v7074, %v7113
    %v7115 = vtanh.pop %v7114
    %v7116 = vsub.f32 %v6742, %v7115
    %v7117 = vmul.f32 %v7112, %v7116
    %v7118 = vadd.f32 %v7115, %v7117
    %7119 = vst [vmem:[#allocation2] sm:$0xff] %v7098
    %7120 = vst [vmem:[#allocation3] sm:$0xff] %v7118
    %v7122 = vcombine.high %v7098, %v7098
    %v7124 = vunpack.c.l.s4 1966171168
    %v7125 = vunpack.c.0.s8 %v7124
    %v7126 = vlaneseq
    %v7127 = vshrl.u32 %v7126, 7
    %v7128 = vsub.s32 %v7125, %v7127
    %v7129 = vrot.slane %v7098, %v7128
    %v7131 = vunpack.c.l.s4 1966171168
    %v7132 = vunpack.c.0.s8 %v7131
    %v7133 = vlaneseq
    %v7134 = vshrl.u32 %v7133, 7
    %v7135 = vsub.s32 %v7132, %v7134
    %v7136 = vrot.slane %v7122, %v7135
    %v7137 = vcombine.high %v7129, %v7129
    %v7138 = vcombine.high %v7136, %v7136
    %v7140 = vunpack.c.l.s4 1966171168
    %v7141 = vunpack.c.0.s8 %v7140
    %v7142 = vlaneseq
    %v7143 = vshrl.u32 %v7142, 7
    %v7144 = vsub.s32 %v7141, %v7143
    %v7145 = vrot.slane %v7129, %v7144
    %v7147 = vunpack.c.l.s4 1966171168
    %v7148 = vunpack.c.0.s8 %v7147
    %v7149 = vlaneseq
    %v7150 = vshrl.u32 %v7149, 7
    %v7151 = vsub.s32 %v7148, %v7150
    %v7152 = vrot.slane %v7136, %v7151
    %v7154 = vunpack.c.l.s4 1966171168
    %v7155 = vunpack.c.0.s8 %v7154
    %v7156 = vlaneseq
    %v7157 = vshrl.u32 %v7156, 7
    %v7158 = vsub.s32 %v7155, %v7157
    %v7159 = vrot.slane %v7137, %v7158
    %v7161 = vunpack.c.l.s4 1966171168
    %v7162 = vunpack.c.0.s8 %v7161
    %v7163 = vlaneseq
    %v7164 = vshrl.u32 %v7163, 7
    %v7165 = vsub.s32 %v7162, %v7164
    %v7166 = vrot.slane %v7138, %v7165
    %v7167 = vcombine.high %v7145, %v7145
    %v7168 = vcombine.high %v7152, %v7152
    %v7169 = vcombine.high %v7159, %v7159
    %v7170 = vcombine.high %v7166, %v7166
    %7179 = vst [vmem:[#allocation13 + $0xc] sm:$0x1] %v7145
    %7180 = vst [vmem:[#allocation13 + $0x1c] sm:$0x1] %v7159
    %7181 = vst [vmem:[#allocation13 + $0x2c] sm:$0x1] %v7167
    %7182 = vst [vmem:[#allocation13 + $0x3c] sm:$0x1] %v7169
    %7183 = vst [vmem:[#allocation13 + $0x4c] sm:$0x1] %v7152
    %7184 = vst [vmem:[#allocation13 + $0x5c] sm:$0x1] %v7166
    %7185 = vst [vmem:[#allocation13 + $0x6c] sm:$0x1] %v7168
    %7186 = vst [vmem:[#allocation13 + $0x7c] sm:$0x1] %v7170
    %v7188 = vcombine.high %v7118, %v7118
    %v7190 = vunpack.c.l.s4 1966171168
    %v7191 = vunpack.c.0.s8 %v7190
    %v7192 = vlaneseq
    %v7193 = vshrl.u32 %v7192, 7
    %v7194 = vsub.s32 %v7191, %v7193
    %v7195 = vrot.slane %v7118, %v7194
    %v7197 = vunpack.c.l.s4 1966171168
    %v7198 = vunpack.c.0.s8 %v7197
    %v7199 = vlaneseq
    %v7200 = vshrl.u32 %v7199, 7
    %v7201 = vsub.s32 %v7198, %v7200
    %v7202 = vrot.slane %v7188, %v7201
    %v7203 = vcombine.high %v7195, %v7195
    %v7204 = vcombine.high %v7202, %v7202
    %v7206 = vunpack.c.l.s4 1966171168
    %v7207 = vunpack.c.0.s8 %v7206
    %v7208 = vlaneseq
    %v7209 = vshrl.u32 %v7208, 7
    %v7210 = vsub.s32 %v7207, %v7209
    %v7211 = vrot.slane %v7195, %v7210
    %v7213 = vunpack.c.l.s4 1966171168
    %v7214 = vunpack.c.0.s8 %v7213
    %v7215 = vlaneseq
    %v7216 = vshrl.u32 %v7215, 7
    %v7217 = vsub.s32 %v7214, %v7216
    %v7218 = vrot.slane %v7202, %v7217
    %v7220 = vunpack.c.l.s4 1966171168
    %v7221 = vunpack.c.0.s8 %v7220
    %v7222 = vlaneseq
    %v7223 = vshrl.u32 %v7222, 7
    %v7224 = vsub.s32 %v7221, %v7223
    %v7225 = vrot.slane %v7203, %v7224
    %v7227 = vunpack.c.l.s4 1966171168
    %v7228 = vunpack.c.0.s8 %v7227
    %v7229 = vlaneseq
    %v7230 = vshrl.u32 %v7229, 7
    %v7231 = vsub.s32 %v7228, %v7230
    %v7232 = vrot.slane %v7204, %v7231
    %v7233 = vcombine.high %v7211, %v7211
    %v7234 = vcombine.high %v7218, %v7218
    %v7235 = vcombine.high %v7225, %v7225
    %v7236 = vcombine.high %v7232, %v7232
    %7245 = vst [vmem:[#allocation14 + $0x3] sm:$0x1] %v7211
    %7246 = vst [vmem:[#allocation14 + $0x13] sm:$0x1] %v7225
    %7247 = vst [vmem:[#allocation14 + $0x23] sm:$0x1] %v7233
    %7248 = vst [vmem:[#allocation14 + $0x33] sm:$0x1] %v7235
    %7249 = vst [vmem:[#allocation14 + $0x43] sm:$0x1] %v7218
    %7250 = vst [vmem:[#allocation14 + $0x53] sm:$0x1] %v7232
    %7251 = vst [vmem:[#allocation14 + $0x63] sm:$0x1] %v7234
    %7252 = vst [vmem:[#allocation14 + $0x73] sm:$0x1] %v7236
    %v7253 = vld [vmem:[#allocation2] sm:$0xff]
    %v7254 = vld [vmem:[#allocation3] sm:$0xff]
    %s7255 = scalar_lea.vmem [#allocation4], 52
    %v7256 = vld [vmem:[%s7255] sm:$0xf]
    %s7257 = scalar_lea.vmem [#allocation7], 8
    %v7258 = vld [vmem:[%s7257] sm:$0xf]
    %v7259 = vpack.c.bf16 %v7253, %v7253
    %7260 = vmatprep.subr.bf16.mxu0 %v300
    %7261 = vmatpush1.bf16.msra.mxu0 %v299
    %7262 = vmatprep.subr.bf16.mxu0 %v303
    %7263 = vmatpush1.bf16.msra.mxu0 %v302
    %7264 = vmatprep.subr.bf16.mxu0 %v306
    %7265 = vmatpush1.bf16.msra.mxu0 %v305
    %7266 = vmatprep.subr.bf16.mxu0 %v309
    %7267 = vmatpush1.bf16.msra.mxu0 %v308
    %7268 = vmatprep.subr.bf16.mxu0 %v312
    %7269 = vmatpush1.bf16.msra.mxu0 %v311
    %7270 = vmatprep.subr.bf16.mxu0 %v315
    %7271 = vmatpush1.bf16.msra.mxu0 %v314
    %7272 = vmatprep.subr.bf16.mxu0 %v318
    %7273 = vmatpush1.bf16.msra.mxu0 %v317
    %7274 = vmatprep.subr.bf16.mxu0 %v321
    %7275 = vmatpush1.bf16.msra.mxu0 %v320
    %7276 = vmatprep.subr.bf16.mxu0 0
    %7277 = vmatpush1.bf16.msra.mxu0 0
    %7278 = vmatprep.subr.bf16.mxu0 0
    %7279 = vmatpush1.bf16.msra.mxu0 0
    %7280 = vmatprep.subr.bf16.mxu0 0
    %7281 = vmatpush1.bf16.msra.mxu0 0
    %7282 = vmatprep.subr.bf16.mxu0 0
    %7283 = vmatpush1.bf16.msra.mxu0 0
    %7284 = vmatprep.subr.bf16.mxu0 0
    %7285 = vmatpush1.bf16.msra.mxu0 0
    %7286 = vmatprep.subr.bf16.mxu0 0
    %7287 = vmatpush1.bf16.msra.mxu0 0
    %7288 = vmatprep.subr.bf16.mxu0 0
    %7289 = vmatpush1.bf16.msra.mxu0 0
    %7290 = vmatprep.subr.bf16.mxu0 0
    %7291 = vmatpush1.bf16.msra.mxu0 0
    %7292 = vmatprep.mubr.bf16.mxu0 0
    %7293 = vmatmul.mubr.bf16.gmra.mrb[0].mxu0 %v7259
    %v7294 = vpop.f32.mrb[0].mxu0
    %v7295 = vadd.f32 0.0, %v7294
    %v7296 = vpop.f32.mrb[0].mxu0
    %v7297 = vadd.f32 0.0, %v7296
    %v7298 = vpop.f32.mrb[0].mxu0
    %v7299 = vpop.f32.mrb[0].mxu0
    %7300 = vdwg.mxu0
    %7301 = vmatprep.subr.bf16.mxu0 0
    %7302 = vmatpush1.bf16.msra.mxu0 %v301
    %7303 = vmatprep.subr.bf16.mxu0 0
    %7304 = vmatpush1.bf16.msra.mxu0 %v304
    %7305 = vmatprep.subr.bf16.mxu0 0
    %7306 = vmatpush1.bf16.msra.mxu0 %v307
    %7307 = vmatprep.subr.bf16.mxu0 0
    %7308 = vmatpush1.bf16.msra.mxu0 %v310
    %7309 = vmatprep.subr.bf16.mxu0 0
    %7310 = vmatpush1.bf16.msra.mxu0 %v313
    %7311 = vmatprep.subr.bf16.mxu0 0
    %7312 = vmatpush1.bf16.msra.mxu0 %v316
    %7313 = vmatprep.subr.bf16.mxu0 0
    %7314 = vmatpush1.bf16.msra.mxu0 %v319
    %7315 = vmatprep.subr.bf16.mxu0 0
    %7316 = vmatpush1.bf16.msra.mxu0 %v322
    %7317 = vmatprep.subr.bf16.mxu0 0
    %7318 = vmatpush1.bf16.msra.mxu0 0
    %7319 = vmatprep.subr.bf16.mxu0 0
    %7320 = vmatpush1.bf16.msra.mxu0 0
    %7321 = vmatprep.subr.bf16.mxu0 0
    %7322 = vmatpush1.bf16.msra.mxu0 0
    %7323 = vmatprep.subr.bf16.mxu0 0
    %7324 = vmatpush1.bf16.msra.mxu0 0
    %7325 = vmatprep.subr.bf16.mxu0 0
    %7326 = vmatpush1.bf16.msra.mxu0 0
    %7327 = vmatprep.subr.bf16.mxu0 0
    %7328 = vmatpush1.bf16.msra.mxu0 0
    %7329 = vmatprep.subr.bf16.mxu0 0
    %7330 = vmatpush1.bf16.msra.mxu0 0
    %7331 = vmatprep.subr.bf16.mxu0 0
    %7332 = vmatpush1.bf16.msra.mxu0 0
    %7333 = vmatprep.mubr.bf16.mxu0 0
    %7334 = vmatmul.mubr.bf16.gmra.mrb[0].mxu0 %v7259
    %v7335 = vpop.f32.mrb[0].mxu0
    %v7336 = vadd.f32 0.0, %v7335
    %v7337 = vpop.f32.mrb[0].mxu0
    %v7338 = vpop.f32.mrb[0].mxu0
    %v7339 = vpop.f32.mrb[0].mxu0
    %7340 = vdwg.mxu0
    %v7341 = vpack.c.bf16 %v7254, %v7254
    %7342 = vmatprep.subr.bf16.mxu0 %v510
    %7343 = vmatpush1.bf16.msra.mxu0 %v509
    %7344 = vmatprep.subr.bf16.mxu0 %v513
    %7345 = vmatpush1.bf16.msra.mxu0 %v512
    %7346 = vmatprep.subr.bf16.mxu0 %v516
    %7347 = vmatpush1.bf16.msra.mxu0 %v515
    %7348 = vmatprep.subr.bf16.mxu0 %v519
    %7349 = vmatpush1.bf16.msra.mxu0 %v518
    %7350 = vmatprep.subr.bf16.mxu0 %v522
    %7351 = vmatpush1.bf16.msra.mxu0 %v521
    %7352 = vmatprep.subr.bf16.mxu0 %v525
    %7353 = vmatpush1.bf16.msra.mxu0 %v524
    %7354 = vmatprep.subr.bf16.mxu0 %v528
    %7355 = vmatpush1.bf16.msra.mxu0 %v527
    %7356 = vmatprep.subr.bf16.mxu0 %v531
    %7357 = vmatpush1.bf16.msra.mxu0 %v530
    %7358 = vmatprep.subr.bf16.mxu0 0
    %7359 = vmatpush1.bf16.msra.mxu0 0
    %7360 = vmatprep.subr.bf16.mxu0 0
    %7361 = vmatpush1.bf16.msra.mxu0 0
    %7362 = vmatprep.subr.bf16.mxu0 0
    %7363 = vmatpush1.bf16.msra.mxu0 0
    %7364 = vmatprep.subr.bf16.mxu0 0
    %7365 = vmatpush1.bf16.msra.mxu0 0
    %7366 = vmatprep.subr.bf16.mxu0 0
    %7367 = vmatpush1.bf16.msra.mxu0 0
    %7368 = vmatprep.subr.bf16.mxu0 0
    %7369 = vmatpush1.bf16.msra.mxu0 0
    %7370 = vmatprep.subr.bf16.mxu0 0
    %7371 = vmatpush1.bf16.msra.mxu0 0
    %7372 = vmatprep.subr.bf16.mxu0 0
    %7373 = vmatpush1.bf16.msra.mxu0 0
    %7374 = vmatprep.mubr.bf16.mxu0 0
    %7375 = vmatmul.mubr.bf16.gmra.mrb[0].mxu0 %v7341
    %v7376 = vpop.f32.mrb[0].mxu0
    %v7377 = vadd.f32 0.0, %v7376
    %v7378 = vpop.f32.mrb[0].mxu0
    %v7379 = vadd.f32 0.0, %v7378
    %v7380 = vpop.f32.mrb[0].mxu0
    %v7381 = vpop.f32.mrb[0].mxu0
    %7382 = vdwg.mxu0
    %7383 = vmatprep.subr.bf16.mxu0 0
    %7384 = vmatpush1.bf16.msra.mxu0 %v511
    %7385 = vmatprep.subr.bf16.mxu0 0
    %7386 = vmatpush1.bf16.msra.mxu0 %v514
    %7387 = vmatprep.subr.bf16.mxu0 0
    %7388 = vmatpush1.bf16.msra.mxu0 %v517
    %7389 = vmatprep.subr.bf16.mxu0 0
    %7390 = vmatpush1.bf16.msra.mxu0 %v520
    %7391 = vmatprep.subr.bf16.mxu0 0
    %7392 = vmatpush1.bf16.msra.mxu0 %v523
    %7393 = vmatprep.subr.bf16.mxu0 0
    %7394 = vmatpush1.bf16.msra.mxu0 %v526
    %7395 = vmatprep.subr.bf16.mxu0 0
    %7396 = vmatpush1.bf16.msra.mxu0 %v529
    %7397 = vmatprep.subr.bf16.mxu0 0
    %7398 = vmatpush1.bf16.msra.mxu0 %v532
    %7399 = vmatprep.subr.bf16.mxu0 0
    %7400 = vmatpush1.bf16.msra.mxu0 0
    %7401 = vmatprep.subr.bf16.mxu0 0
    %7402 = vmatpush1.bf16.msra.mxu0 0
    %7403 = vmatprep.subr.bf16.mxu0 0
    %7404 = vmatpush1.bf16.msra.mxu0 0
    %7405 = vmatprep.subr.bf16.mxu0 0
    %7406 = vmatpush1.bf16.msra.mxu0 0
    %7407 = vmatprep.subr.bf16.mxu0 0
    %7408 = vmatpush1.bf16.msra.mxu0 0
    %7409 = vmatprep.subr.bf16.mxu0 0
    %7410 = vmatpush1.bf16.msra.mxu0 0
    %7411 = vmatprep.subr.bf16.mxu0 0
    %7412 = vmatpush1.bf16.msra.mxu0 0
    %7413 = vmatprep.subr.bf16.mxu0 0
    %7414 = vmatpush1.bf16.msra.mxu0 0
    %7415 = vmatprep.mubr.bf16.mxu0 0
    %7416 = vmatmul.mubr.bf16.gmra.mrb[0].mxu0 %v7341
    %v7417 = vpop.f32.mrb[0].mxu0
    %v7418 = vadd.f32 0.0, %v7417
    %v7419 = vpop.f32.mrb[0].mxu0
    %v7420 = vpop.f32.mrb[0].mxu0
    %v7421 = vpop.f32.mrb[0].mxu0
    %7422 = vdwg.mxu0
    %v7424 = vsel %vm702, %v7256, 0
    %7426 = vmatprep.subr.bf16.mxu0 %v679
    %7427 = vmatpush1.bf16.msra.mxu0 %v678
    %7428 = vmatprep.subr.bf16.mxu0 %v682
    %7429 = vmatpush1.bf16.msra.mxu0 %v681
    %7430 = vmatprep.subr.bf16.mxu0 %v685
    %7431 = vmatpush1.bf16.msra.mxu0 %v684
    %7432 = vmatprep.subr.bf16.mxu0 %v688
    %7433 = vmatpush1.bf16.msra.mxu0 %v687
    %7434 = vmatprep.subr.bf16.mxu0 0
    %7435 = vmatpush1.bf16.msra.mxu0 0
    %7436 = vmatprep.subr.bf16.mxu0 0
    %7437 = vmatpush1.bf16.msra.mxu0 0
    %7438 = vmatprep.subr.bf16.mxu0 0
    %7439 = vmatpush1.bf16.msra.mxu0 0
    %7440 = vmatprep.subr.bf16.mxu0 0
    %7441 = vmatpush1.bf16.msra.mxu0 0
    %7442 = vmatprep.subr.bf16.mxu0 0
    %7443 = vmatpush1.bf16.msra.mxu0 0
    %7444 = vmatprep.subr.bf16.mxu0 0
    %7445 = vmatpush1.bf16.msra.mxu0 0
    %7446 = vmatprep.subr.bf16.mxu0 0
    %7447 = vmatpush1.bf16.msra.mxu0 0
    %7448 = vmatprep.subr.bf16.mxu0 0
    %7449 = vmatpush1.bf16.msra.mxu0 0
    %7450 = vmatprep.subr.bf16.mxu0 0
    %7451 = vmatpush1.bf16.msra.mxu0 0
    %7452 = vmatprep.subr.bf16.mxu0 0
    %7453 = vmatpush1.bf16.msra.mxu0 0
    %7454 = vmatprep.subr.bf16.mxu0 0
    %7455 = vmatpush1.bf16.msra.mxu0 0
    %7456 = vmatprep.subr.bf16.mxu0 0
    %7457 = vmatpush1.bf16.msra.mxu0 0
    %7458 = vmatprep.mubr.bf16.mxu0 0
    %7459 = vmatmul.mubr.bf16.gmra.mrb[0].mxu0 %v7424
    %v7460 = vpop.f32.mrb[0].mxu0
    %v7461 = vadd.f32 %v206, %v7460
    %v7462 = vpop.f32.mrb[0].mxu0
    %v7463 = vadd.f32 %v207, %v7462
    %v7464 = vpop.f32.mrb[0].mxu0
    %v7465 = vpop.f32.mrb[0].mxu0
    %7466 = vdwg.mxu0
    %7467 = vmatprep.subr.bf16.mxu0 0
    %7468 = vmatpush1.bf16.msra.mxu0 %v680
    %7469 = vmatprep.subr.bf16.mxu0 0
    %7470 = vmatpush1.bf16.msra.mxu0 %v683
    %7471 = vmatprep.subr.bf16.mxu0 0
    %7472 = vmatpush1.bf16.msra.mxu0 %v686
    %7473 = vmatprep.subr.bf16.mxu0 0
    %7474 = vmatpush1.bf16.msra.mxu0 %v689
    %7475 = vmatprep.subr.bf16.mxu0 0
    %7476 = vmatpush1.bf16.msra.mxu0 0
    %7477 = vmatprep.subr.bf16.mxu0 0
    %7478 = vmatpush1.bf16.msra.mxu0 0
    %7479 = vmatprep.subr.bf16.mxu0 0
    %7480 = vmatpush1.bf16.msra.mxu0 0
    %7481 = vmatprep.subr.bf16.mxu0 0
    %7482 = vmatpush1.bf16.msra.mxu0 0
    %7483 = vmatprep.subr.bf16.mxu0 0
    %7484 = vmatpush1.bf16.msra.mxu0 0
    %7485 = vmatprep.subr.bf16.mxu0 0
    %7486 = vmatpush1.bf16.msra.mxu0 0
    %7487 = vmatprep.subr.bf16.mxu0 0
    %7488 = vmatpush1.bf16.msra.mxu0 0
    %7489 = vmatprep.subr.bf16.mxu0 0
    %7490 = vmatpush1.bf16.msra.mxu0 0
    %7491 = vmatprep.subr.bf16.mxu0 0
    %7492 = vmatpush1.bf16.msra.mxu0 0
    %7493 = vmatprep.subr.bf16.mxu0 0
    %7494 = vmatpush1.bf16.msra.mxu0 0
    %7495 = vmatprep.subr.bf16.mxu0 0
    %7496 = vmatpush1.bf16.msra.mxu0 0
    %7497 = vmatprep.subr.bf16.mxu0 0
    %7498 = vmatpush1.bf16.msra.mxu0 0
    %7499 = vmatprep.mubr.bf16.mxu0 0
    %7500 = vmatmul.mubr.bf16.gmra.mrb[0].mxu0 %v7424
    %v7501 = vpop.f32.mrb[0].mxu0
    %v7502 = vadd.f32 %v208, %v7501
    %v7503 = vpop.f32.mrb[0].mxu0
    %v7504 = vpop.f32.mrb[0].mxu0
    %v7505 = vpop.f32.mrb[0].mxu0
    %7506 = vdwg.mxu0
    %v7508 = vsel %vm702, %v7258, 0
    %7510 = vmatprep.subr.bf16.mxu0 %v828
    %7511 = vmatpush1.bf16.msra.mxu0 %v827
    %7512 = vmatprep.subr.bf16.mxu0 %v831
    %7513 = vmatpush1.bf16.msra.mxu0 %v830
    %7514 = vmatprep.subr.bf16.mxu0 %v834
    %7515 = vmatpush1.bf16.msra.mxu0 %v833
    %7516 = vmatprep.subr.bf16.mxu0 %v837
    %7517 = vmatpush1.bf16.msra.mxu0 %v836
    %7518 = vmatprep.subr.bf16.mxu0 0
    %7519 = vmatpush1.bf16.msra.mxu0 0
    %7520 = vmatprep.subr.bf16.mxu0 0
    %7521 = vmatpush1.bf16.msra.mxu0 0
    %7522 = vmatprep.subr.bf16.mxu0 0
    %7523 = vmatpush1.bf16.msra.mxu0 0
    %7524 = vmatprep.subr.bf16.mxu0 0
    %7525 = vmatpush1.bf16.msra.mxu0 0
    %7526 = vmatprep.subr.bf16.mxu0 0
    %7527 = vmatpush1.bf16.msra.mxu0 0
    %7528 = vmatprep.subr.bf16.mxu0 0
    %7529 = vmatpush1.bf16.msra.mxu0 0
    %7530 = vmatprep.subr.bf16.mxu0 0
    %7531 = vmatpush1.bf16.msra.mxu0 0
    %7532 = vmatprep.subr.bf16.mxu0 0
    %7533 = vmatpush1.bf16.msra.mxu0 0
    %7534 = vmatprep.subr.bf16.mxu0 0
    %7535 = vmatpush1.bf16.msra.mxu0 0
    %7536 = vmatprep.subr.bf16.mxu0 0
    %7537 = vmatpush1.bf16.msra.mxu0 0
    %7538 = vmatprep.subr.bf16.mxu0 0
    %7539 = vmatpush1.bf16.msra.mxu0 0
    %7540 = vmatprep.subr.bf16.mxu0 0
    %7541 = vmatpush1.bf16.msra.mxu0 0
    %7542 = vmatprep.mubr.bf16.mxu0 0
    %7543 = vmatmul.mubr.bf16.gmra.mrb[0].mxu0 %v7508
    %v7544 = vpop.f32.mrb[0].mxu0
    %v7545 = vadd.f32 %v210, %v7544
    %v7546 = vpop.f32.mrb[0].mxu0
    %v7547 = vadd.f32 %v211, %v7546
    %v7548 = vpop.f32.mrb[0].mxu0
    %v7549 = vpop.f32.mrb[0].mxu0
    %7550 = vdwg.mxu0
    %7551 = vmatprep.subr.bf16.mxu0 0
    %7552 = vmatpush1.bf16.msra.mxu0 %v829
    %7553 = vmatprep.subr.bf16.mxu0 0
    %7554 = vmatpush1.bf16.msra.mxu0 %v832
    %7555 = vmatprep.subr.bf16.mxu0 0
    %7556 = vmatpush1.bf16.msra.mxu0 %v835
    %7557 = vmatprep.subr.bf16.mxu0 0
    %7558 = vmatpush1.bf16.msra.mxu0 %v838
    %7559 = vmatprep.subr.bf16.mxu0 0
    %7560 = vmatpush1.bf16.msra.mxu0 0
    %7561 = vmatprep.subr.bf16.mxu0 0
    %7562 = vmatpush1.bf16.msra.mxu0 0
    %7563 = vmatprep.subr.bf16.mxu0 0
    %7564 = vmatpush1.bf16.msra.mxu0 0
    %7565 = vmatprep.subr.bf16.mxu0 0
    %7566 = vmatpush1.bf16.msra.mxu0 0
    %7567 = vmatprep.subr.bf16.mxu0 0
    %7568 = vmatpush1.bf16.msra.mxu0 0
    %7569 = vmatprep.subr.bf16.mxu0 0
    %7570 = vmatpush1.bf16.msra.mxu0 0
    %7571 = vmatprep.subr.bf16.mxu0 0
    %7572 = vmatpush1.bf16.msra.mxu0 0
    %7573 = vmatprep.subr.bf16.mxu0 0
    %7574 = vmatpush1.bf16.msra.mxu0 0
    %7575 = vmatprep.subr.bf16.mxu0 0
    %7576 = vmatpush1.bf16.msra.mxu0 0
    %7577 = vmatprep.subr.bf16.mxu0 0
    %7578 = vmatpush1.bf16.msra.mxu0 0
    %7579 = vmatprep.subr.bf16.mxu0 0
    %7580 = vmatpush1.bf16.msra.mxu0 0
    %7581 = vmatprep.subr.bf16.mxu0 0
    %7582 = vmatpush1.bf16.msra.mxu0 0
    %7583 = vmatprep.mubr.bf16.mxu0 0
    %7584 = vmatmul.mubr.bf16.gmra.mrb[0].mxu0 %v7508
    %v7585 = vpop.f32.mrb[0].mxu0
    %v7586 = vadd.f32 %v212, %v7585
    %v7587 = vpop.f32.mrb[0].mxu0
    %v7588 = vpop.f32.mrb[0].mxu0
    %v7589 = vpop.f32.mrb[0].mxu0
    %7590 = vdwg.mxu0
    %v7591 = vadd.f32 %v7461, %v7295
    %v7592 = vxor.u32 %v7591, 2147483648
    %v7593 = vmul.f32 %v7592, 1.442695
    %v7594 = vpow.pop %v7593
    %v7595 = vadd.f32 %v7594, 1.0
    %v7596 = vrcp.pop %v7595
    %v7597 = vmul.f32 1.0, %v7596
    %v7598 = vadd.f32 %v7463, %v7297
    %v7599 = vxor.u32 %v7598, 2147483648
    %v7600 = vmul.f32 %v7599, 1.442695
    %v7601 = vpow.pop %v7600
    %v7602 = vadd.f32 %v7601, 1.0
    %v7603 = vrcp.pop %v7602
    %v7604 = vmul.f32 1.0, %v7603
    %v7605 = vmul.f32 %v7597, %v7336
    %v7606 = vadd.f32 %v7502, %v7605
    %v7607 = vtanh.pop %v7606
    %v7608 = vsub.f32 %v7253, %v7607
    %v7609 = vmul.f32 %v7604, %v7608
    %v7610 = vadd.f32 %v7607, %v7609
    %v7611 = vadd.f32 %v7545, %v7377
    %v7612 = vxor.u32 %v7611, 2147483648
    %v7613 = vmul.f32 %v7612, 1.442695
    %v7614 = vpow.pop %v7613
    %v7615 = vadd.f32 %v7614, 1.0
    %v7616 = vrcp.pop %v7615
    %v7617 = vmul.f32 1.0, %v7616
    %v7618 = vadd.f32 %v7547, %v7379
    %v7619 = vxor.u32 %v7618, 2147483648
    %v7620 = vmul.f32 %v7619, 1.442695
    %v7621 = vpow.pop %v7620
    %v7622 = vadd.f32 %v7621, 1.0
    %v7623 = vrcp.pop %v7622
    %v7624 = vmul.f32 1.0, %v7623
    %v7625 = vmul.f32 %v7617, %v7418
    %v7626 = vadd.f32 %v7586, %v7625
    %v7627 = vtanh.pop %v7626
    %v7628 = vsub.f32 %v7254, %v7627
    %v7629 = vmul.f32 %v7624, %v7628
    %v7630 = vadd.f32 %v7627, %v7629
    %7631 = vst [vmem:[#allocation2] sm:$0xff] %v7610
    %7632 = vst [vmem:[#allocation3] sm:$0xff] %v7630
    %v7634 = vcombine.high %v7610, %v7610
    %v7636 = vunpack.c.l.s4 1966171168
    %v7637 = vunpack.c.0.s8 %v7636
    %v7638 = vlaneseq
    %v7639 = vshrl.u32 %v7638, 7
    %v7640 = vsub.s32 %v7637, %v7639
    %v7641 = vrot.slane %v7610, %v7640
    %v7643 = vunpack.c.l.s4 1966171168
    %v7644 = vunpack.c.0.s8 %v7643
    %v7645 = vlaneseq
    %v7646 = vshrl.u32 %v7645, 7
    %v7647 = vsub.s32 %v7644, %v7646
    %v7648 = vrot.slane %v7634, %v7647
    %v7649 = vcombine.high %v7641, %v7641
    %v7650 = vcombine.high %v7648, %v7648
    %v7652 = vunpack.c.l.s4 1966171168
    %v7653 = vunpack.c.0.s8 %v7652
    %v7654 = vlaneseq
    %v7655 = vshrl.u32 %v7654, 7
    %v7656 = vsub.s32 %v7653, %v7655
    %v7657 = vrot.slane %v7641, %v7656
    %v7659 = vunpack.c.l.s4 1966171168
    %v7660 = vunpack.c.0.s8 %v7659
    %v7661 = vlaneseq
    %v7662 = vshrl.u32 %v7661, 7
    %v7663 = vsub.s32 %v7660, %v7662
    %v7664 = vrot.slane %v7648, %v7663
    %v7666 = vunpack.c.l.s4 1966171168
    %v7667 = vunpack.c.0.s8 %v7666
    %v7668 = vlaneseq
    %v7669 = vshrl.u32 %v7668, 7
    %v7670 = vsub.s32 %v7667, %v7669
    %v7671 = vrot.slane %v7649, %v7670
    %v7673 = vunpack.c.l.s4 1966171168
    %v7674 = vunpack.c.0.s8 %v7673
    %v7675 = vlaneseq
    %v7676 = vshrl.u32 %v7675, 7
    %v7677 = vsub.s32 %v7674, %v7676
    %v7678 = vrot.slane %v7650, %v7677
    %v7679 = vcombine.high %v7657, %v7657
    %v7680 = vcombine.high %v7664, %v7664
    %v7681 = vcombine.high %v7671, %v7671
    %v7682 = vcombine.high %v7678, %v7678
    %7691 = vst [vmem:[#allocation13 + $0xd] sm:$0x1] %v7657
    %7692 = vst [vmem:[#allocation13 + $0x1d] sm:$0x1] %v7671
    %7693 = vst [vmem:[#allocation13 + $0x2d] sm:$0x1] %v7679
    %7694 = vst [vmem:[#allocation13 + $0x3d] sm:$0x1] %v7681
    %7695 = vst [vmem:[#allocation13 + $0x4d] sm:$0x1] %v7664
    %7696 = vst [vmem:[#allocation13 + $0x5d] sm:$0x1] %v7678
    %7697 = vst [vmem:[#allocation13 + $0x6d] sm:$0x1] %v7680
    %7698 = vst [vmem:[#allocation13 + $0x7d] sm:$0x1] %v7682
    %v7700 = vcombine.high %v7630, %v7630
    %v7702 = vunpack.c.l.s4 1966171168
    %v7703 = vunpack.c.0.s8 %v7702
    %v7704 = vlaneseq
    %v7705 = vshrl.u32 %v7704, 7
    %v7706 = vsub.s32 %v7703, %v7705
    %v7707 = vrot.slane %v7630, %v7706
    %v7709 = vunpack.c.l.s4 1966171168
    %v7710 = vunpack.c.0.s8 %v7709
    %v7711 = vlaneseq
    %v7712 = vshrl.u32 %v7711, 7
    %v7713 = vsub.s32 %v7710, %v7712
    %v7714 = vrot.slane %v7700, %v7713
    %v7715 = vcombine.high %v7707, %v7707
    %v7716 = vcombine.high %v7714, %v7714
    %v7718 = vunpack.c.l.s4 1966171168
    %v7719 = vunpack.c.0.s8 %v7718
    %v7720 = vlaneseq
    %v7721 = vshrl.u32 %v7720, 7
    %v7722 = vsub.s32 %v7719, %v7721
    %v7723 = vrot.slane %v7707, %v7722
    %v7725 = vunpack.c.l.s4 1966171168
    %v7726 = vunpack.c.0.s8 %v7725
    %v7727 = vlaneseq
    %v7728 = vshrl.u32 %v7727, 7
    %v7729 = vsub.s32 %v7726, %v7728
    %v7730 = vrot.slane %v7714, %v7729
    %v7732 = vunpack.c.l.s4 1966171168
    %v7733 = vunpack.c.0.s8 %v7732
    %v7734 = vlaneseq
    %v7735 = vshrl.u32 %v7734, 7
    %v7736 = vsub.s32 %v7733, %v7735
    %v7737 = vrot.slane %v7715, %v7736
    %v7739 = vunpack.c.l.s4 1966171168
    %v7740 = vunpack.c.0.s8 %v7739
    %v7741 = vlaneseq
    %v7742 = vshrl.u32 %v7741, 7
    %v7743 = vsub.s32 %v7740, %v7742
    %v7744 = vrot.slane %v7716, %v7743
    %v7745 = vcombine.high %v7723, %v7723
    %v7746 = vcombine.high %v7730, %v7730
    %v7747 = vcombine.high %v7737, %v7737
    %v7748 = vcombine.high %v7744, %v7744
    %7757 = vst [vmem:[#allocation14 + $0x2] sm:$0x1] %v7723
    %7758 = vst [vmem:[#allocation14 + $0x12] sm:$0x1] %v7737
    %7759 = vst [vmem:[#allocation14 + $0x22] sm:$0x1] %v7745
    %7760 = vst [vmem:[#allocation14 + $0x32] sm:$0x1] %v7747
    %7761 = vst [vmem:[#allocation14 + $0x42] sm:$0x1] %v7730
    %7762 = vst [vmem:[#allocation14 + $0x52] sm:$0x1] %v7744
    %7763 = vst [vmem:[#allocation14 + $0x62] sm:$0x1] %v7746
    %7764 = vst [vmem:[#allocation14 + $0x72] sm:$0x1] %v7748
    %v7765 = vld [vmem:[#allocation2] sm:$0xff]
    %v7766 = vld [vmem:[#allocation3] sm:$0xff]
    %s7767 = scalar_lea.vmem [#allocation4], 56
    %v7768 = vld [vmem:[%s7767] sm:$0xf]
    %s7769 = scalar_lea.vmem [#allocation7], 4
    %v7770 = vld [vmem:[%s7769] sm:$0xf]
    %v7771 = vpack.c.bf16 %v7765, %v7765
    %7772 = vmatprep.subr.bf16.mxu0 %v300
    %7773 = vmatpush1.bf16.msra.mxu0 %v299
    %7774 = vmatprep.subr.bf16.mxu0 %v303
    %7775 = vmatpush1.bf16.msra.mxu0 %v302
    %7776 = vmatprep.subr.bf16.mxu0 %v306
    %7777 = vmatpush1.bf16.msra.mxu0 %v305
    %7778 = vmatprep.subr.bf16.mxu0 %v309
    %7779 = vmatpush1.bf16.msra.mxu0 %v308
    %7780 = vmatprep.subr.bf16.mxu0 %v312
    %7781 = vmatpush1.bf16.msra.mxu0 %v311
    %7782 = vmatprep.subr.bf16.mxu0 %v315
    %7783 = vmatpush1.bf16.msra.mxu0 %v314
    %7784 = vmatprep.subr.bf16.mxu0 %v318
    %7785 = vmatpush1.bf16.msra.mxu0 %v317
    %7786 = vmatprep.subr.bf16.mxu0 %v321
    %7787 = vmatpush1.bf16.msra.mxu0 %v320
    %7788 = vmatprep.subr.bf16.mxu0 0
    %7789 = vmatpush1.bf16.msra.mxu0 0
    %7790 = vmatprep.subr.bf16.mxu0 0
    %7791 = vmatpush1.bf16.msra.mxu0 0
    %7792 = vmatprep.subr.bf16.mxu0 0
    %7793 = vmatpush1.bf16.msra.mxu0 0
    %7794 = vmatprep.subr.bf16.mxu0 0
    %7795 = vmatpush1.bf16.msra.mxu0 0
    %7796 = vmatprep.subr.bf16.mxu0 0
    %7797 = vmatpush1.bf16.msra.mxu0 0
    %7798 = vmatprep.subr.bf16.mxu0 0
    %7799 = vmatpush1.bf16.msra.mxu0 0
    %7800 = vmatprep.subr.bf16.mxu0 0
    %7801 = vmatpush1.bf16.msra.mxu0 0
    %7802 = vmatprep.subr.bf16.mxu0 0
    %7803 = vmatpush1.bf16.msra.mxu0 0
    %7804 = vmatprep.mubr.bf16.mxu0 0
    %7805 = vmatmul.mubr.bf16.gmra.mrb[0].mxu0 %v7771
    %v7806 = vpop.f32.mrb[0].mxu0
    %v7807 = vadd.f32 0.0, %v7806
    %v7808 = vpop.f32.mrb[0].mxu0
    %v7809 = vadd.f32 0.0, %v7808
    %v7810 = vpop.f32.mrb[0].mxu0
    %v7811 = vpop.f32.mrb[0].mxu0
    %7812 = vdwg.mxu0
    %7813 = vmatprep.subr.bf16.mxu0 0
    %7814 = vmatpush1.bf16.msra.mxu0 %v301
    %7815 = vmatprep.subr.bf16.mxu0 0
    %7816 = vmatpush1.bf16.msra.mxu0 %v304
    %7817 = vmatprep.subr.bf16.mxu0 0
    %7818 = vmatpush1.bf16.msra.mxu0 %v307
    %7819 = vmatprep.subr.bf16.mxu0 0
    %7820 = vmatpush1.bf16.msra.mxu0 %v310
    %7821 = vmatprep.subr.bf16.mxu0 0
    %7822 = vmatpush1.bf16.msra.mxu0 %v313
    %7823 = vmatprep.subr.bf16.mxu0 0
    %7824 = vmatpush1.bf16.msra.mxu0 %v316
    %7825 = vmatprep.subr.bf16.mxu0 0
    %7826 = vmatpush1.bf16.msra.mxu0 %v319
    %7827 = vmatprep.subr.bf16.mxu0 0
    %7828 = vmatpush1.bf16.msra.mxu0 %v322
    %7829 = vmatprep.subr.bf16.mxu0 0
    %7830 = vmatpush1.bf16.msra.mxu0 0
    %7831 = vmatprep.subr.bf16.mxu0 0
    %7832 = vmatpush1.bf16.msra.mxu0 0
    %7833 = vmatprep.subr.bf16.mxu0 0
    %7834 = vmatpush1.bf16.msra.mxu0 0
    %7835 = vmatprep.subr.bf16.mxu0 0
    %7836 = vmatpush1.bf16.msra.mxu0 0
    %7837 = vmatprep.subr.bf16.mxu0 0
    %7838 = vmatpush1.bf16.msra.mxu0 0
    %7839 = vmatprep.subr.bf16.mxu0 0
    %7840 = vmatpush1.bf16.msra.mxu0 0
    %7841 = vmatprep.subr.bf16.mxu0 0
    %7842 = vmatpush1.bf16.msra.mxu0 0
    %7843 = vmatprep.subr.bf16.mxu0 0
    %7844 = vmatpush1.bf16.msra.mxu0 0
    %7845 = vmatprep.mubr.bf16.mxu0 0
    %7846 = vmatmul.mubr.bf16.gmra.mrb[0].mxu0 %v7771
    %v7847 = vpop.f32.mrb[0].mxu0
    %v7848 = vadd.f32 0.0, %v7847
    %v7849 = vpop.f32.mrb[0].mxu0
    %v7850 = vpop.f32.mrb[0].mxu0
    %v7851 = vpop.f32.mrb[0].mxu0
    %7852 = vdwg.mxu0
    %v7853 = vpack.c.bf16 %v7766, %v7766
    %7854 = vmatprep.subr.bf16.mxu0 %v510
    %7855 = vmatpush1.bf16.msra.mxu0 %v509
    %7856 = vmatprep.subr.bf16.mxu0 %v513
    %7857 = vmatpush1.bf16.msra.mxu0 %v512
    %7858 = vmatprep.subr.bf16.mxu0 %v516
    %7859 = vmatpush1.bf16.msra.mxu0 %v515
    %7860 = vmatprep.subr.bf16.mxu0 %v519
    %7861 = vmatpush1.bf16.msra.mxu0 %v518
    %7862 = vmatprep.subr.bf16.mxu0 %v522
    %7863 = vmatpush1.bf16.msra.mxu0 %v521
    %7864 = vmatprep.subr.bf16.mxu0 %v525
    %7865 = vmatpush1.bf16.msra.mxu0 %v524
    %7866 = vmatprep.subr.bf16.mxu0 %v528
    %7867 = vmatpush1.bf16.msra.mxu0 %v527
    %7868 = vmatprep.subr.bf16.mxu0 %v531
    %7869 = vmatpush1.bf16.msra.mxu0 %v530
    %7870 = vmatprep.subr.bf16.mxu0 0
    %7871 = vmatpush1.bf16.msra.mxu0 0
    %7872 = vmatprep.subr.bf16.mxu0 0
    %7873 = vmatpush1.bf16.msra.mxu0 0
    %7874 = vmatprep.subr.bf16.mxu0 0
    %7875 = vmatpush1.bf16.msra.mxu0 0
    %7876 = vmatprep.subr.bf16.mxu0 0
    %7877 = vmatpush1.bf16.msra.mxu0 0
    %7878 = vmatprep.subr.bf16.mxu0 0
    %7879 = vmatpush1.bf16.msra.mxu0 0
    %7880 = vmatprep.subr.bf16.mxu0 0
    %7881 = vmatpush1.bf16.msra.mxu0 0
    %7882 = vmatprep.subr.bf16.mxu0 0
    %7883 = vmatpush1.bf16.msra.mxu0 0
    %7884 = vmatprep.subr.bf16.mxu0 0
    %7885 = vmatpush1.bf16.msra.mxu0 0
    %7886 = vmatprep.mubr.bf16.mxu0 0
    %7887 = vmatmul.mubr.bf16.gmra.mrb[0].mxu0 %v7853
    %v7888 = vpop.f32.mrb[0].mxu0
    %v7889 = vadd.f32 0.0, %v7888
    %v7890 = vpop.f32.mrb[0].mxu0
    %v7891 = vadd.f32 0.0, %v7890
    %v7892 = vpop.f32.mrb[0].mxu0
    %v7893 = vpop.f32.mrb[0].mxu0
    %7894 = vdwg.mxu0
    %7895 = vmatprep.subr.bf16.mxu0 0
    %7896 = vmatpush1.bf16.msra.mxu0 %v511
    %7897 = vmatprep.subr.bf16.mxu0 0
    %7898 = vmatpush1.bf16.msra.mxu0 %v514
    %7899 = vmatprep.subr.bf16.mxu0 0
    %7900 = vmatpush1.bf16.msra.mxu0 %v517
    %7901 = vmatprep.subr.bf16.mxu0 0
    %7902 = vmatpush1.bf16.msra.mxu0 %v520
    %7903 = vmatprep.subr.bf16.mxu0 0
    %7904 = vmatpush1.bf16.msra.mxu0 %v523
    %7905 = vmatprep.subr.bf16.mxu0 0
    %7906 = vmatpush1.bf16.msra.mxu0 %v526
    %7907 = vmatprep.subr.bf16.mxu0 0
    %7908 = vmatpush1.bf16.msra.mxu0 %v529
    %7909 = vmatprep.subr.bf16.mxu0 0
    %7910 = vmatpush1.bf16.msra.mxu0 %v532
    %7911 = vmatprep.subr.bf16.mxu0 0
    %7912 = vmatpush1.bf16.msra.mxu0 0
    %7913 = vmatprep.subr.bf16.mxu0 0
    %7914 = vmatpush1.bf16.msra.mxu0 0
    %7915 = vmatprep.subr.bf16.mxu0 0
    %7916 = vmatpush1.bf16.msra.mxu0 0
    %7917 = vmatprep.subr.bf16.mxu0 0
    %7918 = vmatpush1.bf16.msra.mxu0 0
    %7919 = vmatprep.subr.bf16.mxu0 0
    %7920 = vmatpush1.bf16.msra.mxu0 0
    %7921 = vmatprep.subr.bf16.mxu0 0
    %7922 = vmatpush1.bf16.msra.mxu0 0
    %7923 = vmatprep.subr.bf16.mxu0 0
    %7924 = vmatpush1.bf16.msra.mxu0 0
    %7925 = vmatprep.subr.bf16.mxu0 0
    %7926 = vmatpush1.bf16.msra.mxu0 0
    %7927 = vmatprep.mubr.bf16.mxu0 0
    %7928 = vmatmul.mubr.bf16.gmra.mrb[0].mxu0 %v7853
    %v7929 = vpop.f32.mrb[0].mxu0
    %v7930 = vadd.f32 0.0, %v7929
    %v7931 = vpop.f32.mrb[0].mxu0
    %v7932 = vpop.f32.mrb[0].mxu0
    %v7933 = vpop.f32.mrb[0].mxu0
    %7934 = vdwg.mxu0
    %v7936 = vsel %vm702, %v7768, 0
    %7938 = vmatprep.subr.bf16.mxu0 %v679
    %7939 = vmatpush1.bf16.msra.mxu0 %v678
    %7940 = vmatprep.subr.bf16.mxu0 %v682
    %7941 = vmatpush1.bf16.msra.mxu0 %v681
    %7942 = vmatprep.subr.bf16.mxu0 %v685
    %7943 = vmatpush1.bf16.msra.mxu0 %v684
    %7944 = vmatprep.subr.bf16.mxu0 %v688
    %7945 = vmatpush1.bf16.msra.mxu0 %v687
    %7946 = vmatprep.subr.bf16.mxu0 0
    %7947 = vmatpush1.bf16.msra.mxu0 0
    %7948 = vmatprep.subr.bf16.mxu0 0
    %7949 = vmatpush1.bf16.msra.mxu0 0
    %7950 = vmatprep.subr.bf16.mxu0 0
    %7951 = vmatpush1.bf16.msra.mxu0 0
    %7952 = vmatprep.subr.bf16.mxu0 0
    %7953 = vmatpush1.bf16.msra.mxu0 0
    %7954 = vmatprep.subr.bf16.mxu0 0
    %7955 = vmatpush1.bf16.msra.mxu0 0
    %7956 = vmatprep.subr.bf16.mxu0 0
    %7957 = vmatpush1.bf16.msra.mxu0 0
    %7958 = vmatprep.subr.bf16.mxu0 0
    %7959 = vmatpush1.bf16.msra.mxu0 0
    %7960 = vmatprep.subr.bf16.mxu0 0
    %7961 = vmatpush1.bf16.msra.mxu0 0
    %7962 = vmatprep.subr.bf16.mxu0 0
    %7963 = vmatpush1.bf16.msra.mxu0 0
    %7964 = vmatprep.subr.bf16.mxu0 0
    %7965 = vmatpush1.bf16.msra.mxu0 0
    %7966 = vmatprep.subr.bf16.mxu0 0
    %7967 = vmatpush1.bf16.msra.mxu0 0
    %7968 = vmatprep.subr.bf16.mxu0 0
    %7969 = vmatpush1.bf16.msra.mxu0 0
    %7970 = vmatprep.mubr.bf16.mxu0 0
    %7971 = vmatmul.mubr.bf16.gmra.mrb[0].mxu0 %v7936
    %v7972 = vpop.f32.mrb[0].mxu0
    %v7973 = vadd.f32 %v206, %v7972
    %v7974 = vpop.f32.mrb[0].mxu0
    %v7975 = vadd.f32 %v207, %v7974
    %v7976 = vpop.f32.mrb[0].mxu0
    %v7977 = vpop.f32.mrb[0].mxu0
    %7978 = vdwg.mxu0
    %7979 = vmatprep.subr.bf16.mxu0 0
    %7980 = vmatpush1.bf16.msra.mxu0 %v680
    %7981 = vmatprep.subr.bf16.mxu0 0
    %7982 = vmatpush1.bf16.msra.mxu0 %v683
    %7983 = vmatprep.subr.bf16.mxu0 0
    %7984 = vmatpush1.bf16.msra.mxu0 %v686
    %7985 = vmatprep.subr.bf16.mxu0 0
    %7986 = vmatpush1.bf16.msra.mxu0 %v689
    %7987 = vmatprep.subr.bf16.mxu0 0
    %7988 = vmatpush1.bf16.msra.mxu0 0
    %7989 = vmatprep.subr.bf16.mxu0 0
    %7990 = vmatpush1.bf16.msra.mxu0 0
    %7991 = vmatprep.subr.bf16.mxu0 0
    %7992 = vmatpush1.bf16.msra.mxu0 0
    %7993 = vmatprep.subr.bf16.mxu0 0
    %7994 = vmatpush1.bf16.msra.mxu0 0
    %7995 = vmatprep.subr.bf16.mxu0 0
    %7996 = vmatpush1.bf16.msra.mxu0 0
    %7997 = vmatprep.subr.bf16.mxu0 0
    %7998 = vmatpush1.bf16.msra.mxu0 0
    %7999 = vmatprep.subr.bf16.mxu0 0
    %8000 = vmatpush1.bf16.msra.mxu0 0
    %8001 = vmatprep.subr.bf16.mxu0 0
    %8002 = vmatpush1.bf16.msra.mxu0 0
    %8003 = vmatprep.subr.bf16.mxu0 0
    %8004 = vmatpush1.bf16.msra.mxu0 0
    %8005 = vmatprep.subr.bf16.mxu0 0
    %8006 = vmatpush1.bf16.msra.mxu0 0
    %8007 = vmatprep.subr.bf16.mxu0 0
    %8008 = vmatpush1.bf16.msra.mxu0 0
    %8009 = vmatprep.subr.bf16.mxu0 0
    %8010 = vmatpush1.bf16.msra.mxu0 0
    %8011 = vmatprep.mubr.bf16.mxu0 0
    %8012 = vmatmul.mubr.bf16.gmra.mrb[0].mxu0 %v7936
    %v8013 = vpop.f32.mrb[0].mxu0
    %v8014 = vadd.f32 %v208, %v8013
    %v8015 = vpop.f32.mrb[0].mxu0
    %v8016 = vpop.f32.mrb[0].mxu0
    %v8017 = vpop.f32.mrb[0].mxu0
    %8018 = vdwg.mxu0
    %v8020 = vsel %vm702, %v7770, 0
    %8022 = vmatprep.subr.bf16.mxu0 %v828
    %8023 = vmatpush1.bf16.msra.mxu0 %v827
    %8024 = vmatprep.subr.bf16.mxu0 %v831
    %8025 = vmatpush1.bf16.msra.mxu0 %v830
    %8026 = vmatprep.subr.bf16.mxu0 %v834
    %8027 = vmatpush1.bf16.msra.mxu0 %v833
    %8028 = vmatprep.subr.bf16.mxu0 %v837
    %8029 = vmatpush1.bf16.msra.mxu0 %v836
    %8030 = vmatprep.subr.bf16.mxu0 0
    %8031 = vmatpush1.bf16.msra.mxu0 0
    %8032 = vmatprep.subr.bf16.mxu0 0
    %8033 = vmatpush1.bf16.msra.mxu0 0
    %8034 = vmatprep.subr.bf16.mxu0 0
    %8035 = vmatpush1.bf16.msra.mxu0 0
    %8036 = vmatprep.subr.bf16.mxu0 0
    %8037 = vmatpush1.bf16.msra.mxu0 0
    %8038 = vmatprep.subr.bf16.mxu0 0
    %8039 = vmatpush1.bf16.msra.mxu0 0
    %8040 = vmatprep.subr.bf16.mxu0 0
    %8041 = vmatpush1.bf16.msra.mxu0 0
    %8042 = vmatprep.subr.bf16.mxu0 0
    %8043 = vmatpush1.bf16.msra.mxu0 0
    %8044 = vmatprep.subr.bf16.mxu0 0
    %8045 = vmatpush1.bf16.msra.mxu0 0
    %8046 = vmatprep.subr.bf16.mxu0 0
    %8047 = vmatpush1.bf16.msra.mxu0 0
    %8048 = vmatprep.subr.bf16.mxu0 0
    %8049 = vmatpush1.bf16.msra.mxu0 0
    %8050 = vmatprep.subr.bf16.mxu0 0
    %8051 = vmatpush1.bf16.msra.mxu0 0
    %8052 = vmatprep.subr.bf16.mxu0 0
    %8053 = vmatpush1.bf16.msra.mxu0 0
    %8054 = vmatprep.mubr.bf16.mxu0 0
    %8055 = vmatmul.mubr.bf16.gmra.mrb[0].mxu0 %v8020
    %v8056 = vpop.f32.mrb[0].mxu0
    %v8057 = vadd.f32 %v210, %v8056
    %v8058 = vpop.f32.mrb[0].mxu0
    %v8059 = vadd.f32 %v211, %v8058
    %v8060 = vpop.f32.mrb[0].mxu0
    %v8061 = vpop.f32.mrb[0].mxu0
    %8062 = vdwg.mxu0
    %8063 = vmatprep.subr.bf16.mxu0 0
    %8064 = vmatpush1.bf16.msra.mxu0 %v829
    %8065 = vmatprep.subr.bf16.mxu0 0
    %8066 = vmatpush1.bf16.msra.mxu0 %v832
    %8067 = vmatprep.subr.bf16.mxu0 0
    %8068 = vmatpush1.bf16.msra.mxu0 %v835
    %8069 = vmatprep.subr.bf16.mxu0 0
    %8070 = vmatpush1.bf16.msra.mxu0 %v838
    %8071 = vmatprep.subr.bf16.mxu0 0
    %8072 = vmatpush1.bf16.msra.mxu0 0
    %8073 = vmatprep.subr.bf16.mxu0 0
    %8074 = vmatpush1.bf16.msra.mxu0 0
    %8075 = vmatprep.subr.bf16.mxu0 0
    %8076 = vmatpush1.bf16.msra.mxu0 0
    %8077 = vmatprep.subr.bf16.mxu0 0
    %8078 = vmatpush1.bf16.msra.mxu0 0
    %8079 = vmatprep.subr.bf16.mxu0 0
    %8080 = vmatpush1.bf16.msra.mxu0 0
    %8081 = vmatprep.subr.bf16.mxu0 0
    %8082 = vmatpush1.bf16.msra.mxu0 0
    %8083 = vmatprep.subr.bf16.mxu0 0
    %8084 = vmatpush1.bf16.msra.mxu0 0
    %8085 = vmatprep.subr.bf16.mxu0 0
    %8086 = vmatpush1.bf16.msra.mxu0 0
    %8087 = vmatprep.subr.bf16.mxu0 0
    %8088 = vmatpush1.bf16.msra.mxu0 0
    %8089 = vmatprep.subr.bf16.mxu0 0
    %8090 = vmatpush1.bf16.msra.mxu0 0
    %8091 = vmatprep.subr.bf16.mxu0 0
    %8092 = vmatpush1.bf16.msra.mxu0 0
    %8093 = vmatprep.subr.bf16.mxu0 0
    %8094 = vmatpush1.bf16.msra.mxu0 0
    %8095 = vmatprep.mubr.bf16.mxu0 0
    %8096 = vmatmul.mubr.bf16.gmra.mrb[0].mxu0 %v8020
    %v8097 = vpop.f32.mrb[0].mxu0
    %v8098 = vadd.f32 %v212, %v8097
    %v8099 = vpop.f32.mrb[0].mxu0
    %v8100 = vpop.f32.mrb[0].mxu0
    %v8101 = vpop.f32.mrb[0].mxu0
    %8102 = vdwg.mxu0
    %v8103 = vadd.f32 %v7973, %v7807
    %v8104 = vxor.u32 %v8103, 2147483648
    %v8105 = vmul.f32 %v8104, 1.442695
    %v8106 = vpow.pop %v8105
    %v8107 = vadd.f32 %v8106, 1.0
    %v8108 = vrcp.pop %v8107
    %v8109 = vmul.f32 1.0, %v8108
    %v8110 = vadd.f32 %v7975, %v7809
    %v8111 = vxor.u32 %v8110, 2147483648
    %v8112 = vmul.f32 %v8111, 1.442695
    %v8113 = vpow.pop %v8112
    %v8114 = vadd.f32 %v8113, 1.0
    %v8115 = vrcp.pop %v8114
    %v8116 = vmul.f32 1.0, %v8115
    %v8117 = vmul.f32 %v8109, %v7848
    %v8118 = vadd.f32 %v8014, %v8117
    %v8119 = vtanh.pop %v8118
    %v8120 = vsub.f32 %v7765, %v8119
    %v8121 = vmul.f32 %v8116, %v8120
    %v8122 = vadd.f32 %v8119, %v8121
    %v8123 = vadd.f32 %v8057, %v7889
    %v8124 = vxor.u32 %v8123, 2147483648
    %v8125 = vmul.f32 %v8124, 1.442695
    %v8126 = vpow.pop %v8125
    %v8127 = vadd.f32 %v8126, 1.0
    %v8128 = vrcp.pop %v8127
    %v8129 = vmul.f32 1.0, %v8128
    %v8130 = vadd.f32 %v8059, %v7891
    %v8131 = vxor.u32 %v8130, 2147483648
    %v8132 = vmul.f32 %v8131, 1.442695
    %v8133 = vpow.pop %v8132
    %v8134 = vadd.f32 %v8133, 1.0
    %v8135 = vrcp.pop %v8134
    %v8136 = vmul.f32 1.0, %v8135
    %v8137 = vmul.f32 %v8129, %v7930
    %v8138 = vadd.f32 %v8098, %v8137
    %v8139 = vtanh.pop %v8138
    %v8140 = vsub.f32 %v7766, %v8139
    %v8141 = vmul.f32 %v8136, %v8140
    %v8142 = vadd.f32 %v8139, %v8141
    %8143 = vst [vmem:[#allocation2] sm:$0xff] %v8122
    %8144 = vst [vmem:[#allocation3] sm:$0xff] %v8142
    %v8146 = vcombine.high %v8122, %v8122
    %v8148 = vunpack.c.l.s4 1966171168
    %v8149 = vunpack.c.0.s8 %v8148
    %v8150 = vlaneseq
    %v8151 = vshrl.u32 %v8150, 7
    %v8152 = vsub.s32 %v8149, %v8151
    %v8153 = vrot.slane %v8122, %v8152
    %v8155 = vunpack.c.l.s4 1966171168
    %v8156 = vunpack.c.0.s8 %v8155
    %v8157 = vlaneseq
    %v8158 = vshrl.u32 %v8157, 7
    %v8159 = vsub.s32 %v8156, %v8158
    %v8160 = vrot.slane %v8146, %v8159
    %v8161 = vcombine.high %v8153, %v8153
    %v8162 = vcombine.high %v8160, %v8160
    %v8164 = vunpack.c.l.s4 1966171168
    %v8165 = vunpack.c.0.s8 %v8164
    %v8166 = vlaneseq
    %v8167 = vshrl.u32 %v8166, 7
    %v8168 = vsub.s32 %v8165, %v8167
    %v8169 = vrot.slane %v8153, %v8168
    %v8171 = vunpack.c.l.s4 1966171168
    %v8172 = vunpack.c.0.s8 %v8171
    %v8173 = vlaneseq
    %v8174 = vshrl.u32 %v8173, 7
    %v8175 = vsub.s32 %v8172, %v8174
    %v8176 = vrot.slane %v8160, %v8175
    %v8178 = vunpack.c.l.s4 1966171168
    %v8179 = vunpack.c.0.s8 %v8178
    %v8180 = vlaneseq
    %v8181 = vshrl.u32 %v8180, 7
    %v8182 = vsub.s32 %v8179, %v8181
    %v8183 = vrot.slane %v8161, %v8182
    %v8185 = vunpack.c.l.s4 1966171168
    %v8186 = vunpack.c.0.s8 %v8185
    %v8187 = vlaneseq
    %v8188 = vshrl.u32 %v8187, 7
    %v8189 = vsub.s32 %v8186, %v8188
    %v8190 = vrot.slane %v8162, %v8189
    %v8191 = vcombine.high %v8169, %v8169
    %v8192 = vcombine.high %v8176, %v8176
    %v8193 = vcombine.high %v8183, %v8183
    %v8194 = vcombine.high %v8190, %v8190
    %8203 = vst [vmem:[#allocation13 + $0xe] sm:$0x1] %v8169
    %8204 = vst [vmem:[#allocation13 + $0x1e] sm:$0x1] %v8183
    %8205 = vst [vmem:[#allocation13 + $0x2e] sm:$0x1] %v8191
    %8206 = vst [vmem:[#allocation13 + $0x3e] sm:$0x1] %v8193
    %8207 = vst [vmem:[#allocation13 + $0x4e] sm:$0x1] %v8176
    %8208 = vst [vmem:[#allocation13 + $0x5e] sm:$0x1] %v8190
    %8209 = vst [vmem:[#allocation13 + $0x6e] sm:$0x1] %v8192
    %8210 = vst [vmem:[#allocation13 + $0x7e] sm:$0x1] %v8194
    %v8212 = vcombine.high %v8142, %v8142
    %v8214 = vunpack.c.l.s4 1966171168
    %v8215 = vunpack.c.0.s8 %v8214
    %v8216 = vlaneseq
    %v8217 = vshrl.u32 %v8216, 7
    %v8218 = vsub.s32 %v8215, %v8217
    %v8219 = vrot.slane %v8142, %v8218
    %v8221 = vunpack.c.l.s4 1966171168
    %v8222 = vunpack.c.0.s8 %v8221
    %v8223 = vlaneseq
    %v8224 = vshrl.u32 %v8223, 7
    %v8225 = vsub.s32 %v8222, %v8224
    %v8226 = vrot.slane %v8212, %v8225
    %v8227 = vcombine.high %v8219, %v8219
    %v8228 = vcombine.high %v8226, %v8226
    %v8230 = vunpack.c.l.s4 1966171168
    %v8231 = vunpack.c.0.s8 %v8230
    %v8232 = vlaneseq
    %v8233 = vshrl.u32 %v8232, 7
    %v8234 = vsub.s32 %v8231, %v8233
    %v8235 = vrot.slane %v8219, %v8234
    %v8237 = vunpack.c.l.s4 1966171168
    %v8238 = vunpack.c.0.s8 %v8237
    %v8239 = vlaneseq
    %v8240 = vshrl.u32 %v8239, 7
    %v8241 = vsub.s32 %v8238, %v8240
    %v8242 = vrot.slane %v8226, %v8241
    %v8244 = vunpack.c.l.s4 1966171168
    %v8245 = vunpack.c.0.s8 %v8244
    %v8246 = vlaneseq
    %v8247 = vshrl.u32 %v8246, 7
    %v8248 = vsub.s32 %v8245, %v8247
    %v8249 = vrot.slane %v8227, %v8248
    %v8251 = vunpack.c.l.s4 1966171168
    %v8252 = vunpack.c.0.s8 %v8251
    %v8253 = vlaneseq
    %v8254 = vshrl.u32 %v8253, 7
    %v8255 = vsub.s32 %v8252, %v8254
    %v8256 = vrot.slane %v8228, %v8255
    %v8257 = vcombine.high %v8235, %v8235
    %v8258 = vcombine.high %v8242, %v8242
    %v8259 = vcombine.high %v8249, %v8249
    %v8260 = vcombine.high %v8256, %v8256
    %8269 = vst [vmem:[#allocation14 + $0x1] sm:$0x1] %v8235
    %8270 = vst [vmem:[#allocation14 + $0x11] sm:$0x1] %v8249
    %8271 = vst [vmem:[#allocation14 + $0x21] sm:$0x1] %v8257
    %8272 = vst [vmem:[#allocation14 + $0x31] sm:$0x1] %v8259
    %8273 = vst [vmem:[#allocation14 + $0x41] sm:$0x1] %v8242
    %8274 = vst [vmem:[#allocation14 + $0x51] sm:$0x1] %v8256
    %8275 = vst [vmem:[#allocation14 + $0x61] sm:$0x1] %v8258
    %8276 = vst [vmem:[#allocation14 + $0x71] sm:$0x1] %v8260
    %v8277 = vld [vmem:[#allocation2] sm:$0xff]
    %v8278 = vld [vmem:[#allocation3] sm:$0xff]
    %s8279 = scalar_lea.vmem [#allocation4], 60
    %v8280 = vld [vmem:[%s8279] sm:$0xf]
    %v8281 = vld [vmem:[#allocation7] sm:$0xf]
    %v8282 = vpack.c.bf16 %v8277, %v8277
    %8283 = vmatprep.subr.bf16.mxu0 %v300
    %8284 = vmatpush1.bf16.msra.mxu0 %v299
    %8285 = vmatprep.subr.bf16.mxu0 %v303
    %8286 = vmatpush1.bf16.msra.mxu0 %v302
    %8287 = vmatprep.subr.bf16.mxu0 %v306
    %8288 = vmatpush1.bf16.msra.mxu0 %v305
    %8289 = vmatprep.subr.bf16.mxu0 %v309
    %8290 = vmatpush1.bf16.msra.mxu0 %v308
    %8291 = vmatprep.subr.bf16.mxu0 %v312
    %8292 = vmatpush1.bf16.msra.mxu0 %v311
    %8293 = vmatprep.subr.bf16.mxu0 %v315
    %8294 = vmatpush1.bf16.msra.mxu0 %v314
    %8295 = vmatprep.subr.bf16.mxu0 %v318
    %8296 = vmatpush1.bf16.msra.mxu0 %v317
    %8297 = vmatprep.subr.bf16.mxu0 %v321
    %8298 = vmatpush1.bf16.msra.mxu0 %v320
    %8299 = vmatprep.subr.bf16.mxu0 0
    %8300 = vmatpush1.bf16.msra.mxu0 0
    %8301 = vmatprep.subr.bf16.mxu0 0
    %8302 = vmatpush1.bf16.msra.mxu0 0
    %8303 = vmatprep.subr.bf16.mxu0 0
    %8304 = vmatpush1.bf16.msra.mxu0 0
    %8305 = vmatprep.subr.bf16.mxu0 0
    %8306 = vmatpush1.bf16.msra.mxu0 0
    %8307 = vmatprep.subr.bf16.mxu0 0
    %8308 = vmatpush1.bf16.msra.mxu0 0
    %8309 = vmatprep.subr.bf16.mxu0 0
    %8310 = vmatpush1.bf16.msra.mxu0 0
    %8311 = vmatprep.subr.bf16.mxu0 0
    %8312 = vmatpush1.bf16.msra.mxu0 0
    %8313 = vmatprep.subr.bf16.mxu0 0
    %8314 = vmatpush1.bf16.msra.mxu0 0
    %8315 = vmatprep.mubr.bf16.mxu0 0
    %8316 = vmatmul.mubr.bf16.gmra.mrb[0].mxu0 %v8282
    %v8317 = vpop.f32.mrb[0].mxu0
    %v8318 = vadd.f32 0.0, %v8317
    %v8319 = vpop.f32.mrb[0].mxu0
    %v8320 = vadd.f32 0.0, %v8319
    %v8321 = vpop.f32.mrb[0].mxu0
    %v8322 = vpop.f32.mrb[0].mxu0
    %8323 = vdwg.mxu0
    %8324 = vmatprep.subr.bf16.mxu0 0
    %8325 = vmatpush1.bf16.msra.mxu0 %v301
    %8326 = vmatprep.subr.bf16.mxu0 0
    %8327 = vmatpush1.bf16.msra.mxu0 %v304
    %8328 = vmatprep.subr.bf16.mxu0 0
    %8329 = vmatpush1.bf16.msra.mxu0 %v307
    %8330 = vmatprep.subr.bf16.mxu0 0
    %8331 = vmatpush1.bf16.msra.mxu0 %v310
    %8332 = vmatprep.subr.bf16.mxu0 0
    %8333 = vmatpush1.bf16.msra.mxu0 %v313
    %8334 = vmatprep.subr.bf16.mxu0 0
    %8335 = vmatpush1.bf16.msra.mxu0 %v316
    %8336 = vmatprep.subr.bf16.mxu0 0
    %8337 = vmatpush1.bf16.msra.mxu0 %v319
    %8338 = vmatprep.subr.bf16.mxu0 0
    %8339 = vmatpush1.bf16.msra.mxu0 %v322
    %8340 = vmatprep.subr.bf16.mxu0 0
    %8341 = vmatpush1.bf16.msra.mxu0 0
    %8342 = vmatprep.subr.bf16.mxu0 0
    %8343 = vmatpush1.bf16.msra.mxu0 0
    %8344 = vmatprep.subr.bf16.mxu0 0
    %8345 = vmatpush1.bf16.msra.mxu0 0
    %8346 = vmatprep.subr.bf16.mxu0 0
    %8347 = vmatpush1.bf16.msra.mxu0 0
    %8348 = vmatprep.subr.bf16.mxu0 0
    %8349 = vmatpush1.bf16.msra.mxu0 0
    %8350 = vmatprep.subr.bf16.mxu0 0
    %8351 = vmatpush1.bf16.msra.mxu0 0
    %8352 = vmatprep.subr.bf16.mxu0 0
    %8353 = vmatpush1.bf16.msra.mxu0 0
    %8354 = vmatprep.subr.bf16.mxu0 0
    %8355 = vmatpush1.bf16.msra.mxu0 0
    %8356 = vmatprep.mubr.bf16.mxu0 0
    %8357 = vmatmul.mubr.bf16.gmra.mrb[0].mxu0 %v8282
    %v8358 = vpop.f32.mrb[0].mxu0
    %v8359 = vadd.f32 0.0, %v8358
    %v8360 = vpop.f32.mrb[0].mxu0
    %v8361 = vpop.f32.mrb[0].mxu0
    %v8362 = vpop.f32.mrb[0].mxu0
    %8363 = vdwg.mxu0
    %v8364 = vpack.c.bf16 %v8278, %v8278
    %8365 = vmatprep.subr.bf16.mxu0 %v510
    %8366 = vmatpush1.bf16.msra.mxu0 %v509
    %8367 = vmatprep.subr.bf16.mxu0 %v513
    %8368 = vmatpush1.bf16.msra.mxu0 %v512
    %8369 = vmatprep.subr.bf16.mxu0 %v516
    %8370 = vmatpush1.bf16.msra.mxu0 %v515
    %8371 = vmatprep.subr.bf16.mxu0 %v519
    %8372 = vmatpush1.bf16.msra.mxu0 %v518
    %8373 = vmatprep.subr.bf16.mxu0 %v522
    %8374 = vmatpush1.bf16.msra.mxu0 %v521
    %8375 = vmatprep.subr.bf16.mxu0 %v525
    %8376 = vmatpush1.bf16.msra.mxu0 %v524
    %8377 = vmatprep.subr.bf16.mxu0 %v528
    %8378 = vmatpush1.bf16.msra.mxu0 %v527
    %8379 = vmatprep.subr.bf16.mxu0 %v531
    %8380 = vmatpush1.bf16.msra.mxu0 %v530
    %8381 = vmatprep.subr.bf16.mxu0 0
    %8382 = vmatpush1.bf16.msra.mxu0 0
    %8383 = vmatprep.subr.bf16.mxu0 0
    %8384 = vmatpush1.bf16.msra.mxu0 0
    %8385 = vmatprep.subr.bf16.mxu0 0
    %8386 = vmatpush1.bf16.msra.mxu0 0
    %8387 = vmatprep.subr.bf16.mxu0 0
    %8388 = vmatpush1.bf16.msra.mxu0 0
    %8389 = vmatprep.subr.bf16.mxu0 0
    %8390 = vmatpush1.bf16.msra.mxu0 0
    %8391 = vmatprep.subr.bf16.mxu0 0
    %8392 = vmatpush1.bf16.msra.mxu0 0
    %8393 = vmatprep.subr.bf16.mxu0 0
    %8394 = vmatpush1.bf16.msra.mxu0 0
    %8395 = vmatprep.subr.bf16.mxu0 0
    %8396 = vmatpush1.bf16.msra.mxu0 0
    %8397 = vmatprep.mubr.bf16.mxu0 0
    %8398 = vmatmul.mubr.bf16.gmra.mrb[0].mxu0 %v8364
    %v8399 = vpop.f32.mrb[0].mxu0
    %v8400 = vadd.f32 0.0, %v8399
    %v8401 = vpop.f32.mrb[0].mxu0
    %v8402 = vadd.f32 0.0, %v8401
    %v8403 = vpop.f32.mrb[0].mxu0
    %v8404 = vpop.f32.mrb[0].mxu0
    %8405 = vdwg.mxu0
    %8406 = vmatprep.subr.bf16.mxu0 0
    %8407 = vmatpush1.bf16.msra.mxu0 %v511
    %8408 = vmatprep.subr.bf16.mxu0 0
    %8409 = vmatpush1.bf16.msra.mxu0 %v514
    %8410 = vmatprep.subr.bf16.mxu0 0
    %8411 = vmatpush1.bf16.msra.mxu0 %v517
    %8412 = vmatprep.subr.bf16.mxu0 0
    %8413 = vmatpush1.bf16.msra.mxu0 %v520
    %8414 = vmatprep.subr.bf16.mxu0 0
    %8415 = vmatpush1.bf16.msra.mxu0 %v523
    %8416 = vmatprep.subr.bf16.mxu0 0
    %8417 = vmatpush1.bf16.msra.mxu0 %v526
    %8418 = vmatprep.subr.bf16.mxu0 0
    %8419 = vmatpush1.bf16.msra.mxu0 %v529
    %8420 = vmatprep.subr.bf16.mxu0 0
    %8421 = vmatpush1.bf16.msra.mxu0 %v532
    %8422 = vmatprep.subr.bf16.mxu0 0
    %8423 = vmatpush1.bf16.msra.mxu0 0
    %8424 = vmatprep.subr.bf16.mxu0 0
    %8425 = vmatpush1.bf16.msra.mxu0 0
    %8426 = vmatprep.subr.bf16.mxu0 0
    %8427 = vmatpush1.bf16.msra.mxu0 0
    %8428 = vmatprep.subr.bf16.mxu0 0
    %8429 = vmatpush1.bf16.msra.mxu0 0
    %8430 = vmatprep.subr.bf16.mxu0 0
    %8431 = vmatpush1.bf16.msra.mxu0 0
    %8432 = vmatprep.subr.bf16.mxu0 0
    %8433 = vmatpush1.bf16.msra.mxu0 0
    %8434 = vmatprep.subr.bf16.mxu0 0
    %8435 = vmatpush1.bf16.msra.mxu0 0
    %8436 = vmatprep.subr.bf16.mxu0 0
    %8437 = vmatpush1.bf16.msra.mxu0 0
    %8438 = vmatprep.mubr.bf16.mxu0 0
    %8439 = vmatmul.mubr.bf16.gmra.mrb[0].mxu0 %v8364
    %v8440 = vpop.f32.mrb[0].mxu0
    %v8441 = vadd.f32 0.0, %v8440
    %v8442 = vpop.f32.mrb[0].mxu0
    %v8443 = vpop.f32.mrb[0].mxu0
    %v8444 = vpop.f32.mrb[0].mxu0
    %8445 = vdwg.mxu0
    %v8447 = vsel %vm702, %v8280, 0
    %8449 = vmatprep.subr.bf16.mxu0 %v679
    %8450 = vmatpush1.bf16.msra.mxu0 %v678
    %8451 = vmatprep.subr.bf16.mxu0 %v682
    %8452 = vmatpush1.bf16.msra.mxu0 %v681
    %8453 = vmatprep.subr.bf16.mxu0 %v685
    %8454 = vmatpush1.bf16.msra.mxu0 %v684
    %8455 = vmatprep.subr.bf16.mxu0 %v688
    %8456 = vmatpush1.bf16.msra.mxu0 %v687
    %8457 = vmatprep.subr.bf16.mxu0 0
    %8458 = vmatpush1.bf16.msra.mxu0 0
    %8459 = vmatprep.subr.bf16.mxu0 0
    %8460 = vmatpush1.bf16.msra.mxu0 0
    %8461 = vmatprep.subr.bf16.mxu0 0
    %8462 = vmatpush1.bf16.msra.mxu0 0
    %8463 = vmatprep.subr.bf16.mxu0 0
    %8464 = vmatpush1.bf16.msra.mxu0 0
    %8465 = vmatprep.subr.bf16.mxu0 0
    %8466 = vmatpush1.bf16.msra.mxu0 0
    %8467 = vmatprep.subr.bf16.mxu0 0
    %8468 = vmatpush1.bf16.msra.mxu0 0
    %8469 = vmatprep.subr.bf16.mxu0 0
    %8470 = vmatpush1.bf16.msra.mxu0 0
    %8471 = vmatprep.subr.bf16.mxu0 0
    %8472 = vmatpush1.bf16.msra.mxu0 0
    %8473 = vmatprep.subr.bf16.mxu0 0
    %8474 = vmatpush1.bf16.msra.mxu0 0
    %8475 = vmatprep.subr.bf16.mxu0 0
    %8476 = vmatpush1.bf16.msra.mxu0 0
    %8477 = vmatprep.subr.bf16.mxu0 0
    %8478 = vmatpush1.bf16.msra.mxu0 0
    %8479 = vmatprep.subr.bf16.mxu0 0
    %8480 = vmatpush1.bf16.msra.mxu0 0
    %8481 = vmatprep.mubr.bf16.mxu0 0
    %8482 = vmatmul.mubr.bf16.gmra.mrb[0].mxu0 %v8447
    %v8483 = vpop.f32.mrb[0].mxu0
    %v8484 = vadd.f32 %v206, %v8483
    %v8485 = vpop.f32.mrb[0].mxu0
    %v8486 = vadd.f32 %v207, %v8485
    %v8487 = vpop.f32.mrb[0].mxu0
    %v8488 = vpop.f32.mrb[0].mxu0
    %8489 = vdwg.mxu0
    %8490 = vmatprep.subr.bf16.mxu0 0
    %8491 = vmatpush1.bf16.msra.mxu0 %v680
    %8492 = vmatprep.subr.bf16.mxu0 0
    %8493 = vmatpush1.bf16.msra.mxu0 %v683
    %8494 = vmatprep.subr.bf16.mxu0 0
    %8495 = vmatpush1.bf16.msra.mxu0 %v686
    %8496 = vmatprep.subr.bf16.mxu0 0
    %8497 = vmatpush1.bf16.msra.mxu0 %v689
    %8498 = vmatprep.subr.bf16.mxu0 0
    %8499 = vmatpush1.bf16.msra.mxu0 0
    %8500 = vmatprep.subr.bf16.mxu0 0
    %8501 = vmatpush1.bf16.msra.mxu0 0
    %8502 = vmatprep.subr.bf16.mxu0 0
    %8503 = vmatpush1.bf16.msra.mxu0 0
    %8504 = vmatprep.subr.bf16.mxu0 0
    %8505 = vmatpush1.bf16.msra.mxu0 0
    %8506 = vmatprep.subr.bf16.mxu0 0
    %8507 = vmatpush1.bf16.msra.mxu0 0
    %8508 = vmatprep.subr.bf16.mxu0 0
    %8509 = vmatpush1.bf16.msra.mxu0 0
    %8510 = vmatprep.subr.bf16.mxu0 0
    %8511 = vmatpush1.bf16.msra.mxu0 0
    %8512 = vmatprep.subr.bf16.mxu0 0
    %8513 = vmatpush1.bf16.msra.mxu0 0
    %8514 = vmatprep.subr.bf16.mxu0 0
    %8515 = vmatpush1.bf16.msra.mxu0 0
    %8516 = vmatprep.subr.bf16.mxu0 0
    %8517 = vmatpush1.bf16.msra.mxu0 0
    %8518 = vmatprep.subr.bf16.mxu0 0
    %8519 = vmatpush1.bf16.msra.mxu0 0
    %8520 = vmatprep.subr.bf16.mxu0 0
    %8521 = vmatpush1.bf16.msra.mxu0 0
    %8522 = vmatprep.mubr.bf16.mxu0 0
    %8523 = vmatmul.mubr.bf16.gmra.mrb[0].mxu0 %v8447
    %v8524 = vpop.f32.mrb[0].mxu0
    %v8525 = vadd.f32 %v208, %v8524
    %v8526 = vpop.f32.mrb[0].mxu0
    %v8527 = vpop.f32.mrb[0].mxu0
    %v8528 = vpop.f32.mrb[0].mxu0
    %8529 = vdwg.mxu0
    %v8531 = vsel %vm702, %v8281, 0
    %8533 = vmatprep.subr.bf16.mxu0 %v828
    %8534 = vmatpush1.bf16.msra.mxu0 %v827
    %8535 = vmatprep.subr.bf16.mxu0 %v831
    %8536 = vmatpush1.bf16.msra.mxu0 %v830
    %8537 = vmatprep.subr.bf16.mxu0 %v834
    %8538 = vmatpush1.bf16.msra.mxu0 %v833
    %8539 = vmatprep.subr.bf16.mxu0 %v837
    %8540 = vmatpush1.bf16.msra.mxu0 %v836
    %8541 = vmatprep.subr.bf16.mxu0 0
    %8542 = vmatpush1.bf16.msra.mxu0 0
    %8543 = vmatprep.subr.bf16.mxu0 0
    %8544 = vmatpush1.bf16.msra.mxu0 0
    %8545 = vmatprep.subr.bf16.mxu0 0
    %8546 = vmatpush1.bf16.msra.mxu0 0
    %8547 = vmatprep.subr.bf16.mxu0 0
    %8548 = vmatpush1.bf16.msra.mxu0 0
    %8549 = vmatprep.subr.bf16.mxu0 0
    %8550 = vmatpush1.bf16.msra.mxu0 0
    %8551 = vmatprep.subr.bf16.mxu0 0
    %8552 = vmatpush1.bf16.msra.mxu0 0
    %8553 = vmatprep.subr.bf16.mxu0 0
    %8554 = vmatpush1.bf16.msra.mxu0 0
    %8555 = vmatprep.subr.bf16.mxu0 0
    %8556 = vmatpush1.bf16.msra.mxu0 0
    %8557 = vmatprep.subr.bf16.mxu0 0
    %8558 = vmatpush1.bf16.msra.mxu0 0
    %8559 = vmatprep.subr.bf16.mxu0 0
    %8560 = vmatpush1.bf16.msra.mxu0 0
    %8561 = vmatprep.subr.bf16.mxu0 0
    %8562 = vmatpush1.bf16.msra.mxu0 0
    %8563 = vmatprep.subr.bf16.mxu0 0
    %8564 = vmatpush1.bf16.msra.mxu0 0
    %8565 = vmatprep.mubr.bf16.mxu0 0
    %8566 = vmatmul.mubr.bf16.gmra.mrb[0].mxu0 %v8531
    %v8567 = vpop.f32.mrb[0].mxu0
    %v8568 = vadd.f32 %v210, %v8567
    %v8569 = vpop.f32.mrb[0].mxu0
    %v8570 = vadd.f32 %v211, %v8569
    %v8571 = vpop.f32.mrb[0].mxu0
    %v8572 = vpop.f32.mrb[0].mxu0
    %8573 = vdwg.mxu0
    %8574 = vmatprep.subr.bf16.mxu0 0
    %8575 = vmatpush1.bf16.msra.mxu0 %v829
    %8576 = vmatprep.subr.bf16.mxu0 0
    %8577 = vmatpush1.bf16.msra.mxu0 %v832
    %8578 = vmatprep.subr.bf16.mxu0 0
    %8579 = vmatpush1.bf16.msra.mxu0 %v835
    %8580 = vmatprep.subr.bf16.mxu0 0
    %8581 = vmatpush1.bf16.msra.mxu0 %v838
    %8582 = vmatprep.subr.bf16.mxu0 0
    %8583 = vmatpush1.bf16.msra.mxu0 0
    %8584 = vmatprep.subr.bf16.mxu0 0
    %8585 = vmatpush1.bf16.msra.mxu0 0
    %8586 = vmatprep.subr.bf16.mxu0 0
    %8587 = vmatpush1.bf16.msra.mxu0 0
    %8588 = vmatprep.subr.bf16.mxu0 0
    %8589 = vmatpush1.bf16.msra.mxu0 0
    %8590 = vmatprep.subr.bf16.mxu0 0
    %8591 = vmatpush1.bf16.msra.mxu0 0
    %8592 = vmatprep.subr.bf16.mxu0 0
    %8593 = vmatpush1.bf16.msra.mxu0 0
    %8594 = vmatprep.subr.bf16.mxu0 0
    %8595 = vmatpush1.bf16.msra.mxu0 0
    %8596 = vmatprep.subr.bf16.mxu0 0
    %8597 = vmatpush1.bf16.msra.mxu0 0
    %8598 = vmatprep.subr.bf16.mxu0 0
    %8599 = vmatpush1.bf16.msra.mxu0 0
    %8600 = vmatprep.subr.bf16.mxu0 0
    %8601 = vmatpush1.bf16.msra.mxu0 0
    %8602 = vmatprep.subr.bf16.mxu0 0
    %8603 = vmatpush1.bf16.msra.mxu0 0
    %8604 = vmatprep.subr.bf16.mxu0 0
    %8605 = vmatpush1.bf16.msra.mxu0 0
    %8606 = vmatprep.mubr.bf16.mxu0 0
    %8607 = vmatmul.mubr.bf16.gmra.mrb[0].mxu0 %v8531
    %v8608 = vpop.f32.mrb[0].mxu0
    %v8609 = vadd.f32 %v212, %v8608
    %v8610 = vpop.f32.mrb[0].mxu0
    %v8611 = vpop.f32.mrb[0].mxu0
    %v8612 = vpop.f32.mrb[0].mxu0
    %8613 = vdwg.mxu0
    %v8614 = vadd.f32 %v8484, %v8318
    %v8615 = vxor.u32 %v8614, 2147483648
    %v8616 = vmul.f32 %v8615, 1.442695
    %v8617 = vpow.pop %v8616
    %v8618 = vadd.f32 %v8617, 1.0
    %v8619 = vrcp.pop %v8618
    %v8620 = vmul.f32 1.0, %v8619
    %v8621 = vadd.f32 %v8486, %v8320
    %v8622 = vxor.u32 %v8621, 2147483648
    %v8623 = vmul.f32 %v8622, 1.442695
    %v8624 = vpow.pop %v8623
    %v8625 = vadd.f32 %v8624, 1.0
    %v8626 = vrcp.pop %v8625
    %v8627 = vmul.f32 1.0, %v8626
    %v8628 = vmul.f32 %v8620, %v8359
    %v8629 = vadd.f32 %v8525, %v8628
    %v8630 = vtanh.pop %v8629
    %v8631 = vsub.f32 %v8277, %v8630
    %v8632 = vmul.f32 %v8627, %v8631
    %v8633 = vadd.f32 %v8630, %v8632
    %v8634 = vadd.f32 %v8568, %v8400
    %v8635 = vxor.u32 %v8634, 2147483648
    %v8636 = vmul.f32 %v8635, 1.442695
    %v8637 = vpow.pop %v8636
    %v8638 = vadd.f32 %v8637, 1.0
    %v8639 = vrcp.pop %v8638
    %v8640 = vmul.f32 1.0, %v8639
    %v8641 = vadd.f32 %v8570, %v8402
    %v8642 = vxor.u32 %v8641, 2147483648
    %v8643 = vmul.f32 %v8642, 1.442695
    %v8644 = vpow.pop %v8643
    %v8645 = vadd.f32 %v8644, 1.0
    %v8646 = vrcp.pop %v8645
    %v8647 = vmul.f32 1.0, %v8646
    %v8648 = vmul.f32 %v8640, %v8441
    %v8649 = vadd.f32 %v8609, %v8648
    %v8650 = vtanh.pop %v8649
    %v8651 = vsub.f32 %v8278, %v8650
    %v8652 = vmul.f32 %v8647, %v8651
    %v8653 = vadd.f32 %v8650, %v8652
    %8654 = vst [vmem:[#allocation2] sm:$0xff] %v8633
    %8655 = vst [vmem:[#allocation3] sm:$0xff] %v8653
    %v8657 = vcombine.high %v8633, %v8633
    %v8659 = vunpack.c.l.s4 1966171168
    %v8660 = vunpack.c.0.s8 %v8659
    %v8661 = vlaneseq
    %v8662 = vshrl.u32 %v8661, 7
    %v8663 = vsub.s32 %v8660, %v8662
    %v8664 = vrot.slane %v8633, %v8663
    %v8666 = vunpack.c.l.s4 1966171168
    %v8667 = vunpack.c.0.s8 %v8666
    %v8668 = vlaneseq
    %v8669 = vshrl.u32 %v8668, 7
    %v8670 = vsub.s32 %v8667, %v8669
    %v8671 = vrot.slane %v8657, %v8670
    %v8672 = vcombine.high %v8664, %v8664
    %v8673 = vcombine.high %v8671, %v8671
    %v8675 = vunpack.c.l.s4 1966171168
    %v8676 = vunpack.c.0.s8 %v8675
    %v8677 = vlaneseq
    %v8678 = vshrl.u32 %v8677, 7
    %v8679 = vsub.s32 %v8676, %v8678
    %v8680 = vrot.slane %v8664, %v8679
    %v8682 = vunpack.c.l.s4 1966171168
    %v8683 = vunpack.c.0.s8 %v8682
    %v8684 = vlaneseq
    %v8685 = vshrl.u32 %v8684, 7
    %v8686 = vsub.s32 %v8683, %v8685
    %v8687 = vrot.slane %v8671, %v8686
    %v8689 = vunpack.c.l.s4 1966171168
    %v8690 = vunpack.c.0.s8 %v8689
    %v8691 = vlaneseq
    %v8692 = vshrl.u32 %v8691, 7
    %v8693 = vsub.s32 %v8690, %v8692
    %v8694 = vrot.slane %v8672, %v8693
    %v8696 = vunpack.c.l.s4 1966171168
    %v8697 = vunpack.c.0.s8 %v8696
    %v8698 = vlaneseq
    %v8699 = vshrl.u32 %v8698, 7
    %v8700 = vsub.s32 %v8697, %v8699
    %v8701 = vrot.slane %v8673, %v8700
    %v8702 = vcombine.high %v8680, %v8680
    %v8703 = vcombine.high %v8687, %v8687
    %v8704 = vcombine.high %v8694, %v8694
    %v8705 = vcombine.high %v8701, %v8701
    %8714 = vst [vmem:[#allocation13 + $0xf] sm:$0x1] %v8680
    %8715 = vst [vmem:[#allocation13 + $0x1f] sm:$0x1] %v8694
    %8716 = vst [vmem:[#allocation13 + $0x2f] sm:$0x1] %v8702
    %8717 = vst [vmem:[#allocation13 + $0x3f] sm:$0x1] %v8704
    %8718 = vst [vmem:[#allocation13 + $0x4f] sm:$0x1] %v8687
    %8719 = vst [vmem:[#allocation13 + $0x5f] sm:$0x1] %v8701
    %8720 = vst [vmem:[#allocation13 + $0x6f] sm:$0x1] %v8703
    %8721 = vst [vmem:[#allocation13 + $0x7f] sm:$0x1] %v8705
    %v8723 = vcombine.high %v8653, %v8653
    %v8725 = vunpack.c.l.s4 1966171168
    %v8726 = vunpack.c.0.s8 %v8725
    %v8727 = vlaneseq
    %v8728 = vshrl.u32 %v8727, 7
    %v8729 = vsub.s32 %v8726, %v8728
    %v8730 = vrot.slane %v8653, %v8729
    %v8732 = vunpack.c.l.s4 1966171168
    %v8733 = vunpack.c.0.s8 %v8732
    %v8734 = vlaneseq
    %v8735 = vshrl.u32 %v8734, 7
    %v8736 = vsub.s32 %v8733, %v8735
    %v8737 = vrot.slane %v8723, %v8736
    %v8738 = vcombine.high %v8730, %v8730
    %v8739 = vcombine.high %v8737, %v8737
    %v8741 = vunpack.c.l.s4 1966171168
    %v8742 = vunpack.c.0.s8 %v8741
    %v8743 = vlaneseq
    %v8744 = vshrl.u32 %v8743, 7
    %v8745 = vsub.s32 %v8742, %v8744
    %v8746 = vrot.slane %v8730, %v8745
    %v8748 = vunpack.c.l.s4 1966171168
    %v8749 = vunpack.c.0.s8 %v8748
    %v8750 = vlaneseq
    %v8751 = vshrl.u32 %v8750, 7
    %v8752 = vsub.s32 %v8749, %v8751
    %v8753 = vrot.slane %v8737, %v8752
    %v8755 = vunpack.c.l.s4 1966171168
    %v8756 = vunpack.c.0.s8 %v8755
    %v8757 = vlaneseq
    %v8758 = vshrl.u32 %v8757, 7
    %v8759 = vsub.s32 %v8756, %v8758
    %v8760 = vrot.slane %v8738, %v8759
    %v8762 = vunpack.c.l.s4 1966171168
    %v8763 = vunpack.c.0.s8 %v8762
    %v8764 = vlaneseq
    %v8765 = vshrl.u32 %v8764, 7
    %v8766 = vsub.s32 %v8763, %v8765
    %v8767 = vrot.slane %v8739, %v8766
    %v8768 = vcombine.high %v8746, %v8746
    %v8769 = vcombine.high %v8753, %v8753
    %v8770 = vcombine.high %v8760, %v8760
    %v8771 = vcombine.high %v8767, %v8767
    %8780 = vst [vmem:[#allocation14] sm:$0x1] %v8746
    %8781 = vst [vmem:[#allocation14 + $0x10] sm:$0x1] %v8760
    %8782 = vst [vmem:[#allocation14 + $0x20] sm:$0x1] %v8768
    %8783 = vst [vmem:[#allocation14 + $0x30] sm:$0x1] %v8770
    %8784 = vst [vmem:[#allocation14 + $0x40] sm:$0x1] %v8753
    %8785 = vst [vmem:[#allocation14 + $0x50] sm:$0x1] %v8767
    %8786 = vst [vmem:[#allocation14 + $0x60] sm:$0x1] %v8769
    %8787 = vst [vmem:[#allocation14 + $0x70] sm:$0x1] %v8771
    %v8788 = vld [vmem:[#allocation2] sm:$0xff]
    %8789 = vst [vmem:[#allocation16] sm:$0xff] %v8788
    %v8790 = vld [vmem:[#allocation3] sm:$0xff]
    %s8791 = scalar_lea.vmem [#allocation16], 8
    %8792 = vst [vmem:[%s8791] sm:$0xff] %v8790
    // Predicated region
    $region46: #{tpu_custom_call.1} parent=1 // pred_check
      _
    $region47: #{tpu_custom_call.1} parent=1 // pred_check_branch
      %8794 = sbr.rel (0) target = $region49
    $region48: #{tpu_custom_call.1} parent=1 // pred_region
      %s8796 = ssub.s32 2048, 2048
      %8797 = vsyncadd [#allocation6], %s8796
      %s8798 = sshll.u32 [#allocation13], 4
      %s8799 = int_to_ptr.vmem [resolvable:$true] %s8798
      %8804 = dma.vmem_to_hbm [thread:$0]  %s8799, 2048, %s5, [#allocation6], 128, 128, 8
    $region49: #{tpu_custom_call.1} parent=1 // pred_fallthru
      _
    // Predicated region
    $region50: #{tpu_custom_call.1} parent=1 // pred_check
      _
    $region51: #{tpu_custom_call.1} parent=1 // pred_check_branch
      %8806 = sbr.rel (0) target = $region53
    $region52: #{tpu_custom_call.1} parent=1 // pred_region
      %s8807 = ssub.s32 0, 0
      %s8808 = smul.u32 2, %s8807
      %s8810 = ssub.s32 2048, 2048
      %8811 = vsyncadd [#allocation15], %s8810
      %s8812 = smul.addr %s8808, 128
      %s8813 = scalar_lea.hbm %s6, %s8812
      %s8814 = sshll.u32 [#allocation14], 4
      %s8815 = int_to_ptr.vmem [resolvable:$true] %s8814
      %8820 = dma.vmem_to_hbm [thread:$0]  %s8815, 2048, %s8813, [#allocation15], 128, 128, 8
    $region53: #{tpu_custom_call.1} parent=1 // pred_fallthru
      _
    // Predicated region
    $region54: #{tpu_custom_call.1} parent=1 // pred_check
      _
    $region55: #{tpu_custom_call.1} parent=1 // pred_check_branch
      %8822 = sbr.rel (0) target = $region57
    $region56: #{tpu_custom_call.1} parent=1 // pred_region
      %s8824 = ssub.s32 256, 256
      %8825 = vsyncadd [#allocation15], %s8824
      %s8826 = sshll.u32 [#allocation16], 4
      %s8827 = int_to_ptr.vmem [resolvable:$true] %s8826
      %8832 = dma.vmem_to_hbm [thread:$0]  %s8827, 256, %s7, [#allocation15], 128, 128, 8
    $region57: #{tpu_custom_call.1} parent=1 // pred_fallthru
      _
    // Predicated region
    $region58: #{tpu_custom_call.1} parent=1 // pred_check
      _
    $region59: #{tpu_custom_call.1} parent=1 // pred_check_branch
      %8834 = sbr.rel (0) target = $region61
    $region60: #{tpu_custom_call.1} parent=1 // pred_region
      %8835 = dma.done [#allocation6], 2048
    $region61: #{tpu_custom_call.1} parent=1 // pred_fallthru
      _
    // Predicated region
    $region62: #{tpu_custom_call.1} parent=1 // pred_check
      _
    $region63: #{tpu_custom_call.1} parent=1 // pred_check_branch
      %8837 = sbr.rel (0) target = $region65
    $region64: #{tpu_custom_call.1} parent=1 // pred_region
      %8838 = dma.done [#allocation15], 2048
    $region65: #{tpu_custom_call.1} parent=1 // pred_fallthru
      _
    // Predicated region
    $region66: #{tpu_custom_call.1} parent=1 // pred_check
      _
    $region67: #{tpu_custom_call.1} parent=1 // pred_check_branch
      %8840 = sbr.rel (0) target = $region69
    $region68: #{tpu_custom_call.1} parent=1 // pred_region
      %8841 = dma.done [#allocation15], 256
    $region69: #{tpu_custom_call.1} parent=1 // pred_fallthru
      _
    %8842 = vsyncpa [#allocation5], 1
    %8843 = vsyncpa [#allocation8], 1
    %8844 = vsyncpa [#allocation11], 1
    %8845 = vsyncpa [#allocation6], 1
    %8846 = vsyncpa [#allocation15], 1

</llo_original>
